<compile_context>
chip_gen: v7x
topology: tpu7x:2x2x1
jax: 0.10.0
libtpu: 0.0.40
codegen_flags: <defaults>
</compile_context>

<pallas_src>
import functools

import jax
import jax.numpy as jnp
from jax import lax
from jax.experimental import pallas as pl
from jax.experimental.pallas import tpu as pltpu

NUM_GROUPS = 8
EPS = 1e-5
_LPAD = 8    # interior column offset inside the halo buffer (8-aligned)
_WPAD = 16   # total extra columns in the halo buffer (8 left + 8 right)


# ----------------------------------------------------------------------------
# In-kernel helpers (traced / inlined, no extra launches)
# ----------------------------------------------------------------------------
def _gn_silu(xf, agg, gamma, beta):
    """GroupNorm + SiLU on an (N, C) f32 tile.

    `agg` is a hoisted constant: agg[i, j] = [group(i)==group(j)] / (N * C/G),
    so csum @ agg and csq @ agg give per-channel group mean / E[x^2] directly.
    Stats kept in f32; var = E[x^2] - mean^2 clamped at 0.
    """
    csum = jnp.sum(xf, axis=0, keepdims=True)           # (1, C)
    csq = jnp.sum(xf * xf, axis=0, keepdims=True)       # (1, C)
    mean_c = jnp.dot(csum, agg, preferred_element_type=jnp.float32)
    ex2_c = jnp.dot(csq, agg, preferred_element_type=jnp.float32)
    var_c = jnp.maximum(ex2_c - mean_c * mean_c, 0.0)
    rstd_c = lax.rsqrt(var_c + EPS)
    y = (xf - mean_c) * rstd_c * gamma + beta
    return y * jax.nn.sigmoid(y)


def _fill_pad(pad_ref, h_flat, H, W):
    """Write h_flat (H*W, C) f32 into the interior of the halo buffer.

    Buffer: (H+2, W+_WPAD, C); interior rows [1, H], cols [_LPAD, _LPAD+W).
    Only the border actually read by the shifted views is re-zeroed each step
    (top/bottom rows + one 8-wide aligned band each side); the interior is
    fully overwritten, so no full-buffer clear is needed.
    """
    C = pad_ref.shape[-1]
    Wp = pad_ref.shape[1]
    cdt = pad_ref.dtype
    zrow = jnp.zeros((1, Wp, C), cdt)
    pad_ref[0:1, :, :] = zrow                                # top halo row
    pad_ref[H + 1:H + 2, :, :] = zrow                        # bottom halo row
    zcol = jnp.zeros((H, 8, C), cdt)
    pad_ref[1:H + 1, _LPAD - 8:_LPAD, :] = zcol              # left band (col _LPAD-1)
    pad_ref[1:H + 1, _LPAD + W:_LPAD + W + 8, :] = zcol      # right band (col _LPAD+W)
    pad_ref[1:H + 1, _LPAD:_LPAD + W, :] = (
        h_flat.reshape(H, W, C).astype(cdt))                 # aligned interior store


def _conv3x3_acc(pad_ref, w_ref, H, W, Cout):
    """3x3 'same' conv = 9 accumulating MXU dots over shifted halo-buffer views.

    pad_ref: (H+2, W+_WPAD, Cin) halo buffer. w_ref: (9, Cin, Cout).
    Returns an f32 (H*W, Cout) accumulator. No im2col buffer is materialized.
    """
    HW = H * W
    Cin = pad_ref.shape[-1]
    acc = jnp.zeros((HW, Cout), jnp.float32)
    for ky in range(3):
        for kx in range(3):
            c0 = _LPAD - 1 + kx
            patch = pad_ref[ky:ky + H, c0:c0 + W, :].reshape(HW, Cin)
            acc = acc + jnp.dot(patch, w_ref[ky * 3 + kx],
                                preferred_element_type=jnp.float32)
    return acc


# ----------------------------------------------------------------------------
# Fused ResnetBlock kernel (one grid step = one batch element)
# ----------------------------------------------------------------------------
def _resnet_block_kernel(has_match, H, W, *refs):
    if has_match:
        (x_ref, te_ref, agg1_ref, agg2_ref, g1_ref, be1_ref, w1_ref, b1_ref,
         g2_ref, be2_ref, w2_ref, b2_ref, wm_ref, bm_ref,
         o_ref, pad1_ref, pad2_ref) = refs
    else:
        (x_ref, te_ref, agg1_ref, agg2_ref, g1_ref, be1_ref, w1_ref, b1_ref,
         g2_ref, be2_ref, w2_ref, b2_ref,
         o_ref, pad1_ref, pad2_ref) = refs
        wm_ref = bm_ref = None

    HW = H * W
    Cout = o_ref.shape[-1]
    cdt = pad1_ref.dtype

    xf = x_ref[0].astype(jnp.float32)                        # (HW, Cin) f32

    # ---- GroupNorm1 + SiLU ----
    h1 = _gn_silu(xf, agg1_ref[...], g1_ref[...], be1_ref[...])

    # ---- conv_1 (3x3 'same') ----
    _fill_pad(pad1_ref, h1, H, W)
    acc = _conv3x3_acc(pad1_ref, w1_ref, H, W, Cout)
    acc = acc + b1_ref[...] + te_ref[0]                      # bias + time embedding

    # ---- GroupNorm2 + SiLU ----
    h2 = _gn_silu(acc, agg2_ref[...], g2_ref[...], be2_ref[...])
    # Dropout2d: identity at inference.
    # TODO(synk): training-mode Dropout2d (per-channel dropout) not implemented.

    # ---- conv_2 (3x3 'same') ----
    _fill_pad(pad2_ref, h2, H, W)
    acc2 = _conv3x3_acc(pad2_ref, w2_ref, H, W, Cout)
    acc2 = acc2 + b2_ref[...]

    # ---- skip connection fused into the epilogue ----
    if has_match:
        skip = (jnp.dot(xf.astype(cdt), wm_ref[...],
                        preferred_element_type=jnp.float32) + bm_ref[...])
    else:
        skip = xf
    out = acc2 + skip

    # Attention = nn.Identity (apply_attention=False). Single output store.
    o_ref[...] = out.reshape(1, HW, Cout).astype(o_ref.dtype)


# ----------------------------------------------------------------------------
# Wrapper: NCHW in/out, flattened NHWC inside
# ----------------------------------------------------------------------------
def _group_agg(C, hw):
    cg = C // NUM_GROUPS
    g = jnp.arange(C, dtype=jnp.int32) // cg
    m = (g[:, None] == g[None, :]).astype(jnp.float32)
    return m / jnp.float32(hw * cg)


def resnet_block_forward(params, x_nchw, t, compute_dtype=jnp.bfloat16):
    B, Cin, H, W = x_nchw.shape
    Cout = params["w1"].shape[-1]
    has_match = Cin != Cout
    cdt = compute_dtype
    f32 = jnp.float32

    # NHWC, flattened spatial: (B, H*W, C)
    x2d = jnp.transpose(x_nchw, (0, 2, 3, 1)).reshape(B, H * W, Cin)

    # Time-embedding projection hoisted out of the kernel (one batched matmul).
    temb = (jax.nn.silu(t.astype(f32)) @ params["wd"].astype(f32)
            + params["bd"].astype(f32)).reshape(B, 1, Cout)

    # Hoisted GroupNorm aggregation constants (built once, not per grid step).
    agg1 = _group_agg(Cin, H * W)
    agg2 = _group_agg(Cout, H * W)

    w1 = params["w1"].reshape(9, Cin, Cout).astype(cdt)      # HWIO -> (9, Cin, Cout)
    w2 = params["w2"].reshape(9, Cout, Cout).astype(cdt)

    inputs = [
        x2d, temb, agg1, agg2,
        params["gamma1"].reshape(1, Cin).astype(f32),
        params["beta1"].reshape(1, Cin).astype(f32),
        w1, params["b1"].reshape(1, Cout).astype(f32),
        params["gamma2"].reshape(1, Cout).astype(f32),
        params["beta2"].reshape(1, Cout).astype(f32),
        w2, params["b2"].reshape(1, Cout).astype(f32),
    ]
    in_specs = [
        pl.BlockSpec((1, H * W, Cin), lambda b: (b, 0, 0)),
        pl.BlockSpec((1, 1, Cout), lambda b: (b, 0, 0)),
        pl.BlockSpec((Cin, Cin), lambda b: (0, 0)),
        pl.BlockSpec((Cout, Cout), lambda b: (0, 0)),
        pl.BlockSpec((1, Cin), lambda b: (0, 0)),
        pl.BlockSpec((1, Cin), lambda b: (0, 0)),
        pl.BlockSpec((9, Cin, Cout), lambda b: (0, 0, 0)),
        pl.BlockSpec((1, Cout), lambda b: (0, 0)),
        pl.BlockSpec((1, Cout), lambda b: (0, 0)),
        pl.BlockSpec((1, Cout), lambda b: (0, 0)),
        pl.BlockSpec((9, Cout, Cout), lambda b: (0, 0, 0)),
        pl.BlockSpec((1, Cout), lambda b: (0, 0)),
    ]
    if has_match:
        inputs += [params["wm"].astype(cdt),
                   params["bm"].reshape(1, Cout).astype(f32)]
        in_specs += [pl.BlockSpec((Cin, Cout), lambda b: (0, 0)),
                     pl.BlockSpec((1, Cout), lambda b: (0, 0))]

    # Explicit VMEM budget: double-buffered blocks + halo scratch + working set.
    isz = jnp.dtype(cdt).itemsize
    act_bytes = H * W * max(Cin, Cout) * 4
    scratch_bytes = (H + 2) * (W + _WPAD) * (Cin + Cout) * isz
    blk_bytes = (H * W * Cin * x2d.dtype.itemsize
                 + Cout * 4
                 + (Cin * Cin + Cout * Cout) * 4
                 + (2 * Cin + 4 * Cout) * 4
                 + (9 * Cin * Cout + 9 * Cout * Cout) * isz
                 + H * W * Cout * 4)
    if has_match:
        blk_bytes += Cin * Cout * isz + Cout * 4
    vmem_limit = int(min(120 * 1024 * 1024,
                         max(2 * blk_bytes + scratch_bytes + 8 * act_bytes
                             + (4 << 20), 32 * 1024 * 1024)))

    out = pl.pallas_call(
        functools.partial(_resnet_block_kernel, has_match, H, W),
        out_shape=jax.ShapeDtypeStruct((B, H * W, Cout), x_nchw.dtype),
        grid=(B,),
        in_specs=in_specs,
        out_specs=pl.BlockSpec((1, H * W, Cout), lambda b: (b, 0, 0)),
        scratch_shapes=[
            pltpu.VMEM((H + 2, W + _WPAD, Cin), cdt),   # conv1 halo buffer
            pltpu.VMEM((H + 2, W + _WPAD, Cout), cdt),  # conv2 halo buffer
        ],
        compiler_params=pltpu.CompilerParams(
            dimension_semantics=("parallel",),
            vmem_limit_bytes=vmem_limit),
    )(*inputs)
    return jnp.transpose(out.reshape(B, H, W, Cout), (0, 3, 1, 2))


# ----------------------------------------------------------------------------
# Deterministic parameter init (synthetic)
# ----------------------------------------------------------------------------
def init_params(key, cin, cout, tdim, dtype=jnp.float32):
    ks = jax.random.split(key, 10)
    p = {}
    p["gamma1"] = 1.0 + 0.1 * jax.random.normal(ks[0], (cin,), dtype)
    p["beta1"] = 0.1 * jax.random.normal(ks[1], (cin,), dtype)
    p["w1"] = 0.1 * jax.random.normal(ks[2], (3, 3, cin, cout), dtype)   # HWIO
    p["b1"] = 0.1 * jax.random.normal(ks[3], (cout,), dtype)
    p["wd"] = 0.1 * jax.random.normal(ks[4], (tdim, cout), dtype)
    p["bd"] = 0.1 * jax.random.normal(ks[5], (cout,), dtype)
    p["gamma2"] = 1.0 + 0.1 * jax.random.normal(ks[6], (cout,), dtype)
    p["beta2"] = 0.1 * jax.random.normal(ks[7], (cout,), dtype)
    p["w2"] = 0.1 * jax.random.normal(ks[8], (3, 3, cout, cout), dtype)  # HWIO
    p["b2"] = 0.1 * jax.random.normal(ks[9], (cout,), dtype)
    if cin != cout:
        km1, km2 = jax.random.split(ks[0])
        p["wm"] = 0.1 * jax.random.normal(km1, (cin, cout), dtype)       # 1x1 conv
        p["bm"] = 0.1 * jax.random.normal(km2, (cout,), dtype)
    return p


# ----------------------------------------------------------------------------
# Pure-JAX reference (correctness check)
# ----------------------------------------------------------------------------
def _silu(x):
    return x * jax.nn.sigmoid(x)


def _group_norm_ref(x, gamma, beta):
    B, C, H, W = x.shape
    xg = x.reshape(B, NUM_GROUPS, C // NUM_GROUPS, H, W)
    mu = xg.mean(axis=(2, 3, 4), keepdims=True)
    var = ((xg - mu) ** 2).mean(axis=(2, 3, 4), keepdims=True)
    xn = ((xg - mu) * lax.rsqrt(var + EPS)).reshape(B, C, H, W)
    return xn * gamma[None, :, None, None] + beta[None, :, None, None]


def _conv_ref(x, w_hwio, b):
    y = lax.conv_general_dilated(x, w_hwio, (1, 1), "SAME",
                                 dimension_numbers=("NCHW", "HWIO", "NCHW"))
    return y + b[None, :, None, None]


def resnet_block_ref(params, x, t):
    cin, cout = x.shape[1], params["w1"].shape[-1]
    h = _silu(_group_norm_ref(x, params["gamma1"], params["beta1"]))
    h = _conv_ref(h, params["w1"], params["b1"])
    temb = _silu(t) @ params["wd"] + params["bd"]
    h = h + temb[:, :, None, None]
    h = _silu(_group_norm_ref(h, params["gamma2"], params["beta2"]))
    h = _conv_ref(h, params["w2"], params["b2"])
    if cin != cout:
        skip = _conv_ref(x, params["wm"].reshape(1, 1, cin, cout), params["bm"])
    else:
        skip = x
    return h + skip


if __name__ == "__main__":
    key = jax.random.PRNGKey(0)
    kx, kt, kp, kx2, kp2 = jax.random.split(key, 5)

    B, Cin, Cout, H, W, Tdim = 2, 8, 16, 16, 16, 32
    x = jax.random.normal(kx, (B, Cin, H, W), jnp.float32)
    t = jax.random.normal(kt, (B, Tdim), jnp.float32)
    params = init_params(kp, Cin, Cout, Tdim)
    ref = resnet_block_ref(params, x, t)

    # 1) f32-MXU path (tight structural check), Cin != Cout (1x1 match skip).
    out_f32 = jax.block_until_ready(
        resnet_block_forward(params, x, t, compute_dtype=jnp.float32))
    assert out_f32.shape == (B, Cout, H, W)
    err = float(jnp.max(jnp.abs(out_f32 - ref)))
    if err > 1e-3:
        raise AssertionError(f"Pallas(f32) vs reference mismatch (match path): {err}")

    # 2) bf16-MXU path (default / production): loose tolerance for bf16 rounding.
    out_bf = jax.block_until_ready(resnet_block_forward(params, x, t))
    err_bf = float(jnp.max(jnp.abs(out_bf - ref)))
    if err_bf > 1e-1:
        raise AssertionError(f"Pallas(bf16) vs reference mismatch (match path): {err_bf}")

    # 3) Cin == Cout path (identity skip), f32 check.
    x2 = jax.random.normal(kx2, (B, Cout, H, W), jnp.float32)
    params2 = init_params(kp2, Cout, Cout, Tdim)
    out2 = jax.block_until_ready(
        resnet_block_forward(params2, x2, t, compute_dtype=jnp.float32))
    ref2 = resnet_block_ref(params2, x2, t)
    err2 = float(jnp.max(jnp.abs(out2 - ref2)))
    if err2 > 1e-3:
        raise AssertionError(f"Pallas(f32) vs reference mismatch (identity path): {err2}")

    print("KERNEL_OK")
</pallas_src>

<mosaic_0001>
module attributes {stable_mosaic.version = 11 : i64} {
  func.func @_resnet_block_kernel(%arg0: i32, %arg1: memref<1x256x8xf32, #tpu.memory_space<vmem>>, %arg2: memref<1x1x16xf32, #tpu.memory_space<vmem>>, %arg3: memref<8x8xf32, #tpu.memory_space<vmem>>, %arg4: memref<16x16xf32, #tpu.memory_space<vmem>>, %arg5: memref<1x8xf32, #tpu.memory_space<vmem>>, %arg6: memref<1x8xf32, #tpu.memory_space<vmem>>, %arg7: memref<9x8x16xf32, #tpu.memory_space<vmem>>, %arg8: memref<1x16xf32, #tpu.memory_space<vmem>>, %arg9: memref<1x16xf32, #tpu.memory_space<vmem>>, %arg10: memref<1x16xf32, #tpu.memory_space<vmem>>, %arg11: memref<9x16x16xf32, #tpu.memory_space<vmem>>, %arg12: memref<1x16xf32, #tpu.memory_space<vmem>>, %arg13: memref<8x16xf32, #tpu.memory_space<vmem>>, %arg14: memref<1x16xf32, #tpu.memory_space<vmem>>, %arg15: memref<1x256x16xf32, #tpu.memory_space<vmem>>, %arg16: memref<18x32x8xf32, #tpu.memory_space<vmem>>, %arg17: memref<18x32x16xf32, #tpu.memory_space<vmem>>) attributes {dimension_semantics = [#tpu.dimension_semantics<parallel>], iteration_bounds = array<i64: 2>, scalar_prefetch = 0 : i64, scratch_operands = 2 : i64, tpu.core_type = #tpu.core_type<tc>, window_params = [{transform_indices = @transform_0, window_bounds = array<i64: 1, 256, 8>}, {transform_indices = @transform_1, window_bounds = array<i64: 1, 1, 16>}, {pipeline_mode = #tpu.pipeline_mode<synchronous>, transform_indices = @transform_2, window_bounds = array<i64: 8, 8>}, {pipeline_mode = #tpu.pipeline_mode<synchronous>, transform_indices = @transform_3, window_bounds = array<i64: 16, 16>}, {pipeline_mode = #tpu.pipeline_mode<synchronous>, transform_indices = @transform_4, window_bounds = array<i64: 1, 8>}, {pipeline_mode = #tpu.pipeline_mode<synchronous>, transform_indices = @transform_5, window_bounds = array<i64: 1, 8>}, {pipeline_mode = #tpu.pipeline_mode<synchronous>, transform_indices = @transform_6, window_bounds = array<i64: 9, 8, 16>}, {pipeline_mode = #tpu.pipeline_mode<synchronous>, transform_indices = @transform_7, window_bounds = array<i64: 1, 16>}, {pipeline_mode = #tpu.pipeline_mode<synchronous>, transform_indices = @transform_8, window_bounds = array<i64: 1, 16>}, {pipeline_mode = #tpu.pipeline_mode<synchronous>, transform_indices = @transform_9, window_bounds = array<i64: 1, 16>}, {pipeline_mode = #tpu.pipeline_mode<synchronous>, transform_indices = @transform_10, window_bounds = array<i64: 9, 16, 16>}, {pipeline_mode = #tpu.pipeline_mode<synchronous>, transform_indices = @transform_11, window_bounds = array<i64: 1, 16>}, {pipeline_mode = #tpu.pipeline_mode<synchronous>, transform_indices = @transform_12, window_bounds = array<i64: 8, 16>}, {pipeline_mode = #tpu.pipeline_mode<synchronous>, transform_indices = @transform_13, window_bounds = array<i64: 1, 16>}, {transform_indices = @transform_14, window_bounds = array<i64: 1, 256, 16>}]} {
    %c0 = arith.constant 0 : index
    %c0_0 = arith.constant 0 : index
    %c0_1 = arith.constant 0 : index
    %0 = vector.load %arg1[%c0, %c0_0, %c0_1] : memref<1x256x8xf32, #tpu.memory_space<vmem>>, vector<1x256x8xf32>
    %1 = vector.shape_cast %0 : vector<1x256x8xf32> to vector<256x8xf32>
    %c0_2 = arith.constant 0 : index
    %c0_3 = arith.constant 0 : index
    %2 = vector.load %arg3[%c0_2, %c0_3] : memref<8x8xf32, #tpu.memory_space<vmem>>, vector<8x8xf32>
    %c0_4 = arith.constant 0 : index
    %c0_5 = arith.constant 0 : index
    %3 = vector.load %arg5[%c0_4, %c0_5] : memref<1x8xf32, #tpu.memory_space<vmem>>, vector<1x8xf32>
    %c0_6 = arith.constant 0 : index
    %c0_7 = arith.constant 0 : index
    %4 = vector.load %arg6[%c0_6, %c0_7] : memref<1x8xf32, #tpu.memory_space<vmem>>, vector<1x8xf32>
    %cst = arith.constant dense<0.000000e+00> : vector<8xf32>
    %5 = vector.multi_reduction <add>, %1, %cst [0] : vector<256x8xf32> to vector<8xf32>
    %6 = vector.shape_cast %5 : vector<8xf32> to vector<1x8xf32>
    %7 = arith.mulf %1, %1 : vector<256x8xf32>
    %cst_8 = arith.constant dense<0.000000e+00> : vector<8xf32>
    %8 = vector.multi_reduction <add>, %7, %cst_8 [0] : vector<256x8xf32> to vector<8xf32>
    %9 = vector.shape_cast %8 : vector<8xf32> to vector<1x8xf32>
    %cst_9 = arith.constant dense<0.000000e+00> : vector<1x8xf32>
    %10 = tpu.matmul %6, %2, %cst_9 {dimension_numbers = #tpu.dot_dimension_numbers<[1], [0], [0], [1], [0, 0, 1, 1], [], []>} : vector<1x8xf32>, vector<8x8xf32>, vector<1x8xf32> -> vector<1x8xf32>
    %cst_10 = arith.constant dense<0.000000e+00> : vector<1x8xf32>
    %11 = tpu.matmul %9, %2, %cst_10 {dimension_numbers = #tpu.dot_dimension_numbers<[1], [0], [0], [1], [0, 0, 1, 1], [], []>} : vector<1x8xf32>, vector<8x8xf32>, vector<1x8xf32> -> vector<1x8xf32>
    %12 = arith.mulf %10, %10 : vector<1x8xf32>
    %13 = arith.subf %11, %12 : vector<1x8xf32>
    %cst_11 = arith.constant 0.000000e+00 : f32
    %14 = vector.broadcast %cst_11 : f32 to vector<1x8xf32>
    %15 = arith.maximumf %13, %14 : vector<1x8xf32>
    %cst_12 = arith.constant 9.99999974E-6 : f32
    %16 = vector.broadcast %cst_12 : f32 to vector<1x8xf32>
    %17 = arith.addf %15, %16 : vector<1x8xf32>
    %18 = math.rsqrt %17 : vector<1x8xf32>
    %19 = vector.broadcast %10 : vector<1x8xf32> to vector<256x8xf32>
    %20 = arith.subf %1, %19 : vector<256x8xf32>
    %21 = vector.broadcast %18 : vector<1x8xf32> to vector<256x8xf32>
    %22 = arith.mulf %20, %21 : vector<256x8xf32>
    %23 = vector.broadcast %3 : vector<1x8xf32> to vector<256x8xf32>
    %24 = arith.mulf %22, %23 : vector<256x8xf32>
    %25 = vector.broadcast %4 : vector<1x8xf32> to vector<256x8xf32>
    %26 = arith.addf %24, %25 : vector<256x8xf32>
    %27 = arith.negf %26 : vector<256x8xf32>
    %28 = math.exp %27 : vector<256x8xf32>
    %cst_13 = arith.constant 1.000000e+00 : f32
    %29 = vector.broadcast %cst_13 : f32 to vector<256x8xf32>
    %30 = arith.addf %29, %28 : vector<256x8xf32>
    %31 = arith.divf %29, %30 : vector<256x8xf32>
    %32 = arith.mulf %26, %31 : vector<256x8xf32>
    %cst_14 = arith.constant 0.000000e+00 : f32
    %33 = vector.broadcast %cst_14 : f32 to vector<1x32x8xf32>
    %c0_15 = arith.constant 0 : index
    %c0_16 = arith.constant 0 : index
    %c0_17 = arith.constant 0 : index
    %34 = vector.load %arg16[%c0_15, %c0_16, %c0_17] : memref<18x32x8xf32, #tpu.memory_space<vmem>>, vector<1x32x8xf32>
    tpu.vector_store %arg16[%c0_15, %c0_16, %c0_17], %33 {strides = array<i32>} : memref<18x32x8xf32, #tpu.memory_space<vmem>>, vector<1x32x8xf32>,
    %c17 = arith.constant 17 : index
    %c0_18 = arith.constant 0 : index
    %c0_19 = arith.constant 0 : index
    %35 = vector.load %arg16[%c17, %c0_18, %c0_19] : memref<18x32x8xf32, #tpu.memory_space<vmem>>, vector<1x32x8xf32>
    tpu.vector_store %arg16[%c17, %c0_18, %c0_19], %33 {strides = array<i32>} : memref<18x32x8xf32, #tpu.memory_space<vmem>>, vector<1x32x8xf32>,
    %cst_20 = arith.constant 0.000000e+00 : f32
    %36 = vector.broadcast %cst_20 : f32 to vector<16x8x8xf32>
    %c1 = arith.constant 1 : index
    %c0_21 = arith.constant 0 : index
    %c0_22 = arith.constant 0 : index
    %37 = vector.load %arg16[%c1, %c0_21, %c0_22] : memref<18x32x8xf32, #tpu.memory_space<vmem>>, vector<16x8x8xf32>
    tpu.vector_store %arg16[%c1, %c0_21, %c0_22], %36 {strides = array<i32>} : memref<18x32x8xf32, #tpu.memory_space<vmem>>, vector<16x8x8xf32>,
    %c1_23 = arith.constant 1 : index
    %c24 = arith.constant 24 : index
    %c0_24 = arith.constant 0 : index
    %38 = vector.load %arg16[%c1_23, %c24, %c0_24] : memref<18x32x8xf32, #tpu.memory_space<vmem>>, vector<16x8x8xf32>
    tpu.vector_store %arg16[%c1_23, %c24, %c0_24], %36 {strides = array<i32>} : memref<18x32x8xf32, #tpu.memory_space<vmem>>, vector<16x8x8xf32>,
    %39 = vector.shape_cast %32 : vector<256x8xf32> to vector<16x16x8xf32>
    %c1_25 = arith.constant 1 : index
    %c8 = arith.constant 8 : index
    %c0_26 = arith.constant 0 : index
    %40 = vector.load %arg16[%c1_25, %c8, %c0_26] : memref<18x32x8xf32, #tpu.memory_space<vmem>>, vector<16x16x8xf32>
    tpu.vector_store %arg16[%c1_25, %c8, %c0_26], %39 {strides = array<i32>} : memref<18x32x8xf32, #tpu.memory_space<vmem>>, vector<16x16x8xf32>,
    %cst_27 = arith.constant 0.000000e+00 : f32
    %41 = vector.broadcast %cst_27 : f32 to vector<256x16xf32>
    %c0_28 = arith.constant 0 : index
    %c7 = arith.constant 7 : index
    %c0_29 = arith.constant 0 : index
    %42 = vector.load %arg16[%c0_28, %c7, %c0_29] : memref<18x32x8xf32, #tpu.memory_space<vmem>>, vector<16x16x8xf32>
    %43 = vector.shape_cast %42 : vector<16x16x8xf32> to vector<256x8xf32>
    %c0_30 = arith.constant 0 : index
    %c0_31 = arith.constant 0 : index
    %c0_32 = arith.constant 0 : index
    %44 = vector.load %arg7[%c0_30, %c0_31, %c0_32] : memref<9x8x16xf32, #tpu.memory_space<vmem>>, vector<1x8x16xf32>
    %45 = vector.shape_cast %44 : vector<1x8x16xf32> to vector<8x16xf32>
    %cst_33 = arith.constant dense<0.000000e+00> : vector<256x16xf32>
    %46 = tpu.matmul %43, %45, %cst_33 {dimension_numbers = #tpu.dot_dimension_numbers<[1], [0], [0], [1], [0, 0, 1, 1], [], []>} : vector<256x8xf32>, vector<8x16xf32>, vector<256x16xf32> -> vector<256x16xf32>
    %47 = arith.addf %41, %46 : vector<256x16xf32>
    %c0_34 = arith.constant 0 : index
    %c8_35 = arith.constant 8 : index
    %c0_36 = arith.constant 0 : index
    %48 = vector.load %arg16[%c0_34, %c8_35, %c0_36] : memref<18x32x8xf32, #tpu.memory_space<vmem>>, vector<16x16x8xf32>
    %49 = vector.shape_cast %48 : vector<16x16x8xf32> to vector<256x8xf32>
    %c1_37 = arith.constant 1 : index
    %c0_38 = arith.constant 0 : index
    %c0_39 = arith.constant 0 : index
    %50 = vector.load %arg7[%c1_37, %c0_38, %c0_39] : memref<9x8x16xf32, #tpu.memory_space<vmem>>, vector<1x8x16xf32>
    %51 = vector.shape_cast %50 : vector<1x8x16xf32> to vector<8x16xf32>
    %cst_40 = arith.constant dense<0.000000e+00> : vector<256x16xf32>
    %52 = tpu.matmul %49, %51, %cst_40 {dimension_numbers = #tpu.dot_dimension_numbers<[1], [0], [0], [1], [0, 0, 1, 1], [], []>} : vector<256x8xf32>, vector<8x16xf32>, vector<256x16xf32> -> vector<256x16xf32>
    %53 = arith.addf %47, %52 : vector<256x16xf32>
    %c0_41 = arith.constant 0 : index
    %c9 = arith.constant 9 : index
    %c0_42 = arith.constant 0 : index
    %54 = vector.load %arg16[%c0_41, %c9, %c0_42] : memref<18x32x8xf32, #tpu.memory_space<vmem>>, vector<16x16x8xf32>
    %55 = vector.shape_cast %54 : vector<16x16x8xf32> to vector<256x8xf32>
    %c2 = arith.constant 2 : index
    %c0_43 = arith.constant 0 : index
    %c0_44 = arith.constant 0 : index
    %56 = vector.load %arg7[%c2, %c0_43, %c0_44] : memref<9x8x16xf32, #tpu.memory_space<vmem>>, vector<1x8x16xf32>
    %57 = vector.shape_cast %56 : vector<1x8x16xf32> to vector<8x16xf32>
    %cst_45 = arith.constant dense<0.000000e+00> : vector<256x16xf32>
    %58 = tpu.matmul %55, %57, %cst_45 {dimension_numbers = #tpu.dot_dimension_numbers<[1], [0], [0], [1], [0, 0, 1, 1], [], []>} : vector<256x8xf32>, vector<8x16xf32>, vector<256x16xf32> -> vector<256x16xf32>
    %59 = arith.addf %53, %58 : vector<256x16xf32>
    %c1_46 = arith.constant 1 : index
    %c7_47 = arith.constant 7 : index
    %c0_48 = arith.constant 0 : index
    %60 = vector.load %arg16[%c1_46, %c7_47, %c0_48] : memref<18x32x8xf32, #tpu.memory_space<vmem>>, vector<16x16x8xf32>
    %61 = vector.shape_cast %60 : vector<16x16x8xf32> to vector<256x8xf32>
    %c3 = arith.constant 3 : index
    %c0_49 = arith.constant 0 : index
    %c0_50 = arith.constant 0 : index
    %62 = vector.load %arg7[%c3, %c0_49, %c0_50] : memref<9x8x16xf32, #tpu.memory_space<vmem>>, vector<1x8x16xf32>
    %63 = vector.shape_cast %62 : vector<1x8x16xf32> to vector<8x16xf32>
    %cst_51 = arith.constant dense<0.000000e+00> : vector<256x16xf32>
    %64 = tpu.matmul %61, %63, %cst_51 {dimension_numbers = #tpu.dot_dimension_numbers<[1], [0], [0], [1], [0, 0, 1, 1], [], []>} : vector<256x8xf32>, vector<8x16xf32>, vector<256x16xf32> -> vector<256x16xf32>
    %65 = arith.addf %59, %64 : vector<256x16xf32>
    %c1_52 = arith.constant 1 : index
    %c8_53 = arith.constant 8 : index
    %c0_54 = arith.constant 0 : index
    %66 = vector.load %arg16[%c1_52, %c8_53, %c0_54] : memref<18x32x8xf32, #tpu.memory_space<vmem>>, vector<16x16x8xf32>
    %67 = vector.shape_cast %66 : vector<16x16x8xf32> to vector<256x8xf32>
    %c4 = arith.constant 4 : index
    %c0_55 = arith.constant 0 : index
    %c0_56 = arith.constant 0 : index
    %68 = vector.load %arg7[%c4, %c0_55, %c0_56] : memref<9x8x16xf32, #tpu.memory_space<vmem>>, vector<1x8x16xf32>
    %69 = vector.shape_cast %68 : vector<1x8x16xf32> to vector<8x16xf32>
    %cst_57 = arith.constant dense<0.000000e+00> : vector<256x16xf32>
    %70 = tpu.matmul %67, %69, %cst_57 {dimension_numbers = #tpu.dot_dimension_numbers<[1], [0], [0], [1], [0, 0, 1, 1], [], []>} : vector<256x8xf32>, vector<8x16xf32>, vector<256x16xf32> -> vector<256x16xf32>
    %71 = arith.addf %65, %70 : vector<256x16xf32>
    %c1_58 = arith.constant 1 : index
    %c9_59 = arith.constant 9 : index
    %c0_60 = arith.constant 0 : index
    %72 = vector.load %arg16[%c1_58, %c9_59, %c0_60] : memref<18x32x8xf32, #tpu.memory_space<vmem>>, vector<16x16x8xf32>
    %73 = vector.shape_cast %72 : vector<16x16x8xf32> to vector<256x8xf32>
    %c5 = arith.constant 5 : index
    %c0_61 = arith.constant 0 : index
    %c0_62 = arith.constant 0 : index
    %74 = vector.load %arg7[%c5, %c0_61, %c0_62] : memref<9x8x16xf32, #tpu.memory_space<vmem>>, vector<1x8x16xf32>
    %75 = vector.shape_cast %74 : vector<1x8x16xf32> to vector<8x16xf32>
    %cst_63 = arith.constant dense<0.000000e+00> : vector<256x16xf32>
    %76 = tpu.matmul %73, %75, %cst_63 {dimension_numbers = #tpu.dot_dimension_numbers<[1], [0], [0], [1], [0, 0, 1, 1], [], []>} : vector<256x8xf32>, vector<8x16xf32>, vector<256x16xf32> -> vector<256x16xf32>
    %77 = arith.addf %71, %76 : vector<256x16xf32>
    %c2_64 = arith.constant 2 : index
    %c7_65 = arith.constant 7 : index
    %c0_66 = arith.constant 0 : index
    %78 = vector.load %arg16[%c2_64, %c7_65, %c0_66] : memref<18x32x8xf32, #tpu.memory_space<vmem>>, vector<16x16x8xf32>
    %79 = vector.shape_cast %78 : vector<16x16x8xf32> to vector<256x8xf32>
    %c6 = arith.constant 6 : index
    %c0_67 = arith.constant 0 : index
    %c0_68 = arith.constant 0 : index
    %80 = vector.load %arg7[%c6, %c0_67, %c0_68] : memref<9x8x16xf32, #tpu.memory_space<vmem>>, vector<1x8x16xf32>
    %81 = vector.shape_cast %80 : vector<1x8x16xf32> to vector<8x16xf32>
    %cst_69 = arith.constant dense<0.000000e+00> : vector<256x16xf32>
    %82 = tpu.matmul %79, %81, %cst_69 {dimension_numbers = #tpu.dot_dimension_numbers<[1], [0], [0], [1], [0, 0, 1, 1], [], []>} : vector<256x8xf32>, vector<8x16xf32>, vector<256x16xf32> -> vector<256x16xf32>
    %83 = arith.addf %77, %82 : vector<256x16xf32>
    %c2_70 = arith.constant 2 : index
    %c8_71 = arith.constant 8 : index
    %c0_72 = arith.constant 0 : index
    %84 = vector.load %arg16[%c2_70, %c8_71, %c0_72] : memref<18x32x8xf32, #tpu.memory_space<vmem>>, vector<16x16x8xf32>
    %85 = vector.shape_cast %84 : vector<16x16x8xf32> to vector<256x8xf32>
    %c7_73 = arith.constant 7 : index
    %c0_74 = arith.constant 0 : index
    %c0_75 = arith.constant 0 : index
    %86 = vector.load %arg7[%c7_73, %c0_74, %c0_75] : memref<9x8x16xf32, #tpu.memory_space<vmem>>, vector<1x8x16xf32>
    %87 = vector.shape_cast %86 : vector<1x8x16xf32> to vector<8x16xf32>
    %cst_76 = arith.constant dense<0.000000e+00> : vector<256x16xf32>
    %88 = tpu.matmul %85, %87, %cst_76 {dimension_numbers = #tpu.dot_dimension_numbers<[1], [0], [0], [1], [0, 0, 1, 1], [], []>} : vector<256x8xf32>, vector<8x16xf32>, vector<256x16xf32> -> vector<256x16xf32>
    %89 = arith.addf %83, %88 : vector<256x16xf32>
    %c2_77 = arith.constant 2 : index
    %c9_78 = arith.constant 9 : index
    %c0_79 = arith.constant 0 : index
    %90 = vector.load %arg16[%c2_77, %c9_78, %c0_79] : memref<18x32x8xf32, #tpu.memory_space<vmem>>, vector<16x16x8xf32>
    %91 = vector.shape_cast %90 : vector<16x16x8xf32> to vector<256x8xf32>
    %c8_80 = arith.constant 8 : index
    %c0_81 = arith.constant 0 : index
    %c0_82 = arith.constant 0 : index
    %92 = vector.load %arg7[%c8_80, %c0_81, %c0_82] : memref<9x8x16xf32, #tpu.memory_space<vmem>>, vector<1x8x16xf32>
    %93 = vector.shape_cast %92 : vector<1x8x16xf32> to vector<8x16xf32>
    %cst_83 = arith.constant dense<0.000000e+00> : vector<256x16xf32>
    %94 = tpu.matmul %91, %93, %cst_83 {dimension_numbers = #tpu.dot_dimension_numbers<[1], [0], [0], [1], [0, 0, 1, 1], [], []>} : vector<256x8xf32>, vector<8x16xf32>, vector<256x16xf32> -> vector<256x16xf32>
    %95 = arith.addf %89, %94 : vector<256x16xf32>
    %c0_84 = arith.constant 0 : index
    %c0_85 = arith.constant 0 : index
    %96 = vector.load %arg8[%c0_84, %c0_85] : memref<1x16xf32, #tpu.memory_space<vmem>>, vector<1x16xf32>
    %97 = vector.broadcast %96 : vector<1x16xf32> to vector<256x16xf32>
    %98 = arith.addf %95, %97 : vector<256x16xf32>
    %c0_86 = arith.constant 0 : index
    %c0_87 = arith.constant 0 : index
    %c0_88 = arith.constant 0 : index
    %99 = vector.load %arg2[%c0_86, %c0_87, %c0_88] : memref<1x1x16xf32, #tpu.memory_space<vmem>>, vector<1x1x16xf32>
    %100 = vector.shape_cast %99 : vector<1x1x16xf32> to vector<1x16xf32>
    %101 = vector.broadcast %100 : vector<1x16xf32> to vector<256x16xf32>
    %102 = arith.addf %98, %101 : vector<256x16xf32>
    %c0_89 = arith.constant 0 : index
    %c0_90 = arith.constant 0 : index
    %103 = vector.load %arg4[%c0_89, %c0_90] : memref<16x16xf32, #tpu.memory_space<vmem>>, vector<16x16xf32>
    %c0_91 = arith.constant 0 : index
    %c0_92 = arith.constant 0 : index
    %104 = vector.load %arg9[%c0_91, %c0_92] : memref<1x16xf32, #tpu.memory_space<vmem>>, vector<1x16xf32>
    %c0_93 = arith.constant 0 : index
    %c0_94 = arith.constant 0 : index
    %105 = vector.load %arg10[%c0_93, %c0_94] : memref<1x16xf32, #tpu.memory_space<vmem>>, vector<1x16xf32>
    %cst_95 = arith.constant dense<0.000000e+00> : vector<16xf32>
    %106 = vector.multi_reduction <add>, %102, %cst_95 [0] : vector<256x16xf32> to vector<16xf32>
    %107 = vector.shape_cast %106 : vector<16xf32> to vector<1x16xf32>
    %108 = arith.mulf %102, %102 : vector<256x16xf32>
    %cst_96 = arith.constant dense<0.000000e+00> : vector<16xf32>
    %109 = vector.multi_reduction <add>, %108, %cst_96 [0] : vector<256x16xf32> to vector<16xf32>
    %110 = vector.shape_cast %109 : vector<16xf32> to vector<1x16xf32>
    %cst_97 = arith.constant dense<0.000000e+00> : vector<1x16xf32>
    %111 = tpu.matmul %107, %103, %cst_97 {dimension_numbers = #tpu.dot_dimension_numbers<[1], [0], [0], [1], [0, 0, 1, 1], [], []>} : vector<1x16xf32>, vector<16x16xf32>, vector<1x16xf32> -> vector<1x16xf32>
    %cst_98 = arith.constant dense<0.000000e+00> : vector<1x16xf32>
    %112 = tpu.matmul %110, %103, %cst_98 {dimension_numbers = #tpu.dot_dimension_numbers<[1], [0], [0], [1], [0, 0, 1, 1], [], []>} : vector<1x16xf32>, vector<16x16xf32>, vector<1x16xf32> -> vector<1x16xf32>
    %113 = arith.mulf %111, %111 : vector<1x16xf32>
    %114 = arith.subf %112, %113 : vector<1x16xf32>
    %cst_99 = arith.constant 0.000000e+00 : f32
    %115 = vector.broadcast %cst_99 : f32 to vector<1x16xf32>
    %116 = arith.maximumf %114, %115 : vector<1x16xf32>
    %cst_100 = arith.constant 9.99999974E-6 : f32
    %117 = vector.broadcast %cst_100 : f32 to vector<1x16xf32>
    %118 = arith.addf %116, %117 : vector<1x16xf32>
    %119 = math.rsqrt %118 : vector<1x16xf32>
    %120 = vector.broadcast %111 : vector<1x16xf32> to vector<256x16xf32>
    %121 = arith.subf %102, %120 : vector<256x16xf32>
    %122 = vector.broadcast %119 : vector<1x16xf32> to vector<256x16xf32>
    %123 = arith.mulf %121, %122 : vector<256x16xf32>
    %124 = vector.broadcast %104 : vector<1x16xf32> to vector<256x16xf32>
    %125 = arith.mulf %123, %124 : vector<256x16xf32>
    %126 = vector.broadcast %105 : vector<1x16xf32> to vector<256x16xf32>
    %127 = arith.addf %125, %126 : vector<256x16xf32>
    %128 = arith.negf %127 : vector<256x16xf32>
    %129 = math.exp %128 : vector<256x16xf32>
    %cst_101 = arith.constant 1.000000e+00 : f32
    %130 = vector.broadcast %cst_101 : f32 to vector<256x16xf32>
    %131 = arith.addf %130, %129 : vector<256x16xf32>
    %132 = arith.divf %130, %131 : vector<256x16xf32>
    %133 = arith.mulf %127, %132 : vector<256x16xf32>
    %cst_102 = arith.constant 0.000000e+00 : f32
    %134 = vector.broadcast %cst_102 : f32 to vector<1x32x16xf32>
    %c0_103 = arith.constant 0 : index
    %c0_104 = arith.constant 0 : index
    %c0_105 = arith.constant 0 : index
    %135 = vector.load %arg17[%c0_103, %c0_104, %c0_105] : memref<18x32x16xf32, #tpu.memory_space<vmem>>, vector<1x32x16xf32>
    tpu.vector_store %arg17[%c0_103, %c0_104, %c0_105], %134 {strides = array<i32>} : memref<18x32x16xf32, #tpu.memory_space<vmem>>, vector<1x32x16xf32>,
    %c17_106 = arith.constant 17 : index
    %c0_107 = arith.constant 0 : index
    %c0_108 = arith.constant 0 : index
    %136 = vector.load %arg17[%c17_106, %c0_107, %c0_108] : memref<18x32x16xf32, #tpu.memory_space<vmem>>, vector<1x32x16xf32>
    tpu.vector_store %arg17[%c17_106, %c0_107, %c0_108], %134 {strides = array<i32>} : memref<18x32x16xf32, #tpu.memory_space<vmem>>, vector<1x32x16xf32>,
    %cst_109 = arith.constant 0.000000e+00 : f32
    %137 = vector.broadcast %cst_109 : f32 to vector<16x8x16xf32>
    %c1_110 = arith.constant 1 : index
    %c0_111 = arith.constant 0 : index
    %c0_112 = arith.constant 0 : index
    %138 = vector.load %arg17[%c1_110, %c0_111, %c0_112] : memref<18x32x16xf32, #tpu.memory_space<vmem>>, vector<16x8x16xf32>
    tpu.vector_store %arg17[%c1_110, %c0_111, %c0_112], %137 {strides = array<i32>} : memref<18x32x16xf32, #tpu.memory_space<vmem>>, vector<16x8x16xf32>,
    %c1_113 = arith.constant 1 : index
    %c24_114 = arith.constant 24 : index
    %c0_115 = arith.constant 0 : index
    %139 = vector.load %arg17[%c1_113, %c24_114, %c0_115] : memref<18x32x16xf32, #tpu.memory_space<vmem>>, vector<16x8x16xf32>
    tpu.vector_store %arg17[%c1_113, %c24_114, %c0_115], %137 {strides = array<i32>} : memref<18x32x16xf32, #tpu.memory_space<vmem>>, vector<16x8x16xf32>,
    %140 = vector.shape_cast %133 : vector<256x16xf32> to vector<16x16x16xf32>
    %c1_116 = arith.constant 1 : index
    %c8_117 = arith.constant 8 : index
    %c0_118 = arith.constant 0 : index
    %141 = vector.load %arg17[%c1_116, %c8_117, %c0_118] : memref<18x32x16xf32, #tpu.memory_space<vmem>>, vector<16x16x16xf32>
    tpu.vector_store %arg17[%c1_116, %c8_117, %c0_118], %140 {strides = array<i32>} : memref<18x32x16xf32, #tpu.memory_space<vmem>>, vector<16x16x16xf32>,
    %cst_119 = arith.constant 0.000000e+00 : f32
    %142 = vector.broadcast %cst_119 : f32 to vector<256x16xf32>
    %c0_120 = arith.constant 0 : index
    %c7_121 = arith.constant 7 : index
    %c0_122 = arith.constant 0 : index
    %143 = vector.load %arg17[%c0_120, %c7_121, %c0_122] : memref<18x32x16xf32, #tpu.memory_space<vmem>>, vector<16x16x16xf32>
    %144 = vector.shape_cast %143 : vector<16x16x16xf32> to vector<256x16xf32>
    %c0_123 = arith.constant 0 : index
    %c0_124 = arith.constant 0 : index
    %c0_125 = arith.constant 0 : index
    %145 = vector.load %arg11[%c0_123, %c0_124, %c0_125] : memref<9x16x16xf32, #tpu.memory_space<vmem>>, vector<1x16x16xf32>
    %146 = vector.shape_cast %145 : vector<1x16x16xf32> to vector<16x16xf32>
    %cst_126 = arith.constant dense<0.000000e+00> : vector<256x16xf32>
    %147 = tpu.matmul %144, %146, %cst_126 {dimension_numbers = #tpu.dot_dimension_numbers<[1], [0], [0], [1], [0, 0, 1, 1], [], []>} : vector<256x16xf32>, vector<16x16xf32>, vector<256x16xf32> -> vector<256x16xf32>
    %148 = arith.addf %142, %147 : vector<256x16xf32>
    %c0_127 = arith.constant 0 : index
    %c8_128 = arith.constant 8 : index
    %c0_129 = arith.constant 0 : index
    %149 = vector.load %arg17[%c0_127, %c8_128, %c0_129] : memref<18x32x16xf32, #tpu.memory_space<vmem>>, vector<16x16x16xf32>
    %150 = vector.shape_cast %149 : vector<16x16x16xf32> to vector<256x16xf32>
    %c1_130 = arith.constant 1 : index
    %c0_131 = arith.constant 0 : index
    %c0_132 = arith.constant 0 : index
    %151 = vector.load %arg11[%c1_130, %c0_131, %c0_132] : memref<9x16x16xf32, #tpu.memory_space<vmem>>, vector<1x16x16xf32>
    %152 = vector.shape_cast %151 : vector<1x16x16xf32> to vector<16x16xf32>
    %cst_133 = arith.constant dense<0.000000e+00> : vector<256x16xf32>
    %153 = tpu.matmul %150, %152, %cst_133 {dimension_numbers = #tpu.dot_dimension_numbers<[1], [0], [0], [1], [0, 0, 1, 1], [], []>} : vector<256x16xf32>, vector<16x16xf32>, vector<256x16xf32> -> vector<256x16xf32>
    %154 = arith.addf %148, %153 : vector<256x16xf32>
    %c0_134 = arith.constant 0 : index
    %c9_135 = arith.constant 9 : index
    %c0_136 = arith.constant 0 : index
    %155 = vector.load %arg17[%c0_134, %c9_135, %c0_136] : memref<18x32x16xf32, #tpu.memory_space<vmem>>, vector<16x16x16xf32>
    %156 = vector.shape_cast %155 : vector<16x16x16xf32> to vector<256x16xf32>
    %c2_137 = arith.constant 2 : index
    %c0_138 = arith.constant 0 : index
    %c0_139 = arith.constant 0 : index
    %157 = vector.load %arg11[%c2_137, %c0_138, %c0_139] : memref<9x16x16xf32, #tpu.memory_space<vmem>>, vector<1x16x16xf32>
    %158 = vector.shape_cast %157 : vector<1x16x16xf32> to vector<16x16xf32>
    %cst_140 = arith.constant dense<0.000000e+00> : vector<256x16xf32>
    %159 = tpu.matmul %156, %158, %cst_140 {dimension_numbers = #tpu.dot_dimension_numbers<[1], [0], [0], [1], [0, 0, 1, 1], [], []>} : vector<256x16xf32>, vector<16x16xf32>, vector<256x16xf32> -> vector<256x16xf32>
    %160 = arith.addf %154, %159 : vector<256x16xf32>
    %c1_141 = arith.constant 1 : index
    %c7_142 = arith.constant 7 : index
    %c0_143 = arith.constant 0 : index
    %161 = vector.load %arg17[%c1_141, %c7_142, %c0_143] : memref<18x32x16xf32, #tpu.memory_space<vmem>>, vector<16x16x16xf32>
    %162 = vector.shape_cast %161 : vector<16x16x16xf32> to vector<256x16xf32>
    %c3_144 = arith.constant 3 : index
    %c0_145 = arith.constant 0 : index
    %c0_146 = arith.constant 0 : index
    %163 = vector.load %arg11[%c3_144, %c0_145, %c0_146] : memref<9x16x16xf32, #tpu.memory_space<vmem>>, vector<1x16x16xf32>
    %164 = vector.shape_cast %163 : vector<1x16x16xf32> to vector<16x16xf32>
    %cst_147 = arith.constant dense<0.000000e+00> : vector<256x16xf32>
    %165 = tpu.matmul %162, %164, %cst_147 {dimension_numbers = #tpu.dot_dimension_numbers<[1], [0], [0], [1], [0, 0, 1, 1], [], []>} : vector<256x16xf32>, vector<16x16xf32>, vector<256x16xf32> -> vector<256x16xf32>
    %166 = arith.addf %160, %165 : vector<256x16xf32>
    %c1_148 = arith.constant 1 : index
    %c8_149 = arith.constant 8 : index
    %c0_150 = arith.constant 0 : index
    %167 = vector.load %arg17[%c1_148, %c8_149, %c0_150] : memref<18x32x16xf32, #tpu.memory_space<vmem>>, vector<16x16x16xf32>
    %168 = vector.shape_cast %167 : vector<16x16x16xf32> to vector<256x16xf32>
    %c4_151 = arith.constant 4 : index
    %c0_152 = arith.constant 0 : index
    %c0_153 = arith.constant 0 : index
    %169 = vector.load %arg11[%c4_151, %c0_152, %c0_153] : memref<9x16x16xf32, #tpu.memory_space<vmem>>, vector<1x16x16xf32>
    %170 = vector.shape_cast %169 : vector<1x16x16xf32> to vector<16x16xf32>
    %cst_154 = arith.constant dense<0.000000e+00> : vector<256x16xf32>
    %171 = tpu.matmul %168, %170, %cst_154 {dimension_numbers = #tpu.dot_dimension_numbers<[1], [0], [0], [1], [0, 0, 1, 1], [], []>} : vector<256x16xf32>, vector<16x16xf32>, vector<256x16xf32> -> vector<256x16xf32>
    %172 = arith.addf %166, %171 : vector<256x16xf32>
    %c1_155 = arith.constant 1 : index
    %c9_156 = arith.constant 9 : index
    %c0_157 = arith.constant 0 : index
    %173 = vector.load %arg17[%c1_155, %c9_156, %c0_157] : memref<18x32x16xf32, #tpu.memory_space<vmem>>, vector<16x16x16xf32>
    %174 = vector.shape_cast %173 : vector<16x16x16xf32> to vector<256x16xf32>
    %c5_158 = arith.constant 5 : index
    %c0_159 = arith.constant 0 : index
    %c0_160 = arith.constant 0 : index
    %175 = vector.load %arg11[%c5_158, %c0_159, %c0_160] : memref<9x16x16xf32, #tpu.memory_space<vmem>>, vector<1x16x16xf32>
    %176 = vector.shape_cast %175 : vector<1x16x16xf32> to vector<16x16xf32>
    %cst_161 = arith.constant dense<0.000000e+00> : vector<256x16xf32>
    %177 = tpu.matmul %174, %176, %cst_161 {dimension_numbers = #tpu.dot_dimension_numbers<[1], [0], [0], [1], [0, 0, 1, 1], [], []>} : vector<256x16xf32>, vector<16x16xf32>, vector<256x16xf32> -> vector<256x16xf32>
    %178 = arith.addf %172, %177 : vector<256x16xf32>
    %c2_162 = arith.constant 2 : index
    %c7_163 = arith.constant 7 : index
    %c0_164 = arith.constant 0 : index
    %179 = vector.load %arg17[%c2_162, %c7_163, %c0_164] : memref<18x32x16xf32, #tpu.memory_space<vmem>>, vector<16x16x16xf32>
    %180 = vector.shape_cast %179 : vector<16x16x16xf32> to vector<256x16xf32>
    %c6_165 = arith.constant 6 : index
    %c0_166 = arith.constant 0 : index
    %c0_167 = arith.constant 0 : index
    %181 = vector.load %arg11[%c6_165, %c0_166, %c0_167] : memref<9x16x16xf32, #tpu.memory_space<vmem>>, vector<1x16x16xf32>
    %182 = vector.shape_cast %181 : vector<1x16x16xf32> to vector<16x16xf32>
    %cst_168 = arith.constant dense<0.000000e+00> : vector<256x16xf32>
    %183 = tpu.matmul %180, %182, %cst_168 {dimension_numbers = #tpu.dot_dimension_numbers<[1], [0], [0], [1], [0, 0, 1, 1], [], []>} : vector<256x16xf32>, vector<16x16xf32>, vector<256x16xf32> -> vector<256x16xf32>
    %184 = arith.addf %178, %183 : vector<256x16xf32>
    %c2_169 = arith.constant 2 : index
    %c8_170 = arith.constant 8 : index
    %c0_171 = arith.constant 0 : index
    %185 = vector.load %arg17[%c2_169, %c8_170, %c0_171] : memref<18x32x16xf32, #tpu.memory_space<vmem>>, vector<16x16x16xf32>
    %186 = vector.shape_cast %185 : vector<16x16x16xf32> to vector<256x16xf32>
    %c7_172 = arith.constant 7 : index
    %c0_173 = arith.constant 0 : index
    %c0_174 = arith.constant 0 : index
    %187 = vector.load %arg11[%c7_172, %c0_173, %c0_174] : memref<9x16x16xf32, #tpu.memory_space<vmem>>, vector<1x16x16xf32>
    %188 = vector.shape_cast %187 : vector<1x16x16xf32> to vector<16x16xf32>
    %cst_175 = arith.constant dense<0.000000e+00> : vector<256x16xf32>
    %189 = tpu.matmul %186, %188, %cst_175 {dimension_numbers = #tpu.dot_dimension_numbers<[1], [0], [0], [1], [0, 0, 1, 1], [], []>} : vector<256x16xf32>, vector<16x16xf32>, vector<256x16xf32> -> vector<256x16xf32>
    %190 = arith.addf %184, %189 : vector<256x16xf32>
    %c2_176 = arith.constant 2 : index
    %c9_177 = arith.constant 9 : index
    %c0_178 = arith.constant 0 : index
    %191 = vector.load %arg17[%c2_176, %c9_177, %c0_178] : memref<18x32x16xf32, #tpu.memory_space<vmem>>, vector<16x16x16xf32>
    %192 = vector.shape_cast %191 : vector<16x16x16xf32> to vector<256x16xf32>
    %c8_179 = arith.constant 8 : index
    %c0_180 = arith.constant 0 : index
    %c0_181 = arith.constant 0 : index
    %193 = vector.load %arg11[%c8_179, %c0_180, %c0_181] : memref<9x16x16xf32, #tpu.memory_space<vmem>>, vector<1x16x16xf32>
    %194 = vector.shape_cast %193 : vector<1x16x16xf32> to vector<16x16xf32>
    %cst_182 = arith.constant dense<0.000000e+00> : vector<256x16xf32>
    %195 = tpu.matmul %192, %194, %cst_182 {dimension_numbers = #tpu.dot_dimension_numbers<[1], [0], [0], [1], [0, 0, 1, 1], [], []>} : vector<256x16xf32>, vector<16x16xf32>, vector<256x16xf32> -> vector<256x16xf32>
    %196 = arith.addf %190, %195 : vector<256x16xf32>
    %c0_183 = arith.constant 0 : index
    %c0_184 = arith.constant 0 : index
    %197 = vector.load %arg12[%c0_183, %c0_184] : memref<1x16xf32, #tpu.memory_space<vmem>>, vector<1x16xf32>
    %198 = vector.broadcast %197 : vector<1x16xf32> to vector<256x16xf32>
    %199 = arith.addf %196, %198 : vector<256x16xf32>
    %c0_185 = arith.constant 0 : index
    %c0_186 = arith.constant 0 : index
    %200 = vector.load %arg13[%c0_185, %c0_186] : memref<8x16xf32, #tpu.memory_space<vmem>>, vector<8x16xf32>
    %cst_187 = arith.constant dense<0.000000e+00> : vector<256x16xf32>
    %201 = tpu.matmul %1, %200, %cst_187 {dimension_numbers = #tpu.dot_dimension_numbers<[1], [0], [0], [1], [0, 0, 1, 1], [], []>} : vector<256x8xf32>, vector<8x16xf32>, vector<256x16xf32> -> vector<256x16xf32>
    %c0_188 = arith.constant 0 : index
    %c0_189 = arith.constant 0 : index
    %202 = vector.load %arg14[%c0_188, %c0_189] : memref<1x16xf32, #tpu.memory_space<vmem>>, vector<1x16xf32>
    %203 = vector.broadcast %202 : vector<1x16xf32> to vector<256x16xf32>
    %204 = arith.addf %201, %203 : vector<256x16xf32>
    %205 = arith.addf %199, %204 : vector<256x16xf32>
    %206 = vector.shape_cast %205 : vector<256x16xf32> to vector<1x256x16xf32>
    %c0_190 = arith.constant 0 : index
    %c0_191 = arith.constant 0 : index
    %c0_192 = arith.constant 0 : index
    %207 = vector.load %arg15[%c0_190, %c0_191, %c0_192] : memref<1x256x16xf32, #tpu.memory_space<vmem>>, vector<1x256x16xf32>
    tpu.vector_store %arg15[%c0_190, %c0_191, %c0_192], %206 {strides = array<i32>} : memref<1x256x16xf32, #tpu.memory_space<vmem>>, vector<1x256x16xf32>,
    return
  }
  func.func @transform_0(%arg0: i32) -> (i32, i32, i32) {
    %c0_i32 = arith.constant 0 : i32
    %c0_i32_0 = arith.constant 0 : i32
    %c0_i32_1 = arith.constant 0 : i32
    return %arg0, %c0_i32, %c0_i32_0 : i32, i32, i32
  }
  func.func @transform_1(%arg0: i32) -> (i32, i32, i32) {
    %c0_i32 = arith.constant 0 : i32
    %c0_i32_0 = arith.constant 0 : i32
    %c0_i32_1 = arith.constant 0 : i32
    return %arg0, %c0_i32, %c0_i32_0 : i32, i32, i32
  }
  func.func @transform_2(%arg0: i32) -> (i32, i32) {
    %c0_i32 = arith.constant 0 : i32
    %c0_i32_0 = arith.constant 0 : i32
    %c0_i32_1 = arith.constant 0 : i32
    return %c0_i32, %c0_i32_0 : i32, i32
  }
  func.func @transform_3(%arg0: i32) -> (i32, i32) {
    %c0_i32 = arith.constant 0 : i32
    %c0_i32_0 = arith.constant 0 : i32
    %c0_i32_1 = arith.constant 0 : i32
    return %c0_i32, %c0_i32_0 : i32, i32
  }
  func.func @transform_4(%arg0: i32) -> (i32, i32) {
    %c0_i32 = arith.constant 0 : i32
    %c0_i32_0 = arith.constant 0 : i32
    %c0_i32_1 = arith.constant 0 : i32
    return %c0_i32, %c0_i32_0 : i32, i32
  }
  func.func @transform_5(%arg0: i32) -> (i32, i32) {
    %c0_i32 = arith.constant 0 : i32
    %c0_i32_0 = arith.constant 0 : i32
    %c0_i32_1 = arith.constant 0 : i32
    return %c0_i32, %c0_i32_0 : i32, i32
  }
  func.func @transform_6(%arg0: i32) -> (i32, i32, i32) {
    %c0_i32 = arith.constant 0 : i32
    %c0_i32_0 = arith.constant 0 : i32
    %c0_i32_1 = arith.constant 0 : i32
    %c0_i32_2 = arith.constant 0 : i32
    return %c0_i32, %c0_i32_0, %c0_i32_1 : i32, i32, i32
  }
  func.func @transform_7(%arg0: i32) -> (i32, i32) {
    %c0_i32 = arith.constant 0 : i32
    %c0_i32_0 = arith.constant 0 : i32
    %c0_i32_1 = arith.constant 0 : i32
    return %c0_i32, %c0_i32_0 : i32, i32
  }
  func.func @transform_8(%arg0: i32) -> (i32, i32) {
    %c0_i32 = arith.constant 0 : i32
    %c0_i32_0 = arith.constant 0 : i32
    %c0_i32_1 = arith.constant 0 : i32
    return %c0_i32, %c0_i32_0 : i32, i32
  }
  func.func @transform_9(%arg0: i32) -> (i32, i32) {
    %c0_i32 = arith.constant 0 : i32
    %c0_i32_0 = arith.constant 0 : i32
    %c0_i32_1 = arith.constant 0 : i32
    return %c0_i32, %c0_i32_0 : i32, i32
  }
  func.func @transform_10(%arg0: i32) -> (i32, i32, i32) {
    %c0_i32 = arith.constant 0 : i32
    %c0_i32_0 = arith.constant 0 : i32
    %c0_i32_1 = arith.constant 0 : i32
    %c0_i32_2 = arith.constant 0 : i32
    return %c0_i32, %c0_i32_0, %c0_i32_1 : i32, i32, i32
  }
  func.func @transform_11(%arg0: i32) -> (i32, i32) {
    %c0_i32 = arith.constant 0 : i32
    %c0_i32_0 = arith.constant 0 : i32
    %c0_i32_1 = arith.constant 0 : i32
    return %c0_i32, %c0_i32_0 : i32, i32
  }
  func.func @transform_12(%arg0: i32) -> (i32, i32) {
    %c0_i32 = arith.constant 0 : i32
    %c0_i32_0 = arith.constant 0 : i32
    %c0_i32_1 = arith.constant 0 : i32
    return %c0_i32, %c0_i32_0 : i32, i32
  }
  func.func @transform_13(%arg0: i32) -> (i32, i32) {
    %c0_i32 = arith.constant 0 : i32
    %c0_i32_0 = arith.constant 0 : i32
    %c0_i32_1 = arith.constant 0 : i32
    return %c0_i32, %c0_i32_0 : i32, i32
  }
  func.func @transform_14(%arg0: i32) -> (i32, i32, i32) {
    %c0_i32 = arith.constant 0 : i32
    %c0_i32_0 = arith.constant 0 : i32
    %c0_i32_1 = arith.constant 0 : i32
    return %arg0, %c0_i32, %c0_i32_0 : i32, i32, i32
  }
}

</mosaic_0001>

<llo_original>
// kernel: tpu_custom_call.1
$region0: #{tpu_custom_call.1}
  #allocation0 [shape = 'u32[]', space=smem, size = 0x4, offset = 0x4, fixed_abs, tag = 'smem constant byte address 0x4 - core index']
  #allocation1 [shape = 'u32[144,128]{1,0:T(1,128)}', space=vmem, size = 0x12000, scoped, tag = 'internal scratch']
  #allocation2 [shape = 'f32[18,32,8]{2,1,0:T(8,128)}', space=vmem, size = 0x48000, scoped, tag = 'scratch operand']
  #allocation3 [shape = 'f32[18,32,16]{2,1,0:T(8,128)}', space=vmem, size = 0x48000, scoped, tag = 'scratch operand']
  %s0 = inlined_call_operand.vmem [shape: f32[2,256,8], index: 0, kind: input, shape index: {}]
  %s1 = inlined_call_operand.vmem [shape: f32[2,1,16], index: 1, kind: input, shape index: {}]
  %s2 = inlined_call_operand.vmem [shape: f32[8,8], index: 2, kind: input, shape index: {}]
  %s3 = inlined_call_operand.vmem [shape: f32[16,16], index: 3, kind: input, shape index: {}]
  %s4 = inlined_call_operand.vmem [shape: f32[1,8], index: 4, kind: input, shape index: {}]
  %s5 = inlined_call_operand.vmem [shape: f32[1,8], index: 5, kind: input, shape index: {}]
  %s6 = inlined_call_operand.vmem [shape: f32[9,8,16], index: 6, kind: input, shape index: {}]
  %s7 = inlined_call_operand.vmem [shape: f32[1,16], index: 7, kind: input, shape index: {}]
  %s8 = inlined_call_operand.vmem [shape: f32[1,16], index: 8, kind: input, shape index: {}]
  %s9 = inlined_call_operand.vmem [shape: f32[1,16], index: 9, kind: input, shape index: {}]
  %s10 = inlined_call_operand.vmem [shape: f32[9,16,16], index: 10, kind: input, shape index: {}]
  %s11 = inlined_call_operand.vmem [shape: f32[1,16], index: 11, kind: input, shape index: {}]
  %s12 = inlined_call_operand.vmem [shape: f32[8,16], index: 12, kind: input, shape index: {}]
  %s13 = inlined_call_operand.vmem [shape: f32[1,16], index: 13, kind: input, shape index: {}]
  %s14 = inlined_call_operand.vmem [shape: f32[2,256,16], index: 14, kind: output, shape index: {}]
  %s15 = sld [smem:[#allocation0]]
  $region89: #{tpu_custom_call.1} parent=0
    _
  %s17 = ssub.s32 1, %s15
  %s18 = scalar_select 0, %s17, %s15
  loop: start=0, step=1, limit=4
  $region2: #{tpu_custom_call.1} parent=0 // loop_pre_header
    _
  $region3: #{tpu_custom_call.1} parent=0 // loop_header
    %s20 = sphi 0, %s24
    %p21 = scmp.ge.s32.totalorder %s20, 4
    %s30 = sphi 0, %s32
    %s33 = sphi 0, %s30
    %s34 = sphi 0, %s33
    %s50 = sphi 0, %s34
    %s56 = sphi 0, %s58
    %s59 = sphi 0, %s56
    %s60 = sphi 0, %s59
    %s76 = sphi 0, %s60
    %s80 = sphi 0, %s80
    %s82 = sphi 0, %s80
    %s83 = sphi 0, %s82
    %s97 = sphi 0, %s83
    %s101 = sphi 0, %s101
    %s103 = sphi 0, %s101
    %s104 = sphi 0, %s103
    %s118 = sphi 0, %s104
    %s122 = sphi 0, %s122
    %s124 = sphi 0, %s122
    %s125 = sphi 0, %s124
    %s139 = sphi 0, %s125
    %s143 = sphi 0, %s143
    %s145 = sphi 0, %s143
    %s146 = sphi 0, %s145
    %s160 = sphi 0, %s146
    %s164 = sphi 0, %s164
    %s166 = sphi 0, %s164
    %s167 = sphi 0, %s166
    %s181 = sphi 0, %s167
    %s185 = sphi 0, %s185
    %s187 = sphi 0, %s185
    %s188 = sphi 0, %s187
    %s202 = sphi 0, %s188
    %s206 = sphi 0, %s206
    %s208 = sphi 0, %s206
    %s209 = sphi 0, %s208
    %s223 = sphi 0, %s209
    %s227 = sphi 0, %s227
    %s229 = sphi 0, %s227
    %s230 = sphi 0, %s229
    %s244 = sphi 0, %s230
    %s248 = sphi 0, %s248
    %s250 = sphi 0, %s248
    %s251 = sphi 0, %s250
    %s265 = sphi 0, %s251
    %s269 = sphi 0, %s269
    %s271 = sphi 0, %s269
    %s272 = sphi 0, %s271
    %s286 = sphi 0, %s272
    %s290 = sphi 0, %s290
    %s292 = sphi 0, %s290
    %s293 = sphi 0, %s292
    %s307 = sphi 0, %s293
    %s311 = sphi 0, %s311
    %s313 = sphi 0, %s311
    %s314 = sphi 0, %s313
    %s328 = sphi 0, %s314
    %s334 = sphi 0, %s336
    %s337 = sphi 0, %s334
    %s338 = sphi 0, %s337
    %s354 = sphi 0, %s338
  $region4: #{tpu_custom_call.1} parent=0 // loop_header_branch
    %23 = sbr.rel (%p21) target = $region8
  $region5: #{tpu_custom_call.1} parent=0 // loop_body
    %s25 = ssub.s32 %s20, 1
    %s26 = ssub.s32 %s20, 2
    %s27 = sadd.s32 %s20, 1
    %s28 = ssub.s32 %s20, %s27
    %p29 = scmp.eq.s32.totalorder %s28, 0
    %s31 = sadd.s32 %s30, 1
    %s32 = scalar_select %p29, %s30, %s31
    %p35 = pneg %p29
    %p36 = scmp.eq.s32.totalorder %s20, 1
    %p37 = por %p35, %p36
    %p38 = scmp.ne.s32.totalorder %s30, %s33
    %p39 = scmp.eq.s32.totalorder %s20, 0
    %p40 = por %p38, %p39
    %p41 = scmp.ne.s32.totalorder %s30, %s33
    %p42 = scmp.eq.s32.totalorder %s25, 1
    %p43 = por %p41, %p42
    %p44 = scmp.ne.s32.totalorder %s33, %s34
    %p45 = scmp.eq.s32.totalorder %s25, 0
    %p46 = por %p44, %p45
    %p47 = scmp.ne.s32.totalorder %s33, %s34
    %p48 = scmp.eq.s32.totalorder %s26, 1
    %p49 = por %p47, %p48
    %p51 = scmp.ne.s32.totalorder %s34, %s50
    %p52 = scmp.eq.s32.totalorder %s26, 0
    %p53 = por %p51, %p52
    %s54 = ssub.s32 %s20, %s27
    %p55 = scmp.eq.s32.totalorder %s54, 0
    %s57 = sadd.s32 %s56, 1
    %s58 = scalar_select %p55, %s56, %s57
    %p61 = pneg %p55
    %p62 = scmp.eq.s32.totalorder %s20, 1
    %p63 = por %p61, %p62
    %p64 = scmp.ne.s32.totalorder %s56, %s59
    %p65 = scmp.eq.s32.totalorder %s20, 0
    %p66 = por %p64, %p65
    %p67 = scmp.ne.s32.totalorder %s56, %s59
    %p68 = scmp.eq.s32.totalorder %s25, 1
    %p69 = por %p67, %p68
    %p70 = scmp.ne.s32.totalorder %s59, %s60
    %p71 = scmp.eq.s32.totalorder %s25, 0
    %p72 = por %p70, %p71
    %p73 = scmp.ne.s32.totalorder %s59, %s60
    %p74 = scmp.eq.s32.totalorder %s26, 1
    %p75 = por %p73, %p74
    %p77 = scmp.ne.s32.totalorder %s60, %s76
    %p78 = scmp.eq.s32.totalorder %s26, 0
    %p79 = por %p77, %p78
    %s81 = sadd.s32 %s80, 1
    %p84 = scmp.eq.s32.totalorder %s20, 1
    %p85 = scmp.ne.s32.totalorder %s80, %s82
    %p86 = scmp.eq.s32.totalorder %s20, 0
    %p87 = por %p85, %p86
    %p88 = scmp.ne.s32.totalorder %s80, %s82
    %p89 = scmp.eq.s32.totalorder %s25, 1
    %p90 = por %p88, %p89
    %p91 = scmp.ne.s32.totalorder %s82, %s83
    %p92 = scmp.eq.s32.totalorder %s25, 0
    %p93 = por %p91, %p92
    %p94 = scmp.ne.s32.totalorder %s82, %s83
    %p95 = scmp.eq.s32.totalorder %s26, 1
    %p96 = por %p94, %p95
    %p98 = scmp.ne.s32.totalorder %s83, %s97
    %p99 = scmp.eq.s32.totalorder %s26, 0
    %p100 = por %p98, %p99
    %s102 = sadd.s32 %s101, 1
    %p105 = scmp.eq.s32.totalorder %s20, 1
    %p106 = scmp.ne.s32.totalorder %s101, %s103
    %p107 = scmp.eq.s32.totalorder %s20, 0
    %p108 = por %p106, %p107
    %p109 = scmp.ne.s32.totalorder %s101, %s103
    %p110 = scmp.eq.s32.totalorder %s25, 1
    %p111 = por %p109, %p110
    %p112 = scmp.ne.s32.totalorder %s103, %s104
    %p113 = scmp.eq.s32.totalorder %s25, 0
    %p114 = por %p112, %p113
    %p115 = scmp.ne.s32.totalorder %s103, %s104
    %p116 = scmp.eq.s32.totalorder %s26, 1
    %p117 = por %p115, %p116
    %p119 = scmp.ne.s32.totalorder %s104, %s118
    %p120 = scmp.eq.s32.totalorder %s26, 0
    %p121 = por %p119, %p120
    %s123 = sadd.s32 %s122, 1
    %p126 = scmp.eq.s32.totalorder %s20, 1
    %p127 = scmp.ne.s32.totalorder %s122, %s124
    %p128 = scmp.eq.s32.totalorder %s20, 0
    %p129 = por %p127, %p128
    %p130 = scmp.ne.s32.totalorder %s122, %s124
    %p131 = scmp.eq.s32.totalorder %s25, 1
    %p132 = por %p130, %p131
    %p133 = scmp.ne.s32.totalorder %s124, %s125
    %p134 = scmp.eq.s32.totalorder %s25, 0
    %p135 = por %p133, %p134
    %p136 = scmp.ne.s32.totalorder %s124, %s125
    %p137 = scmp.eq.s32.totalorder %s26, 1
    %p138 = por %p136, %p137
    %p140 = scmp.ne.s32.totalorder %s125, %s139
    %p141 = scmp.eq.s32.totalorder %s26, 0
    %p142 = por %p140, %p141
    %s144 = sadd.s32 %s143, 1
    %p147 = scmp.eq.s32.totalorder %s20, 1
    %p148 = scmp.ne.s32.totalorder %s143, %s145
    %p149 = scmp.eq.s32.totalorder %s20, 0
    %p150 = por %p148, %p149
    %p151 = scmp.ne.s32.totalorder %s143, %s145
    %p152 = scmp.eq.s32.totalorder %s25, 1
    %p153 = por %p151, %p152
    %p154 = scmp.ne.s32.totalorder %s145, %s146
    %p155 = scmp.eq.s32.totalorder %s25, 0
    %p156 = por %p154, %p155
    %p157 = scmp.ne.s32.totalorder %s145, %s146
    %p158 = scmp.eq.s32.totalorder %s26, 1
    %p159 = por %p157, %p158
    %p161 = scmp.ne.s32.totalorder %s146, %s160
    %p162 = scmp.eq.s32.totalorder %s26, 0
    %p163 = por %p161, %p162
    %s165 = sadd.s32 %s164, 1
    %p168 = scmp.eq.s32.totalorder %s20, 1
    %p169 = scmp.ne.s32.totalorder %s164, %s166
    %p170 = scmp.eq.s32.totalorder %s20, 0
    %p171 = por %p169, %p170
    %p172 = scmp.ne.s32.totalorder %s164, %s166
    %p173 = scmp.eq.s32.totalorder %s25, 1
    %p174 = por %p172, %p173
    %p175 = scmp.ne.s32.totalorder %s166, %s167
    %p176 = scmp.eq.s32.totalorder %s25, 0
    %p177 = por %p175, %p176
    %p178 = scmp.ne.s32.totalorder %s166, %s167
    %p179 = scmp.eq.s32.totalorder %s26, 1
    %p180 = por %p178, %p179
    %p182 = scmp.ne.s32.totalorder %s167, %s181
    %p183 = scmp.eq.s32.totalorder %s26, 0
    %p184 = por %p182, %p183
    %s186 = sadd.s32 %s185, 1
    %p189 = scmp.eq.s32.totalorder %s20, 1
    %p190 = scmp.ne.s32.totalorder %s185, %s187
    %p191 = scmp.eq.s32.totalorder %s20, 0
    %p192 = por %p190, %p191
    %p193 = scmp.ne.s32.totalorder %s185, %s187
    %p194 = scmp.eq.s32.totalorder %s25, 1
    %p195 = por %p193, %p194
    %p196 = scmp.ne.s32.totalorder %s187, %s188
    %p197 = scmp.eq.s32.totalorder %s25, 0
    %p198 = por %p196, %p197
    %p199 = scmp.ne.s32.totalorder %s187, %s188
    %p200 = scmp.eq.s32.totalorder %s26, 1
    %p201 = por %p199, %p200
    %p203 = scmp.ne.s32.totalorder %s188, %s202
    %p204 = scmp.eq.s32.totalorder %s26, 0
    %p205 = por %p203, %p204
    %s207 = sadd.s32 %s206, 1
    %p210 = scmp.eq.s32.totalorder %s20, 1
    %p211 = scmp.ne.s32.totalorder %s206, %s208
    %p212 = scmp.eq.s32.totalorder %s20, 0
    %p213 = por %p211, %p212
    %p214 = scmp.ne.s32.totalorder %s206, %s208
    %p215 = scmp.eq.s32.totalorder %s25, 1
    %p216 = por %p214, %p215
    %p217 = scmp.ne.s32.totalorder %s208, %s209
    %p218 = scmp.eq.s32.totalorder %s25, 0
    %p219 = por %p217, %p218
    %p220 = scmp.ne.s32.totalorder %s208, %s209
    %p221 = scmp.eq.s32.totalorder %s26, 1
    %p222 = por %p220, %p221
    %p224 = scmp.ne.s32.totalorder %s209, %s223
    %p225 = scmp.eq.s32.totalorder %s26, 0
    %p226 = por %p224, %p225
    %s228 = sadd.s32 %s227, 1
    %p231 = scmp.eq.s32.totalorder %s20, 1
    %p232 = scmp.ne.s32.totalorder %s227, %s229
    %p233 = scmp.eq.s32.totalorder %s20, 0
    %p234 = por %p232, %p233
    %p235 = scmp.ne.s32.totalorder %s227, %s229
    %p236 = scmp.eq.s32.totalorder %s25, 1
    %p237 = por %p235, %p236
    %p238 = scmp.ne.s32.totalorder %s229, %s230
    %p239 = scmp.eq.s32.totalorder %s25, 0
    %p240 = por %p238, %p239
    %p241 = scmp.ne.s32.totalorder %s229, %s230
    %p242 = scmp.eq.s32.totalorder %s26, 1
    %p243 = por %p241, %p242
    %p245 = scmp.ne.s32.totalorder %s230, %s244
    %p246 = scmp.eq.s32.totalorder %s26, 0
    %p247 = por %p245, %p246
    %s249 = sadd.s32 %s248, 1
    %p252 = scmp.eq.s32.totalorder %s20, 1
    %p253 = scmp.ne.s32.totalorder %s248, %s250
    %p254 = scmp.eq.s32.totalorder %s20, 0
    %p255 = por %p253, %p254
    %p256 = scmp.ne.s32.totalorder %s248, %s250
    %p257 = scmp.eq.s32.totalorder %s25, 1
    %p258 = por %p256, %p257
    %p259 = scmp.ne.s32.totalorder %s250, %s251
    %p260 = scmp.eq.s32.totalorder %s25, 0
    %p261 = por %p259, %p260
    %p262 = scmp.ne.s32.totalorder %s250, %s251
    %p263 = scmp.eq.s32.totalorder %s26, 1
    %p264 = por %p262, %p263
    %p266 = scmp.ne.s32.totalorder %s251, %s265
    %p267 = scmp.eq.s32.totalorder %s26, 0
    %p268 = por %p266, %p267
    %s270 = sadd.s32 %s269, 1
    %p273 = scmp.eq.s32.totalorder %s20, 1
    %p274 = scmp.ne.s32.totalorder %s269, %s271
    %p275 = scmp.eq.s32.totalorder %s20, 0
    %p276 = por %p274, %p275
    %p277 = scmp.ne.s32.totalorder %s269, %s271
    %p278 = scmp.eq.s32.totalorder %s25, 1
    %p279 = por %p277, %p278
    %p280 = scmp.ne.s32.totalorder %s271, %s272
    %p281 = scmp.eq.s32.totalorder %s25, 0
    %p282 = por %p280, %p281
    %p283 = scmp.ne.s32.totalorder %s271, %s272
    %p284 = scmp.eq.s32.totalorder %s26, 1
    %p285 = por %p283, %p284
    %p287 = scmp.ne.s32.totalorder %s272, %s286
    %p288 = scmp.eq.s32.totalorder %s26, 0
    %p289 = por %p287, %p288
    %s291 = sadd.s32 %s290, 1
    %p294 = scmp.eq.s32.totalorder %s20, 1
    %p295 = scmp.ne.s32.totalorder %s290, %s292
    %p296 = scmp.eq.s32.totalorder %s20, 0
    %p297 = por %p295, %p296
    %p298 = scmp.ne.s32.totalorder %s290, %s292
    %p299 = scmp.eq.s32.totalorder %s25, 1
    %p300 = por %p298, %p299
    %p301 = scmp.ne.s32.totalorder %s292, %s293
    %p302 = scmp.eq.s32.totalorder %s25, 0
    %p303 = por %p301, %p302
    %p304 = scmp.ne.s32.totalorder %s292, %s293
    %p305 = scmp.eq.s32.totalorder %s26, 1
    %p306 = por %p304, %p305
    %p308 = scmp.ne.s32.totalorder %s293, %s307
    %p309 = scmp.eq.s32.totalorder %s26, 0
    %p310 = por %p308, %p309
    %s312 = sadd.s32 %s311, 1
    %p315 = scmp.eq.s32.totalorder %s20, 1
    %p316 = scmp.ne.s32.totalorder %s311, %s313
    %p317 = scmp.eq.s32.totalorder %s20, 0
    %p318 = por %p316, %p317
    %p319 = scmp.ne.s32.totalorder %s311, %s313
    %p320 = scmp.eq.s32.totalorder %s25, 1
    %p321 = por %p319, %p320
    %p322 = scmp.ne.s32.totalorder %s313, %s314
    %p323 = scmp.eq.s32.totalorder %s25, 0
    %p324 = por %p322, %p323
    %p325 = scmp.ne.s32.totalorder %s313, %s314
    %p326 = scmp.eq.s32.totalorder %s26, 1
    %p327 = por %p325, %p326
    %p329 = scmp.ne.s32.totalorder %s314, %s328
    %p330 = scmp.eq.s32.totalorder %s26, 0
    %p331 = por %p329, %p330
    %s332 = ssub.s32 %s20, %s27
    %p333 = scmp.eq.s32.totalorder %s332, 0
    %s335 = sadd.s32 %s334, 1
    %s336 = scalar_select %p333, %s334, %s335
    %p339 = pneg %p333
    %p340 = scmp.eq.s32.totalorder %s20, 1
    %p341 = por %p339, %p340
    %p342 = scmp.ne.s32.totalorder %s334, %s337
    %p343 = scmp.eq.s32.totalorder %s20, 0
    %p344 = por %p342, %p343
    %p345 = scmp.ne.s32.totalorder %s334, %s337
    %p346 = scmp.eq.s32.totalorder %s25, 1
    %p347 = por %p345, %p346
    %p348 = scmp.ne.s32.totalorder %s337, %s338
    %p349 = scmp.eq.s32.totalorder %s25, 0
    %p350 = por %p348, %p349
    %p351 = scmp.ne.s32.totalorder %s337, %s338
    %p352 = scmp.eq.s32.totalorder %s26, 1
    %p353 = por %p351, %p352
    %p355 = scmp.ne.s32.totalorder %s338, %s354
    %p356 = scmp.eq.s32.totalorder %s26, 0
    %p357 = por %p355, %p356
    %p358 = scmp.le.s32.totalorder 1, %s20
    %p359 = scmp.lt.s32.totalorder %s20, 3
    %p360 = pnand %p358, %p359
    %p361 = pneg %p360
    // Predicated region
    $region9: #{tpu_custom_call.1} parent=5 // pred_check
      _
    $region10: #{tpu_custom_call.1} parent=5 // pred_check_branch
      %363 = sbr.rel (%p360) target = $region12
    $region11: #{tpu_custom_call.1} parent=5 // pred_region
      %s364 = ssub.s32 %s20, 1
      // Predicated region
      $region13: #{tpu_custom_call.1} parent=11 // pred_check
        %p365 = pneg %p93
      $region14: #{tpu_custom_call.1} parent=11 // pred_check_branch
        %367 = sbr.rel (%p365) target = $region16
      $region15: #{tpu_custom_call.1} parent=11 // pred_region
        _
      $region16: #{tpu_custom_call.1} parent=11 // pred_fallthru
        _
      // Predicated region
      $region17: #{tpu_custom_call.1} parent=11 // pred_check
        %p368 = pneg %p114
      $region18: #{tpu_custom_call.1} parent=11 // pred_check_branch
        %370 = sbr.rel (%p368) target = $region20
      $region19: #{tpu_custom_call.1} parent=11 // pred_region
        _
      $region20: #{tpu_custom_call.1} parent=11 // pred_fallthru
        _
      // Predicated region
      $region21: #{tpu_custom_call.1} parent=11 // pred_check
        %p371 = pneg %p135
      $region22: #{tpu_custom_call.1} parent=11 // pred_check_branch
        %373 = sbr.rel (%p371) target = $region24
      $region23: #{tpu_custom_call.1} parent=11 // pred_region
        _
      $region24: #{tpu_custom_call.1} parent=11 // pred_fallthru
        _
      // Predicated region
      $region25: #{tpu_custom_call.1} parent=11 // pred_check
        %p374 = pneg %p156
      $region26: #{tpu_custom_call.1} parent=11 // pred_check_branch
        %376 = sbr.rel (%p374) target = $region28
      $region27: #{tpu_custom_call.1} parent=11 // pred_region
        _
      $region28: #{tpu_custom_call.1} parent=11 // pred_fallthru
        _
      // Predicated region
      $region29: #{tpu_custom_call.1} parent=11 // pred_check
        %p377 = pneg %p177
      $region30: #{tpu_custom_call.1} parent=11 // pred_check_branch
        %379 = sbr.rel (%p377) target = $region32
      $region31: #{tpu_custom_call.1} parent=11 // pred_region
        _
      $region32: #{tpu_custom_call.1} parent=11 // pred_fallthru
        _
      // Predicated region
      $region33: #{tpu_custom_call.1} parent=11 // pred_check
        %p380 = pneg %p198
      $region34: #{tpu_custom_call.1} parent=11 // pred_check_branch
        %382 = sbr.rel (%p380) target = $region36
      $region35: #{tpu_custom_call.1} parent=11 // pred_region
        _
      $region36: #{tpu_custom_call.1} parent=11 // pred_fallthru
        _
      // Predicated region
      $region37: #{tpu_custom_call.1} parent=11 // pred_check
        %p383 = pneg %p219
      $region38: #{tpu_custom_call.1} parent=11 // pred_check_branch
        %385 = sbr.rel (%p383) target = $region40
      $region39: #{tpu_custom_call.1} parent=11 // pred_region
        _
      $region40: #{tpu_custom_call.1} parent=11 // pred_fallthru
        _
      // Predicated region
      $region41: #{tpu_custom_call.1} parent=11 // pred_check
        %p386 = pneg %p240
      $region42: #{tpu_custom_call.1} parent=11 // pred_check_branch
        %388 = sbr.rel (%p386) target = $region44
      $region43: #{tpu_custom_call.1} parent=11 // pred_region
        _
      $region44: #{tpu_custom_call.1} parent=11 // pred_fallthru
        _
      // Predicated region
      $region45: #{tpu_custom_call.1} parent=11 // pred_check
        %p389 = pneg %p261
      $region46: #{tpu_custom_call.1} parent=11 // pred_check_branch
        %391 = sbr.rel (%p389) target = $region48
      $region47: #{tpu_custom_call.1} parent=11 // pred_region
        _
      $region48: #{tpu_custom_call.1} parent=11 // pred_fallthru
        _
      // Predicated region
      $region49: #{tpu_custom_call.1} parent=11 // pred_check
        %p392 = pneg %p282
      $region50: #{tpu_custom_call.1} parent=11 // pred_check_branch
        %394 = sbr.rel (%p392) target = $region52
      $region51: #{tpu_custom_call.1} parent=11 // pred_region
        _
      $region52: #{tpu_custom_call.1} parent=11 // pred_fallthru
        _
      // Predicated region
      $region53: #{tpu_custom_call.1} parent=11 // pred_check
        %p395 = pneg %p303
      $region54: #{tpu_custom_call.1} parent=11 // pred_check_branch
        %397 = sbr.rel (%p395) target = $region56
      $region55: #{tpu_custom_call.1} parent=11 // pred_region
        _
      $region56: #{tpu_custom_call.1} parent=11 // pred_fallthru
        _
      // Predicated region
      $region57: #{tpu_custom_call.1} parent=11 // pred_check
        %p398 = pneg %p324
      $region58: #{tpu_custom_call.1} parent=11 // pred_check_branch
        %400 = sbr.rel (%p398) target = $region60
      $region59: #{tpu_custom_call.1} parent=11 // pred_region
        _
      $region60: #{tpu_custom_call.1} parent=11 // pred_fallthru
        _
    $region12: #{tpu_custom_call.1} parent=5 // pred_fallthru
      _
    %p401 = scmp.lt.s32.totalorder %s20, 2
    // Predicated region
    $region61: #{tpu_custom_call.1} parent=5 // pred_check
      %p402 = pneg %p401
    $region62: #{tpu_custom_call.1} parent=5 // pred_check_branch
      %404 = sbr.rel (%p402) target = $region64
    $region63: #{tpu_custom_call.1} parent=5 // pred_region
      // Predicated region
      $region65: #{tpu_custom_call.1} parent=63 // pred_check
        %p405 = pneg %p40
      $region66: #{tpu_custom_call.1} parent=63 // pred_check_branch
        %407 = sbr.rel (%p405) target = $region68
      $region67: #{tpu_custom_call.1} parent=63 // pred_region
        %p408 = scmp.lt.s32.totalorder %s20, 1
        %s409 = scalar_select %p408, %s20, 1
        %s410 = smul.addr %s409, 32
        %s411 = smul.addr %s410, 8
        %s412 = scalar_lea.vmem %s0, %s411
      $region68: #{tpu_custom_call.1} parent=63 // pred_fallthru
        _
      // Predicated region
      $region69: #{tpu_custom_call.1} parent=63 // pred_check
        %p413 = pneg %p66
      $region70: #{tpu_custom_call.1} parent=63 // pred_check_branch
        %415 = sbr.rel (%p413) target = $region72
      $region71: #{tpu_custom_call.1} parent=63 // pred_region
        %p416 = scmp.lt.s32.totalorder %s20, 1
        %s417 = scalar_select %p416, %s20, 1
        %s418 = scalar_lea.vmem %s1, %s417
      $region72: #{tpu_custom_call.1} parent=63 // pred_fallthru
        _
    $region64: #{tpu_custom_call.1} parent=5 // pred_fallthru
      _
    %p419 = scmp.le.s32.totalorder 1, %s20
    %p420 = scmp.lt.s32.totalorder %s20, 3
    %p421 = pnand %p419, %p420
    %p422 = pneg %p421
    // Predicated region
    $region73: #{tpu_custom_call.1} parent=5 // pred_check
      _
    $region74: #{tpu_custom_call.1} parent=5 // pred_check_branch
      %424 = sbr.rel (%p421) target = $region76
    $region75: #{tpu_custom_call.1} parent=5 // pred_region
      %s425 = ssub.s32 %s20, 1
      %p426 = scmp.lt.s32.totalorder %s25, 1
      %s427 = scalar_select %p426, %s25, 1
      %s428 = smul.addr %s427, 32
      %s429 = smul.addr %s428, 8
      %s430 = scalar_lea.vmem %s0, %s429
      %p431 = pneg %p46
      %p432 = pneg %p43
      %p433 = scmp.lt.s32.totalorder %s25, 1
      %s434 = scalar_select %p433, %s25, 1
      %s435 = scalar_lea.vmem %s1, %s434
      %p436 = pneg %p72
      %p437 = pneg %p69
      %p438 = pneg %p93
      %p439 = pneg %p90
      %p440 = pneg %p114
      %p441 = pneg %p111
      %p442 = pneg %p135
      %p443 = pneg %p132
      %p444 = pneg %p156
      %p445 = pneg %p153
      %p446 = pneg %p177
      %p447 = pneg %p174
      %p448 = pneg %p198
      %p449 = pneg %p195
      %p450 = pneg %p219
      %p451 = pneg %p216
      %p452 = pneg %p240
      %p453 = pneg %p237
      %p454 = pneg %p261
      %p455 = pneg %p258
      %p456 = pneg %p282
      %p457 = pneg %p279
      %p458 = pneg %p303
      %p459 = pneg %p300
      %p460 = pneg %p324
      %p461 = pneg %p321
      %p462 = pneg %p350
      %p463 = pneg %p347
      %p464 = scmp.lt.s32.totalorder %s25, 1
      %s465 = scalar_select %p464, %s25, 1
      %s466 = smul.addr %s465, 32
      %s467 = smul.addr %s466, 8
      %s468 = scalar_lea.vmem %s14, %s467
      %p469 = scmp.lt.s32.totalorder %s25, 1
      %s470 = scalar_select %p469, %s25, 1
      %s471 = smul.addr %s470, 32
      %s472 = smul.addr %s471, 8
      %s473 = scalar_lea.vmem %s0, %s472
      %p474 = scmp.lt.s32.totalorder %s25, 1
      %s475 = scalar_select %p474, %s25, 1
      %s476 = scalar_lea.vmem %s1, %s475
      %p477 = scmp.lt.s32.totalorder %s25, 1
      %s478 = scalar_select %p477, %s25, 1
      %s479 = smul.addr %s478, 32
      %s480 = smul.addr %s479, 8
      %s481 = scalar_lea.vmem %s14, %s480
      %v482 = vld [vmem:[%s473] sm:$0xff]
      %v483 = vld [vmem:[%s473 + $0x8] sm:$0xff]
      %v484 = vld [vmem:[%s473 + $0x10] sm:$0xff]
      %v485 = vld [vmem:[%s473 + $0x18] sm:$0xff]
      %v486 = vld [vmem:[%s473 + $0x20] sm:$0xff]
      %v487 = vld [vmem:[%s473 + $0x28] sm:$0xff]
      %v488 = vld [vmem:[%s473 + $0x30] sm:$0xff]
      %v489 = vld [vmem:[%s473 + $0x38] sm:$0xff]
      %v490 = vld [vmem:[%s473 + $0x40] sm:$0xff]
      %v491 = vld [vmem:[%s473 + $0x48] sm:$0xff]
      %v492 = vld [vmem:[%s473 + $0x50] sm:$0xff]
      %v493 = vld [vmem:[%s473 + $0x58] sm:$0xff]
      %v494 = vld [vmem:[%s473 + $0x60] sm:$0xff]
      %v495 = vld [vmem:[%s473 + $0x68] sm:$0xff]
      %v496 = vld [vmem:[%s473 + $0x70] sm:$0xff]
      %v497 = vld [vmem:[%s473 + $0x78] sm:$0xff]
      %v498 = vld [vmem:[%s473 + $0x80] sm:$0xff]
      %v499 = vld [vmem:[%s473 + $0x88] sm:$0xff]
      %v500 = vld [vmem:[%s473 + $0x90] sm:$0xff]
      %v501 = vld [vmem:[%s473 + $0x98] sm:$0xff]
      %v502 = vld [vmem:[%s473 + $0xa0] sm:$0xff]
      %v503 = vld [vmem:[%s473 + $0xa8] sm:$0xff]
      %v504 = vld [vmem:[%s473 + $0xb0] sm:$0xff]
      %v505 = vld [vmem:[%s473 + $0xb8] sm:$0xff]
      %v506 = vld [vmem:[%s473 + $0xc0] sm:$0xff]
      %v507 = vld [vmem:[%s473 + $0xc8] sm:$0xff]
      %v508 = vld [vmem:[%s473 + $0xd0] sm:$0xff]
      %v509 = vld [vmem:[%s473 + $0xd8] sm:$0xff]
      %v510 = vld [vmem:[%s473 + $0xe0] sm:$0xff]
      %v511 = vld [vmem:[%s473 + $0xe8] sm:$0xff]
      %v512 = vld [vmem:[%s473 + $0xf0] sm:$0xff]
      %v513 = vld [vmem:[%s473 + $0xf8] sm:$0xff]
      %v514 = vld [vmem:[%s2] sm:$0xff]
      %v515 = vld [vmem:[%s4] sm:$0x1]
      %v516 = vld [vmem:[%s5] sm:$0x1]
      %vm517 = vcmask 64512
      %v518 = vsel %vm517, %v482, 0.0
      %v519 = vsel %vm517, %v483, 0.0
      %v520 = vadd.f32 %v518, %v519
      %v521 = vsel %vm517, %v484, 0.0
      %v522 = vadd.f32 %v520, %v521
      %v523 = vsel %vm517, %v485, 0.0
      %v524 = vadd.f32 %v522, %v523
      %v525 = vsel %vm517, %v486, 0.0
      %v526 = vadd.f32 %v524, %v525
      %v527 = vsel %vm517, %v487, 0.0
      %v528 = vadd.f32 %v526, %v527
      %v529 = vsel %vm517, %v488, 0.0
      %v530 = vadd.f32 %v528, %v529
      %v531 = vsel %vm517, %v489, 0.0
      %v532 = vadd.f32 %v530, %v531
      %v533 = vsel %vm517, %v490, 0.0
      %v534 = vadd.f32 %v532, %v533
      %v535 = vsel %vm517, %v491, 0.0
      %v536 = vadd.f32 %v534, %v535
      %v537 = vsel %vm517, %v492, 0.0
      %v538 = vadd.f32 %v536, %v537
      %v539 = vsel %vm517, %v493, 0.0
      %v540 = vadd.f32 %v538, %v539
      %v541 = vsel %vm517, %v494, 0.0
      %v542 = vadd.f32 %v540, %v541
      %v543 = vsel %vm517, %v495, 0.0
      %v544 = vadd.f32 %v542, %v543
      %v545 = vsel %vm517, %v496, 0.0
      %v546 = vadd.f32 %v544, %v545
      %v547 = vsel %vm517, %v497, 0.0
      %v548 = vadd.f32 %v546, %v547
      %v549 = vsel %vm517, %v498, 0.0
      %v550 = vadd.f32 %v548, %v549
      %v551 = vsel %vm517, %v499, 0.0
      %v552 = vadd.f32 %v550, %v551
      %v553 = vsel %vm517, %v500, 0.0
      %v554 = vadd.f32 %v552, %v553
      %v555 = vsel %vm517, %v501, 0.0
      %v556 = vadd.f32 %v554, %v555
      %v557 = vsel %vm517, %v502, 0.0
      %v558 = vadd.f32 %v556, %v557
      %v559 = vsel %vm517, %v503, 0.0
      %v560 = vadd.f32 %v558, %v559
      %v561 = vsel %vm517, %v504, 0.0
      %v562 = vadd.f32 %v560, %v561
      %v563 = vsel %vm517, %v505, 0.0
      %v564 = vadd.f32 %v562, %v563
      %v565 = vsel %vm517, %v506, 0.0
      %v566 = vadd.f32 %v564, %v565
      %v567 = vsel %vm517, %v507, 0.0
      %v568 = vadd.f32 %v566, %v567
      %v569 = vsel %vm517, %v508, 0.0
      %v570 = vadd.f32 %v568, %v569
      %v571 = vsel %vm517, %v509, 0.0
      %v572 = vadd.f32 %v570, %v571
      %v573 = vsel %vm517, %v510, 0.0
      %v574 = vadd.f32 %v572, %v573
      %v575 = vsel %vm517, %v511, 0.0
      %v576 = vadd.f32 %v574, %v575
      %v577 = vsel %vm517, %v512, 0.0
      %v578 = vadd.f32 %v576, %v577
      %v579 = vsel %vm517, %v513, 0.0
      %v580 = vadd.f32 %v578, %v579
      %v581 = vrot.slane %v580, 4
      %v582 = vadd.f32 %v580, %v581
      %v583 = vrot.slane %v582, 2
      %v584 = vadd.f32 %v582, %v583
      %v585 = vrot.slane %v584, 1
      %v586 = vadd.f32 %v584, %v585
      %v587 = vmul.f32 %v482, %v482
      %v588 = vmul.f32 %v483, %v483
      %v589 = vmul.f32 %v484, %v484
      %v590 = vmul.f32 %v485, %v485
      %v591 = vmul.f32 %v486, %v486
      %v592 = vmul.f32 %v487, %v487
      %v593 = vmul.f32 %v488, %v488
      %v594 = vmul.f32 %v489, %v489
      %v595 = vmul.f32 %v490, %v490
      %v596 = vmul.f32 %v491, %v491
      %v597 = vmul.f32 %v492, %v492
      %v598 = vmul.f32 %v493, %v493
      %v599 = vmul.f32 %v494, %v494
      %v600 = vmul.f32 %v495, %v495
      %v601 = vmul.f32 %v496, %v496
      %v602 = vmul.f32 %v497, %v497
      %v603 = vmul.f32 %v498, %v498
      %v604 = vmul.f32 %v499, %v499
      %v605 = vmul.f32 %v500, %v500
      %v606 = vmul.f32 %v501, %v501
      %v607 = vmul.f32 %v502, %v502
      %v608 = vmul.f32 %v503, %v503
      %v609 = vmul.f32 %v504, %v504
      %v610 = vmul.f32 %v505, %v505
      %v611 = vmul.f32 %v506, %v506
      %v612 = vmul.f32 %v507, %v507
      %v613 = vmul.f32 %v508, %v508
      %v614 = vmul.f32 %v509, %v509
      %v615 = vmul.f32 %v510, %v510
      %v616 = vmul.f32 %v511, %v511
      %v617 = vmul.f32 %v512, %v512
      %v618 = vmul.f32 %v513, %v513
      %v619 = vsel %vm517, %v587, 0.0
      %v620 = vsel %vm517, %v588, 0.0
      %v621 = vadd.f32 %v619, %v620
      %v622 = vsel %vm517, %v589, 0.0
      %v623 = vadd.f32 %v621, %v622
      %v624 = vsel %vm517, %v590, 0.0
      %v625 = vadd.f32 %v623, %v624
      %v626 = vsel %vm517, %v591, 0.0
      %v627 = vadd.f32 %v625, %v626
      %v628 = vsel %vm517, %v592, 0.0
      %v629 = vadd.f32 %v627, %v628
      %v630 = vsel %vm517, %v593, 0.0
      %v631 = vadd.f32 %v629, %v630
      %v632 = vsel %vm517, %v594, 0.0
      %v633 = vadd.f32 %v631, %v632
      %v634 = vsel %vm517, %v595, 0.0
      %v635 = vadd.f32 %v633, %v634
      %v636 = vsel %vm517, %v596, 0.0
      %v637 = vadd.f32 %v635, %v636
      %v638 = vsel %vm517, %v597, 0.0
      %v639 = vadd.f32 %v637, %v638
      %v640 = vsel %vm517, %v598, 0.0
      %v641 = vadd.f32 %v639, %v640
      %v642 = vsel %vm517, %v599, 0.0
      %v643 = vadd.f32 %v641, %v642
      %v644 = vsel %vm517, %v600, 0.0
      %v645 = vadd.f32 %v643, %v644
      %v646 = vsel %vm517, %v601, 0.0
      %v647 = vadd.f32 %v645, %v646
      %v648 = vsel %vm517, %v602, 0.0
      %v649 = vadd.f32 %v647, %v648
      %v650 = vsel %vm517, %v603, 0.0
      %v651 = vadd.f32 %v649, %v650
      %v652 = vsel %vm517, %v604, 0.0
      %v653 = vadd.f32 %v651, %v652
      %v654 = vsel %vm517, %v605, 0.0
      %v655 = vadd.f32 %v653, %v654
      %v656 = vsel %vm517, %v606, 0.0
      %v657 = vadd.f32 %v655, %v656
      %v658 = vsel %vm517, %v607, 0.0
      %v659 = vadd.f32 %v657, %v658
      %v660 = vsel %vm517, %v608, 0.0
      %v661 = vadd.f32 %v659, %v660
      %v662 = vsel %vm517, %v609, 0.0
      %v663 = vadd.f32 %v661, %v662
      %v664 = vsel %vm517, %v610, 0.0
      %v665 = vadd.f32 %v663, %v664
      %v666 = vsel %vm517, %v611, 0.0
      %v667 = vadd.f32 %v665, %v666
      %v668 = vsel %vm517, %v612, 0.0
      %v669 = vadd.f32 %v667, %v668
      %v670 = vsel %vm517, %v613, 0.0
      %v671 = vadd.f32 %v669, %v670
      %v672 = vsel %vm517, %v614, 0.0
      %v673 = vadd.f32 %v671, %v672
      %v674 = vsel %vm517, %v615, 0.0
      %v675 = vadd.f32 %v673, %v674
      %v676 = vsel %vm517, %v616, 0.0
      %v677 = vadd.f32 %v675, %v676
      %v678 = vsel %vm517, %v617, 0.0
      %v679 = vadd.f32 %v677, %v678
      %v680 = vsel %vm517, %v618, 0.0
      %v681 = vadd.f32 %v679, %v680
      %v682 = vrot.slane %v681, 4
      %v683 = vadd.f32 %v681, %v682
      %v684 = vrot.slane %v683, 2
      %v685 = vadd.f32 %v683, %v684
      %v686 = vrot.slane %v685, 1
      %v687 = vadd.f32 %v685, %v686
      %v689 = vsel %vm517, %v586, 0
      %691 = vmatprep.subr.mxu0 0.0
      %692 = vmatpush1.msra.mxu0 %v514
      %693 = vmatprep.subr.mxu0 0.0
      %694 = vmatpush1.msra.mxu0 0.0
      %695 = vmatprep.subr.mxu0 0.0
      %696 = vmatpush1.msra.mxu0 0.0
      %697 = vmatprep.subr.mxu0 0.0
      %698 = vmatpush1.msra.mxu0 0.0
      %699 = vmatprep.subr.mxu0 0.0
      %700 = vmatpush1.msra.mxu0 0.0
      %701 = vmatprep.subr.mxu0 0.0
      %702 = vmatpush1.msra.mxu0 0.0
      %703 = vmatprep.subr.mxu0 0.0
      %704 = vmatpush1.msra.mxu0 0.0
      %705 = vmatprep.subr.mxu0 0.0
      %706 = vmatpush1.msra.mxu0 0.0
      %707 = vmatprep.subr.mxu0 0.0
      %708 = vmatpush1.msra.mxu0 0.0
      %709 = vmatprep.subr.mxu0 0.0
      %710 = vmatpush1.msra.mxu0 0.0
      %711 = vmatprep.subr.mxu0 0.0
      %712 = vmatpush1.msra.mxu0 0.0
      %713 = vmatprep.subr.mxu0 0.0
      %714 = vmatpush1.msra.mxu0 0.0
      %715 = vmatprep.subr.mxu0 0.0
      %716 = vmatpush1.msra.mxu0 0.0
      %717 = vmatprep.subr.mxu0 0.0
      %718 = vmatpush1.msra.mxu0 0.0
      %719 = vmatprep.subr.mxu0 0.0
      %720 = vmatpush1.msra.mxu0 0.0
      %721 = vmatprep.subr.mxu0 0.0
      %722 = vmatpush1.msra.mxu0 0.0
      %723 = vmatprep.subr.mxu0 0.0
      %724 = vmatpush1.msra.mxu0 0.0
      %725 = vmatprep.subr.mxu0 0.0
      %726 = vmatpush1.msra.mxu0 0.0
      %727 = vmatprep.subr.mxu0 0.0
      %728 = vmatpush1.msra.mxu0 0.0
      %729 = vmatprep.subr.mxu0 0.0
      %730 = vmatpush1.msra.mxu0 0.0
      %731 = vmatprep.subr.mxu0 0.0
      %732 = vmatpush1.msra.mxu0 0.0
      %733 = vmatprep.subr.mxu0 0.0
      %734 = vmatpush1.msra.mxu0 0.0
      %735 = vmatprep.subr.mxu0 0.0
      %736 = vmatpush1.msra.mxu0 0.0
      %737 = vmatprep.subr.mxu0 0.0
      %738 = vmatpush1.msra.mxu0 0.0
      %739 = vmatprep.subr.mxu0 0.0
      %740 = vmatpush1.msra.mxu0 0.0
      %741 = vmatprep.subr.mxu0 0.0
      %742 = vmatpush1.msra.mxu0 0.0
      %743 = vmatprep.subr.mxu0 0.0
      %744 = vmatpush1.msra.mxu0 0.0
      %745 = vmatprep.subr.mxu0 0.0
      %746 = vmatpush1.msra.mxu0 0.0
      %747 = vmatprep.subr.mxu0 0.0
      %748 = vmatpush1.msra.mxu0 0.0
      %749 = vmatprep.subr.mxu0 0.0
      %750 = vmatpush1.msra.mxu0 0.0
      %751 = vmatprep.subr.mxu0 0.0
      %752 = vmatpush1.msra.mxu0 0.0
      %753 = vmatprep.subr.mxu0 0.0
      %754 = vmatpush1.msra.mxu0 0.0
      %755 = vmatprep.mubr.f32.mxu0 0.0
      %756 = vmatmul.mubr.f32.gmra.mrb[0].mxu0 %v689
      %v757 = vpop.f32.mrb[0].mxu0
      %v758 = vadd.f32 0.0, %v757
      %v759 = vpop.f32.mrb[0].mxu0
      %760 = vdwg.mxu0
      %v762 = vsel %vm517, %v687, 0
      %764 = vmatprep.subr.mxu0 0.0
      %765 = vmatpush1.msra.mxu0 %v514
      %766 = vmatprep.subr.mxu0 0.0
      %767 = vmatpush1.msra.mxu0 0.0
      %768 = vmatprep.subr.mxu0 0.0
      %769 = vmatpush1.msra.mxu0 0.0
      %770 = vmatprep.subr.mxu0 0.0
      %771 = vmatpush1.msra.mxu0 0.0
      %772 = vmatprep.subr.mxu0 0.0
      %773 = vmatpush1.msra.mxu0 0.0
      %774 = vmatprep.subr.mxu0 0.0
      %775 = vmatpush1.msra.mxu0 0.0
      %776 = vmatprep.subr.mxu0 0.0
      %777 = vmatpush1.msra.mxu0 0.0
      %778 = vmatprep.subr.mxu0 0.0
      %779 = vmatpush1.msra.mxu0 0.0
      %780 = vmatprep.subr.mxu0 0.0
      %781 = vmatpush1.msra.mxu0 0.0
      %782 = vmatprep.subr.mxu0 0.0
      %783 = vmatpush1.msra.mxu0 0.0
      %784 = vmatprep.subr.mxu0 0.0
      %785 = vmatpush1.msra.mxu0 0.0
      %786 = vmatprep.subr.mxu0 0.0
      %787 = vmatpush1.msra.mxu0 0.0
      %788 = vmatprep.subr.mxu0 0.0
      %789 = vmatpush1.msra.mxu0 0.0
      %790 = vmatprep.subr.mxu0 0.0
      %791 = vmatpush1.msra.mxu0 0.0
      %792 = vmatprep.subr.mxu0 0.0
      %793 = vmatpush1.msra.mxu0 0.0
      %794 = vmatprep.subr.mxu0 0.0
      %795 = vmatpush1.msra.mxu0 0.0
      %796 = vmatprep.subr.mxu0 0.0
      %797 = vmatpush1.msra.mxu0 0.0
      %798 = vmatprep.subr.mxu0 0.0
      %799 = vmatpush1.msra.mxu0 0.0
      %800 = vmatprep.subr.mxu0 0.0
      %801 = vmatpush1.msra.mxu0 0.0
      %802 = vmatprep.subr.mxu0 0.0
      %803 = vmatpush1.msra.mxu0 0.0
      %804 = vmatprep.subr.mxu0 0.0
      %805 = vmatpush1.msra.mxu0 0.0
      %806 = vmatprep.subr.mxu0 0.0
      %807 = vmatpush1.msra.mxu0 0.0
      %808 = vmatprep.subr.mxu0 0.0
      %809 = vmatpush1.msra.mxu0 0.0
      %810 = vmatprep.subr.mxu0 0.0
      %811 = vmatpush1.msra.mxu0 0.0
      %812 = vmatprep.subr.mxu0 0.0
      %813 = vmatpush1.msra.mxu0 0.0
      %814 = vmatprep.subr.mxu0 0.0
      %815 = vmatpush1.msra.mxu0 0.0
      %816 = vmatprep.subr.mxu0 0.0
      %817 = vmatpush1.msra.mxu0 0.0
      %818 = vmatprep.subr.mxu0 0.0
      %819 = vmatpush1.msra.mxu0 0.0
      %820 = vmatprep.subr.mxu0 0.0
      %821 = vmatpush1.msra.mxu0 0.0
      %822 = vmatprep.subr.mxu0 0.0
      %823 = vmatpush1.msra.mxu0 0.0
      %824 = vmatprep.subr.mxu0 0.0
      %825 = vmatpush1.msra.mxu0 0.0
      %826 = vmatprep.subr.mxu0 0.0
      %827 = vmatpush1.msra.mxu0 0.0
      %828 = vmatprep.mubr.f32.mxu0 0.0
      %829 = vmatmul.mubr.f32.gmra.mrb[0].mxu0 %v762
      %v830 = vpop.f32.mrb[0].mxu0
      %v831 = vadd.f32 0.0, %v830
      %v832 = vpop.f32.mrb[0].mxu0
      %833 = vdwg.mxu0
      %v834 = vmul.f32 %v758, %v758
      %v835 = vsub.f32 %v831, %v834
      %v836 = vmax.f32 %v835, 0.0
      %v837 = vadd.f32 %v836, 1e-05
      %v838 = vrsqrt.pop %v837
      %v839 = vlaneseq
      %v840 = vshrl.u32 %v839, 7
      %v841 = vsub.s32 0, %v840
      %v842 = vrot.slane %v758, %v841
      %v843 = vsub.f32 %v482, %v842
      %v844 = vsub.f32 %v483, %v842
      %v845 = vsub.f32 %v484, %v842
      %v846 = vsub.f32 %v485, %v842
      %v847 = vsub.f32 %v486, %v842
      %v848 = vsub.f32 %v487, %v842
      %v849 = vsub.f32 %v488, %v842
      %v850 = vsub.f32 %v489, %v842
      %v851 = vsub.f32 %v490, %v842
      %v852 = vsub.f32 %v491, %v842
      %v853 = vsub.f32 %v492, %v842
      %v854 = vsub.f32 %v493, %v842
      %v855 = vsub.f32 %v494, %v842
      %v856 = vsub.f32 %v495, %v842
      %v857 = vsub.f32 %v496, %v842
      %v858 = vsub.f32 %v497, %v842
      %v859 = vsub.f32 %v498, %v842
      %v860 = vsub.f32 %v499, %v842
      %v861 = vsub.f32 %v500, %v842
      %v862 = vsub.f32 %v501, %v842
      %v863 = vsub.f32 %v502, %v842
      %v864 = vsub.f32 %v503, %v842
      %v865 = vsub.f32 %v504, %v842
      %v866 = vsub.f32 %v505, %v842
      %v867 = vsub.f32 %v506, %v842
      %v868 = vsub.f32 %v507, %v842
      %v869 = vsub.f32 %v508, %v842
      %v870 = vsub.f32 %v509, %v842
      %v871 = vsub.f32 %v510, %v842
      %v872 = vsub.f32 %v511, %v842
      %v873 = vsub.f32 %v512, %v842
      %v874 = vsub.f32 %v513, %v842
      %v875 = vlaneseq
      %v876 = vshrl.u32 %v875, 7
      %v877 = vsub.s32 0, %v876
      %v878 = vrot.slane %v838, %v877
      %v879 = vmul.f32 %v843, %v878
      %v880 = vmul.f32 %v844, %v878
      %v881 = vmul.f32 %v845, %v878
      %v882 = vmul.f32 %v846, %v878
      %v883 = vmul.f32 %v847, %v878
      %v884 = vmul.f32 %v848, %v878
      %v885 = vmul.f32 %v849, %v878
      %v886 = vmul.f32 %v850, %v878
      %v887 = vmul.f32 %v851, %v878
      %v888 = vmul.f32 %v852, %v878
      %v889 = vmul.f32 %v853, %v878
      %v890 = vmul.f32 %v854, %v878
      %v891 = vmul.f32 %v855, %v878
      %v892 = vmul.f32 %v856, %v878
      %v893 = vmul.f32 %v857, %v878
      %v894 = vmul.f32 %v858, %v878
      %v895 = vmul.f32 %v859, %v878
      %v896 = vmul.f32 %v860, %v878
      %v897 = vmul.f32 %v861, %v878
      %v898 = vmul.f32 %v862, %v878
      %v899 = vmul.f32 %v863, %v878
      %v900 = vmul.f32 %v864, %v878
      %v901 = vmul.f32 %v865, %v878
      %v902 = vmul.f32 %v866, %v878
      %v903 = vmul.f32 %v867, %v878
      %v904 = vmul.f32 %v868, %v878
      %v905 = vmul.f32 %v869, %v878
      %v906 = vmul.f32 %v870, %v878
      %v907 = vmul.f32 %v871, %v878
      %v908 = vmul.f32 %v872, %v878
      %v909 = vmul.f32 %v873, %v878
      %v910 = vmul.f32 %v874, %v878
      %v912 = vlaneseq
      %v913 = vshrl.u32 %v912, 7
      %v914 = vsub.s32 0, %v913
      %v915 = vrot.slane %v515, %v914
      %v917 = vmul.f32 %v879, %v915
      %v918 = vmul.f32 %v880, %v915
      %v919 = vmul.f32 %v881, %v915
      %v920 = vmul.f32 %v882, %v915
      %v921 = vmul.f32 %v883, %v915
      %v922 = vmul.f32 %v884, %v915
      %v923 = vmul.f32 %v885, %v915
      %v924 = vmul.f32 %v886, %v915
      %v925 = vmul.f32 %v887, %v915
      %v926 = vmul.f32 %v888, %v915
      %v927 = vmul.f32 %v889, %v915
      %v928 = vmul.f32 %v890, %v915
      %v929 = vmul.f32 %v891, %v915
      %v930 = vmul.f32 %v892, %v915
      %v931 = vmul.f32 %v893, %v915
      %v932 = vmul.f32 %v894, %v915
      %v933 = vmul.f32 %v895, %v915
      %v934 = vmul.f32 %v896, %v915
      %v935 = vmul.f32 %v897, %v915
      %v936 = vmul.f32 %v898, %v915
      %v937 = vmul.f32 %v899, %v915
      %v938 = vmul.f32 %v900, %v915
      %v939 = vmul.f32 %v901, %v915
      %v940 = vmul.f32 %v902, %v915
      %v941 = vmul.f32 %v903, %v915
      %v942 = vmul.f32 %v904, %v915
      %v943 = vmul.f32 %v905, %v915
      %v944 = vmul.f32 %v906, %v915
      %v945 = vmul.f32 %v907, %v915
      %v946 = vmul.f32 %v908, %v915
      %v947 = vmul.f32 %v909, %v915
      %v948 = vmul.f32 %v910, %v915
      %v950 = vlaneseq
      %v951 = vshrl.u32 %v950, 7
      %v952 = vsub.s32 0, %v951
      %v953 = vrot.slane %v516, %v952
      %v955 = vadd.f32 %v917, %v953
      %v956 = vadd.f32 %v918, %v953
      %v957 = vadd.f32 %v919, %v953
      %v958 = vadd.f32 %v920, %v953
      %v959 = vadd.f32 %v921, %v953
      %v960 = vadd.f32 %v922, %v953
      %v961 = vadd.f32 %v923, %v953
      %v962 = vadd.f32 %v924, %v953
      %v963 = vadd.f32 %v925, %v953
      %v964 = vadd.f32 %v926, %v953
      %v965 = vadd.f32 %v927, %v953
      %v966 = vadd.f32 %v928, %v953
      %v967 = vadd.f32 %v929, %v953
      %v968 = vadd.f32 %v930, %v953
      %v969 = vadd.f32 %v931, %v953
      %v970 = vadd.f32 %v932, %v953
      %v971 = vadd.f32 %v933, %v953
      %v972 = vadd.f32 %v934, %v953
      %v973 = vadd.f32 %v935, %v953
      %v974 = vadd.f32 %v936, %v953
      %v975 = vadd.f32 %v937, %v953
      %v976 = vadd.f32 %v938, %v953
      %v977 = vadd.f32 %v939, %v953
      %v978 = vadd.f32 %v940, %v953
      %v979 = vadd.f32 %v941, %v953
      %v980 = vadd.f32 %v942, %v953
      %v981 = vadd.f32 %v943, %v953
      %v982 = vadd.f32 %v944, %v953
      %v983 = vadd.f32 %v945, %v953
      %v984 = vadd.f32 %v946, %v953
      %v985 = vadd.f32 %v947, %v953
      %v986 = vadd.f32 %v948, %v953
      %v987 = vxor.u32 %v955, 2147483648
      %v988 = vxor.u32 %v956, 2147483648
      %v989 = vxor.u32 %v957, 2147483648
      %v990 = vxor.u32 %v958, 2147483648
      %v991 = vxor.u32 %v959, 2147483648
      %v992 = vxor.u32 %v960, 2147483648
      %v993 = vxor.u32 %v961, 2147483648
      %v994 = vxor.u32 %v962, 2147483648
      %v995 = vxor.u32 %v963, 2147483648
      %v996 = vxor.u32 %v964, 2147483648
      %v997 = vxor.u32 %v965, 2147483648
      %v998 = vxor.u32 %v966, 2147483648
      %v999 = vxor.u32 %v967, 2147483648
      %v1000 = vxor.u32 %v968, 2147483648
      %v1001 = vxor.u32 %v969, 2147483648
      %v1002 = vxor.u32 %v970, 2147483648
      %v1003 = vxor.u32 %v971, 2147483648
      %v1004 = vxor.u32 %v972, 2147483648
      %v1005 = vxor.u32 %v973, 2147483648
      %v1006 = vxor.u32 %v974, 2147483648
      %v1007 = vxor.u32 %v975, 2147483648
      %v1008 = vxor.u32 %v976, 2147483648
      %v1009 = vxor.u32 %v977, 2147483648
      %v1010 = vxor.u32 %v978, 2147483648
      %v1011 = vxor.u32 %v979, 2147483648
      %v1012 = vxor.u32 %v980, 2147483648
      %v1013 = vxor.u32 %v981, 2147483648
      %v1014 = vxor.u32 %v982, 2147483648
      %v1015 = vxor.u32 %v983, 2147483648
      %v1016 = vxor.u32 %v984, 2147483648
      %v1017 = vxor.u32 %v985, 2147483648
      %v1018 = vxor.u32 %v986, 2147483648
      %v1019 = vmul.f32 %v987, 1.442695
      %v1020 = vpow.pop %v1019
      %v1021 = vmul.f32 %v988, 1.442695
      %v1022 = vpow.pop %v1021
      %v1023 = vmul.f32 %v989, 1.442695
      %v1024 = vpow.pop %v1023
      %v1025 = vmul.f32 %v990, 1.442695
      %v1026 = vpow.pop %v1025
      %v1027 = vmul.f32 %v991, 1.442695
      %v1028 = vpow.pop %v1027
      %v1029 = vmul.f32 %v992, 1.442695
      %v1030 = vpow.pop %v1029
      %v1031 = vmul.f32 %v993, 1.442695
      %v1032 = vpow.pop %v1031
      %v1033 = vmul.f32 %v994, 1.442695
      %v1034 = vpow.pop %v1033
      %v1035 = vmul.f32 %v995, 1.442695
      %v1036 = vpow.pop %v1035
      %v1037 = vmul.f32 %v996, 1.442695
      %v1038 = vpow.pop %v1037
      %v1039 = vmul.f32 %v997, 1.442695
      %v1040 = vpow.pop %v1039
      %v1041 = vmul.f32 %v998, 1.442695
      %v1042 = vpow.pop %v1041
      %v1043 = vmul.f32 %v999, 1.442695
      %v1044 = vpow.pop %v1043
      %v1045 = vmul.f32 %v1000, 1.442695
      %v1046 = vpow.pop %v1045
      %v1047 = vmul.f32 %v1001, 1.442695
      %v1048 = vpow.pop %v1047
      %v1049 = vmul.f32 %v1002, 1.442695
      %v1050 = vpow.pop %v1049
      %v1051 = vmul.f32 %v1003, 1.442695
      %v1052 = vpow.pop %v1051
      %v1053 = vmul.f32 %v1004, 1.442695
      %v1054 = vpow.pop %v1053
      %v1055 = vmul.f32 %v1005, 1.442695
      %v1056 = vpow.pop %v1055
      %v1057 = vmul.f32 %v1006, 1.442695
      %v1058 = vpow.pop %v1057
      %v1059 = vmul.f32 %v1007, 1.442695
      %v1060 = vpow.pop %v1059
      %v1061 = vmul.f32 %v1008, 1.442695
      %v1062 = vpow.pop %v1061
      %v1063 = vmul.f32 %v1009, 1.442695
      %v1064 = vpow.pop %v1063
      %v1065 = vmul.f32 %v1010, 1.442695
      %v1066 = vpow.pop %v1065
      %v1067 = vmul.f32 %v1011, 1.442695
      %v1068 = vpow.pop %v1067
      %v1069 = vmul.f32 %v1012, 1.442695
      %v1070 = vpow.pop %v1069
      %v1071 = vmul.f32 %v1013, 1.442695
      %v1072 = vpow.pop %v1071
      %v1073 = vmul.f32 %v1014, 1.442695
      %v1074 = vpow.pop %v1073
      %v1075 = vmul.f32 %v1015, 1.442695
      %v1076 = vpow.pop %v1075
      %v1077 = vmul.f32 %v1016, 1.442695
      %v1078 = vpow.pop %v1077
      %v1079 = vmul.f32 %v1017, 1.442695
      %v1080 = vpow.pop %v1079
      %v1081 = vmul.f32 %v1018, 1.442695
      %v1082 = vpow.pop %v1081
      %v1083 = vadd.f32 %v1020, 1.0
      %v1084 = vadd.f32 %v1022, 1.0
      %v1085 = vadd.f32 %v1024, 1.0
      %v1086 = vadd.f32 %v1026, 1.0
      %v1087 = vadd.f32 %v1028, 1.0
      %v1088 = vadd.f32 %v1030, 1.0
      %v1089 = vadd.f32 %v1032, 1.0
      %v1090 = vadd.f32 %v1034, 1.0
      %v1091 = vadd.f32 %v1036, 1.0
      %v1092 = vadd.f32 %v1038, 1.0
      %v1093 = vadd.f32 %v1040, 1.0
      %v1094 = vadd.f32 %v1042, 1.0
      %v1095 = vadd.f32 %v1044, 1.0
      %v1096 = vadd.f32 %v1046, 1.0
      %v1097 = vadd.f32 %v1048, 1.0
      %v1098 = vadd.f32 %v1050, 1.0
      %v1099 = vadd.f32 %v1052, 1.0
      %v1100 = vadd.f32 %v1054, 1.0
      %v1101 = vadd.f32 %v1056, 1.0
      %v1102 = vadd.f32 %v1058, 1.0
      %v1103 = vadd.f32 %v1060, 1.0
      %v1104 = vadd.f32 %v1062, 1.0
      %v1105 = vadd.f32 %v1064, 1.0
      %v1106 = vadd.f32 %v1066, 1.0
      %v1107 = vadd.f32 %v1068, 1.0
      %v1108 = vadd.f32 %v1070, 1.0
      %v1109 = vadd.f32 %v1072, 1.0
      %v1110 = vadd.f32 %v1074, 1.0
      %v1111 = vadd.f32 %v1076, 1.0
      %v1112 = vadd.f32 %v1078, 1.0
      %v1113 = vadd.f32 %v1080, 1.0
      %v1114 = vadd.f32 %v1082, 1.0
      %v1115 = vrcp.pop %v1083
      %v1116 = vmul.f32 1.0, %v1115
      %v1117 = vrcp.pop %v1084
      %v1118 = vmul.f32 1.0, %v1117
      %v1119 = vrcp.pop %v1085
      %v1120 = vmul.f32 1.0, %v1119
      %v1121 = vrcp.pop %v1086
      %v1122 = vmul.f32 1.0, %v1121
      %v1123 = vrcp.pop %v1087
      %v1124 = vmul.f32 1.0, %v1123
      %v1125 = vrcp.pop %v1088
      %v1126 = vmul.f32 1.0, %v1125
      %v1127 = vrcp.pop %v1089
      %v1128 = vmul.f32 1.0, %v1127
      %v1129 = vrcp.pop %v1090
      %v1130 = vmul.f32 1.0, %v1129
      %v1131 = vrcp.pop %v1091
      %v1132 = vmul.f32 1.0, %v1131
      %v1133 = vrcp.pop %v1092
      %v1134 = vmul.f32 1.0, %v1133
      %v1135 = vrcp.pop %v1093
      %v1136 = vmul.f32 1.0, %v1135
      %v1137 = vrcp.pop %v1094
      %v1138 = vmul.f32 1.0, %v1137
      %v1139 = vrcp.pop %v1095
      %v1140 = vmul.f32 1.0, %v1139
      %v1141 = vrcp.pop %v1096
      %v1142 = vmul.f32 1.0, %v1141
      %v1143 = vrcp.pop %v1097
      %v1144 = vmul.f32 1.0, %v1143
      %v1145 = vrcp.pop %v1098
      %v1146 = vmul.f32 1.0, %v1145
      %v1147 = vrcp.pop %v1099
      %v1148 = vmul.f32 1.0, %v1147
      %v1149 = vrcp.pop %v1100
      %v1150 = vmul.f32 1.0, %v1149
      %v1151 = vrcp.pop %v1101
      %v1152 = vmul.f32 1.0, %v1151
      %v1153 = vrcp.pop %v1102
      %v1154 = vmul.f32 1.0, %v1153
      %v1155 = vrcp.pop %v1103
      %v1156 = vmul.f32 1.0, %v1155
      %v1157 = vrcp.pop %v1104
      %v1158 = vmul.f32 1.0, %v1157
      %v1159 = vrcp.pop %v1105
      %v1160 = vmul.f32 1.0, %v1159
      %v1161 = vrcp.pop %v1106
      %v1162 = vmul.f32 1.0, %v1161
      %v1163 = vrcp.pop %v1107
      %v1164 = vmul.f32 1.0, %v1163
      %v1165 = vrcp.pop %v1108
      %v1166 = vmul.f32 1.0, %v1165
      %v1167 = vrcp.pop %v1109
      %v1168 = vmul.f32 1.0, %v1167
      %v1169 = vrcp.pop %v1110
      %v1170 = vmul.f32 1.0, %v1169
      %v1171 = vrcp.pop %v1111
      %v1172 = vmul.f32 1.0, %v1171
      %v1173 = vrcp.pop %v1112
      %v1174 = vmul.f32 1.0, %v1173
      %v1175 = vrcp.pop %v1113
      %v1176 = vmul.f32 1.0, %v1175
      %v1177 = vrcp.pop %v1114
      %v1178 = vmul.f32 1.0, %v1177
      %v1179 = vmul.f32 %v955, %v1116
      %v1180 = vmul.f32 %v956, %v1118
      %v1181 = vmul.f32 %v957, %v1120
      %v1182 = vmul.f32 %v958, %v1122
      %v1183 = vmul.f32 %v959, %v1124
      %v1184 = vmul.f32 %v960, %v1126
      %v1185 = vmul.f32 %v961, %v1128
      %v1186 = vmul.f32 %v962, %v1130
      %v1187 = vmul.f32 %v963, %v1132
      %v1188 = vmul.f32 %v964, %v1134
      %v1189 = vmul.f32 %v965, %v1136
      %v1190 = vmul.f32 %v966, %v1138
      %v1191 = vmul.f32 %v967, %v1140
      %v1192 = vmul.f32 %v968, %v1142
      %v1193 = vmul.f32 %v969, %v1144
      %v1194 = vmul.f32 %v970, %v1146
      %v1195 = vmul.f32 %v971, %v1148
      %v1196 = vmul.f32 %v972, %v1150
      %v1197 = vmul.f32 %v973, %v1152
      %v1198 = vmul.f32 %v974, %v1154
      %v1199 = vmul.f32 %v975, %v1156
      %v1200 = vmul.f32 %v976, %v1158
      %v1201 = vmul.f32 %v977, %v1160
      %v1202 = vmul.f32 %v978, %v1162
      %v1203 = vmul.f32 %v979, %v1164
      %v1204 = vmul.f32 %v980, %v1166
      %v1205 = vmul.f32 %v981, %v1168
      %v1206 = vmul.f32 %v982, %v1170
      %v1207 = vmul.f32 %v983, %v1172
      %v1208 = vmul.f32 %v984, %v1174
      %v1209 = vmul.f32 %v985, %v1176
      %v1210 = vmul.f32 %v986, %v1178
      %1211 = vst.msk [vmem:[#allocation2] sm:$0xff] %vm517, 0.0
      %1212 = vst.msk [vmem:[#allocation2 + $0x8] sm:$0xff] %vm517, 0.0
      %1213 = vst.msk [vmem:[#allocation2 + $0x10] sm:$0xff] %vm517, 0.0
      %1214 = vst.msk [vmem:[#allocation2 + $0x18] sm:$0xff] %vm517, 0.0
      %s1215 = scalar_lea.vmem [#allocation2], 544
      %1216 = vst.msk [vmem:[%s1215] sm:$0xff] %vm517, 0.0
      %1217 = vst.msk [vmem:[%s1215 + $0x8] sm:$0xff] %vm517, 0.0
      %1218 = vst.msk [vmem:[%s1215 + $0x10] sm:$0xff] %vm517, 0.0
      %1219 = vst.msk [vmem:[%s1215 + $0x18] sm:$0xff] %vm517, 0.0
      %s1220 = scalar_lea.vmem [#allocation2], 32
      %1221 = vst.msk [vmem:[%s1220] sm:$0xff] %vm517, 0.0
      %1222 = vst.msk [vmem:[%s1220 + $0x20] sm:$0xff] %vm517, 0.0
      %1223 = vst.msk [vmem:[%s1220 + $0x40] sm:$0xff] %vm517, 0.0
      %1224 = vst.msk [vmem:[%s1220 + $0x60] sm:$0xff] %vm517, 0.0
      %1225 = vst.msk [vmem:[%s1220 + $0x80] sm:$0xff] %vm517, 0.0
      %1226 = vst.msk [vmem:[%s1220 + $0xa0] sm:$0xff] %vm517, 0.0
      %1227 = vst.msk [vmem:[%s1220 + $0xc0] sm:$0xff] %vm517, 0.0
      %1228 = vst.msk [vmem:[%s1220 + $0xe0] sm:$0xff] %vm517, 0.0
      %1229 = vst.msk [vmem:[%s1220 + $0x100] sm:$0xff] %vm517, 0.0
      %1230 = vst.msk [vmem:[%s1220 + $0x120] sm:$0xff] %vm517, 0.0
      %1231 = vst.msk [vmem:[%s1220 + $0x140] sm:$0xff] %vm517, 0.0
      %1232 = vst.msk [vmem:[%s1220 + $0x160] sm:$0xff] %vm517, 0.0
      %1233 = vst.msk [vmem:[%s1220 + $0x180] sm:$0xff] %vm517, 0.0
      %1234 = vst.msk [vmem:[%s1220 + $0x1a0] sm:$0xff] %vm517, 0.0
      %1235 = vst.msk [vmem:[%s1220 + $0x1c0] sm:$0xff] %vm517, 0.0
      %1236 = vst.msk [vmem:[%s1220 + $0x1e0] sm:$0xff] %vm517, 0.0
      %1237 = vst.msk [vmem:[%s1220 + $0x18] sm:$0xff] %vm517, 0.0
      %1238 = vst.msk [vmem:[%s1220 + $0x38] sm:$0xff] %vm517, 0.0
      %1239 = vst.msk [vmem:[%s1220 + $0x58] sm:$0xff] %vm517, 0.0
      %1240 = vst.msk [vmem:[%s1220 + $0x78] sm:$0xff] %vm517, 0.0
      %1241 = vst.msk [vmem:[%s1220 + $0x98] sm:$0xff] %vm517, 0.0
      %1242 = vst.msk [vmem:[%s1220 + $0xb8] sm:$0xff] %vm517, 0.0
      %1243 = vst.msk [vmem:[%s1220 + $0xd8] sm:$0xff] %vm517, 0.0
      %1244 = vst.msk [vmem:[%s1220 + $0xf8] sm:$0xff] %vm517, 0.0
      %1245 = vst.msk [vmem:[%s1220 + $0x118] sm:$0xff] %vm517, 0.0
      %1246 = vst.msk [vmem:[%s1220 + $0x138] sm:$0xff] %vm517, 0.0
      %1247 = vst.msk [vmem:[%s1220 + $0x158] sm:$0xff] %vm517, 0.0
      %1248 = vst.msk [vmem:[%s1220 + $0x178] sm:$0xff] %vm517, 0.0
      %1249 = vst.msk [vmem:[%s1220 + $0x198] sm:$0xff] %vm517, 0.0
      %1250 = vst.msk [vmem:[%s1220 + $0x1b8] sm:$0xff] %vm517, 0.0
      %1251 = vst.msk [vmem:[%s1220 + $0x1d8] sm:$0xff] %vm517, 0.0
      %1252 = vst.msk [vmem:[%s1220 + $0x1f8] sm:$0xff] %vm517, 0.0
      %1253 = vst.msk [vmem:[%s1220 + $0x8] sm:$0xff] %vm517, %v1179
      %1254 = vst.msk [vmem:[%s1220 + $0x10] sm:$0xff] %vm517, %v1180
      %1255 = vst.msk [vmem:[%s1220 + $0x28] sm:$0xff] %vm517, %v1181
      %1256 = vst.msk [vmem:[%s1220 + $0x30] sm:$0xff] %vm517, %v1182
      %1257 = vst.msk [vmem:[%s1220 + $0x48] sm:$0xff] %vm517, %v1183
      %1258 = vst.msk [vmem:[%s1220 + $0x50] sm:$0xff] %vm517, %v1184
      %1259 = vst.msk [vmem:[%s1220 + $0x68] sm:$0xff] %vm517, %v1185
      %1260 = vst.msk [vmem:[%s1220 + $0x70] sm:$0xff] %vm517, %v1186
      %1261 = vst.msk [vmem:[%s1220 + $0x88] sm:$0xff] %vm517, %v1187
      %1262 = vst.msk [vmem:[%s1220 + $0x90] sm:$0xff] %vm517, %v1188
      %1263 = vst.msk [vmem:[%s1220 + $0xa8] sm:$0xff] %vm517, %v1189
      %1264 = vst.msk [vmem:[%s1220 + $0xb0] sm:$0xff] %vm517, %v1190
      %1265 = vst.msk [vmem:[%s1220 + $0xc8] sm:$0xff] %vm517, %v1191
      %1266 = vst.msk [vmem:[%s1220 + $0xd0] sm:$0xff] %vm517, %v1192
      %1267 = vst.msk [vmem:[%s1220 + $0xe8] sm:$0xff] %vm517, %v1193
      %1268 = vst.msk [vmem:[%s1220 + $0xf0] sm:$0xff] %vm517, %v1194
      %1269 = vst.msk [vmem:[%s1220 + $0x108] sm:$0xff] %vm517, %v1195
      %1270 = vst.msk [vmem:[%s1220 + $0x110] sm:$0xff] %vm517, %v1196
      %1271 = vst.msk [vmem:[%s1220 + $0x128] sm:$0xff] %vm517, %v1197
      %1272 = vst.msk [vmem:[%s1220 + $0x130] sm:$0xff] %vm517, %v1198
      %1273 = vst.msk [vmem:[%s1220 + $0x148] sm:$0xff] %vm517, %v1199
      %1274 = vst.msk [vmem:[%s1220 + $0x150] sm:$0xff] %vm517, %v1200
      %1275 = vst.msk [vmem:[%s1220 + $0x168] sm:$0xff] %vm517, %v1201
      %1276 = vst.msk [vmem:[%s1220 + $0x170] sm:$0xff] %vm517, %v1202
      %1277 = vst.msk [vmem:[%s1220 + $0x188] sm:$0xff] %vm517, %v1203
      %1278 = vst.msk [vmem:[%s1220 + $0x190] sm:$0xff] %vm517, %v1204
      %1279 = vst.msk [vmem:[%s1220 + $0x1a8] sm:$0xff] %vm517, %v1205
      %1280 = vst.msk [vmem:[%s1220 + $0x1b0] sm:$0xff] %vm517, %v1206
      %1281 = vst.msk [vmem:[%s1220 + $0x1c8] sm:$0xff] %vm517, %v1207
      %1282 = vst.msk [vmem:[%s1220 + $0x1d0] sm:$0xff] %vm517, %v1208
      %1283 = vst.msk [vmem:[%s1220 + $0x1e8] sm:$0xff] %vm517, %v1209
      %1284 = vst.msk [vmem:[%s1220 + $0x1f0] sm:$0xff] %vm517, %v1210
      %v1285 = vld [vmem:[#allocation2 + $0x7] sm:$0xff]
      %v1286 = vld [vmem:[#allocation2 + $0xf] sm:$0xff]
      %v1287 = vld [vmem:[#allocation2 + $0x27] sm:$0xff]
      %v1288 = vld [vmem:[#allocation2 + $0x2f] sm:$0xff]
      %v1289 = vld [vmem:[#allocation2 + $0x47] sm:$0xff]
      %v1290 = vld [vmem:[#allocation2 + $0x4f] sm:$0xff]
      %v1291 = vld [vmem:[#allocation2 + $0x67] sm:$0xff]
      %v1292 = vld [vmem:[#allocation2 + $0x6f] sm:$0xff]
      %v1293 = vld [vmem:[#allocation2 + $0x87] sm:$0xff]
      %v1294 = vld [vmem:[#allocation2 + $0x8f] sm:$0xff]
      %v1295 = vld [vmem:[#allocation2 + $0xa7] sm:$0xff]
      %v1296 = vld [vmem:[#allocation2 + $0xaf] sm:$0xff]
      %v1297 = vld [vmem:[#allocation2 + $0xc7] sm:$0xff]
      %v1298 = vld [vmem:[#allocation2 + $0xcf] sm:$0xff]
      %v1299 = vld [vmem:[#allocation2 + $0xe7] sm:$0xff]
      %v1300 = vld [vmem:[#allocation2 + $0xef] sm:$0xff]
      %v1301 = vld [vmem:[#allocation2 + $0x107] sm:$0xff]
      %v1302 = vld [vmem:[#allocation2 + $0x10f] sm:$0xff]
      %v1303 = vld [vmem:[#allocation2 + $0x127] sm:$0xff]
      %v1304 = vld [vmem:[#allocation2 + $0x12f] sm:$0xff]
      %v1305 = vld [vmem:[#allocation2 + $0x147] sm:$0xff]
      %v1306 = vld [vmem:[#allocation2 + $0x14f] sm:$0xff]
      %v1307 = vld [vmem:[#allocation2 + $0x167] sm:$0xff]
      %v1308 = vld [vmem:[#allocation2 + $0x16f] sm:$0xff]
      %v1309 = vld [vmem:[#allocation2 + $0x187] sm:$0xff]
      %v1310 = vld [vmem:[#allocation2 + $0x18f] sm:$0xff]
      %v1311 = vld [vmem:[#allocation2 + $0x1a7] sm:$0xff]
      %v1312 = vld [vmem:[#allocation2 + $0x1af] sm:$0xff]
      %v1313 = vld [vmem:[#allocation2 + $0x1c7] sm:$0xff]
      %v1314 = vld [vmem:[#allocation2 + $0x1cf] sm:$0xff]
      %v1315 = vld [vmem:[#allocation2 + $0x1e7] sm:$0xff]
      %v1316 = vld [vmem:[#allocation2 + $0x1ef] sm:$0xff]
      %v1317 = vld [vmem:[%s6] sm:$0xff]
      %v1318 = vld [vmem:[#allocation2 + $0x8] sm:$0xff]
      %v1319 = vld [vmem:[#allocation2 + $0x10] sm:$0xff]
      %v1320 = vld [vmem:[#allocation2 + $0x28] sm:$0xff]
      %v1321 = vld [vmem:[#allocation2 + $0x30] sm:$0xff]
      %v1322 = vld [vmem:[#allocation2 + $0x48] sm:$0xff]
      %v1323 = vld [vmem:[#allocation2 + $0x50] sm:$0xff]
      %v1324 = vld [vmem:[#allocation2 + $0x68] sm:$0xff]
      %v1325 = vld [vmem:[#allocation2 + $0x70] sm:$0xff]
      %v1326 = vld [vmem:[#allocation2 + $0x88] sm:$0xff]
      %v1327 = vld [vmem:[#allocation2 + $0x90] sm:$0xff]
      %v1328 = vld [vmem:[#allocation2 + $0xa8] sm:$0xff]
      %v1329 = vld [vmem:[#allocation2 + $0xb0] sm:$0xff]
      %v1330 = vld [vmem:[#allocation2 + $0xc8] sm:$0xff]
      %v1331 = vld [vmem:[#allocation2 + $0xd0] sm:$0xff]
      %v1332 = vld [vmem:[#allocation2 + $0xe8] sm:$0xff]
      %v1333 = vld [vmem:[#allocation2 + $0xf0] sm:$0xff]
      %v1334 = vld [vmem:[#allocation2 + $0x108] sm:$0xff]
      %v1335 = vld [vmem:[#allocation2 + $0x110] sm:$0xff]
      %v1336 = vld [vmem:[#allocation2 + $0x128] sm:$0xff]
      %v1337 = vld [vmem:[#allocation2 + $0x130] sm:$0xff]
      %v1338 = vld [vmem:[#allocation2 + $0x148] sm:$0xff]
      %v1339 = vld [vmem:[#allocation2 + $0x150] sm:$0xff]
      %v1340 = vld [vmem:[#allocation2 + $0x168] sm:$0xff]
      %v1341 = vld [vmem:[#allocation2 + $0x170] sm:$0xff]
      %v1342 = vld [vmem:[#allocation2 + $0x188] sm:$0xff]
      %v1343 = vld [vmem:[#allocation2 + $0x190] sm:$0xff]
      %v1344 = vld [vmem:[#allocation2 + $0x1a8] sm:$0xff]
      %v1345 = vld [vmem:[#allocation2 + $0x1b0] sm:$0xff]
      %v1346 = vld [vmem:[#allocation2 + $0x1c8] sm:$0xff]
      %v1347 = vld [vmem:[#allocation2 + $0x1d0] sm:$0xff]
      %v1348 = vld [vmem:[#allocation2 + $0x1e8] sm:$0xff]
      %v1349 = vld [vmem:[#allocation2 + $0x1f0] sm:$0xff]
      %s1350 = scalar_lea.vmem %s6, 8
      %v1351 = vld [vmem:[%s1350] sm:$0xff]
      %v1353 = vsel %vm517, %v1318, 0
      %v1356 = vsel %vm517, %v1319, 0
      %v1359 = vsel %vm517, %v1320, 0
      %v1362 = vsel %vm517, %v1321, 0
      %v1365 = vsel %vm517, %v1322, 0
      %v1368 = vsel %vm517, %v1323, 0
      %v1371 = vsel %vm517, %v1324, 0
      %v1374 = vsel %vm517, %v1325, 0
      %v1377 = vsel %vm517, %v1326, 0
      %v1380 = vsel %vm517, %v1327, 0
      %v1383 = vsel %vm517, %v1328, 0
      %v1386 = vsel %vm517, %v1329, 0
      %v1389 = vsel %vm517, %v1330, 0
      %v1392 = vsel %vm517, %v1331, 0
      %v1395 = vsel %vm517, %v1332, 0
      %v1398 = vsel %vm517, %v1333, 0
      %v1401 = vsel %vm517, %v1334, 0
      %v1404 = vsel %vm517, %v1335, 0
      %v1407 = vsel %vm517, %v1336, 0
      %v1410 = vsel %vm517, %v1337, 0
      %v1413 = vsel %vm517, %v1338, 0
      %v1416 = vsel %vm517, %v1339, 0
      %v1419 = vsel %vm517, %v1340, 0
      %v1422 = vsel %vm517, %v1341, 0
      %v1425 = vsel %vm517, %v1342, 0
      %v1428 = vsel %vm517, %v1343, 0
      %v1431 = vsel %vm517, %v1344, 0
      %v1434 = vsel %vm517, %v1345, 0
      %v1437 = vsel %vm517, %v1346, 0
      %v1440 = vsel %vm517, %v1347, 0
      %v1443 = vsel %vm517, %v1348, 0
      %v1446 = vsel %vm517, %v1349, 0
      %1448 = vmatprep.subr.mxu0 0.0
      %1449 = vmatpush1.msra.mxu0 %v1351
      %1450 = vmatprep.subr.mxu0 0.0
      %1451 = vmatpush1.msra.mxu0 0.0
      %1452 = vmatprep.subr.mxu0 0.0
      %1453 = vmatpush1.msra.mxu0 0.0
      %1454 = vmatprep.subr.mxu0 0.0
      %1455 = vmatpush1.msra.mxu0 0.0
      %1456 = vmatprep.subr.mxu0 0.0
      %1457 = vmatpush1.msra.mxu0 0.0
      %1458 = vmatprep.subr.mxu0 0.0
      %1459 = vmatpush1.msra.mxu0 0.0
      %1460 = vmatprep.subr.mxu0 0.0
      %1461 = vmatpush1.msra.mxu0 0.0
      %1462 = vmatprep.subr.mxu0 0.0
      %1463 = vmatpush1.msra.mxu0 0.0
      %1464 = vmatprep.subr.mxu0 0.0
      %1465 = vmatpush1.msra.mxu0 0.0
      %1466 = vmatprep.subr.mxu0 0.0
      %1467 = vmatpush1.msra.mxu0 0.0
      %1468 = vmatprep.subr.mxu0 0.0
      %1469 = vmatpush1.msra.mxu0 0.0
      %1470 = vmatprep.subr.mxu0 0.0
      %1471 = vmatpush1.msra.mxu0 0.0
      %1472 = vmatprep.subr.mxu0 0.0
      %1473 = vmatpush1.msra.mxu0 0.0
      %1474 = vmatprep.subr.mxu0 0.0
      %1475 = vmatpush1.msra.mxu0 0.0
      %1476 = vmatprep.subr.mxu0 0.0
      %1477 = vmatpush1.msra.mxu0 0.0
      %1478 = vmatprep.subr.mxu0 0.0
      %1479 = vmatpush1.msra.mxu0 0.0
      %1480 = vmatprep.subr.mxu0 0.0
      %1481 = vmatpush1.msra.mxu0 0.0
      %1482 = vmatprep.subr.mxu0 0.0
      %1483 = vmatpush1.msra.mxu0 0.0
      %1484 = vmatprep.subr.mxu0 0.0
      %1485 = vmatpush1.msra.mxu0 0.0
      %1486 = vmatprep.subr.mxu0 0.0
      %1487 = vmatpush1.msra.mxu0 0.0
      %1488 = vmatprep.subr.mxu0 0.0
      %1489 = vmatpush1.msra.mxu0 0.0
      %1490 = vmatprep.subr.mxu0 0.0
      %1491 = vmatpush1.msra.mxu0 0.0
      %1492 = vmatprep.subr.mxu0 0.0
      %1493 = vmatpush1.msra.mxu0 0.0
      %1494 = vmatprep.subr.mxu0 0.0
      %1495 = vmatpush1.msra.mxu0 0.0
      %1496 = vmatprep.subr.mxu0 0.0
      %1497 = vmatpush1.msra.mxu0 0.0
      %1498 = vmatprep.subr.mxu0 0.0
      %1499 = vmatpush1.msra.mxu0 0.0
      %1500 = vmatprep.subr.mxu0 0.0
      %1501 = vmatpush1.msra.mxu0 0.0
      %1502 = vmatprep.subr.mxu0 0.0
      %1503 = vmatpush1.msra.mxu0 0.0
      %1504 = vmatprep.subr.mxu0 0.0
      %1505 = vmatpush1.msra.mxu0 0.0
      %1506 = vmatprep.subr.mxu0 0.0
      %1507 = vmatpush1.msra.mxu0 0.0
      %1508 = vmatprep.subr.mxu0 0.0
      %1509 = vmatpush1.msra.mxu0 0.0
      %1510 = vmatprep.subr.mxu0 0.0
      %1511 = vmatpush1.msra.mxu0 0.0
      %1512 = vmatprep.mubr.f32.mxu0 0.0
      %1513 = vmatmul.mubr.f32.gmra.mrb[0].mxu0 %v1353
      %v1514 = vpop.f32.mrb[0].mxu0
      %v1515 = vadd.f32 0.0, %v1514
      %v1516 = vpop.f32.mrb[0].mxu0
      %1517 = vmatprep.mubr.f32.mxu0 0.0
      %1518 = vmatmul.mubr.f32.gmra.mrb[0].mxu0 %v1356
      %v1519 = vpop.f32.mrb[0].mxu0
      %v1520 = vadd.f32 0.0, %v1519
      %v1521 = vpop.f32.mrb[0].mxu0
      %1522 = vmatprep.mubr.f32.mxu0 0.0
      %1523 = vmatmul.mubr.f32.gmra.mrb[0].mxu0 %v1359
      %v1524 = vpop.f32.mrb[0].mxu0
      %v1525 = vadd.f32 0.0, %v1524
      %v1526 = vpop.f32.mrb[0].mxu0
      %1527 = vmatprep.mubr.f32.mxu0 0.0
      %1528 = vmatmul.mubr.f32.gmra.mrb[0].mxu0 %v1362
      %v1529 = vpop.f32.mrb[0].mxu0
      %v1530 = vadd.f32 0.0, %v1529
      %v1531 = vpop.f32.mrb[0].mxu0
      %1532 = vmatprep.mubr.f32.mxu0 0.0
      %1533 = vmatmul.mubr.f32.gmra.mrb[0].mxu0 %v1365
      %v1534 = vpop.f32.mrb[0].mxu0
      %v1535 = vadd.f32 0.0, %v1534
      %v1536 = vpop.f32.mrb[0].mxu0
      %1537 = vmatprep.mubr.f32.mxu0 0.0
      %1538 = vmatmul.mubr.f32.gmra.mrb[0].mxu0 %v1368
      %v1539 = vpop.f32.mrb[0].mxu0
      %v1540 = vadd.f32 0.0, %v1539
      %v1541 = vpop.f32.mrb[0].mxu0
      %1542 = vmatprep.mubr.f32.mxu0 0.0
      %1543 = vmatmul.mubr.f32.gmra.mrb[0].mxu0 %v1371
      %v1544 = vpop.f32.mrb[0].mxu0
      %v1545 = vadd.f32 0.0, %v1544
      %v1546 = vpop.f32.mrb[0].mxu0
      %1547 = vmatprep.mubr.f32.mxu0 0.0
      %1548 = vmatmul.mubr.f32.gmra.mrb[0].mxu0 %v1374
      %v1549 = vpop.f32.mrb[0].mxu0
      %v1550 = vadd.f32 0.0, %v1549
      %v1551 = vpop.f32.mrb[0].mxu0
      %1552 = vmatprep.mubr.f32.mxu0 0.0
      %1553 = vmatmul.mubr.f32.gmra.mrb[0].mxu0 %v1377
      %v1554 = vpop.f32.mrb[0].mxu0
      %v1555 = vadd.f32 0.0, %v1554
      %v1556 = vpop.f32.mrb[0].mxu0
      %1557 = vmatprep.mubr.f32.mxu0 0.0
      %1558 = vmatmul.mubr.f32.gmra.mrb[0].mxu0 %v1380
      %v1559 = vpop.f32.mrb[0].mxu0
      %v1560 = vadd.f32 0.0, %v1559
      %v1561 = vpop.f32.mrb[0].mxu0
      %1562 = vmatprep.mubr.f32.mxu0 0.0
      %1563 = vmatmul.mubr.f32.gmra.mrb[0].mxu0 %v1383
      %v1564 = vpop.f32.mrb[0].mxu0
      %v1565 = vadd.f32 0.0, %v1564
      %v1566 = vpop.f32.mrb[0].mxu0
      %1567 = vmatprep.mubr.f32.mxu0 0.0
      %1568 = vmatmul.mubr.f32.gmra.mrb[0].mxu0 %v1386
      %v1569 = vpop.f32.mrb[0].mxu0
      %v1570 = vadd.f32 0.0, %v1569
      %v1571 = vpop.f32.mrb[0].mxu0
      %1572 = vmatprep.mubr.f32.mxu0 0.0
      %1573 = vmatmul.mubr.f32.gmra.mrb[0].mxu0 %v1389
      %v1574 = vpop.f32.mrb[0].mxu0
      %v1575 = vadd.f32 0.0, %v1574
      %v1576 = vpop.f32.mrb[0].mxu0
      %1577 = vmatprep.mubr.f32.mxu0 0.0
      %1578 = vmatmul.mubr.f32.gmra.mrb[0].mxu0 %v1392
      %v1579 = vpop.f32.mrb[0].mxu0
      %v1580 = vadd.f32 0.0, %v1579
      %v1581 = vpop.f32.mrb[0].mxu0
      %1582 = vmatprep.mubr.f32.mxu0 0.0
      %1583 = vmatmul.mubr.f32.gmra.mrb[0].mxu0 %v1395
      %v1584 = vpop.f32.mrb[0].mxu0
      %v1585 = vadd.f32 0.0, %v1584
      %v1586 = vpop.f32.mrb[0].mxu0
      %1587 = vmatprep.mubr.f32.mxu0 0.0
      %1588 = vmatmul.mubr.f32.gmra.mrb[0].mxu0 %v1398
      %v1589 = vpop.f32.mrb[0].mxu0
      %v1590 = vadd.f32 0.0, %v1589
      %v1591 = vpop.f32.mrb[0].mxu0
      %1592 = vmatprep.mubr.f32.mxu0 0.0
      %1593 = vmatmul.mubr.f32.gmra.mrb[0].mxu0 %v1401
      %v1594 = vpop.f32.mrb[0].mxu0
      %v1595 = vadd.f32 0.0, %v1594
      %v1596 = vpop.f32.mrb[0].mxu0
      %1597 = vmatprep.mubr.f32.mxu0 0.0
      %1598 = vmatmul.mubr.f32.gmra.mrb[0].mxu0 %v1404
      %v1599 = vpop.f32.mrb[0].mxu0
      %v1600 = vadd.f32 0.0, %v1599
      %v1601 = vpop.f32.mrb[0].mxu0
      %1602 = vmatprep.mubr.f32.mxu0 0.0
      %1603 = vmatmul.mubr.f32.gmra.mrb[0].mxu0 %v1407
      %v1604 = vpop.f32.mrb[0].mxu0
      %v1605 = vadd.f32 0.0, %v1604
      %v1606 = vpop.f32.mrb[0].mxu0
      %1607 = vmatprep.mubr.f32.mxu0 0.0
      %1608 = vmatmul.mubr.f32.gmra.mrb[0].mxu0 %v1410
      %v1609 = vpop.f32.mrb[0].mxu0
      %v1610 = vadd.f32 0.0, %v1609
      %v1611 = vpop.f32.mrb[0].mxu0
      %1612 = vmatprep.mubr.f32.mxu0 0.0
      %1613 = vmatmul.mubr.f32.gmra.mrb[0].mxu0 %v1413
      %v1614 = vpop.f32.mrb[0].mxu0
      %v1615 = vadd.f32 0.0, %v1614
      %v1616 = vpop.f32.mrb[0].mxu0
      %1617 = vmatprep.mubr.f32.mxu0 0.0
      %1618 = vmatmul.mubr.f32.gmra.mrb[0].mxu0 %v1416
      %v1619 = vpop.f32.mrb[0].mxu0
      %v1620 = vadd.f32 0.0, %v1619
      %v1621 = vpop.f32.mrb[0].mxu0
      %1622 = vmatprep.mubr.f32.mxu0 0.0
      %1623 = vmatmul.mubr.f32.gmra.mrb[0].mxu0 %v1419
      %v1624 = vpop.f32.mrb[0].mxu0
      %v1625 = vadd.f32 0.0, %v1624
      %v1626 = vpop.f32.mrb[0].mxu0
      %1627 = vmatprep.mubr.f32.mxu0 0.0
      %1628 = vmatmul.mubr.f32.gmra.mrb[0].mxu0 %v1422
      %v1629 = vpop.f32.mrb[0].mxu0
      %v1630 = vadd.f32 0.0, %v1629
      %v1631 = vpop.f32.mrb[0].mxu0
      %1632 = vmatprep.mubr.f32.mxu0 0.0
      %1633 = vmatmul.mubr.f32.gmra.mrb[0].mxu0 %v1425
      %v1634 = vpop.f32.mrb[0].mxu0
      %v1635 = vadd.f32 0.0, %v1634
      %v1636 = vpop.f32.mrb[0].mxu0
      %1637 = vmatprep.mubr.f32.mxu0 0.0
      %1638 = vmatmul.mubr.f32.gmra.mrb[0].mxu0 %v1428
      %v1639 = vpop.f32.mrb[0].mxu0
      %v1640 = vadd.f32 0.0, %v1639
      %v1641 = vpop.f32.mrb[0].mxu0
      %1642 = vmatprep.mubr.f32.mxu0 0.0
      %1643 = vmatmul.mubr.f32.gmra.mrb[0].mxu0 %v1431
      %v1644 = vpop.f32.mrb[0].mxu0
      %v1645 = vadd.f32 0.0, %v1644
      %v1646 = vpop.f32.mrb[0].mxu0
      %1647 = vmatprep.mubr.f32.mxu0 0.0
      %1648 = vmatmul.mubr.f32.gmra.mrb[0].mxu0 %v1434
      %v1649 = vpop.f32.mrb[0].mxu0
      %v1650 = vadd.f32 0.0, %v1649
      %v1651 = vpop.f32.mrb[0].mxu0
      %1652 = vmatprep.mubr.f32.mxu0 0.0
      %1653 = vmatmul.mubr.f32.gmra.mrb[0].mxu0 %v1437
      %v1654 = vpop.f32.mrb[0].mxu0
      %v1655 = vadd.f32 0.0, %v1654
      %v1656 = vpop.f32.mrb[0].mxu0
      %1657 = vmatprep.mubr.f32.mxu0 0.0
      %1658 = vmatmul.mubr.f32.gmra.mrb[0].mxu0 %v1440
      %v1659 = vpop.f32.mrb[0].mxu0
      %v1660 = vadd.f32 0.0, %v1659
      %v1661 = vpop.f32.mrb[0].mxu0
      %1662 = vmatprep.mubr.f32.mxu0 0.0
      %1663 = vmatmul.mubr.f32.gmra.mrb[0].mxu0 %v1443
      %v1664 = vpop.f32.mrb[0].mxu0
      %v1665 = vadd.f32 0.0, %v1664
      %v1666 = vpop.f32.mrb[0].mxu0
      %1667 = vmatprep.mubr.f32.mxu0 0.0
      %1668 = vmatmul.mubr.f32.gmra.mrb[0].mxu0 %v1446
      %v1669 = vpop.f32.mrb[0].mxu0
      %v1670 = vadd.f32 0.0, %v1669
      %v1671 = vpop.f32.mrb[0].mxu0
      %1672 = vdwg.mxu0
      %v1674 = vsel %vm517, %v1285, 0
      %v1677 = vsel %vm517, %v1286, 0
      %v1680 = vsel %vm517, %v1287, 0
      %v1683 = vsel %vm517, %v1288, 0
      %v1686 = vsel %vm517, %v1289, 0
      %v1689 = vsel %vm517, %v1290, 0
      %v1692 = vsel %vm517, %v1291, 0
      %v1695 = vsel %vm517, %v1292, 0
      %v1698 = vsel %vm517, %v1293, 0
      %v1701 = vsel %vm517, %v1294, 0
      %v1704 = vsel %vm517, %v1295, 0
      %v1707 = vsel %vm517, %v1296, 0
      %v1710 = vsel %vm517, %v1297, 0
      %v1713 = vsel %vm517, %v1298, 0
      %v1716 = vsel %vm517, %v1299, 0
      %v1719 = vsel %vm517, %v1300, 0
      %v1722 = vsel %vm517, %v1301, 0
      %v1725 = vsel %vm517, %v1302, 0
      %v1728 = vsel %vm517, %v1303, 0
      %v1731 = vsel %vm517, %v1304, 0
      %v1734 = vsel %vm517, %v1305, 0
      %v1737 = vsel %vm517, %v1306, 0
      %v1740 = vsel %vm517, %v1307, 0
      %v1743 = vsel %vm517, %v1308, 0
      %v1746 = vsel %vm517, %v1309, 0
      %v1749 = vsel %vm517, %v1310, 0
      %v1752 = vsel %vm517, %v1311, 0
      %v1755 = vsel %vm517, %v1312, 0
      %v1758 = vsel %vm517, %v1313, 0
      %v1761 = vsel %vm517, %v1314, 0
      %v1764 = vsel %vm517, %v1315, 0
      %v1767 = vsel %vm517, %v1316, 0
      %1769 = vmatprep.subr.mxu0 0.0
      %1770 = vmatpush1.msra.mxu0 %v1317
      %1771 = vmatprep.subr.mxu0 0.0
      %1772 = vmatpush1.msra.mxu0 0.0
      %1773 = vmatprep.subr.mxu0 0.0
      %1774 = vmatpush1.msra.mxu0 0.0
      %1775 = vmatprep.subr.mxu0 0.0
      %1776 = vmatpush1.msra.mxu0 0.0
      %1777 = vmatprep.subr.mxu0 0.0
      %1778 = vmatpush1.msra.mxu0 0.0
      %1779 = vmatprep.subr.mxu0 0.0
      %1780 = vmatpush1.msra.mxu0 0.0
      %1781 = vmatprep.subr.mxu0 0.0
      %1782 = vmatpush1.msra.mxu0 0.0
      %1783 = vmatprep.subr.mxu0 0.0
      %1784 = vmatpush1.msra.mxu0 0.0
      %1785 = vmatprep.subr.mxu0 0.0
      %1786 = vmatpush1.msra.mxu0 0.0
      %1787 = vmatprep.subr.mxu0 0.0
      %1788 = vmatpush1.msra.mxu0 0.0
      %1789 = vmatprep.subr.mxu0 0.0
      %1790 = vmatpush1.msra.mxu0 0.0
      %1791 = vmatprep.subr.mxu0 0.0
      %1792 = vmatpush1.msra.mxu0 0.0
      %1793 = vmatprep.subr.mxu0 0.0
      %1794 = vmatpush1.msra.mxu0 0.0
      %1795 = vmatprep.subr.mxu0 0.0
      %1796 = vmatpush1.msra.mxu0 0.0
      %1797 = vmatprep.subr.mxu0 0.0
      %1798 = vmatpush1.msra.mxu0 0.0
      %1799 = vmatprep.subr.mxu0 0.0
      %1800 = vmatpush1.msra.mxu0 0.0
      %1801 = vmatprep.subr.mxu0 0.0
      %1802 = vmatpush1.msra.mxu0 0.0
      %1803 = vmatprep.subr.mxu0 0.0
      %1804 = vmatpush1.msra.mxu0 0.0
      %1805 = vmatprep.subr.mxu0 0.0
      %1806 = vmatpush1.msra.mxu0 0.0
      %1807 = vmatprep.subr.mxu0 0.0
      %1808 = vmatpush1.msra.mxu0 0.0
      %1809 = vmatprep.subr.mxu0 0.0
      %1810 = vmatpush1.msra.mxu0 0.0
      %1811 = vmatprep.subr.mxu0 0.0
      %1812 = vmatpush1.msra.mxu0 0.0
      %1813 = vmatprep.subr.mxu0 0.0
      %1814 = vmatpush1.msra.mxu0 0.0
      %1815 = vmatprep.subr.mxu0 0.0
      %1816 = vmatpush1.msra.mxu0 0.0
      %1817 = vmatprep.subr.mxu0 0.0
      %1818 = vmatpush1.msra.mxu0 0.0
      %1819 = vmatprep.subr.mxu0 0.0
      %1820 = vmatpush1.msra.mxu0 0.0
      %1821 = vmatprep.subr.mxu0 0.0
      %1822 = vmatpush1.msra.mxu0 0.0
      %1823 = vmatprep.subr.mxu0 0.0
      %1824 = vmatpush1.msra.mxu0 0.0
      %1825 = vmatprep.subr.mxu0 0.0
      %1826 = vmatpush1.msra.mxu0 0.0
      %1827 = vmatprep.subr.mxu0 0.0
      %1828 = vmatpush1.msra.mxu0 0.0
      %1829 = vmatprep.subr.mxu0 0.0
      %1830 = vmatpush1.msra.mxu0 0.0
      %1831 = vmatprep.subr.mxu0 0.0
      %1832 = vmatpush1.msra.mxu0 0.0
      %1833 = vmatprep.mubr.f32.mxu0 0.0
      %1834 = vmatmul.mubr.f32.gmra.mrb[0].mxu0 %v1674
      %v1835 = vpop.f32.mrb[0].mxu0
      %v1836 = vadd.f32 %v1515, %v1835
      %v1837 = vpop.f32.mrb[0].mxu0
      %1838 = vmatprep.mubr.f32.mxu0 0.0
      %1839 = vmatmul.mubr.f32.gmra.mrb[0].mxu0 %v1677
      %v1840 = vpop.f32.mrb[0].mxu0
      %v1841 = vadd.f32 %v1520, %v1840
      %v1842 = vpop.f32.mrb[0].mxu0
      %1843 = vmatprep.mubr.f32.mxu0 0.0
      %1844 = vmatmul.mubr.f32.gmra.mrb[0].mxu0 %v1680
      %v1845 = vpop.f32.mrb[0].mxu0
      %v1846 = vadd.f32 %v1525, %v1845
      %v1847 = vpop.f32.mrb[0].mxu0
      %1848 = vmatprep.mubr.f32.mxu0 0.0
      %1849 = vmatmul.mubr.f32.gmra.mrb[0].mxu0 %v1683
      %v1850 = vpop.f32.mrb[0].mxu0
      %v1851 = vadd.f32 %v1530, %v1850
      %v1852 = vpop.f32.mrb[0].mxu0
      %1853 = vmatprep.mubr.f32.mxu0 0.0
      %1854 = vmatmul.mubr.f32.gmra.mrb[0].mxu0 %v1686
      %v1855 = vpop.f32.mrb[0].mxu0
      %v1856 = vadd.f32 %v1535, %v1855
      %v1857 = vpop.f32.mrb[0].mxu0
      %1858 = vmatprep.mubr.f32.mxu0 0.0
      %1859 = vmatmul.mubr.f32.gmra.mrb[0].mxu0 %v1689
      %v1860 = vpop.f32.mrb[0].mxu0
      %v1861 = vadd.f32 %v1540, %v1860
      %v1862 = vpop.f32.mrb[0].mxu0
      %1863 = vmatprep.mubr.f32.mxu0 0.0
      %1864 = vmatmul.mubr.f32.gmra.mrb[0].mxu0 %v1692
      %v1865 = vpop.f32.mrb[0].mxu0
      %v1866 = vadd.f32 %v1545, %v1865
      %v1867 = vpop.f32.mrb[0].mxu0
      %1868 = vmatprep.mubr.f32.mxu0 0.0
      %1869 = vmatmul.mubr.f32.gmra.mrb[0].mxu0 %v1695
      %v1870 = vpop.f32.mrb[0].mxu0
      %v1871 = vadd.f32 %v1550, %v1870
      %v1872 = vpop.f32.mrb[0].mxu0
      %1873 = vmatprep.mubr.f32.mxu0 0.0
      %1874 = vmatmul.mubr.f32.gmra.mrb[0].mxu0 %v1698
      %v1875 = vpop.f32.mrb[0].mxu0
      %v1876 = vadd.f32 %v1555, %v1875
      %v1877 = vpop.f32.mrb[0].mxu0
      %1878 = vmatprep.mubr.f32.mxu0 0.0
      %1879 = vmatmul.mubr.f32.gmra.mrb[0].mxu0 %v1701
      %v1880 = vpop.f32.mrb[0].mxu0
      %v1881 = vadd.f32 %v1560, %v1880
      %v1882 = vpop.f32.mrb[0].mxu0
      %1883 = vmatprep.mubr.f32.mxu0 0.0
      %1884 = vmatmul.mubr.f32.gmra.mrb[0].mxu0 %v1704
      %v1885 = vpop.f32.mrb[0].mxu0
      %v1886 = vadd.f32 %v1565, %v1885
      %v1887 = vpop.f32.mrb[0].mxu0
      %1888 = vmatprep.mubr.f32.mxu0 0.0
      %1889 = vmatmul.mubr.f32.gmra.mrb[0].mxu0 %v1707
      %v1890 = vpop.f32.mrb[0].mxu0
      %v1891 = vadd.f32 %v1570, %v1890
      %v1892 = vpop.f32.mrb[0].mxu0
      %1893 = vmatprep.mubr.f32.mxu0 0.0
      %1894 = vmatmul.mubr.f32.gmra.mrb[0].mxu0 %v1710
      %v1895 = vpop.f32.mrb[0].mxu0
      %v1896 = vadd.f32 %v1575, %v1895
      %v1897 = vpop.f32.mrb[0].mxu0
      %1898 = vmatprep.mubr.f32.mxu0 0.0
      %1899 = vmatmul.mubr.f32.gmra.mrb[0].mxu0 %v1713
      %v1900 = vpop.f32.mrb[0].mxu0
      %v1901 = vadd.f32 %v1580, %v1900
      %v1902 = vpop.f32.mrb[0].mxu0
      %1903 = vmatprep.mubr.f32.mxu0 0.0
      %1904 = vmatmul.mubr.f32.gmra.mrb[0].mxu0 %v1716
      %v1905 = vpop.f32.mrb[0].mxu0
      %v1906 = vadd.f32 %v1585, %v1905
      %v1907 = vpop.f32.mrb[0].mxu0
      %1908 = vmatprep.mubr.f32.mxu0 0.0
      %1909 = vmatmul.mubr.f32.gmra.mrb[0].mxu0 %v1719
      %v1910 = vpop.f32.mrb[0].mxu0
      %v1911 = vadd.f32 %v1590, %v1910
      %v1912 = vpop.f32.mrb[0].mxu0
      %1913 = vmatprep.mubr.f32.mxu0 0.0
      %1914 = vmatmul.mubr.f32.gmra.mrb[0].mxu0 %v1722
      %v1915 = vpop.f32.mrb[0].mxu0
      %v1916 = vadd.f32 %v1595, %v1915
      %v1917 = vpop.f32.mrb[0].mxu0
      %1918 = vmatprep.mubr.f32.mxu0 0.0
      %1919 = vmatmul.mubr.f32.gmra.mrb[0].mxu0 %v1725
      %v1920 = vpop.f32.mrb[0].mxu0
      %v1921 = vadd.f32 %v1600, %v1920
      %v1922 = vpop.f32.mrb[0].mxu0
      %1923 = vmatprep.mubr.f32.mxu0 0.0
      %1924 = vmatmul.mubr.f32.gmra.mrb[0].mxu0 %v1728
      %v1925 = vpop.f32.mrb[0].mxu0
      %v1926 = vadd.f32 %v1605, %v1925
      %v1927 = vpop.f32.mrb[0].mxu0
      %1928 = vmatprep.mubr.f32.mxu0 0.0
      %1929 = vmatmul.mubr.f32.gmra.mrb[0].mxu0 %v1731
      %v1930 = vpop.f32.mrb[0].mxu0
      %v1931 = vadd.f32 %v1610, %v1930
      %v1932 = vpop.f32.mrb[0].mxu0
      %1933 = vmatprep.mubr.f32.mxu0 0.0
      %1934 = vmatmul.mubr.f32.gmra.mrb[0].mxu0 %v1734
      %v1935 = vpop.f32.mrb[0].mxu0
      %v1936 = vadd.f32 %v1615, %v1935
      %v1937 = vpop.f32.mrb[0].mxu0
      %1938 = vmatprep.mubr.f32.mxu0 0.0
      %1939 = vmatmul.mubr.f32.gmra.mrb[0].mxu0 %v1737
      %v1940 = vpop.f32.mrb[0].mxu0
      %v1941 = vadd.f32 %v1620, %v1940
      %v1942 = vpop.f32.mrb[0].mxu0
      %1943 = vmatprep.mubr.f32.mxu0 0.0
      %1944 = vmatmul.mubr.f32.gmra.mrb[0].mxu0 %v1740
      %v1945 = vpop.f32.mrb[0].mxu0
      %v1946 = vadd.f32 %v1625, %v1945
      %v1947 = vpop.f32.mrb[0].mxu0
      %1948 = vmatprep.mubr.f32.mxu0 0.0
      %1949 = vmatmul.mubr.f32.gmra.mrb[0].mxu0 %v1743
      %v1950 = vpop.f32.mrb[0].mxu0
      %v1951 = vadd.f32 %v1630, %v1950
      %v1952 = vpop.f32.mrb[0].mxu0
      %1953 = vmatprep.mubr.f32.mxu0 0.0
      %1954 = vmatmul.mubr.f32.gmra.mrb[0].mxu0 %v1746
      %v1955 = vpop.f32.mrb[0].mxu0
      %v1956 = vadd.f32 %v1635, %v1955
      %v1957 = vpop.f32.mrb[0].mxu0
      %1958 = vmatprep.mubr.f32.mxu0 0.0
      %1959 = vmatmul.mubr.f32.gmra.mrb[0].mxu0 %v1749
      %v1960 = vpop.f32.mrb[0].mxu0
      %v1961 = vadd.f32 %v1640, %v1960
      %v1962 = vpop.f32.mrb[0].mxu0
      %1963 = vmatprep.mubr.f32.mxu0 0.0
      %1964 = vmatmul.mubr.f32.gmra.mrb[0].mxu0 %v1752
      %v1965 = vpop.f32.mrb[0].mxu0
      %v1966 = vadd.f32 %v1645, %v1965
      %v1967 = vpop.f32.mrb[0].mxu0
      %1968 = vmatprep.mubr.f32.mxu0 0.0
      %1969 = vmatmul.mubr.f32.gmra.mrb[0].mxu0 %v1755
      %v1970 = vpop.f32.mrb[0].mxu0
      %v1971 = vadd.f32 %v1650, %v1970
      %v1972 = vpop.f32.mrb[0].mxu0
      %1973 = vmatprep.mubr.f32.mxu0 0.0
      %1974 = vmatmul.mubr.f32.gmra.mrb[0].mxu0 %v1758
      %v1975 = vpop.f32.mrb[0].mxu0
      %v1976 = vadd.f32 %v1655, %v1975
      %v1977 = vpop.f32.mrb[0].mxu0
      %1978 = vmatprep.mubr.f32.mxu0 0.0
      %1979 = vmatmul.mubr.f32.gmra.mrb[0].mxu0 %v1761
      %v1980 = vpop.f32.mrb[0].mxu0
      %v1981 = vadd.f32 %v1660, %v1980
      %v1982 = vpop.f32.mrb[0].mxu0
      %1983 = vmatprep.mubr.f32.mxu0 0.0
      %1984 = vmatmul.mubr.f32.gmra.mrb[0].mxu0 %v1764
      %v1985 = vpop.f32.mrb[0].mxu0
      %v1986 = vadd.f32 %v1665, %v1985
      %v1987 = vpop.f32.mrb[0].mxu0
      %1988 = vmatprep.mubr.f32.mxu0 0.0
      %1989 = vmatmul.mubr.f32.gmra.mrb[0].mxu0 %v1767
      %v1990 = vpop.f32.mrb[0].mxu0
      %v1991 = vadd.f32 %v1670, %v1990
      %v1992 = vpop.f32.mrb[0].mxu0
      %1993 = vdwg.mxu0
      %v1994 = vld [vmem:[#allocation2 + $0x9] sm:$0xff]
      %v1995 = vld [vmem:[#allocation2 + $0x11] sm:$0xff]
      %v1996 = vld [vmem:[#allocation2 + $0x29] sm:$0xff]
      %v1997 = vld [vmem:[#allocation2 + $0x31] sm:$0xff]
      %v1998 = vld [vmem:[#allocation2 + $0x49] sm:$0xff]
      %v1999 = vld [vmem:[#allocation2 + $0x51] sm:$0xff]
      %v2000 = vld [vmem:[#allocation2 + $0x69] sm:$0xff]
      %v2001 = vld [vmem:[#allocation2 + $0x71] sm:$0xff]
      %v2002 = vld [vmem:[#allocation2 + $0x89] sm:$0xff]
      %v2003 = vld [vmem:[#allocation2 + $0x91] sm:$0xff]
      %v2004 = vld [vmem:[#allocation2 + $0xa9] sm:$0xff]
      %v2005 = vld [vmem:[#allocation2 + $0xb1] sm:$0xff]
      %v2006 = vld [vmem:[#allocation2 + $0xc9] sm:$0xff]
      %v2007 = vld [vmem:[#allocation2 + $0xd1] sm:$0xff]
      %v2008 = vld [vmem:[#allocation2 + $0xe9] sm:$0xff]
      %v2009 = vld [vmem:[#allocation2 + $0xf1] sm:$0xff]
      %v2010 = vld [vmem:[#allocation2 + $0x109] sm:$0xff]
      %v2011 = vld [vmem:[#allocation2 + $0x111] sm:$0xff]
      %v2012 = vld [vmem:[#allocation2 + $0x129] sm:$0xff]
      %v2013 = vld [vmem:[#allocation2 + $0x131] sm:$0xff]
      %v2014 = vld [vmem:[#allocation2 + $0x149] sm:$0xff]
      %v2015 = vld [vmem:[#allocation2 + $0x151] sm:$0xff]
      %v2016 = vld [vmem:[#allocation2 + $0x169] sm:$0xff]
      %v2017 = vld [vmem:[#allocation2 + $0x171] sm:$0xff]
      %v2018 = vld [vmem:[#allocation2 + $0x189] sm:$0xff]
      %v2019 = vld [vmem:[#allocation2 + $0x191] sm:$0xff]
      %v2020 = vld [vmem:[#allocation2 + $0x1a9] sm:$0xff]
      %v2021 = vld [vmem:[#allocation2 + $0x1b1] sm:$0xff]
      %v2022 = vld [vmem:[#allocation2 + $0x1c9] sm:$0xff]
      %v2023 = vld [vmem:[#allocation2 + $0x1d1] sm:$0xff]
      %v2024 = vld [vmem:[#allocation2 + $0x1e9] sm:$0xff]
      %v2025 = vld [vmem:[#allocation2 + $0x1f1] sm:$0xff]
      %s2026 = scalar_lea.vmem %s6, 16
      %v2027 = vld [vmem:[%s2026] sm:$0xff]
      %v2029 = vsel %vm517, %v1994, 0
      %v2032 = vsel %vm517, %v1995, 0
      %v2035 = vsel %vm517, %v1996, 0
      %v2038 = vsel %vm517, %v1997, 0
      %v2041 = vsel %vm517, %v1998, 0
      %v2044 = vsel %vm517, %v1999, 0
      %v2047 = vsel %vm517, %v2000, 0
      %v2050 = vsel %vm517, %v2001, 0
      %v2053 = vsel %vm517, %v2002, 0
      %v2056 = vsel %vm517, %v2003, 0
      %v2059 = vsel %vm517, %v2004, 0
      %v2062 = vsel %vm517, %v2005, 0
      %v2065 = vsel %vm517, %v2006, 0
      %v2068 = vsel %vm517, %v2007, 0
      %v2071 = vsel %vm517, %v2008, 0
      %v2074 = vsel %vm517, %v2009, 0
      %v2077 = vsel %vm517, %v2010, 0
      %v2080 = vsel %vm517, %v2011, 0
      %v2083 = vsel %vm517, %v2012, 0
      %v2086 = vsel %vm517, %v2013, 0
      %v2089 = vsel %vm517, %v2014, 0
      %v2092 = vsel %vm517, %v2015, 0
      %v2095 = vsel %vm517, %v2016, 0
      %v2098 = vsel %vm517, %v2017, 0
      %v2101 = vsel %vm517, %v2018, 0
      %v2104 = vsel %vm517, %v2019, 0
      %v2107 = vsel %vm517, %v2020, 0
      %v2110 = vsel %vm517, %v2021, 0
      %v2113 = vsel %vm517, %v2022, 0
      %v2116 = vsel %vm517, %v2023, 0
      %v2119 = vsel %vm517, %v2024, 0
      %v2122 = vsel %vm517, %v2025, 0
      %2124 = vmatprep.subr.mxu0 0.0
      %2125 = vmatpush1.msra.mxu0 %v2027
      %2126 = vmatprep.subr.mxu0 0.0
      %2127 = vmatpush1.msra.mxu0 0.0
      %2128 = vmatprep.subr.mxu0 0.0
      %2129 = vmatpush1.msra.mxu0 0.0
      %2130 = vmatprep.subr.mxu0 0.0
      %2131 = vmatpush1.msra.mxu0 0.0
      %2132 = vmatprep.subr.mxu0 0.0
      %2133 = vmatpush1.msra.mxu0 0.0
      %2134 = vmatprep.subr.mxu0 0.0
      %2135 = vmatpush1.msra.mxu0 0.0
      %2136 = vmatprep.subr.mxu0 0.0
      %2137 = vmatpush1.msra.mxu0 0.0
      %2138 = vmatprep.subr.mxu0 0.0
      %2139 = vmatpush1.msra.mxu0 0.0
      %2140 = vmatprep.subr.mxu0 0.0
      %2141 = vmatpush1.msra.mxu0 0.0
      %2142 = vmatprep.subr.mxu0 0.0
      %2143 = vmatpush1.msra.mxu0 0.0
      %2144 = vmatprep.subr.mxu0 0.0
      %2145 = vmatpush1.msra.mxu0 0.0
      %2146 = vmatprep.subr.mxu0 0.0
      %2147 = vmatpush1.msra.mxu0 0.0
      %2148 = vmatprep.subr.mxu0 0.0
      %2149 = vmatpush1.msra.mxu0 0.0
      %2150 = vmatprep.subr.mxu0 0.0
      %2151 = vmatpush1.msra.mxu0 0.0
      %2152 = vmatprep.subr.mxu0 0.0
      %2153 = vmatpush1.msra.mxu0 0.0
      %2154 = vmatprep.subr.mxu0 0.0
      %2155 = vmatpush1.msra.mxu0 0.0
      %2156 = vmatprep.subr.mxu0 0.0
      %2157 = vmatpush1.msra.mxu0 0.0
      %2158 = vmatprep.subr.mxu0 0.0
      %2159 = vmatpush1.msra.mxu0 0.0
      %2160 = vmatprep.subr.mxu0 0.0
      %2161 = vmatpush1.msra.mxu0 0.0
      %2162 = vmatprep.subr.mxu0 0.0
      %2163 = vmatpush1.msra.mxu0 0.0
      %2164 = vmatprep.subr.mxu0 0.0
      %2165 = vmatpush1.msra.mxu0 0.0
      %2166 = vmatprep.subr.mxu0 0.0
      %2167 = vmatpush1.msra.mxu0 0.0
      %2168 = vmatprep.subr.mxu0 0.0
      %2169 = vmatpush1.msra.mxu0 0.0
      %2170 = vmatprep.subr.mxu0 0.0
      %2171 = vmatpush1.msra.mxu0 0.0
      %2172 = vmatprep.subr.mxu0 0.0
      %2173 = vmatpush1.msra.mxu0 0.0
      %2174 = vmatprep.subr.mxu0 0.0
      %2175 = vmatpush1.msra.mxu0 0.0
      %2176 = vmatprep.subr.mxu0 0.0
      %2177 = vmatpush1.msra.mxu0 0.0
      %2178 = vmatprep.subr.mxu0 0.0
      %2179 = vmatpush1.msra.mxu0 0.0
      %2180 = vmatprep.subr.mxu0 0.0
      %2181 = vmatpush1.msra.mxu0 0.0
      %2182 = vmatprep.subr.mxu0 0.0
      %2183 = vmatpush1.msra.mxu0 0.0
      %2184 = vmatprep.subr.mxu0 0.0
      %2185 = vmatpush1.msra.mxu0 0.0
      %2186 = vmatprep.subr.mxu0 0.0
      %2187 = vmatpush1.msra.mxu0 0.0
      %2188 = vmatprep.mubr.f32.mxu0 0.0
      %2189 = vmatmul.mubr.f32.gmra.mrb[0].mxu0 %v2029
      %v2190 = vpop.f32.mrb[0].mxu0
      %v2191 = vadd.f32 0.0, %v2190
      %v2192 = vpop.f32.mrb[0].mxu0
      %2193 = vmatprep.mubr.f32.mxu0 0.0
      %2194 = vmatmul.mubr.f32.gmra.mrb[0].mxu0 %v2032
      %v2195 = vpop.f32.mrb[0].mxu0
      %v2196 = vadd.f32 0.0, %v2195
      %v2197 = vpop.f32.mrb[0].mxu0
      %2198 = vmatprep.mubr.f32.mxu0 0.0
      %2199 = vmatmul.mubr.f32.gmra.mrb[0].mxu0 %v2035
      %v2200 = vpop.f32.mrb[0].mxu0
      %v2201 = vadd.f32 0.0, %v2200
      %v2202 = vpop.f32.mrb[0].mxu0
      %2203 = vmatprep.mubr.f32.mxu0 0.0
      %2204 = vmatmul.mubr.f32.gmra.mrb[0].mxu0 %v2038
      %v2205 = vpop.f32.mrb[0].mxu0
      %v2206 = vadd.f32 0.0, %v2205
      %v2207 = vpop.f32.mrb[0].mxu0
      %2208 = vmatprep.mubr.f32.mxu0 0.0
      %2209 = vmatmul.mubr.f32.gmra.mrb[0].mxu0 %v2041
      %v2210 = vpop.f32.mrb[0].mxu0
      %v2211 = vadd.f32 0.0, %v2210
      %v2212 = vpop.f32.mrb[0].mxu0
      %2213 = vmatprep.mubr.f32.mxu0 0.0
      %2214 = vmatmul.mubr.f32.gmra.mrb[0].mxu0 %v2044
      %v2215 = vpop.f32.mrb[0].mxu0
      %v2216 = vadd.f32 0.0, %v2215
      %v2217 = vpop.f32.mrb[0].mxu0
      %2218 = vmatprep.mubr.f32.mxu0 0.0
      %2219 = vmatmul.mubr.f32.gmra.mrb[0].mxu0 %v2047
      %v2220 = vpop.f32.mrb[0].mxu0
      %v2221 = vadd.f32 0.0, %v2220
      %v2222 = vpop.f32.mrb[0].mxu0
      %2223 = vmatprep.mubr.f32.mxu0 0.0
      %2224 = vmatmul.mubr.f32.gmra.mrb[0].mxu0 %v2050
      %v2225 = vpop.f32.mrb[0].mxu0
      %v2226 = vadd.f32 0.0, %v2225
      %v2227 = vpop.f32.mrb[0].mxu0
      %2228 = vmatprep.mubr.f32.mxu0 0.0
      %2229 = vmatmul.mubr.f32.gmra.mrb[0].mxu0 %v2053
      %v2230 = vpop.f32.mrb[0].mxu0
      %v2231 = vadd.f32 0.0, %v2230
      %v2232 = vpop.f32.mrb[0].mxu0
      %2233 = vmatprep.mubr.f32.mxu0 0.0
      %2234 = vmatmul.mubr.f32.gmra.mrb[0].mxu0 %v2056
      %v2235 = vpop.f32.mrb[0].mxu0
      %v2236 = vadd.f32 0.0, %v2235
      %v2237 = vpop.f32.mrb[0].mxu0
      %2238 = vmatprep.mubr.f32.mxu0 0.0
      %2239 = vmatmul.mubr.f32.gmra.mrb[0].mxu0 %v2059
      %v2240 = vpop.f32.mrb[0].mxu0
      %v2241 = vadd.f32 0.0, %v2240
      %v2242 = vpop.f32.mrb[0].mxu0
      %2243 = vmatprep.mubr.f32.mxu0 0.0
      %2244 = vmatmul.mubr.f32.gmra.mrb[0].mxu0 %v2062
      %v2245 = vpop.f32.mrb[0].mxu0
      %v2246 = vadd.f32 0.0, %v2245
      %v2247 = vpop.f32.mrb[0].mxu0
      %2248 = vmatprep.mubr.f32.mxu0 0.0
      %2249 = vmatmul.mubr.f32.gmra.mrb[0].mxu0 %v2065
      %v2250 = vpop.f32.mrb[0].mxu0
      %v2251 = vadd.f32 0.0, %v2250
      %v2252 = vpop.f32.mrb[0].mxu0
      %2253 = vmatprep.mubr.f32.mxu0 0.0
      %2254 = vmatmul.mubr.f32.gmra.mrb[0].mxu0 %v2068
      %v2255 = vpop.f32.mrb[0].mxu0
      %v2256 = vadd.f32 0.0, %v2255
      %v2257 = vpop.f32.mrb[0].mxu0
      %2258 = vmatprep.mubr.f32.mxu0 0.0
      %2259 = vmatmul.mubr.f32.gmra.mrb[0].mxu0 %v2071
      %v2260 = vpop.f32.mrb[0].mxu0
      %v2261 = vadd.f32 0.0, %v2260
      %v2262 = vpop.f32.mrb[0].mxu0
      %2263 = vmatprep.mubr.f32.mxu0 0.0
      %2264 = vmatmul.mubr.f32.gmra.mrb[0].mxu0 %v2074
      %v2265 = vpop.f32.mrb[0].mxu0
      %v2266 = vadd.f32 0.0, %v2265
      %v2267 = vpop.f32.mrb[0].mxu0
      %2268 = vmatprep.mubr.f32.mxu0 0.0
      %2269 = vmatmul.mubr.f32.gmra.mrb[0].mxu0 %v2077
      %v2270 = vpop.f32.mrb[0].mxu0
      %v2271 = vadd.f32 0.0, %v2270
      %v2272 = vpop.f32.mrb[0].mxu0
      %2273 = vmatprep.mubr.f32.mxu0 0.0
      %2274 = vmatmul.mubr.f32.gmra.mrb[0].mxu0 %v2080
      %v2275 = vpop.f32.mrb[0].mxu0
      %v2276 = vadd.f32 0.0, %v2275
      %v2277 = vpop.f32.mrb[0].mxu0
      %2278 = vmatprep.mubr.f32.mxu0 0.0
      %2279 = vmatmul.mubr.f32.gmra.mrb[0].mxu0 %v2083
      %v2280 = vpop.f32.mrb[0].mxu0
      %v2281 = vadd.f32 0.0, %v2280
      %v2282 = vpop.f32.mrb[0].mxu0
      %2283 = vmatprep.mubr.f32.mxu0 0.0
      %2284 = vmatmul.mubr.f32.gmra.mrb[0].mxu0 %v2086
      %v2285 = vpop.f32.mrb[0].mxu0
      %v2286 = vadd.f32 0.0, %v2285
      %v2287 = vpop.f32.mrb[0].mxu0
      %2288 = vmatprep.mubr.f32.mxu0 0.0
      %2289 = vmatmul.mubr.f32.gmra.mrb[0].mxu0 %v2089
      %v2290 = vpop.f32.mrb[0].mxu0
      %v2291 = vadd.f32 0.0, %v2290
      %v2292 = vpop.f32.mrb[0].mxu0
      %2293 = vmatprep.mubr.f32.mxu0 0.0
      %2294 = vmatmul.mubr.f32.gmra.mrb[0].mxu0 %v2092
      %v2295 = vpop.f32.mrb[0].mxu0
      %v2296 = vadd.f32 0.0, %v2295
      %v2297 = vpop.f32.mrb[0].mxu0
      %2298 = vmatprep.mubr.f32.mxu0 0.0
      %2299 = vmatmul.mubr.f32.gmra.mrb[0].mxu0 %v2095
      %v2300 = vpop.f32.mrb[0].mxu0
      %v2301 = vadd.f32 0.0, %v2300
      %v2302 = vpop.f32.mrb[0].mxu0
      %2303 = vmatprep.mubr.f32.mxu0 0.0
      %2304 = vmatmul.mubr.f32.gmra.mrb[0].mxu0 %v2098
      %v2305 = vpop.f32.mrb[0].mxu0
      %v2306 = vadd.f32 0.0, %v2305
      %v2307 = vpop.f32.mrb[0].mxu0
      %2308 = vmatprep.mubr.f32.mxu0 0.0
      %2309 = vmatmul.mubr.f32.gmra.mrb[0].mxu0 %v2101
      %v2310 = vpop.f32.mrb[0].mxu0
      %v2311 = vadd.f32 0.0, %v2310
      %v2312 = vpop.f32.mrb[0].mxu0
      %2313 = vmatprep.mubr.f32.mxu0 0.0
      %2314 = vmatmul.mubr.f32.gmra.mrb[0].mxu0 %v2104
      %v2315 = vpop.f32.mrb[0].mxu0
      %v2316 = vadd.f32 0.0, %v2315
      %v2317 = vpop.f32.mrb[0].mxu0
      %2318 = vmatprep.mubr.f32.mxu0 0.0
      %2319 = vmatmul.mubr.f32.gmra.mrb[0].mxu0 %v2107
      %v2320 = vpop.f32.mrb[0].mxu0
      %v2321 = vadd.f32 0.0, %v2320
      %v2322 = vpop.f32.mrb[0].mxu0
      %2323 = vmatprep.mubr.f32.mxu0 0.0
      %2324 = vmatmul.mubr.f32.gmra.mrb[0].mxu0 %v2110
      %v2325 = vpop.f32.mrb[0].mxu0
      %v2326 = vadd.f32 0.0, %v2325
      %v2327 = vpop.f32.mrb[0].mxu0
      %2328 = vmatprep.mubr.f32.mxu0 0.0
      %2329 = vmatmul.mubr.f32.gmra.mrb[0].mxu0 %v2113
      %v2330 = vpop.f32.mrb[0].mxu0
      %v2331 = vadd.f32 0.0, %v2330
      %v2332 = vpop.f32.mrb[0].mxu0
      %2333 = vmatprep.mubr.f32.mxu0 0.0
      %2334 = vmatmul.mubr.f32.gmra.mrb[0].mxu0 %v2116
      %v2335 = vpop.f32.mrb[0].mxu0
      %v2336 = vadd.f32 0.0, %v2335
      %v2337 = vpop.f32.mrb[0].mxu0
      %2338 = vmatprep.mubr.f32.mxu0 0.0
      %2339 = vmatmul.mubr.f32.gmra.mrb[0].mxu0 %v2119
      %v2340 = vpop.f32.mrb[0].mxu0
      %v2341 = vadd.f32 0.0, %v2340
      %v2342 = vpop.f32.mrb[0].mxu0
      %2343 = vmatprep.mubr.f32.mxu0 0.0
      %2344 = vmatmul.mubr.f32.gmra.mrb[0].mxu0 %v2122
      %v2345 = vpop.f32.mrb[0].mxu0
      %v2346 = vadd.f32 0.0, %v2345
      %v2347 = vpop.f32.mrb[0].mxu0
      %2348 = vdwg.mxu0
      %v2349 = vadd.f32 %v1836, %v2191
      %v2350 = vadd.f32 %v1841, %v2196
      %v2351 = vadd.f32 %v1846, %v2201
      %v2352 = vadd.f32 %v1851, %v2206
      %v2353 = vadd.f32 %v1856, %v2211
      %v2354 = vadd.f32 %v1861, %v2216
      %v2355 = vadd.f32 %v1866, %v2221
      %v2356 = vadd.f32 %v1871, %v2226
      %v2357 = vadd.f32 %v1876, %v2231
      %v2358 = vadd.f32 %v1881, %v2236
      %v2359 = vadd.f32 %v1886, %v2241
      %v2360 = vadd.f32 %v1891, %v2246
      %v2361 = vadd.f32 %v1896, %v2251
      %v2362 = vadd.f32 %v1901, %v2256
      %v2363 = vadd.f32 %v1906, %v2261
      %v2364 = vadd.f32 %v1911, %v2266
      %v2365 = vadd.f32 %v1916, %v2271
      %v2366 = vadd.f32 %v1921, %v2276
      %v2367 = vadd.f32 %v1926, %v2281
      %v2368 = vadd.f32 %v1931, %v2286
      %v2369 = vadd.f32 %v1936, %v2291
      %v2370 = vadd.f32 %v1941, %v2296
      %v2371 = vadd.f32 %v1946, %v2301
      %v2372 = vadd.f32 %v1951, %v2306
      %v2373 = vadd.f32 %v1956, %v2311
      %v2374 = vadd.f32 %v1961, %v2316
      %v2375 = vadd.f32 %v1966, %v2321
      %v2376 = vadd.f32 %v1971, %v2326
      %v2377 = vadd.f32 %v1976, %v2331
      %v2378 = vadd.f32 %v1981, %v2336
      %v2379 = vadd.f32 %v1986, %v2341
      %v2380 = vadd.f32 %v1991, %v2346
      %v2381 = vld [vmem:[%s1220 + $0x7] sm:$0xff]
      %v2382 = vld [vmem:[%s1220 + $0xf] sm:$0xff]
      %v2383 = vld [vmem:[%s1220 + $0x27] sm:$0xff]
      %v2384 = vld [vmem:[%s1220 + $0x2f] sm:$0xff]
      %v2385 = vld [vmem:[%s1220 + $0x47] sm:$0xff]
      %v2386 = vld [vmem:[%s1220 + $0x4f] sm:$0xff]
      %v2387 = vld [vmem:[%s1220 + $0x67] sm:$0xff]
      %v2388 = vld [vmem:[%s1220 + $0x6f] sm:$0xff]
      %v2389 = vld [vmem:[%s1220 + $0x87] sm:$0xff]
      %v2390 = vld [vmem:[%s1220 + $0x8f] sm:$0xff]
      %v2391 = vld [vmem:[%s1220 + $0xa7] sm:$0xff]
      %v2392 = vld [vmem:[%s1220 + $0xaf] sm:$0xff]
      %v2393 = vld [vmem:[%s1220 + $0xc7] sm:$0xff]
      %v2394 = vld [vmem:[%s1220 + $0xcf] sm:$0xff]
      %v2395 = vld [vmem:[%s1220 + $0xe7] sm:$0xff]
      %v2396 = vld [vmem:[%s1220 + $0xef] sm:$0xff]
      %v2397 = vld [vmem:[%s1220 + $0x107] sm:$0xff]
      %v2398 = vld [vmem:[%s1220 + $0x10f] sm:$0xff]
      %v2399 = vld [vmem:[%s1220 + $0x127] sm:$0xff]
      %v2400 = vld [vmem:[%s1220 + $0x12f] sm:$0xff]
      %v2401 = vld [vmem:[%s1220 + $0x147] sm:$0xff]
      %v2402 = vld [vmem:[%s1220 + $0x14f] sm:$0xff]
      %v2403 = vld [vmem:[%s1220 + $0x167] sm:$0xff]
      %v2404 = vld [vmem:[%s1220 + $0x16f] sm:$0xff]
      %v2405 = vld [vmem:[%s1220 + $0x187] sm:$0xff]
      %v2406 = vld [vmem:[%s1220 + $0x18f] sm:$0xff]
      %v2407 = vld [vmem:[%s1220 + $0x1a7] sm:$0xff]
      %v2408 = vld [vmem:[%s1220 + $0x1af] sm:$0xff]
      %v2409 = vld [vmem:[%s1220 + $0x1c7] sm:$0xff]
      %v2410 = vld [vmem:[%s1220 + $0x1cf] sm:$0xff]
      %v2411 = vld [vmem:[%s1220 + $0x1e7] sm:$0xff]
      %v2412 = vld [vmem:[%s1220 + $0x1ef] sm:$0xff]
      %s2413 = scalar_lea.vmem %s6, 24
      %v2414 = vld [vmem:[%s2413] sm:$0xff]
      %v2416 = vsel %vm517, %v2381, 0
      %v2419 = vsel %vm517, %v2382, 0
      %v2422 = vsel %vm517, %v2383, 0
      %v2425 = vsel %vm517, %v2384, 0
      %v2428 = vsel %vm517, %v2385, 0
      %v2431 = vsel %vm517, %v2386, 0
      %v2434 = vsel %vm517, %v2387, 0
      %v2437 = vsel %vm517, %v2388, 0
      %v2440 = vsel %vm517, %v2389, 0
      %v2443 = vsel %vm517, %v2390, 0
      %v2446 = vsel %vm517, %v2391, 0
      %v2449 = vsel %vm517, %v2392, 0
      %v2452 = vsel %vm517, %v2393, 0
      %v2455 = vsel %vm517, %v2394, 0
      %v2458 = vsel %vm517, %v2395, 0
      %v2461 = vsel %vm517, %v2396, 0
      %v2464 = vsel %vm517, %v2397, 0
      %v2467 = vsel %vm517, %v2398, 0
      %v2470 = vsel %vm517, %v2399, 0
      %v2473 = vsel %vm517, %v2400, 0
      %v2476 = vsel %vm517, %v2401, 0
      %v2479 = vsel %vm517, %v2402, 0
      %v2482 = vsel %vm517, %v2403, 0
      %v2485 = vsel %vm517, %v2404, 0
      %v2488 = vsel %vm517, %v2405, 0
      %v2491 = vsel %vm517, %v2406, 0
      %v2494 = vsel %vm517, %v2407, 0
      %v2497 = vsel %vm517, %v2408, 0
      %v2500 = vsel %vm517, %v2409, 0
      %v2503 = vsel %vm517, %v2410, 0
      %v2506 = vsel %vm517, %v2411, 0
      %v2509 = vsel %vm517, %v2412, 0
      %2511 = vmatprep.subr.mxu0 0.0
      %2512 = vmatpush1.msra.mxu0 %v2414
      %2513 = vmatprep.subr.mxu0 0.0
      %2514 = vmatpush1.msra.mxu0 0.0
      %2515 = vmatprep.subr.mxu0 0.0
      %2516 = vmatpush1.msra.mxu0 0.0
      %2517 = vmatprep.subr.mxu0 0.0
      %2518 = vmatpush1.msra.mxu0 0.0
      %2519 = vmatprep.subr.mxu0 0.0
      %2520 = vmatpush1.msra.mxu0 0.0
      %2521 = vmatprep.subr.mxu0 0.0
      %2522 = vmatpush1.msra.mxu0 0.0
      %2523 = vmatprep.subr.mxu0 0.0
      %2524 = vmatpush1.msra.mxu0 0.0
      %2525 = vmatprep.subr.mxu0 0.0
      %2526 = vmatpush1.msra.mxu0 0.0
      %2527 = vmatprep.subr.mxu0 0.0
      %2528 = vmatpush1.msra.mxu0 0.0
      %2529 = vmatprep.subr.mxu0 0.0
      %2530 = vmatpush1.msra.mxu0 0.0
      %2531 = vmatprep.subr.mxu0 0.0
      %2532 = vmatpush1.msra.mxu0 0.0
      %2533 = vmatprep.subr.mxu0 0.0
      %2534 = vmatpush1.msra.mxu0 0.0
      %2535 = vmatprep.subr.mxu0 0.0
      %2536 = vmatpush1.msra.mxu0 0.0
      %2537 = vmatprep.subr.mxu0 0.0
      %2538 = vmatpush1.msra.mxu0 0.0
      %2539 = vmatprep.subr.mxu0 0.0
      %2540 = vmatpush1.msra.mxu0 0.0
      %2541 = vmatprep.subr.mxu0 0.0
      %2542 = vmatpush1.msra.mxu0 0.0
      %2543 = vmatprep.subr.mxu0 0.0
      %2544 = vmatpush1.msra.mxu0 0.0
      %2545 = vmatprep.subr.mxu0 0.0
      %2546 = vmatpush1.msra.mxu0 0.0
      %2547 = vmatprep.subr.mxu0 0.0
      %2548 = vmatpush1.msra.mxu0 0.0
      %2549 = vmatprep.subr.mxu0 0.0
      %2550 = vmatpush1.msra.mxu0 0.0
      %2551 = vmatprep.subr.mxu0 0.0
      %2552 = vmatpush1.msra.mxu0 0.0
      %2553 = vmatprep.subr.mxu0 0.0
      %2554 = vmatpush1.msra.mxu0 0.0
      %2555 = vmatprep.subr.mxu0 0.0
      %2556 = vmatpush1.msra.mxu0 0.0
      %2557 = vmatprep.subr.mxu0 0.0
      %2558 = vmatpush1.msra.mxu0 0.0
      %2559 = vmatprep.subr.mxu0 0.0
      %2560 = vmatpush1.msra.mxu0 0.0
      %2561 = vmatprep.subr.mxu0 0.0
      %2562 = vmatpush1.msra.mxu0 0.0
      %2563 = vmatprep.subr.mxu0 0.0
      %2564 = vmatpush1.msra.mxu0 0.0
      %2565 = vmatprep.subr.mxu0 0.0
      %2566 = vmatpush1.msra.mxu0 0.0
      %2567 = vmatprep.subr.mxu0 0.0
      %2568 = vmatpush1.msra.mxu0 0.0
      %2569 = vmatprep.subr.mxu0 0.0
      %2570 = vmatpush1.msra.mxu0 0.0
      %2571 = vmatprep.subr.mxu0 0.0
      %2572 = vmatpush1.msra.mxu0 0.0
      %2573 = vmatprep.subr.mxu0 0.0
      %2574 = vmatpush1.msra.mxu0 0.0
      %2575 = vmatprep.mubr.f32.mxu0 0.0
      %2576 = vmatmul.mubr.f32.gmra.mrb[0].mxu0 %v2416
      %v2577 = vpop.f32.mrb[0].mxu0
      %v2578 = vadd.f32 0.0, %v2577
      %v2579 = vpop.f32.mrb[0].mxu0
      %2580 = vmatprep.mubr.f32.mxu0 0.0
      %2581 = vmatmul.mubr.f32.gmra.mrb[0].mxu0 %v2419
      %v2582 = vpop.f32.mrb[0].mxu0
      %v2583 = vadd.f32 0.0, %v2582
      %v2584 = vpop.f32.mrb[0].mxu0
      %2585 = vmatprep.mubr.f32.mxu0 0.0
      %2586 = vmatmul.mubr.f32.gmra.mrb[0].mxu0 %v2422
      %v2587 = vpop.f32.mrb[0].mxu0
      %v2588 = vadd.f32 0.0, %v2587
      %v2589 = vpop.f32.mrb[0].mxu0
      %2590 = vmatprep.mubr.f32.mxu0 0.0
      %2591 = vmatmul.mubr.f32.gmra.mrb[0].mxu0 %v2425
      %v2592 = vpop.f32.mrb[0].mxu0
      %v2593 = vadd.f32 0.0, %v2592
      %v2594 = vpop.f32.mrb[0].mxu0
      %2595 = vmatprep.mubr.f32.mxu0 0.0
      %2596 = vmatmul.mubr.f32.gmra.mrb[0].mxu0 %v2428
      %v2597 = vpop.f32.mrb[0].mxu0
      %v2598 = vadd.f32 0.0, %v2597
      %v2599 = vpop.f32.mrb[0].mxu0
      %2600 = vmatprep.mubr.f32.mxu0 0.0
      %2601 = vmatmul.mubr.f32.gmra.mrb[0].mxu0 %v2431
      %v2602 = vpop.f32.mrb[0].mxu0
      %v2603 = vadd.f32 0.0, %v2602
      %v2604 = vpop.f32.mrb[0].mxu0
      %2605 = vmatprep.mubr.f32.mxu0 0.0
      %2606 = vmatmul.mubr.f32.gmra.mrb[0].mxu0 %v2434
      %v2607 = vpop.f32.mrb[0].mxu0
      %v2608 = vadd.f32 0.0, %v2607
      %v2609 = vpop.f32.mrb[0].mxu0
      %2610 = vmatprep.mubr.f32.mxu0 0.0
      %2611 = vmatmul.mubr.f32.gmra.mrb[0].mxu0 %v2437
      %v2612 = vpop.f32.mrb[0].mxu0
      %v2613 = vadd.f32 0.0, %v2612
      %v2614 = vpop.f32.mrb[0].mxu0
      %2615 = vmatprep.mubr.f32.mxu0 0.0
      %2616 = vmatmul.mubr.f32.gmra.mrb[0].mxu0 %v2440
      %v2617 = vpop.f32.mrb[0].mxu0
      %v2618 = vadd.f32 0.0, %v2617
      %v2619 = vpop.f32.mrb[0].mxu0
      %2620 = vmatprep.mubr.f32.mxu0 0.0
      %2621 = vmatmul.mubr.f32.gmra.mrb[0].mxu0 %v2443
      %v2622 = vpop.f32.mrb[0].mxu0
      %v2623 = vadd.f32 0.0, %v2622
      %v2624 = vpop.f32.mrb[0].mxu0
      %2625 = vmatprep.mubr.f32.mxu0 0.0
      %2626 = vmatmul.mubr.f32.gmra.mrb[0].mxu0 %v2446
      %v2627 = vpop.f32.mrb[0].mxu0
      %v2628 = vadd.f32 0.0, %v2627
      %v2629 = vpop.f32.mrb[0].mxu0
      %2630 = vmatprep.mubr.f32.mxu0 0.0
      %2631 = vmatmul.mubr.f32.gmra.mrb[0].mxu0 %v2449
      %v2632 = vpop.f32.mrb[0].mxu0
      %v2633 = vadd.f32 0.0, %v2632
      %v2634 = vpop.f32.mrb[0].mxu0
      %2635 = vmatprep.mubr.f32.mxu0 0.0
      %2636 = vmatmul.mubr.f32.gmra.mrb[0].mxu0 %v2452
      %v2637 = vpop.f32.mrb[0].mxu0
      %v2638 = vadd.f32 0.0, %v2637
      %v2639 = vpop.f32.mrb[0].mxu0
      %2640 = vmatprep.mubr.f32.mxu0 0.0
      %2641 = vmatmul.mubr.f32.gmra.mrb[0].mxu0 %v2455
      %v2642 = vpop.f32.mrb[0].mxu0
      %v2643 = vadd.f32 0.0, %v2642
      %v2644 = vpop.f32.mrb[0].mxu0
      %2645 = vmatprep.mubr.f32.mxu0 0.0
      %2646 = vmatmul.mubr.f32.gmra.mrb[0].mxu0 %v2458
      %v2647 = vpop.f32.mrb[0].mxu0
      %v2648 = vadd.f32 0.0, %v2647
      %v2649 = vpop.f32.mrb[0].mxu0
      %2650 = vmatprep.mubr.f32.mxu0 0.0
      %2651 = vmatmul.mubr.f32.gmra.mrb[0].mxu0 %v2461
      %v2652 = vpop.f32.mrb[0].mxu0
      %v2653 = vadd.f32 0.0, %v2652
      %v2654 = vpop.f32.mrb[0].mxu0
      %2655 = vmatprep.mubr.f32.mxu0 0.0
      %2656 = vmatmul.mubr.f32.gmra.mrb[0].mxu0 %v2464
      %v2657 = vpop.f32.mrb[0].mxu0
      %v2658 = vadd.f32 0.0, %v2657
      %v2659 = vpop.f32.mrb[0].mxu0
      %2660 = vmatprep.mubr.f32.mxu0 0.0
      %2661 = vmatmul.mubr.f32.gmra.mrb[0].mxu0 %v2467
      %v2662 = vpop.f32.mrb[0].mxu0
      %v2663 = vadd.f32 0.0, %v2662
      %v2664 = vpop.f32.mrb[0].mxu0
      %2665 = vmatprep.mubr.f32.mxu0 0.0
      %2666 = vmatmul.mubr.f32.gmra.mrb[0].mxu0 %v2470
      %v2667 = vpop.f32.mrb[0].mxu0
      %v2668 = vadd.f32 0.0, %v2667
      %v2669 = vpop.f32.mrb[0].mxu0
      %2670 = vmatprep.mubr.f32.mxu0 0.0
      %2671 = vmatmul.mubr.f32.gmra.mrb[0].mxu0 %v2473
      %v2672 = vpop.f32.mrb[0].mxu0
      %v2673 = vadd.f32 0.0, %v2672
      %v2674 = vpop.f32.mrb[0].mxu0
      %2675 = vmatprep.mubr.f32.mxu0 0.0
      %2676 = vmatmul.mubr.f32.gmra.mrb[0].mxu0 %v2476
      %v2677 = vpop.f32.mrb[0].mxu0
      %v2678 = vadd.f32 0.0, %v2677
      %v2679 = vpop.f32.mrb[0].mxu0
      %2680 = vmatprep.mubr.f32.mxu0 0.0
      %2681 = vmatmul.mubr.f32.gmra.mrb[0].mxu0 %v2479
      %v2682 = vpop.f32.mrb[0].mxu0
      %v2683 = vadd.f32 0.0, %v2682
      %v2684 = vpop.f32.mrb[0].mxu0
      %2685 = vmatprep.mubr.f32.mxu0 0.0
      %2686 = vmatmul.mubr.f32.gmra.mrb[0].mxu0 %v2482
      %v2687 = vpop.f32.mrb[0].mxu0
      %v2688 = vadd.f32 0.0, %v2687
      %v2689 = vpop.f32.mrb[0].mxu0
      %2690 = vmatprep.mubr.f32.mxu0 0.0
      %2691 = vmatmul.mubr.f32.gmra.mrb[0].mxu0 %v2485
      %v2692 = vpop.f32.mrb[0].mxu0
      %v2693 = vadd.f32 0.0, %v2692
      %v2694 = vpop.f32.mrb[0].mxu0
      %2695 = vmatprep.mubr.f32.mxu0 0.0
      %2696 = vmatmul.mubr.f32.gmra.mrb[0].mxu0 %v2488
      %v2697 = vpop.f32.mrb[0].mxu0
      %v2698 = vadd.f32 0.0, %v2697
      %v2699 = vpop.f32.mrb[0].mxu0
      %2700 = vmatprep.mubr.f32.mxu0 0.0
      %2701 = vmatmul.mubr.f32.gmra.mrb[0].mxu0 %v2491
      %v2702 = vpop.f32.mrb[0].mxu0
      %v2703 = vadd.f32 0.0, %v2702
      %v2704 = vpop.f32.mrb[0].mxu0
      %2705 = vmatprep.mubr.f32.mxu0 0.0
      %2706 = vmatmul.mubr.f32.gmra.mrb[0].mxu0 %v2494
      %v2707 = vpop.f32.mrb[0].mxu0
      %v2708 = vadd.f32 0.0, %v2707
      %v2709 = vpop.f32.mrb[0].mxu0
      %2710 = vmatprep.mubr.f32.mxu0 0.0
      %2711 = vmatmul.mubr.f32.gmra.mrb[0].mxu0 %v2497
      %v2712 = vpop.f32.mrb[0].mxu0
      %v2713 = vadd.f32 0.0, %v2712
      %v2714 = vpop.f32.mrb[0].mxu0
      %2715 = vmatprep.mubr.f32.mxu0 0.0
      %2716 = vmatmul.mubr.f32.gmra.mrb[0].mxu0 %v2500
      %v2717 = vpop.f32.mrb[0].mxu0
      %v2718 = vadd.f32 0.0, %v2717
      %v2719 = vpop.f32.mrb[0].mxu0
      %2720 = vmatprep.mubr.f32.mxu0 0.0
      %2721 = vmatmul.mubr.f32.gmra.mrb[0].mxu0 %v2503
      %v2722 = vpop.f32.mrb[0].mxu0
      %v2723 = vadd.f32 0.0, %v2722
      %v2724 = vpop.f32.mrb[0].mxu0
      %2725 = vmatprep.mubr.f32.mxu0 0.0
      %2726 = vmatmul.mubr.f32.gmra.mrb[0].mxu0 %v2506
      %v2727 = vpop.f32.mrb[0].mxu0
      %v2728 = vadd.f32 0.0, %v2727
      %v2729 = vpop.f32.mrb[0].mxu0
      %2730 = vmatprep.mubr.f32.mxu0 0.0
      %2731 = vmatmul.mubr.f32.gmra.mrb[0].mxu0 %v2509
      %v2732 = vpop.f32.mrb[0].mxu0
      %v2733 = vadd.f32 0.0, %v2732
      %v2734 = vpop.f32.mrb[0].mxu0
      %2735 = vdwg.mxu0
      %v2736 = vadd.f32 %v2349, %v2578
      %v2737 = vadd.f32 %v2350, %v2583
      %v2738 = vadd.f32 %v2351, %v2588
      %v2739 = vadd.f32 %v2352, %v2593
      %v2740 = vadd.f32 %v2353, %v2598
      %v2741 = vadd.f32 %v2354, %v2603
      %v2742 = vadd.f32 %v2355, %v2608
      %v2743 = vadd.f32 %v2356, %v2613
      %v2744 = vadd.f32 %v2357, %v2618
      %v2745 = vadd.f32 %v2358, %v2623
      %v2746 = vadd.f32 %v2359, %v2628
      %v2747 = vadd.f32 %v2360, %v2633
      %v2748 = vadd.f32 %v2361, %v2638
      %v2749 = vadd.f32 %v2362, %v2643
      %v2750 = vadd.f32 %v2363, %v2648
      %v2751 = vadd.f32 %v2364, %v2653
      %v2752 = vadd.f32 %v2365, %v2658
      %v2753 = vadd.f32 %v2366, %v2663
      %v2754 = vadd.f32 %v2367, %v2668
      %v2755 = vadd.f32 %v2368, %v2673
      %v2756 = vadd.f32 %v2369, %v2678
      %v2757 = vadd.f32 %v2370, %v2683
      %v2758 = vadd.f32 %v2371, %v2688
      %v2759 = vadd.f32 %v2372, %v2693
      %v2760 = vadd.f32 %v2373, %v2698
      %v2761 = vadd.f32 %v2374, %v2703
      %v2762 = vadd.f32 %v2375, %v2708
      %v2763 = vadd.f32 %v2376, %v2713
      %v2764 = vadd.f32 %v2377, %v2718
      %v2765 = vadd.f32 %v2378, %v2723
      %v2766 = vadd.f32 %v2379, %v2728
      %v2767 = vadd.f32 %v2380, %v2733
      %v2768 = vld [vmem:[%s1220 + $0x8] sm:$0xff]
      %v2769 = vld [vmem:[%s1220 + $0x10] sm:$0xff]
      %v2770 = vld [vmem:[%s1220 + $0x28] sm:$0xff]
      %v2771 = vld [vmem:[%s1220 + $0x30] sm:$0xff]
      %v2772 = vld [vmem:[%s1220 + $0x48] sm:$0xff]
      %v2773 = vld [vmem:[%s1220 + $0x50] sm:$0xff]
      %v2774 = vld [vmem:[%s1220 + $0x68] sm:$0xff]
      %v2775 = vld [vmem:[%s1220 + $0x70] sm:$0xff]
      %v2776 = vld [vmem:[%s1220 + $0x88] sm:$0xff]
      %v2777 = vld [vmem:[%s1220 + $0x90] sm:$0xff]
      %v2778 = vld [vmem:[%s1220 + $0xa8] sm:$0xff]
      %v2779 = vld [vmem:[%s1220 + $0xb0] sm:$0xff]
      %v2780 = vld [vmem:[%s1220 + $0xc8] sm:$0xff]
      %v2781 = vld [vmem:[%s1220 + $0xd0] sm:$0xff]
      %v2782 = vld [vmem:[%s1220 + $0xe8] sm:$0xff]
      %v2783 = vld [vmem:[%s1220 + $0xf0] sm:$0xff]
      %v2784 = vld [vmem:[%s1220 + $0x108] sm:$0xff]
      %v2785 = vld [vmem:[%s1220 + $0x110] sm:$0xff]
      %v2786 = vld [vmem:[%s1220 + $0x128] sm:$0xff]
      %v2787 = vld [vmem:[%s1220 + $0x130] sm:$0xff]
      %v2788 = vld [vmem:[%s1220 + $0x148] sm:$0xff]
      %v2789 = vld [vmem:[%s1220 + $0x150] sm:$0xff]
      %v2790 = vld [vmem:[%s1220 + $0x168] sm:$0xff]
      %v2791 = vld [vmem:[%s1220 + $0x170] sm:$0xff]
      %v2792 = vld [vmem:[%s1220 + $0x188] sm:$0xff]
      %v2793 = vld [vmem:[%s1220 + $0x190] sm:$0xff]
      %v2794 = vld [vmem:[%s1220 + $0x1a8] sm:$0xff]
      %v2795 = vld [vmem:[%s1220 + $0x1b0] sm:$0xff]
      %v2796 = vld [vmem:[%s1220 + $0x1c8] sm:$0xff]
      %v2797 = vld [vmem:[%s1220 + $0x1d0] sm:$0xff]
      %v2798 = vld [vmem:[%s1220 + $0x1e8] sm:$0xff]
      %v2799 = vld [vmem:[%s1220 + $0x1f0] sm:$0xff]
      %s2800 = scalar_lea.vmem %s6, 32
      %v2801 = vld [vmem:[%s2800] sm:$0xff]
      %v2803 = vsel %vm517, %v2768, 0
      %v2806 = vsel %vm517, %v2769, 0
      %v2809 = vsel %vm517, %v2770, 0
      %v2812 = vsel %vm517, %v2771, 0
      %v2815 = vsel %vm517, %v2772, 0
      %v2818 = vsel %vm517, %v2773, 0
      %v2821 = vsel %vm517, %v2774, 0
      %v2824 = vsel %vm517, %v2775, 0
      %v2827 = vsel %vm517, %v2776, 0
      %v2830 = vsel %vm517, %v2777, 0
      %v2833 = vsel %vm517, %v2778, 0
      %v2836 = vsel %vm517, %v2779, 0
      %v2839 = vsel %vm517, %v2780, 0
      %v2842 = vsel %vm517, %v2781, 0
      %v2845 = vsel %vm517, %v2782, 0
      %v2848 = vsel %vm517, %v2783, 0
      %v2851 = vsel %vm517, %v2784, 0
      %v2854 = vsel %vm517, %v2785, 0
      %v2857 = vsel %vm517, %v2786, 0
      %v2860 = vsel %vm517, %v2787, 0
      %v2863 = vsel %vm517, %v2788, 0
      %v2866 = vsel %vm517, %v2789, 0
      %v2869 = vsel %vm517, %v2790, 0
      %v2872 = vsel %vm517, %v2791, 0
      %v2875 = vsel %vm517, %v2792, 0
      %v2878 = vsel %vm517, %v2793, 0
      %v2881 = vsel %vm517, %v2794, 0
      %v2884 = vsel %vm517, %v2795, 0
      %v2887 = vsel %vm517, %v2796, 0
      %v2890 = vsel %vm517, %v2797, 0
      %v2893 = vsel %vm517, %v2798, 0
      %v2896 = vsel %vm517, %v2799, 0
      %2898 = vmatprep.subr.mxu0 0.0
      %2899 = vmatpush1.msra.mxu0 %v2801
      %2900 = vmatprep.subr.mxu0 0.0
      %2901 = vmatpush1.msra.mxu0 0.0
      %2902 = vmatprep.subr.mxu0 0.0
      %2903 = vmatpush1.msra.mxu0 0.0
      %2904 = vmatprep.subr.mxu0 0.0
      %2905 = vmatpush1.msra.mxu0 0.0
      %2906 = vmatprep.subr.mxu0 0.0
      %2907 = vmatpush1.msra.mxu0 0.0
      %2908 = vmatprep.subr.mxu0 0.0
      %2909 = vmatpush1.msra.mxu0 0.0
      %2910 = vmatprep.subr.mxu0 0.0
      %2911 = vmatpush1.msra.mxu0 0.0
      %2912 = vmatprep.subr.mxu0 0.0
      %2913 = vmatpush1.msra.mxu0 0.0
      %2914 = vmatprep.subr.mxu0 0.0
      %2915 = vmatpush1.msra.mxu0 0.0
      %2916 = vmatprep.subr.mxu0 0.0
      %2917 = vmatpush1.msra.mxu0 0.0
      %2918 = vmatprep.subr.mxu0 0.0
      %2919 = vmatpush1.msra.mxu0 0.0
      %2920 = vmatprep.subr.mxu0 0.0
      %2921 = vmatpush1.msra.mxu0 0.0
      %2922 = vmatprep.subr.mxu0 0.0
      %2923 = vmatpush1.msra.mxu0 0.0
      %2924 = vmatprep.subr.mxu0 0.0
      %2925 = vmatpush1.msra.mxu0 0.0
      %2926 = vmatprep.subr.mxu0 0.0
      %2927 = vmatpush1.msra.mxu0 0.0
      %2928 = vmatprep.subr.mxu0 0.0
      %2929 = vmatpush1.msra.mxu0 0.0
      %2930 = vmatprep.subr.mxu0 0.0
      %2931 = vmatpush1.msra.mxu0 0.0
      %2932 = vmatprep.subr.mxu0 0.0
      %2933 = vmatpush1.msra.mxu0 0.0
      %2934 = vmatprep.subr.mxu0 0.0
      %2935 = vmatpush1.msra.mxu0 0.0
      %2936 = vmatprep.subr.mxu0 0.0
      %2937 = vmatpush1.msra.mxu0 0.0
      %2938 = vmatprep.subr.mxu0 0.0
      %2939 = vmatpush1.msra.mxu0 0.0
      %2940 = vmatprep.subr.mxu0 0.0
      %2941 = vmatpush1.msra.mxu0 0.0
      %2942 = vmatprep.subr.mxu0 0.0
      %2943 = vmatpush1.msra.mxu0 0.0
      %2944 = vmatprep.subr.mxu0 0.0
      %2945 = vmatpush1.msra.mxu0 0.0
      %2946 = vmatprep.subr.mxu0 0.0
      %2947 = vmatpush1.msra.mxu0 0.0
      %2948 = vmatprep.subr.mxu0 0.0
      %2949 = vmatpush1.msra.mxu0 0.0
      %2950 = vmatprep.subr.mxu0 0.0
      %2951 = vmatpush1.msra.mxu0 0.0
      %2952 = vmatprep.subr.mxu0 0.0
      %2953 = vmatpush1.msra.mxu0 0.0
      %2954 = vmatprep.subr.mxu0 0.0
      %2955 = vmatpush1.msra.mxu0 0.0
      %2956 = vmatprep.subr.mxu0 0.0
      %2957 = vmatpush1.msra.mxu0 0.0
      %2958 = vmatprep.subr.mxu0 0.0
      %2959 = vmatpush1.msra.mxu0 0.0
      %2960 = vmatprep.subr.mxu0 0.0
      %2961 = vmatpush1.msra.mxu0 0.0
      %2962 = vmatprep.mubr.f32.mxu0 0.0
      %2963 = vmatmul.mubr.f32.gmra.mrb[0].mxu0 %v2803
      %v2964 = vpop.f32.mrb[0].mxu0
      %v2965 = vadd.f32 0.0, %v2964
      %v2966 = vpop.f32.mrb[0].mxu0
      %2967 = vmatprep.mubr.f32.mxu0 0.0
      %2968 = vmatmul.mubr.f32.gmra.mrb[0].mxu0 %v2806
      %v2969 = vpop.f32.mrb[0].mxu0
      %v2970 = vadd.f32 0.0, %v2969
      %v2971 = vpop.f32.mrb[0].mxu0
      %2972 = vmatprep.mubr.f32.mxu0 0.0
      %2973 = vmatmul.mubr.f32.gmra.mrb[0].mxu0 %v2809
      %v2974 = vpop.f32.mrb[0].mxu0
      %v2975 = vadd.f32 0.0, %v2974
      %v2976 = vpop.f32.mrb[0].mxu0
      %2977 = vmatprep.mubr.f32.mxu0 0.0
      %2978 = vmatmul.mubr.f32.gmra.mrb[0].mxu0 %v2812
      %v2979 = vpop.f32.mrb[0].mxu0
      %v2980 = vadd.f32 0.0, %v2979
      %v2981 = vpop.f32.mrb[0].mxu0
      %2982 = vmatprep.mubr.f32.mxu0 0.0
      %2983 = vmatmul.mubr.f32.gmra.mrb[0].mxu0 %v2815
      %v2984 = vpop.f32.mrb[0].mxu0
      %v2985 = vadd.f32 0.0, %v2984
      %v2986 = vpop.f32.mrb[0].mxu0
      %2987 = vmatprep.mubr.f32.mxu0 0.0
      %2988 = vmatmul.mubr.f32.gmra.mrb[0].mxu0 %v2818
      %v2989 = vpop.f32.mrb[0].mxu0
      %v2990 = vadd.f32 0.0, %v2989
      %v2991 = vpop.f32.mrb[0].mxu0
      %2992 = vmatprep.mubr.f32.mxu0 0.0
      %2993 = vmatmul.mubr.f32.gmra.mrb[0].mxu0 %v2821
      %v2994 = vpop.f32.mrb[0].mxu0
      %v2995 = vadd.f32 0.0, %v2994
      %v2996 = vpop.f32.mrb[0].mxu0
      %2997 = vmatprep.mubr.f32.mxu0 0.0
      %2998 = vmatmul.mubr.f32.gmra.mrb[0].mxu0 %v2824
      %v2999 = vpop.f32.mrb[0].mxu0
      %v3000 = vadd.f32 0.0, %v2999
      %v3001 = vpop.f32.mrb[0].mxu0
      %3002 = vmatprep.mubr.f32.mxu0 0.0
      %3003 = vmatmul.mubr.f32.gmra.mrb[0].mxu0 %v2827
      %v3004 = vpop.f32.mrb[0].mxu0
      %v3005 = vadd.f32 0.0, %v3004
      %v3006 = vpop.f32.mrb[0].mxu0
      %3007 = vmatprep.mubr.f32.mxu0 0.0
      %3008 = vmatmul.mubr.f32.gmra.mrb[0].mxu0 %v2830
      %v3009 = vpop.f32.mrb[0].mxu0
      %v3010 = vadd.f32 0.0, %v3009
      %v3011 = vpop.f32.mrb[0].mxu0
      %3012 = vmatprep.mubr.f32.mxu0 0.0
      %3013 = vmatmul.mubr.f32.gmra.mrb[0].mxu0 %v2833
      %v3014 = vpop.f32.mrb[0].mxu0
      %v3015 = vadd.f32 0.0, %v3014
      %v3016 = vpop.f32.mrb[0].mxu0
      %3017 = vmatprep.mubr.f32.mxu0 0.0
      %3018 = vmatmul.mubr.f32.gmra.mrb[0].mxu0 %v2836
      %v3019 = vpop.f32.mrb[0].mxu0
      %v3020 = vadd.f32 0.0, %v3019
      %v3021 = vpop.f32.mrb[0].mxu0
      %3022 = vmatprep.mubr.f32.mxu0 0.0
      %3023 = vmatmul.mubr.f32.gmra.mrb[0].mxu0 %v2839
      %v3024 = vpop.f32.mrb[0].mxu0
      %v3025 = vadd.f32 0.0, %v3024
      %v3026 = vpop.f32.mrb[0].mxu0
      %3027 = vmatprep.mubr.f32.mxu0 0.0
      %3028 = vmatmul.mubr.f32.gmra.mrb[0].mxu0 %v2842
      %v3029 = vpop.f32.mrb[0].mxu0
      %v3030 = vadd.f32 0.0, %v3029
      %v3031 = vpop.f32.mrb[0].mxu0
      %3032 = vmatprep.mubr.f32.mxu0 0.0
      %3033 = vmatmul.mubr.f32.gmra.mrb[0].mxu0 %v2845
      %v3034 = vpop.f32.mrb[0].mxu0
      %v3035 = vadd.f32 0.0, %v3034
      %v3036 = vpop.f32.mrb[0].mxu0
      %3037 = vmatprep.mubr.f32.mxu0 0.0
      %3038 = vmatmul.mubr.f32.gmra.mrb[0].mxu0 %v2848
      %v3039 = vpop.f32.mrb[0].mxu0
      %v3040 = vadd.f32 0.0, %v3039
      %v3041 = vpop.f32.mrb[0].mxu0
      %3042 = vmatprep.mubr.f32.mxu0 0.0
      %3043 = vmatmul.mubr.f32.gmra.mrb[0].mxu0 %v2851
      %v3044 = vpop.f32.mrb[0].mxu0
      %v3045 = vadd.f32 0.0, %v3044
      %v3046 = vpop.f32.mrb[0].mxu0
      %3047 = vmatprep.mubr.f32.mxu0 0.0
      %3048 = vmatmul.mubr.f32.gmra.mrb[0].mxu0 %v2854
      %v3049 = vpop.f32.mrb[0].mxu0
      %v3050 = vadd.f32 0.0, %v3049
      %v3051 = vpop.f32.mrb[0].mxu0
      %3052 = vmatprep.mubr.f32.mxu0 0.0
      %3053 = vmatmul.mubr.f32.gmra.mrb[0].mxu0 %v2857
      %v3054 = vpop.f32.mrb[0].mxu0
      %v3055 = vadd.f32 0.0, %v3054
      %v3056 = vpop.f32.mrb[0].mxu0
      %3057 = vmatprep.mubr.f32.mxu0 0.0
      %3058 = vmatmul.mubr.f32.gmra.mrb[0].mxu0 %v2860
      %v3059 = vpop.f32.mrb[0].mxu0
      %v3060 = vadd.f32 0.0, %v3059
      %v3061 = vpop.f32.mrb[0].mxu0
      %3062 = vmatprep.mubr.f32.mxu0 0.0
      %3063 = vmatmul.mubr.f32.gmra.mrb[0].mxu0 %v2863
      %v3064 = vpop.f32.mrb[0].mxu0
      %v3065 = vadd.f32 0.0, %v3064
      %v3066 = vpop.f32.mrb[0].mxu0
      %3067 = vmatprep.mubr.f32.mxu0 0.0
      %3068 = vmatmul.mubr.f32.gmra.mrb[0].mxu0 %v2866
      %v3069 = vpop.f32.mrb[0].mxu0
      %v3070 = vadd.f32 0.0, %v3069
      %v3071 = vpop.f32.mrb[0].mxu0
      %3072 = vmatprep.mubr.f32.mxu0 0.0
      %3073 = vmatmul.mubr.f32.gmra.mrb[0].mxu0 %v2869
      %v3074 = vpop.f32.mrb[0].mxu0
      %v3075 = vadd.f32 0.0, %v3074
      %v3076 = vpop.f32.mrb[0].mxu0
      %3077 = vmatprep.mubr.f32.mxu0 0.0
      %3078 = vmatmul.mubr.f32.gmra.mrb[0].mxu0 %v2872
      %v3079 = vpop.f32.mrb[0].mxu0
      %v3080 = vadd.f32 0.0, %v3079
      %v3081 = vpop.f32.mrb[0].mxu0
      %3082 = vmatprep.mubr.f32.mxu0 0.0
      %3083 = vmatmul.mubr.f32.gmra.mrb[0].mxu0 %v2875
      %v3084 = vpop.f32.mrb[0].mxu0
      %v3085 = vadd.f32 0.0, %v3084
      %v3086 = vpop.f32.mrb[0].mxu0
      %3087 = vmatprep.mubr.f32.mxu0 0.0
      %3088 = vmatmul.mubr.f32.gmra.mrb[0].mxu0 %v2878
      %v3089 = vpop.f32.mrb[0].mxu0
      %v3090 = vadd.f32 0.0, %v3089
      %v3091 = vpop.f32.mrb[0].mxu0
      %3092 = vmatprep.mubr.f32.mxu0 0.0
      %3093 = vmatmul.mubr.f32.gmra.mrb[0].mxu0 %v2881
      %v3094 = vpop.f32.mrb[0].mxu0
      %v3095 = vadd.f32 0.0, %v3094
      %v3096 = vpop.f32.mrb[0].mxu0
      %3097 = vmatprep.mubr.f32.mxu0 0.0
      %3098 = vmatmul.mubr.f32.gmra.mrb[0].mxu0 %v2884
      %v3099 = vpop.f32.mrb[0].mxu0
      %v3100 = vadd.f32 0.0, %v3099
      %v3101 = vpop.f32.mrb[0].mxu0
      %3102 = vmatprep.mubr.f32.mxu0 0.0
      %3103 = vmatmul.mubr.f32.gmra.mrb[0].mxu0 %v2887
      %v3104 = vpop.f32.mrb[0].mxu0
      %v3105 = vadd.f32 0.0, %v3104
      %v3106 = vpop.f32.mrb[0].mxu0
      %3107 = vmatprep.mubr.f32.mxu0 0.0
      %3108 = vmatmul.mubr.f32.gmra.mrb[0].mxu0 %v2890
      %v3109 = vpop.f32.mrb[0].mxu0
      %v3110 = vadd.f32 0.0, %v3109
      %v3111 = vpop.f32.mrb[0].mxu0
      %3112 = vmatprep.mubr.f32.mxu0 0.0
      %3113 = vmatmul.mubr.f32.gmra.mrb[0].mxu0 %v2893
      %v3114 = vpop.f32.mrb[0].mxu0
      %v3115 = vadd.f32 0.0, %v3114
      %v3116 = vpop.f32.mrb[0].mxu0
      %3117 = vmatprep.mubr.f32.mxu0 0.0
      %3118 = vmatmul.mubr.f32.gmra.mrb[0].mxu0 %v2896
      %v3119 = vpop.f32.mrb[0].mxu0
      %v3120 = vadd.f32 0.0, %v3119
      %v3121 = vpop.f32.mrb[0].mxu0
      %3122 = vdwg.mxu0
      %v3123 = vadd.f32 %v2736, %v2965
      %v3124 = vadd.f32 %v2737, %v2970
      %v3125 = vadd.f32 %v2738, %v2975
      %v3126 = vadd.f32 %v2739, %v2980
      %v3127 = vadd.f32 %v2740, %v2985
      %v3128 = vadd.f32 %v2741, %v2990
      %v3129 = vadd.f32 %v2742, %v2995
      %v3130 = vadd.f32 %v2743, %v3000
      %v3131 = vadd.f32 %v2744, %v3005
      %v3132 = vadd.f32 %v2745, %v3010
      %v3133 = vadd.f32 %v2746, %v3015
      %v3134 = vadd.f32 %v2747, %v3020
      %v3135 = vadd.f32 %v2748, %v3025
      %v3136 = vadd.f32 %v2749, %v3030
      %v3137 = vadd.f32 %v2750, %v3035
      %v3138 = vadd.f32 %v2751, %v3040
      %v3139 = vadd.f32 %v2752, %v3045
      %v3140 = vadd.f32 %v2753, %v3050
      %v3141 = vadd.f32 %v2754, %v3055
      %v3142 = vadd.f32 %v2755, %v3060
      %v3143 = vadd.f32 %v2756, %v3065
      %v3144 = vadd.f32 %v2757, %v3070
      %v3145 = vadd.f32 %v2758, %v3075
      %v3146 = vadd.f32 %v2759, %v3080
      %v3147 = vadd.f32 %v2760, %v3085
      %v3148 = vadd.f32 %v2761, %v3090
      %v3149 = vadd.f32 %v2762, %v3095
      %v3150 = vadd.f32 %v2763, %v3100
      %v3151 = vadd.f32 %v2764, %v3105
      %v3152 = vadd.f32 %v2765, %v3110
      %v3153 = vadd.f32 %v2766, %v3115
      %v3154 = vadd.f32 %v2767, %v3120
      %v3155 = vld [vmem:[%s1220 + $0x9] sm:$0xff]
      %v3156 = vld [vmem:[%s1220 + $0x11] sm:$0xff]
      %v3157 = vld [vmem:[%s1220 + $0x29] sm:$0xff]
      %v3158 = vld [vmem:[%s1220 + $0x31] sm:$0xff]
      %v3159 = vld [vmem:[%s1220 + $0x49] sm:$0xff]
      %v3160 = vld [vmem:[%s1220 + $0x51] sm:$0xff]
      %v3161 = vld [vmem:[%s1220 + $0x69] sm:$0xff]
      %v3162 = vld [vmem:[%s1220 + $0x71] sm:$0xff]
      %v3163 = vld [vmem:[%s1220 + $0x89] sm:$0xff]
      %v3164 = vld [vmem:[%s1220 + $0x91] sm:$0xff]
      %v3165 = vld [vmem:[%s1220 + $0xa9] sm:$0xff]
      %v3166 = vld [vmem:[%s1220 + $0xb1] sm:$0xff]
      %v3167 = vld [vmem:[%s1220 + $0xc9] sm:$0xff]
      %v3168 = vld [vmem:[%s1220 + $0xd1] sm:$0xff]
      %v3169 = vld [vmem:[%s1220 + $0xe9] sm:$0xff]
      %v3170 = vld [vmem:[%s1220 + $0xf1] sm:$0xff]
      %v3171 = vld [vmem:[%s1220 + $0x109] sm:$0xff]
      %v3172 = vld [vmem:[%s1220 + $0x111] sm:$0xff]
      %v3173 = vld [vmem:[%s1220 + $0x129] sm:$0xff]
      %v3174 = vld [vmem:[%s1220 + $0x131] sm:$0xff]
      %v3175 = vld [vmem:[%s1220 + $0x149] sm:$0xff]
      %v3176 = vld [vmem:[%s1220 + $0x151] sm:$0xff]
      %v3177 = vld [vmem:[%s1220 + $0x169] sm:$0xff]
      %v3178 = vld [vmem:[%s1220 + $0x171] sm:$0xff]
      %v3179 = vld [vmem:[%s1220 + $0x189] sm:$0xff]
      %v3180 = vld [vmem:[%s1220 + $0x191] sm:$0xff]
      %v3181 = vld [vmem:[%s1220 + $0x1a9] sm:$0xff]
      %v3182 = vld [vmem:[%s1220 + $0x1b1] sm:$0xff]
      %v3183 = vld [vmem:[%s1220 + $0x1c9] sm:$0xff]
      %v3184 = vld [vmem:[%s1220 + $0x1d1] sm:$0xff]
      %v3185 = vld [vmem:[%s1220 + $0x1e9] sm:$0xff]
      %v3186 = vld [vmem:[%s1220 + $0x1f1] sm:$0xff]
      %s3187 = scalar_lea.vmem %s6, 40
      %v3188 = vld [vmem:[%s3187] sm:$0xff]
      %v3190 = vsel %vm517, %v3155, 0
      %v3193 = vsel %vm517, %v3156, 0
      %v3196 = vsel %vm517, %v3157, 0
      %v3199 = vsel %vm517, %v3158, 0
      %v3202 = vsel %vm517, %v3159, 0
      %v3205 = vsel %vm517, %v3160, 0
      %v3208 = vsel %vm517, %v3161, 0
      %v3211 = vsel %vm517, %v3162, 0
      %v3214 = vsel %vm517, %v3163, 0
      %v3217 = vsel %vm517, %v3164, 0
      %v3220 = vsel %vm517, %v3165, 0
      %v3223 = vsel %vm517, %v3166, 0
      %v3226 = vsel %vm517, %v3167, 0
      %v3229 = vsel %vm517, %v3168, 0
      %v3232 = vsel %vm517, %v3169, 0
      %v3235 = vsel %vm517, %v3170, 0
      %v3238 = vsel %vm517, %v3171, 0
      %v3241 = vsel %vm517, %v3172, 0
      %v3244 = vsel %vm517, %v3173, 0
      %v3247 = vsel %vm517, %v3174, 0
      %v3250 = vsel %vm517, %v3175, 0
      %v3253 = vsel %vm517, %v3176, 0
      %v3256 = vsel %vm517, %v3177, 0
      %v3259 = vsel %vm517, %v3178, 0
      %v3262 = vsel %vm517, %v3179, 0
      %v3265 = vsel %vm517, %v3180, 0
      %v3268 = vsel %vm517, %v3181, 0
      %v3271 = vsel %vm517, %v3182, 0
      %v3274 = vsel %vm517, %v3183, 0
      %v3277 = vsel %vm517, %v3184, 0
      %v3280 = vsel %vm517, %v3185, 0
      %v3283 = vsel %vm517, %v3186, 0
      %3285 = vmatprep.subr.mxu0 0.0
      %3286 = vmatpush1.msra.mxu0 %v3188
      %3287 = vmatprep.subr.mxu0 0.0
      %3288 = vmatpush1.msra.mxu0 0.0
      %3289 = vmatprep.subr.mxu0 0.0
      %3290 = vmatpush1.msra.mxu0 0.0
      %3291 = vmatprep.subr.mxu0 0.0
      %3292 = vmatpush1.msra.mxu0 0.0
      %3293 = vmatprep.subr.mxu0 0.0
      %3294 = vmatpush1.msra.mxu0 0.0
      %3295 = vmatprep.subr.mxu0 0.0
      %3296 = vmatpush1.msra.mxu0 0.0
      %3297 = vmatprep.subr.mxu0 0.0
      %3298 = vmatpush1.msra.mxu0 0.0
      %3299 = vmatprep.subr.mxu0 0.0
      %3300 = vmatpush1.msra.mxu0 0.0
      %3301 = vmatprep.subr.mxu0 0.0
      %3302 = vmatpush1.msra.mxu0 0.0
      %3303 = vmatprep.subr.mxu0 0.0
      %3304 = vmatpush1.msra.mxu0 0.0
      %3305 = vmatprep.subr.mxu0 0.0
      %3306 = vmatpush1.msra.mxu0 0.0
      %3307 = vmatprep.subr.mxu0 0.0
      %3308 = vmatpush1.msra.mxu0 0.0
      %3309 = vmatprep.subr.mxu0 0.0
      %3310 = vmatpush1.msra.mxu0 0.0
      %3311 = vmatprep.subr.mxu0 0.0
      %3312 = vmatpush1.msra.mxu0 0.0
      %3313 = vmatprep.subr.mxu0 0.0
      %3314 = vmatpush1.msra.mxu0 0.0
      %3315 = vmatprep.subr.mxu0 0.0
      %3316 = vmatpush1.msra.mxu0 0.0
      %3317 = vmatprep.subr.mxu0 0.0
      %3318 = vmatpush1.msra.mxu0 0.0
      %3319 = vmatprep.subr.mxu0 0.0
      %3320 = vmatpush1.msra.mxu0 0.0
      %3321 = vmatprep.subr.mxu0 0.0
      %3322 = vmatpush1.msra.mxu0 0.0
      %3323 = vmatprep.subr.mxu0 0.0
      %3324 = vmatpush1.msra.mxu0 0.0
      %3325 = vmatprep.subr.mxu0 0.0
      %3326 = vmatpush1.msra.mxu0 0.0
      %3327 = vmatprep.subr.mxu0 0.0
      %3328 = vmatpush1.msra.mxu0 0.0
      %3329 = vmatprep.subr.mxu0 0.0
      %3330 = vmatpush1.msra.mxu0 0.0
      %3331 = vmatprep.subr.mxu0 0.0
      %3332 = vmatpush1.msra.mxu0 0.0
      %3333 = vmatprep.subr.mxu0 0.0
      %3334 = vmatpush1.msra.mxu0 0.0
      %3335 = vmatprep.subr.mxu0 0.0
      %3336 = vmatpush1.msra.mxu0 0.0
      %3337 = vmatprep.subr.mxu0 0.0
      %3338 = vmatpush1.msra.mxu0 0.0
      %3339 = vmatprep.subr.mxu0 0.0
      %3340 = vmatpush1.msra.mxu0 0.0
      %3341 = vmatprep.subr.mxu0 0.0
      %3342 = vmatpush1.msra.mxu0 0.0
      %3343 = vmatprep.subr.mxu0 0.0
      %3344 = vmatpush1.msra.mxu0 0.0
      %3345 = vmatprep.subr.mxu0 0.0
      %3346 = vmatpush1.msra.mxu0 0.0
      %3347 = vmatprep.subr.mxu0 0.0
      %3348 = vmatpush1.msra.mxu0 0.0
      %3349 = vmatprep.mubr.f32.mxu0 0.0
      %3350 = vmatmul.mubr.f32.gmra.mrb[0].mxu0 %v3190
      %v3351 = vpop.f32.mrb[0].mxu0
      %v3352 = vadd.f32 0.0, %v3351
      %v3353 = vpop.f32.mrb[0].mxu0
      %3354 = vmatprep.mubr.f32.mxu0 0.0
      %3355 = vmatmul.mubr.f32.gmra.mrb[0].mxu0 %v3193
      %v3356 = vpop.f32.mrb[0].mxu0
      %v3357 = vadd.f32 0.0, %v3356
      %v3358 = vpop.f32.mrb[0].mxu0
      %3359 = vmatprep.mubr.f32.mxu0 0.0
      %3360 = vmatmul.mubr.f32.gmra.mrb[0].mxu0 %v3196
      %v3361 = vpop.f32.mrb[0].mxu0
      %v3362 = vadd.f32 0.0, %v3361
      %v3363 = vpop.f32.mrb[0].mxu0
      %3364 = vmatprep.mubr.f32.mxu0 0.0
      %3365 = vmatmul.mubr.f32.gmra.mrb[0].mxu0 %v3199
      %v3366 = vpop.f32.mrb[0].mxu0
      %v3367 = vadd.f32 0.0, %v3366
      %v3368 = vpop.f32.mrb[0].mxu0
      %3369 = vmatprep.mubr.f32.mxu0 0.0
      %3370 = vmatmul.mubr.f32.gmra.mrb[0].mxu0 %v3202
      %v3371 = vpop.f32.mrb[0].mxu0
      %v3372 = vadd.f32 0.0, %v3371
      %v3373 = vpop.f32.mrb[0].mxu0
      %3374 = vmatprep.mubr.f32.mxu0 0.0
      %3375 = vmatmul.mubr.f32.gmra.mrb[0].mxu0 %v3205
      %v3376 = vpop.f32.mrb[0].mxu0
      %v3377 = vadd.f32 0.0, %v3376
      %v3378 = vpop.f32.mrb[0].mxu0
      %3379 = vmatprep.mubr.f32.mxu0 0.0
      %3380 = vmatmul.mubr.f32.gmra.mrb[0].mxu0 %v3208
      %v3381 = vpop.f32.mrb[0].mxu0
      %v3382 = vadd.f32 0.0, %v3381
      %v3383 = vpop.f32.mrb[0].mxu0
      %3384 = vmatprep.mubr.f32.mxu0 0.0
      %3385 = vmatmul.mubr.f32.gmra.mrb[0].mxu0 %v3211
      %v3386 = vpop.f32.mrb[0].mxu0
      %v3387 = vadd.f32 0.0, %v3386
      %v3388 = vpop.f32.mrb[0].mxu0
      %3389 = vmatprep.mubr.f32.mxu0 0.0
      %3390 = vmatmul.mubr.f32.gmra.mrb[0].mxu0 %v3214
      %v3391 = vpop.f32.mrb[0].mxu0
      %v3392 = vadd.f32 0.0, %v3391
      %v3393 = vpop.f32.mrb[0].mxu0
      %3394 = vmatprep.mubr.f32.mxu0 0.0
      %3395 = vmatmul.mubr.f32.gmra.mrb[0].mxu0 %v3217
      %v3396 = vpop.f32.mrb[0].mxu0
      %v3397 = vadd.f32 0.0, %v3396
      %v3398 = vpop.f32.mrb[0].mxu0
      %3399 = vmatprep.mubr.f32.mxu0 0.0
      %3400 = vmatmul.mubr.f32.gmra.mrb[0].mxu0 %v3220
      %v3401 = vpop.f32.mrb[0].mxu0
      %v3402 = vadd.f32 0.0, %v3401
      %v3403 = vpop.f32.mrb[0].mxu0
      %3404 = vmatprep.mubr.f32.mxu0 0.0
      %3405 = vmatmul.mubr.f32.gmra.mrb[0].mxu0 %v3223
      %v3406 = vpop.f32.mrb[0].mxu0
      %v3407 = vadd.f32 0.0, %v3406
      %v3408 = vpop.f32.mrb[0].mxu0
      %3409 = vmatprep.mubr.f32.mxu0 0.0
      %3410 = vmatmul.mubr.f32.gmra.mrb[0].mxu0 %v3226
      %v3411 = vpop.f32.mrb[0].mxu0
      %v3412 = vadd.f32 0.0, %v3411
      %v3413 = vpop.f32.mrb[0].mxu0
      %3414 = vmatprep.mubr.f32.mxu0 0.0
      %3415 = vmatmul.mubr.f32.gmra.mrb[0].mxu0 %v3229
      %v3416 = vpop.f32.mrb[0].mxu0
      %v3417 = vadd.f32 0.0, %v3416
      %v3418 = vpop.f32.mrb[0].mxu0
      %3419 = vmatprep.mubr.f32.mxu0 0.0
      %3420 = vmatmul.mubr.f32.gmra.mrb[0].mxu0 %v3232
      %v3421 = vpop.f32.mrb[0].mxu0
      %v3422 = vadd.f32 0.0, %v3421
      %v3423 = vpop.f32.mrb[0].mxu0
      %3424 = vmatprep.mubr.f32.mxu0 0.0
      %3425 = vmatmul.mubr.f32.gmra.mrb[0].mxu0 %v3235
      %v3426 = vpop.f32.mrb[0].mxu0
      %v3427 = vadd.f32 0.0, %v3426
      %v3428 = vpop.f32.mrb[0].mxu0
      %3429 = vmatprep.mubr.f32.mxu0 0.0
      %3430 = vmatmul.mubr.f32.gmra.mrb[0].mxu0 %v3238
      %v3431 = vpop.f32.mrb[0].mxu0
      %v3432 = vadd.f32 0.0, %v3431
      %v3433 = vpop.f32.mrb[0].mxu0
      %3434 = vmatprep.mubr.f32.mxu0 0.0
      %3435 = vmatmul.mubr.f32.gmra.mrb[0].mxu0 %v3241
      %v3436 = vpop.f32.mrb[0].mxu0
      %v3437 = vadd.f32 0.0, %v3436
      %v3438 = vpop.f32.mrb[0].mxu0
      %3439 = vmatprep.mubr.f32.mxu0 0.0
      %3440 = vmatmul.mubr.f32.gmra.mrb[0].mxu0 %v3244
      %v3441 = vpop.f32.mrb[0].mxu0
      %v3442 = vadd.f32 0.0, %v3441
      %v3443 = vpop.f32.mrb[0].mxu0
      %3444 = vmatprep.mubr.f32.mxu0 0.0
      %3445 = vmatmul.mubr.f32.gmra.mrb[0].mxu0 %v3247
      %v3446 = vpop.f32.mrb[0].mxu0
      %v3447 = vadd.f32 0.0, %v3446
      %v3448 = vpop.f32.mrb[0].mxu0
      %3449 = vmatprep.mubr.f32.mxu0 0.0
      %3450 = vmatmul.mubr.f32.gmra.mrb[0].mxu0 %v3250
      %v3451 = vpop.f32.mrb[0].mxu0
      %v3452 = vadd.f32 0.0, %v3451
      %v3453 = vpop.f32.mrb[0].mxu0
      %3454 = vmatprep.mubr.f32.mxu0 0.0
      %3455 = vmatmul.mubr.f32.gmra.mrb[0].mxu0 %v3253
      %v3456 = vpop.f32.mrb[0].mxu0
      %v3457 = vadd.f32 0.0, %v3456
      %v3458 = vpop.f32.mrb[0].mxu0
      %3459 = vmatprep.mubr.f32.mxu0 0.0
      %3460 = vmatmul.mubr.f32.gmra.mrb[0].mxu0 %v3256
      %v3461 = vpop.f32.mrb[0].mxu0
      %v3462 = vadd.f32 0.0, %v3461
      %v3463 = vpop.f32.mrb[0].mxu0
      %3464 = vmatprep.mubr.f32.mxu0 0.0
      %3465 = vmatmul.mubr.f32.gmra.mrb[0].mxu0 %v3259
      %v3466 = vpop.f32.mrb[0].mxu0
      %v3467 = vadd.f32 0.0, %v3466
      %v3468 = vpop.f32.mrb[0].mxu0
      %3469 = vmatprep.mubr.f32.mxu0 0.0
      %3470 = vmatmul.mubr.f32.gmra.mrb[0].mxu0 %v3262
      %v3471 = vpop.f32.mrb[0].mxu0
      %v3472 = vadd.f32 0.0, %v3471
      %v3473 = vpop.f32.mrb[0].mxu0
      %3474 = vmatprep.mubr.f32.mxu0 0.0
      %3475 = vmatmul.mubr.f32.gmra.mrb[0].mxu0 %v3265
      %v3476 = vpop.f32.mrb[0].mxu0
      %v3477 = vadd.f32 0.0, %v3476
      %v3478 = vpop.f32.mrb[0].mxu0
      %3479 = vmatprep.mubr.f32.mxu0 0.0
      %3480 = vmatmul.mubr.f32.gmra.mrb[0].mxu0 %v3268
      %v3481 = vpop.f32.mrb[0].mxu0
      %v3482 = vadd.f32 0.0, %v3481
      %v3483 = vpop.f32.mrb[0].mxu0
      %3484 = vmatprep.mubr.f32.mxu0 0.0
      %3485 = vmatmul.mubr.f32.gmra.mrb[0].mxu0 %v3271
      %v3486 = vpop.f32.mrb[0].mxu0
      %v3487 = vadd.f32 0.0, %v3486
      %v3488 = vpop.f32.mrb[0].mxu0
      %3489 = vmatprep.mubr.f32.mxu0 0.0
      %3490 = vmatmul.mubr.f32.gmra.mrb[0].mxu0 %v3274
      %v3491 = vpop.f32.mrb[0].mxu0
      %v3492 = vadd.f32 0.0, %v3491
      %v3493 = vpop.f32.mrb[0].mxu0
      %3494 = vmatprep.mubr.f32.mxu0 0.0
      %3495 = vmatmul.mubr.f32.gmra.mrb[0].mxu0 %v3277
      %v3496 = vpop.f32.mrb[0].mxu0
      %v3497 = vadd.f32 0.0, %v3496
      %v3498 = vpop.f32.mrb[0].mxu0
      %3499 = vmatprep.mubr.f32.mxu0 0.0
      %3500 = vmatmul.mubr.f32.gmra.mrb[0].mxu0 %v3280
      %v3501 = vpop.f32.mrb[0].mxu0
      %v3502 = vadd.f32 0.0, %v3501
      %v3503 = vpop.f32.mrb[0].mxu0
      %3504 = vmatprep.mubr.f32.mxu0 0.0
      %3505 = vmatmul.mubr.f32.gmra.mrb[0].mxu0 %v3283
      %v3506 = vpop.f32.mrb[0].mxu0
      %v3507 = vadd.f32 0.0, %v3506
      %v3508 = vpop.f32.mrb[0].mxu0
      %3509 = vdwg.mxu0
      %v3510 = vadd.f32 %v3123, %v3352
      %v3511 = vadd.f32 %v3124, %v3357
      %v3512 = vadd.f32 %v3125, %v3362
      %v3513 = vadd.f32 %v3126, %v3367
      %v3514 = vadd.f32 %v3127, %v3372
      %v3515 = vadd.f32 %v3128, %v3377
      %v3516 = vadd.f32 %v3129, %v3382
      %v3517 = vadd.f32 %v3130, %v3387
      %v3518 = vadd.f32 %v3131, %v3392
      %v3519 = vadd.f32 %v3132, %v3397
      %v3520 = vadd.f32 %v3133, %v3402
      %v3521 = vadd.f32 %v3134, %v3407
      %v3522 = vadd.f32 %v3135, %v3412
      %v3523 = vadd.f32 %v3136, %v3417
      %v3524 = vadd.f32 %v3137, %v3422
      %v3525 = vadd.f32 %v3138, %v3427
      %v3526 = vadd.f32 %v3139, %v3432
      %v3527 = vadd.f32 %v3140, %v3437
      %v3528 = vadd.f32 %v3141, %v3442
      %v3529 = vadd.f32 %v3142, %v3447
      %v3530 = vadd.f32 %v3143, %v3452
      %v3531 = vadd.f32 %v3144, %v3457
      %v3532 = vadd.f32 %v3145, %v3462
      %v3533 = vadd.f32 %v3146, %v3467
      %v3534 = vadd.f32 %v3147, %v3472
      %v3535 = vadd.f32 %v3148, %v3477
      %v3536 = vadd.f32 %v3149, %v3482
      %v3537 = vadd.f32 %v3150, %v3487
      %v3538 = vadd.f32 %v3151, %v3492
      %v3539 = vadd.f32 %v3152, %v3497
      %v3540 = vadd.f32 %v3153, %v3502
      %v3541 = vadd.f32 %v3154, %v3507
      %s3542 = scalar_lea.vmem [#allocation2], 64
      %v3543 = vld [vmem:[%s3542 + $0x7] sm:$0xff]
      %v3544 = vld [vmem:[%s3542 + $0xf] sm:$0xff]
      %v3545 = vld [vmem:[%s3542 + $0x27] sm:$0xff]
      %v3546 = vld [vmem:[%s3542 + $0x2f] sm:$0xff]
      %v3547 = vld [vmem:[%s3542 + $0x47] sm:$0xff]
      %v3548 = vld [vmem:[%s3542 + $0x4f] sm:$0xff]
      %v3549 = vld [vmem:[%s3542 + $0x67] sm:$0xff]
      %v3550 = vld [vmem:[%s3542 + $0x6f] sm:$0xff]
      %v3551 = vld [vmem:[%s3542 + $0x87] sm:$0xff]
      %v3552 = vld [vmem:[%s3542 + $0x8f] sm:$0xff]
      %v3553 = vld [vmem:[%s3542 + $0xa7] sm:$0xff]
      %v3554 = vld [vmem:[%s3542 + $0xaf] sm:$0xff]
      %v3555 = vld [vmem:[%s3542 + $0xc7] sm:$0xff]
      %v3556 = vld [vmem:[%s3542 + $0xcf] sm:$0xff]
      %v3557 = vld [vmem:[%s3542 + $0xe7] sm:$0xff]
      %v3558 = vld [vmem:[%s3542 + $0xef] sm:$0xff]
      %v3559 = vld [vmem:[%s3542 + $0x107] sm:$0xff]
      %v3560 = vld [vmem:[%s3542 + $0x10f] sm:$0xff]
      %v3561 = vld [vmem:[%s3542 + $0x127] sm:$0xff]
      %v3562 = vld [vmem:[%s3542 + $0x12f] sm:$0xff]
      %v3563 = vld [vmem:[%s3542 + $0x147] sm:$0xff]
      %v3564 = vld [vmem:[%s3542 + $0x14f] sm:$0xff]
      %v3565 = vld [vmem:[%s3542 + $0x167] sm:$0xff]
      %v3566 = vld [vmem:[%s3542 + $0x16f] sm:$0xff]
      %v3567 = vld [vmem:[%s3542 + $0x187] sm:$0xff]
      %v3568 = vld [vmem:[%s3542 + $0x18f] sm:$0xff]
      %v3569 = vld [vmem:[%s3542 + $0x1a7] sm:$0xff]
      %v3570 = vld [vmem:[%s3542 + $0x1af] sm:$0xff]
      %v3571 = vld [vmem:[%s3542 + $0x1c7] sm:$0xff]
      %v3572 = vld [vmem:[%s3542 + $0x1cf] sm:$0xff]
      %v3573 = vld [vmem:[%s3542 + $0x1e7] sm:$0xff]
      %v3574 = vld [vmem:[%s3542 + $0x1ef] sm:$0xff]
      %s3575 = scalar_lea.vmem %s6, 48
      %v3576 = vld [vmem:[%s3575] sm:$0xff]
      %v3578 = vsel %vm517, %v3543, 0
      %v3581 = vsel %vm517, %v3544, 0
      %v3584 = vsel %vm517, %v3545, 0
      %v3587 = vsel %vm517, %v3546, 0
      %v3590 = vsel %vm517, %v3547, 0
      %v3593 = vsel %vm517, %v3548, 0
      %v3596 = vsel %vm517, %v3549, 0
      %v3599 = vsel %vm517, %v3550, 0
      %v3602 = vsel %vm517, %v3551, 0
      %v3605 = vsel %vm517, %v3552, 0
      %v3608 = vsel %vm517, %v3553, 0
      %v3611 = vsel %vm517, %v3554, 0
      %v3614 = vsel %vm517, %v3555, 0
      %v3617 = vsel %vm517, %v3556, 0
      %v3620 = vsel %vm517, %v3557, 0
      %v3623 = vsel %vm517, %v3558, 0
      %v3626 = vsel %vm517, %v3559, 0
      %v3629 = vsel %vm517, %v3560, 0
      %v3632 = vsel %vm517, %v3561, 0
      %v3635 = vsel %vm517, %v3562, 0
      %v3638 = vsel %vm517, %v3563, 0
      %v3641 = vsel %vm517, %v3564, 0
      %v3644 = vsel %vm517, %v3565, 0
      %v3647 = vsel %vm517, %v3566, 0
      %v3650 = vsel %vm517, %v3567, 0
      %v3653 = vsel %vm517, %v3568, 0
      %v3656 = vsel %vm517, %v3569, 0
      %v3659 = vsel %vm517, %v3570, 0
      %v3662 = vsel %vm517, %v3571, 0
      %v3665 = vsel %vm517, %v3572, 0
      %v3668 = vsel %vm517, %v3573, 0
      %v3671 = vsel %vm517, %v3574, 0
      %3673 = vmatprep.subr.mxu0 0.0
      %3674 = vmatpush1.msra.mxu0 %v3576
      %3675 = vmatprep.subr.mxu0 0.0
      %3676 = vmatpush1.msra.mxu0 0.0
      %3677 = vmatprep.subr.mxu0 0.0
      %3678 = vmatpush1.msra.mxu0 0.0
      %3679 = vmatprep.subr.mxu0 0.0
      %3680 = vmatpush1.msra.mxu0 0.0
      %3681 = vmatprep.subr.mxu0 0.0
      %3682 = vmatpush1.msra.mxu0 0.0
      %3683 = vmatprep.subr.mxu0 0.0
      %3684 = vmatpush1.msra.mxu0 0.0
      %3685 = vmatprep.subr.mxu0 0.0
      %3686 = vmatpush1.msra.mxu0 0.0
      %3687 = vmatprep.subr.mxu0 0.0
      %3688 = vmatpush1.msra.mxu0 0.0
      %3689 = vmatprep.subr.mxu0 0.0
      %3690 = vmatpush1.msra.mxu0 0.0
      %3691 = vmatprep.subr.mxu0 0.0
      %3692 = vmatpush1.msra.mxu0 0.0
      %3693 = vmatprep.subr.mxu0 0.0
      %3694 = vmatpush1.msra.mxu0 0.0
      %3695 = vmatprep.subr.mxu0 0.0
      %3696 = vmatpush1.msra.mxu0 0.0
      %3697 = vmatprep.subr.mxu0 0.0
      %3698 = vmatpush1.msra.mxu0 0.0
      %3699 = vmatprep.subr.mxu0 0.0
      %3700 = vmatpush1.msra.mxu0 0.0
      %3701 = vmatprep.subr.mxu0 0.0
      %3702 = vmatpush1.msra.mxu0 0.0
      %3703 = vmatprep.subr.mxu0 0.0
      %3704 = vmatpush1.msra.mxu0 0.0
      %3705 = vmatprep.subr.mxu0 0.0
      %3706 = vmatpush1.msra.mxu0 0.0
      %3707 = vmatprep.subr.mxu0 0.0
      %3708 = vmatpush1.msra.mxu0 0.0
      %3709 = vmatprep.subr.mxu0 0.0
      %3710 = vmatpush1.msra.mxu0 0.0
      %3711 = vmatprep.subr.mxu0 0.0
      %3712 = vmatpush1.msra.mxu0 0.0
      %3713 = vmatprep.subr.mxu0 0.0
      %3714 = vmatpush1.msra.mxu0 0.0
      %3715 = vmatprep.subr.mxu0 0.0
      %3716 = vmatpush1.msra.mxu0 0.0
      %3717 = vmatprep.subr.mxu0 0.0
      %3718 = vmatpush1.msra.mxu0 0.0
      %3719 = vmatprep.subr.mxu0 0.0
      %3720 = vmatpush1.msra.mxu0 0.0
      %3721 = vmatprep.subr.mxu0 0.0
      %3722 = vmatpush1.msra.mxu0 0.0
      %3723 = vmatprep.subr.mxu0 0.0
      %3724 = vmatpush1.msra.mxu0 0.0
      %3725 = vmatprep.subr.mxu0 0.0
      %3726 = vmatpush1.msra.mxu0 0.0
      %3727 = vmatprep.subr.mxu0 0.0
      %3728 = vmatpush1.msra.mxu0 0.0
      %3729 = vmatprep.subr.mxu0 0.0
      %3730 = vmatpush1.msra.mxu0 0.0
      %3731 = vmatprep.subr.mxu0 0.0
      %3732 = vmatpush1.msra.mxu0 0.0
      %3733 = vmatprep.subr.mxu0 0.0
      %3734 = vmatpush1.msra.mxu0 0.0
      %3735 = vmatprep.subr.mxu0 0.0
      %3736 = vmatpush1.msra.mxu0 0.0
      %3737 = vmatprep.mubr.f32.mxu0 0.0
      %3738 = vmatmul.mubr.f32.gmra.mrb[0].mxu0 %v3578
      %v3739 = vpop.f32.mrb[0].mxu0
      %v3740 = vadd.f32 0.0, %v3739
      %v3741 = vpop.f32.mrb[0].mxu0
      %3742 = vmatprep.mubr.f32.mxu0 0.0
      %3743 = vmatmul.mubr.f32.gmra.mrb[0].mxu0 %v3581
      %v3744 = vpop.f32.mrb[0].mxu0
      %v3745 = vadd.f32 0.0, %v3744
      %v3746 = vpop.f32.mrb[0].mxu0
      %3747 = vmatprep.mubr.f32.mxu0 0.0
      %3748 = vmatmul.mubr.f32.gmra.mrb[0].mxu0 %v3584
      %v3749 = vpop.f32.mrb[0].mxu0
      %v3750 = vadd.f32 0.0, %v3749
      %v3751 = vpop.f32.mrb[0].mxu0
      %3752 = vmatprep.mubr.f32.mxu0 0.0
      %3753 = vmatmul.mubr.f32.gmra.mrb[0].mxu0 %v3587
      %v3754 = vpop.f32.mrb[0].mxu0
      %v3755 = vadd.f32 0.0, %v3754
      %v3756 = vpop.f32.mrb[0].mxu0
      %3757 = vmatprep.mubr.f32.mxu0 0.0
      %3758 = vmatmul.mubr.f32.gmra.mrb[0].mxu0 %v3590
      %v3759 = vpop.f32.mrb[0].mxu0
      %v3760 = vadd.f32 0.0, %v3759
      %v3761 = vpop.f32.mrb[0].mxu0
      %3762 = vmatprep.mubr.f32.mxu0 0.0
      %3763 = vmatmul.mubr.f32.gmra.mrb[0].mxu0 %v3593
      %v3764 = vpop.f32.mrb[0].mxu0
      %v3765 = vadd.f32 0.0, %v3764
      %v3766 = vpop.f32.mrb[0].mxu0
      %3767 = vmatprep.mubr.f32.mxu0 0.0
      %3768 = vmatmul.mubr.f32.gmra.mrb[0].mxu0 %v3596
      %v3769 = vpop.f32.mrb[0].mxu0
      %v3770 = vadd.f32 0.0, %v3769
      %v3771 = vpop.f32.mrb[0].mxu0
      %3772 = vmatprep.mubr.f32.mxu0 0.0
      %3773 = vmatmul.mubr.f32.gmra.mrb[0].mxu0 %v3599
      %v3774 = vpop.f32.mrb[0].mxu0
      %v3775 = vadd.f32 0.0, %v3774
      %v3776 = vpop.f32.mrb[0].mxu0
      %3777 = vmatprep.mubr.f32.mxu0 0.0
      %3778 = vmatmul.mubr.f32.gmra.mrb[0].mxu0 %v3602
      %v3779 = vpop.f32.mrb[0].mxu0
      %v3780 = vadd.f32 0.0, %v3779
      %v3781 = vpop.f32.mrb[0].mxu0
      %3782 = vmatprep.mubr.f32.mxu0 0.0
      %3783 = vmatmul.mubr.f32.gmra.mrb[0].mxu0 %v3605
      %v3784 = vpop.f32.mrb[0].mxu0
      %v3785 = vadd.f32 0.0, %v3784
      %v3786 = vpop.f32.mrb[0].mxu0
      %3787 = vmatprep.mubr.f32.mxu0 0.0
      %3788 = vmatmul.mubr.f32.gmra.mrb[0].mxu0 %v3608
      %v3789 = vpop.f32.mrb[0].mxu0
      %v3790 = vadd.f32 0.0, %v3789
      %v3791 = vpop.f32.mrb[0].mxu0
      %3792 = vmatprep.mubr.f32.mxu0 0.0
      %3793 = vmatmul.mubr.f32.gmra.mrb[0].mxu0 %v3611
      %v3794 = vpop.f32.mrb[0].mxu0
      %v3795 = vadd.f32 0.0, %v3794
      %v3796 = vpop.f32.mrb[0].mxu0
      %3797 = vmatprep.mubr.f32.mxu0 0.0
      %3798 = vmatmul.mubr.f32.gmra.mrb[0].mxu0 %v3614
      %v3799 = vpop.f32.mrb[0].mxu0
      %v3800 = vadd.f32 0.0, %v3799
      %v3801 = vpop.f32.mrb[0].mxu0
      %3802 = vmatprep.mubr.f32.mxu0 0.0
      %3803 = vmatmul.mubr.f32.gmra.mrb[0].mxu0 %v3617
      %v3804 = vpop.f32.mrb[0].mxu0
      %v3805 = vadd.f32 0.0, %v3804
      %v3806 = vpop.f32.mrb[0].mxu0
      %3807 = vmatprep.mubr.f32.mxu0 0.0
      %3808 = vmatmul.mubr.f32.gmra.mrb[0].mxu0 %v3620
      %v3809 = vpop.f32.mrb[0].mxu0
      %v3810 = vadd.f32 0.0, %v3809
      %v3811 = vpop.f32.mrb[0].mxu0
      %3812 = vmatprep.mubr.f32.mxu0 0.0
      %3813 = vmatmul.mubr.f32.gmra.mrb[0].mxu0 %v3623
      %v3814 = vpop.f32.mrb[0].mxu0
      %v3815 = vadd.f32 0.0, %v3814
      %v3816 = vpop.f32.mrb[0].mxu0
      %3817 = vmatprep.mubr.f32.mxu0 0.0
      %3818 = vmatmul.mubr.f32.gmra.mrb[0].mxu0 %v3626
      %v3819 = vpop.f32.mrb[0].mxu0
      %v3820 = vadd.f32 0.0, %v3819
      %v3821 = vpop.f32.mrb[0].mxu0
      %3822 = vmatprep.mubr.f32.mxu0 0.0
      %3823 = vmatmul.mubr.f32.gmra.mrb[0].mxu0 %v3629
      %v3824 = vpop.f32.mrb[0].mxu0
      %v3825 = vadd.f32 0.0, %v3824
      %v3826 = vpop.f32.mrb[0].mxu0
      %3827 = vmatprep.mubr.f32.mxu0 0.0
      %3828 = vmatmul.mubr.f32.gmra.mrb[0].mxu0 %v3632
      %v3829 = vpop.f32.mrb[0].mxu0
      %v3830 = vadd.f32 0.0, %v3829
      %v3831 = vpop.f32.mrb[0].mxu0
      %3832 = vmatprep.mubr.f32.mxu0 0.0
      %3833 = vmatmul.mubr.f32.gmra.mrb[0].mxu0 %v3635
      %v3834 = vpop.f32.mrb[0].mxu0
      %v3835 = vadd.f32 0.0, %v3834
      %v3836 = vpop.f32.mrb[0].mxu0
      %3837 = vmatprep.mubr.f32.mxu0 0.0
      %3838 = vmatmul.mubr.f32.gmra.mrb[0].mxu0 %v3638
      %v3839 = vpop.f32.mrb[0].mxu0
      %v3840 = vadd.f32 0.0, %v3839
      %v3841 = vpop.f32.mrb[0].mxu0
      %3842 = vmatprep.mubr.f32.mxu0 0.0
      %3843 = vmatmul.mubr.f32.gmra.mrb[0].mxu0 %v3641
      %v3844 = vpop.f32.mrb[0].mxu0
      %v3845 = vadd.f32 0.0, %v3844
      %v3846 = vpop.f32.mrb[0].mxu0
      %3847 = vmatprep.mubr.f32.mxu0 0.0
      %3848 = vmatmul.mubr.f32.gmra.mrb[0].mxu0 %v3644
      %v3849 = vpop.f32.mrb[0].mxu0
      %v3850 = vadd.f32 0.0, %v3849
      %v3851 = vpop.f32.mrb[0].mxu0
      %3852 = vmatprep.mubr.f32.mxu0 0.0
      %3853 = vmatmul.mubr.f32.gmra.mrb[0].mxu0 %v3647
      %v3854 = vpop.f32.mrb[0].mxu0
      %v3855 = vadd.f32 0.0, %v3854
      %v3856 = vpop.f32.mrb[0].mxu0
      %3857 = vmatprep.mubr.f32.mxu0 0.0
      %3858 = vmatmul.mubr.f32.gmra.mrb[0].mxu0 %v3650
      %v3859 = vpop.f32.mrb[0].mxu0
      %v3860 = vadd.f32 0.0, %v3859
      %v3861 = vpop.f32.mrb[0].mxu0
      %3862 = vmatprep.mubr.f32.mxu0 0.0
      %3863 = vmatmul.mubr.f32.gmra.mrb[0].mxu0 %v3653
      %v3864 = vpop.f32.mrb[0].mxu0
      %v3865 = vadd.f32 0.0, %v3864
      %v3866 = vpop.f32.mrb[0].mxu0
      %3867 = vmatprep.mubr.f32.mxu0 0.0
      %3868 = vmatmul.mubr.f32.gmra.mrb[0].mxu0 %v3656
      %v3869 = vpop.f32.mrb[0].mxu0
      %v3870 = vadd.f32 0.0, %v3869
      %v3871 = vpop.f32.mrb[0].mxu0
      %3872 = vmatprep.mubr.f32.mxu0 0.0
      %3873 = vmatmul.mubr.f32.gmra.mrb[0].mxu0 %v3659
      %v3874 = vpop.f32.mrb[0].mxu0
      %v3875 = vadd.f32 0.0, %v3874
      %v3876 = vpop.f32.mrb[0].mxu0
      %3877 = vmatprep.mubr.f32.mxu0 0.0
      %3878 = vmatmul.mubr.f32.gmra.mrb[0].mxu0 %v3662
      %v3879 = vpop.f32.mrb[0].mxu0
      %v3880 = vadd.f32 0.0, %v3879
      %v3881 = vpop.f32.mrb[0].mxu0
      %3882 = vmatprep.mubr.f32.mxu0 0.0
      %3883 = vmatmul.mubr.f32.gmra.mrb[0].mxu0 %v3665
      %v3884 = vpop.f32.mrb[0].mxu0
      %v3885 = vadd.f32 0.0, %v3884
      %v3886 = vpop.f32.mrb[0].mxu0
      %3887 = vmatprep.mubr.f32.mxu0 0.0
      %3888 = vmatmul.mubr.f32.gmra.mrb[0].mxu0 %v3668
      %v3889 = vpop.f32.mrb[0].mxu0
      %v3890 = vadd.f32 0.0, %v3889
      %v3891 = vpop.f32.mrb[0].mxu0
      %3892 = vmatprep.mubr.f32.mxu0 0.0
      %3893 = vmatmul.mubr.f32.gmra.mrb[0].mxu0 %v3671
      %v3894 = vpop.f32.mrb[0].mxu0
      %v3895 = vadd.f32 0.0, %v3894
      %v3896 = vpop.f32.mrb[0].mxu0
      %3897 = vdwg.mxu0
      %v3898 = vadd.f32 %v3510, %v3740
      %v3899 = vadd.f32 %v3511, %v3745
      %v3900 = vadd.f32 %v3512, %v3750
      %v3901 = vadd.f32 %v3513, %v3755
      %v3902 = vadd.f32 %v3514, %v3760
      %v3903 = vadd.f32 %v3515, %v3765
      %v3904 = vadd.f32 %v3516, %v3770
      %v3905 = vadd.f32 %v3517, %v3775
      %v3906 = vadd.f32 %v3518, %v3780
      %v3907 = vadd.f32 %v3519, %v3785
      %v3908 = vadd.f32 %v3520, %v3790
      %v3909 = vadd.f32 %v3521, %v3795
      %v3910 = vadd.f32 %v3522, %v3800
      %v3911 = vadd.f32 %v3523, %v3805
      %v3912 = vadd.f32 %v3524, %v3810
      %v3913 = vadd.f32 %v3525, %v3815
      %v3914 = vadd.f32 %v3526, %v3820
      %v3915 = vadd.f32 %v3527, %v3825
      %v3916 = vadd.f32 %v3528, %v3830
      %v3917 = vadd.f32 %v3529, %v3835
      %v3918 = vadd.f32 %v3530, %v3840
      %v3919 = vadd.f32 %v3531, %v3845
      %v3920 = vadd.f32 %v3532, %v3850
      %v3921 = vadd.f32 %v3533, %v3855
      %v3922 = vadd.f32 %v3534, %v3860
      %v3923 = vadd.f32 %v3535, %v3865
      %v3924 = vadd.f32 %v3536, %v3870
      %v3925 = vadd.f32 %v3537, %v3875
      %v3926 = vadd.f32 %v3538, %v3880
      %v3927 = vadd.f32 %v3539, %v3885
      %v3928 = vadd.f32 %v3540, %v3890
      %v3929 = vadd.f32 %v3541, %v3895
      %v3930 = vld [vmem:[%s3542 + $0x8] sm:$0xff]
      %v3931 = vld [vmem:[%s3542 + $0x10] sm:$0xff]
      %v3932 = vld [vmem:[%s3542 + $0x28] sm:$0xff]
      %v3933 = vld [vmem:[%s3542 + $0x30] sm:$0xff]
      %v3934 = vld [vmem:[%s3542 + $0x48] sm:$0xff]
      %v3935 = vld [vmem:[%s3542 + $0x50] sm:$0xff]
      %v3936 = vld [vmem:[%s3542 + $0x68] sm:$0xff]
      %v3937 = vld [vmem:[%s3542 + $0x70] sm:$0xff]
      %v3938 = vld [vmem:[%s3542 + $0x88] sm:$0xff]
      %v3939 = vld [vmem:[%s3542 + $0x90] sm:$0xff]
      %v3940 = vld [vmem:[%s3542 + $0xa8] sm:$0xff]
      %v3941 = vld [vmem:[%s3542 + $0xb0] sm:$0xff]
      %v3942 = vld [vmem:[%s3542 + $0xc8] sm:$0xff]
      %v3943 = vld [vmem:[%s3542 + $0xd0] sm:$0xff]
      %v3944 = vld [vmem:[%s3542 + $0xe8] sm:$0xff]
      %v3945 = vld [vmem:[%s3542 + $0xf0] sm:$0xff]
      %v3946 = vld [vmem:[%s3542 + $0x108] sm:$0xff]
      %v3947 = vld [vmem:[%s3542 + $0x110] sm:$0xff]
      %v3948 = vld [vmem:[%s3542 + $0x128] sm:$0xff]
      %v3949 = vld [vmem:[%s3542 + $0x130] sm:$0xff]
      %v3950 = vld [vmem:[%s3542 + $0x148] sm:$0xff]
      %v3951 = vld [vmem:[%s3542 + $0x150] sm:$0xff]
      %v3952 = vld [vmem:[%s3542 + $0x168] sm:$0xff]
      %v3953 = vld [vmem:[%s3542 + $0x170] sm:$0xff]
      %v3954 = vld [vmem:[%s3542 + $0x188] sm:$0xff]
      %v3955 = vld [vmem:[%s3542 + $0x190] sm:$0xff]
      %v3956 = vld [vmem:[%s3542 + $0x1a8] sm:$0xff]
      %v3957 = vld [vmem:[%s3542 + $0x1b0] sm:$0xff]
      %v3958 = vld [vmem:[%s3542 + $0x1c8] sm:$0xff]
      %v3959 = vld [vmem:[%s3542 + $0x1d0] sm:$0xff]
      %v3960 = vld [vmem:[%s3542 + $0x1e8] sm:$0xff]
      %v3961 = vld [vmem:[%s3542 + $0x1f0] sm:$0xff]
      %s3962 = scalar_lea.vmem %s6, 56
      %v3963 = vld [vmem:[%s3962] sm:$0xff]
      %v3965 = vsel %vm517, %v3930, 0
      %v3968 = vsel %vm517, %v3931, 0
      %v3971 = vsel %vm517, %v3932, 0
      %v3974 = vsel %vm517, %v3933, 0
      %v3977 = vsel %vm517, %v3934, 0
      %v3980 = vsel %vm517, %v3935, 0
      %v3983 = vsel %vm517, %v3936, 0
      %v3986 = vsel %vm517, %v3937, 0
      %v3989 = vsel %vm517, %v3938, 0
      %v3992 = vsel %vm517, %v3939, 0
      %v3995 = vsel %vm517, %v3940, 0
      %v3998 = vsel %vm517, %v3941, 0
      %v4001 = vsel %vm517, %v3942, 0
      %v4004 = vsel %vm517, %v3943, 0
      %v4007 = vsel %vm517, %v3944, 0
      %v4010 = vsel %vm517, %v3945, 0
      %v4013 = vsel %vm517, %v3946, 0
      %v4016 = vsel %vm517, %v3947, 0
      %v4019 = vsel %vm517, %v3948, 0
      %v4022 = vsel %vm517, %v3949, 0
      %v4025 = vsel %vm517, %v3950, 0
      %v4028 = vsel %vm517, %v3951, 0
      %v4031 = vsel %vm517, %v3952, 0
      %v4034 = vsel %vm517, %v3953, 0
      %v4037 = vsel %vm517, %v3954, 0
      %v4040 = vsel %vm517, %v3955, 0
      %v4043 = vsel %vm517, %v3956, 0
      %v4046 = vsel %vm517, %v3957, 0
      %v4049 = vsel %vm517, %v3958, 0
      %v4052 = vsel %vm517, %v3959, 0
      %v4055 = vsel %vm517, %v3960, 0
      %v4058 = vsel %vm517, %v3961, 0
      %4060 = vmatprep.subr.mxu0 0.0
      %4061 = vmatpush1.msra.mxu0 %v3963
      %4062 = vmatprep.subr.mxu0 0.0
      %4063 = vmatpush1.msra.mxu0 0.0
      %4064 = vmatprep.subr.mxu0 0.0
      %4065 = vmatpush1.msra.mxu0 0.0
      %4066 = vmatprep.subr.mxu0 0.0
      %4067 = vmatpush1.msra.mxu0 0.0
      %4068 = vmatprep.subr.mxu0 0.0
      %4069 = vmatpush1.msra.mxu0 0.0
      %4070 = vmatprep.subr.mxu0 0.0
      %4071 = vmatpush1.msra.mxu0 0.0
      %4072 = vmatprep.subr.mxu0 0.0
      %4073 = vmatpush1.msra.mxu0 0.0
      %4074 = vmatprep.subr.mxu0 0.0
      %4075 = vmatpush1.msra.mxu0 0.0
      %4076 = vmatprep.subr.mxu0 0.0
      %4077 = vmatpush1.msra.mxu0 0.0
      %4078 = vmatprep.subr.mxu0 0.0
      %4079 = vmatpush1.msra.mxu0 0.0
      %4080 = vmatprep.subr.mxu0 0.0
      %4081 = vmatpush1.msra.mxu0 0.0
      %4082 = vmatprep.subr.mxu0 0.0
      %4083 = vmatpush1.msra.mxu0 0.0
      %4084 = vmatprep.subr.mxu0 0.0
      %4085 = vmatpush1.msra.mxu0 0.0
      %4086 = vmatprep.subr.mxu0 0.0
      %4087 = vmatpush1.msra.mxu0 0.0
      %4088 = vmatprep.subr.mxu0 0.0
      %4089 = vmatpush1.msra.mxu0 0.0
      %4090 = vmatprep.subr.mxu0 0.0
      %4091 = vmatpush1.msra.mxu0 0.0
      %4092 = vmatprep.subr.mxu0 0.0
      %4093 = vmatpush1.msra.mxu0 0.0
      %4094 = vmatprep.subr.mxu0 0.0
      %4095 = vmatpush1.msra.mxu0 0.0
      %4096 = vmatprep.subr.mxu0 0.0
      %4097 = vmatpush1.msra.mxu0 0.0
      %4098 = vmatprep.subr.mxu0 0.0
      %4099 = vmatpush1.msra.mxu0 0.0
      %4100 = vmatprep.subr.mxu0 0.0
      %4101 = vmatpush1.msra.mxu0 0.0
      %4102 = vmatprep.subr.mxu0 0.0
      %4103 = vmatpush1.msra.mxu0 0.0
      %4104 = vmatprep.subr.mxu0 0.0
      %4105 = vmatpush1.msra.mxu0 0.0
      %4106 = vmatprep.subr.mxu0 0.0
      %4107 = vmatpush1.msra.mxu0 0.0
      %4108 = vmatprep.subr.mxu0 0.0
      %4109 = vmatpush1.msra.mxu0 0.0
      %4110 = vmatprep.subr.mxu0 0.0
      %4111 = vmatpush1.msra.mxu0 0.0
      %4112 = vmatprep.subr.mxu0 0.0
      %4113 = vmatpush1.msra.mxu0 0.0
      %4114 = vmatprep.subr.mxu0 0.0
      %4115 = vmatpush1.msra.mxu0 0.0
      %4116 = vmatprep.subr.mxu0 0.0
      %4117 = vmatpush1.msra.mxu0 0.0
      %4118 = vmatprep.subr.mxu0 0.0
      %4119 = vmatpush1.msra.mxu0 0.0
      %4120 = vmatprep.subr.mxu0 0.0
      %4121 = vmatpush1.msra.mxu0 0.0
      %4122 = vmatprep.subr.mxu0 0.0
      %4123 = vmatpush1.msra.mxu0 0.0
      %4124 = vmatprep.mubr.f32.mxu0 0.0
      %4125 = vmatmul.mubr.f32.gmra.mrb[0].mxu0 %v3965
      %v4126 = vpop.f32.mrb[0].mxu0
      %v4127 = vadd.f32 0.0, %v4126
      %v4128 = vpop.f32.mrb[0].mxu0
      %4129 = vmatprep.mubr.f32.mxu0 0.0
      %4130 = vmatmul.mubr.f32.gmra.mrb[0].mxu0 %v3968
      %v4131 = vpop.f32.mrb[0].mxu0
      %v4132 = vadd.f32 0.0, %v4131
      %v4133 = vpop.f32.mrb[0].mxu0
      %4134 = vmatprep.mubr.f32.mxu0 0.0
      %4135 = vmatmul.mubr.f32.gmra.mrb[0].mxu0 %v3971
      %v4136 = vpop.f32.mrb[0].mxu0
      %v4137 = vadd.f32 0.0, %v4136
      %v4138 = vpop.f32.mrb[0].mxu0
      %4139 = vmatprep.mubr.f32.mxu0 0.0
      %4140 = vmatmul.mubr.f32.gmra.mrb[0].mxu0 %v3974
      %v4141 = vpop.f32.mrb[0].mxu0
      %v4142 = vadd.f32 0.0, %v4141
      %v4143 = vpop.f32.mrb[0].mxu0
      %4144 = vmatprep.mubr.f32.mxu0 0.0
      %4145 = vmatmul.mubr.f32.gmra.mrb[0].mxu0 %v3977
      %v4146 = vpop.f32.mrb[0].mxu0
      %v4147 = vadd.f32 0.0, %v4146
      %v4148 = vpop.f32.mrb[0].mxu0
      %4149 = vmatprep.mubr.f32.mxu0 0.0
      %4150 = vmatmul.mubr.f32.gmra.mrb[0].mxu0 %v3980
      %v4151 = vpop.f32.mrb[0].mxu0
      %v4152 = vadd.f32 0.0, %v4151
      %v4153 = vpop.f32.mrb[0].mxu0
      %4154 = vmatprep.mubr.f32.mxu0 0.0
      %4155 = vmatmul.mubr.f32.gmra.mrb[0].mxu0 %v3983
      %v4156 = vpop.f32.mrb[0].mxu0
      %v4157 = vadd.f32 0.0, %v4156
      %v4158 = vpop.f32.mrb[0].mxu0
      %4159 = vmatprep.mubr.f32.mxu0 0.0
      %4160 = vmatmul.mubr.f32.gmra.mrb[0].mxu0 %v3986
      %v4161 = vpop.f32.mrb[0].mxu0
      %v4162 = vadd.f32 0.0, %v4161
      %v4163 = vpop.f32.mrb[0].mxu0
      %4164 = vmatprep.mubr.f32.mxu0 0.0
      %4165 = vmatmul.mubr.f32.gmra.mrb[0].mxu0 %v3989
      %v4166 = vpop.f32.mrb[0].mxu0
      %v4167 = vadd.f32 0.0, %v4166
      %v4168 = vpop.f32.mrb[0].mxu0
      %4169 = vmatprep.mubr.f32.mxu0 0.0
      %4170 = vmatmul.mubr.f32.gmra.mrb[0].mxu0 %v3992
      %v4171 = vpop.f32.mrb[0].mxu0
      %v4172 = vadd.f32 0.0, %v4171
      %v4173 = vpop.f32.mrb[0].mxu0
      %4174 = vmatprep.mubr.f32.mxu0 0.0
      %4175 = vmatmul.mubr.f32.gmra.mrb[0].mxu0 %v3995
      %v4176 = vpop.f32.mrb[0].mxu0
      %v4177 = vadd.f32 0.0, %v4176
      %v4178 = vpop.f32.mrb[0].mxu0
      %4179 = vmatprep.mubr.f32.mxu0 0.0
      %4180 = vmatmul.mubr.f32.gmra.mrb[0].mxu0 %v3998
      %v4181 = vpop.f32.mrb[0].mxu0
      %v4182 = vadd.f32 0.0, %v4181
      %v4183 = vpop.f32.mrb[0].mxu0
      %4184 = vmatprep.mubr.f32.mxu0 0.0
      %4185 = vmatmul.mubr.f32.gmra.mrb[0].mxu0 %v4001
      %v4186 = vpop.f32.mrb[0].mxu0
      %v4187 = vadd.f32 0.0, %v4186
      %v4188 = vpop.f32.mrb[0].mxu0
      %4189 = vmatprep.mubr.f32.mxu0 0.0
      %4190 = vmatmul.mubr.f32.gmra.mrb[0].mxu0 %v4004
      %v4191 = vpop.f32.mrb[0].mxu0
      %v4192 = vadd.f32 0.0, %v4191
      %v4193 = vpop.f32.mrb[0].mxu0
      %4194 = vmatprep.mubr.f32.mxu0 0.0
      %4195 = vmatmul.mubr.f32.gmra.mrb[0].mxu0 %v4007
      %v4196 = vpop.f32.mrb[0].mxu0
      %v4197 = vadd.f32 0.0, %v4196
      %v4198 = vpop.f32.mrb[0].mxu0
      %4199 = vmatprep.mubr.f32.mxu0 0.0
      %4200 = vmatmul.mubr.f32.gmra.mrb[0].mxu0 %v4010
      %v4201 = vpop.f32.mrb[0].mxu0
      %v4202 = vadd.f32 0.0, %v4201
      %v4203 = vpop.f32.mrb[0].mxu0
      %4204 = vmatprep.mubr.f32.mxu0 0.0
      %4205 = vmatmul.mubr.f32.gmra.mrb[0].mxu0 %v4013
      %v4206 = vpop.f32.mrb[0].mxu0
      %v4207 = vadd.f32 0.0, %v4206
      %v4208 = vpop.f32.mrb[0].mxu0
      %4209 = vmatprep.mubr.f32.mxu0 0.0
      %4210 = vmatmul.mubr.f32.gmra.mrb[0].mxu0 %v4016
      %v4211 = vpop.f32.mrb[0].mxu0
      %v4212 = vadd.f32 0.0, %v4211
      %v4213 = vpop.f32.mrb[0].mxu0
      %4214 = vmatprep.mubr.f32.mxu0 0.0
      %4215 = vmatmul.mubr.f32.gmra.mrb[0].mxu0 %v4019
      %v4216 = vpop.f32.mrb[0].mxu0
      %v4217 = vadd.f32 0.0, %v4216
      %v4218 = vpop.f32.mrb[0].mxu0
      %4219 = vmatprep.mubr.f32.mxu0 0.0
      %4220 = vmatmul.mubr.f32.gmra.mrb[0].mxu0 %v4022
      %v4221 = vpop.f32.mrb[0].mxu0
      %v4222 = vadd.f32 0.0, %v4221
      %v4223 = vpop.f32.mrb[0].mxu0
      %4224 = vmatprep.mubr.f32.mxu0 0.0
      %4225 = vmatmul.mubr.f32.gmra.mrb[0].mxu0 %v4025
      %v4226 = vpop.f32.mrb[0].mxu0
      %v4227 = vadd.f32 0.0, %v4226
      %v4228 = vpop.f32.mrb[0].mxu0
      %4229 = vmatprep.mubr.f32.mxu0 0.0
      %4230 = vmatmul.mubr.f32.gmra.mrb[0].mxu0 %v4028
      %v4231 = vpop.f32.mrb[0].mxu0
      %v4232 = vadd.f32 0.0, %v4231
      %v4233 = vpop.f32.mrb[0].mxu0
      %4234 = vmatprep.mubr.f32.mxu0 0.0
      %4235 = vmatmul.mubr.f32.gmra.mrb[0].mxu0 %v4031
      %v4236 = vpop.f32.mrb[0].mxu0
      %v4237 = vadd.f32 0.0, %v4236
      %v4238 = vpop.f32.mrb[0].mxu0
      %4239 = vmatprep.mubr.f32.mxu0 0.0
      %4240 = vmatmul.mubr.f32.gmra.mrb[0].mxu0 %v4034
      %v4241 = vpop.f32.mrb[0].mxu0
      %v4242 = vadd.f32 0.0, %v4241
      %v4243 = vpop.f32.mrb[0].mxu0
      %4244 = vmatprep.mubr.f32.mxu0 0.0
      %4245 = vmatmul.mubr.f32.gmra.mrb[0].mxu0 %v4037
      %v4246 = vpop.f32.mrb[0].mxu0
      %v4247 = vadd.f32 0.0, %v4246
      %v4248 = vpop.f32.mrb[0].mxu0
      %4249 = vmatprep.mubr.f32.mxu0 0.0
      %4250 = vmatmul.mubr.f32.gmra.mrb[0].mxu0 %v4040
      %v4251 = vpop.f32.mrb[0].mxu0
      %v4252 = vadd.f32 0.0, %v4251
      %v4253 = vpop.f32.mrb[0].mxu0
      %4254 = vmatprep.mubr.f32.mxu0 0.0
      %4255 = vmatmul.mubr.f32.gmra.mrb[0].mxu0 %v4043
      %v4256 = vpop.f32.mrb[0].mxu0
      %v4257 = vadd.f32 0.0, %v4256
      %v4258 = vpop.f32.mrb[0].mxu0
      %4259 = vmatprep.mubr.f32.mxu0 0.0
      %4260 = vmatmul.mubr.f32.gmra.mrb[0].mxu0 %v4046
      %v4261 = vpop.f32.mrb[0].mxu0
      %v4262 = vadd.f32 0.0, %v4261
      %v4263 = vpop.f32.mrb[0].mxu0
      %4264 = vmatprep.mubr.f32.mxu0 0.0
      %4265 = vmatmul.mubr.f32.gmra.mrb[0].mxu0 %v4049
      %v4266 = vpop.f32.mrb[0].mxu0
      %v4267 = vadd.f32 0.0, %v4266
      %v4268 = vpop.f32.mrb[0].mxu0
      %4269 = vmatprep.mubr.f32.mxu0 0.0
      %4270 = vmatmul.mubr.f32.gmra.mrb[0].mxu0 %v4052
      %v4271 = vpop.f32.mrb[0].mxu0
      %v4272 = vadd.f32 0.0, %v4271
      %v4273 = vpop.f32.mrb[0].mxu0
      %4274 = vmatprep.mubr.f32.mxu0 0.0
      %4275 = vmatmul.mubr.f32.gmra.mrb[0].mxu0 %v4055
      %v4276 = vpop.f32.mrb[0].mxu0
      %v4277 = vadd.f32 0.0, %v4276
      %v4278 = vpop.f32.mrb[0].mxu0
      %4279 = vmatprep.mubr.f32.mxu0 0.0
      %4280 = vmatmul.mubr.f32.gmra.mrb[0].mxu0 %v4058
      %v4281 = vpop.f32.mrb[0].mxu0
      %v4282 = vadd.f32 0.0, %v4281
      %v4283 = vpop.f32.mrb[0].mxu0
      %4284 = vdwg.mxu0
      %v4285 = vadd.f32 %v3898, %v4127
      %v4286 = vadd.f32 %v3899, %v4132
      %v4287 = vadd.f32 %v3900, %v4137
      %v4288 = vadd.f32 %v3901, %v4142
      %v4289 = vadd.f32 %v3902, %v4147
      %v4290 = vadd.f32 %v3903, %v4152
      %v4291 = vadd.f32 %v3904, %v4157
      %v4292 = vadd.f32 %v3905, %v4162
      %v4293 = vadd.f32 %v3906, %v4167
      %v4294 = vadd.f32 %v3907, %v4172
      %v4295 = vadd.f32 %v3908, %v4177
      %v4296 = vadd.f32 %v3909, %v4182
      %v4297 = vadd.f32 %v3910, %v4187
      %v4298 = vadd.f32 %v3911, %v4192
      %v4299 = vadd.f32 %v3912, %v4197
      %v4300 = vadd.f32 %v3913, %v4202
      %v4301 = vadd.f32 %v3914, %v4207
      %v4302 = vadd.f32 %v3915, %v4212
      %v4303 = vadd.f32 %v3916, %v4217
      %v4304 = vadd.f32 %v3917, %v4222
      %v4305 = vadd.f32 %v3918, %v4227
      %v4306 = vadd.f32 %v3919, %v4232
      %v4307 = vadd.f32 %v3920, %v4237
      %v4308 = vadd.f32 %v3921, %v4242
      %v4309 = vadd.f32 %v3922, %v4247
      %v4310 = vadd.f32 %v3923, %v4252
      %v4311 = vadd.f32 %v3924, %v4257
      %v4312 = vadd.f32 %v3925, %v4262
      %v4313 = vadd.f32 %v3926, %v4267
      %v4314 = vadd.f32 %v3927, %v4272
      %v4315 = vadd.f32 %v3928, %v4277
      %v4316 = vadd.f32 %v3929, %v4282
      %v4317 = vld [vmem:[%s3542 + $0x9] sm:$0xff]
      %v4318 = vld [vmem:[%s3542 + $0x11] sm:$0xff]
      %v4319 = vld [vmem:[%s3542 + $0x29] sm:$0xff]
      %v4320 = vld [vmem:[%s3542 + $0x31] sm:$0xff]
      %v4321 = vld [vmem:[%s3542 + $0x49] sm:$0xff]
      %v4322 = vld [vmem:[%s3542 + $0x51] sm:$0xff]
      %v4323 = vld [vmem:[%s3542 + $0x69] sm:$0xff]
      %v4324 = vld [vmem:[%s3542 + $0x71] sm:$0xff]
      %v4325 = vld [vmem:[%s3542 + $0x89] sm:$0xff]
      %v4326 = vld [vmem:[%s3542 + $0x91] sm:$0xff]
      %v4327 = vld [vmem:[%s3542 + $0xa9] sm:$0xff]
      %v4328 = vld [vmem:[%s3542 + $0xb1] sm:$0xff]
      %v4329 = vld [vmem:[%s3542 + $0xc9] sm:$0xff]
      %v4330 = vld [vmem:[%s3542 + $0xd1] sm:$0xff]
      %v4331 = vld [vmem:[%s3542 + $0xe9] sm:$0xff]
      %v4332 = vld [vmem:[%s3542 + $0xf1] sm:$0xff]
      %v4333 = vld [vmem:[%s3542 + $0x109] sm:$0xff]
      %v4334 = vld [vmem:[%s3542 + $0x111] sm:$0xff]
      %v4335 = vld [vmem:[%s3542 + $0x129] sm:$0xff]
      %v4336 = vld [vmem:[%s3542 + $0x131] sm:$0xff]
      %v4337 = vld [vmem:[%s3542 + $0x149] sm:$0xff]
      %v4338 = vld [vmem:[%s3542 + $0x151] sm:$0xff]
      %v4339 = vld [vmem:[%s3542 + $0x169] sm:$0xff]
      %v4340 = vld [vmem:[%s3542 + $0x171] sm:$0xff]
      %v4341 = vld [vmem:[%s3542 + $0x189] sm:$0xff]
      %v4342 = vld [vmem:[%s3542 + $0x191] sm:$0xff]
      %v4343 = vld [vmem:[%s3542 + $0x1a9] sm:$0xff]
      %v4344 = vld [vmem:[%s3542 + $0x1b1] sm:$0xff]
      %v4345 = vld [vmem:[%s3542 + $0x1c9] sm:$0xff]
      %v4346 = vld [vmem:[%s3542 + $0x1d1] sm:$0xff]
      %v4347 = vld [vmem:[%s3542 + $0x1e9] sm:$0xff]
      %v4348 = vld [vmem:[%s3542 + $0x1f1] sm:$0xff]
      %s4349 = scalar_lea.vmem %s6, 64
      %v4350 = vld [vmem:[%s4349] sm:$0xff]
      %v4352 = vsel %vm517, %v4317, 0
      %v4355 = vsel %vm517, %v4318, 0
      %v4358 = vsel %vm517, %v4319, 0
      %v4361 = vsel %vm517, %v4320, 0
      %v4364 = vsel %vm517, %v4321, 0
      %v4367 = vsel %vm517, %v4322, 0
      %v4370 = vsel %vm517, %v4323, 0
      %v4373 = vsel %vm517, %v4324, 0
      %v4376 = vsel %vm517, %v4325, 0
      %v4379 = vsel %vm517, %v4326, 0
      %v4382 = vsel %vm517, %v4327, 0
      %v4385 = vsel %vm517, %v4328, 0
      %v4388 = vsel %vm517, %v4329, 0
      %v4391 = vsel %vm517, %v4330, 0
      %v4394 = vsel %vm517, %v4331, 0
      %v4397 = vsel %vm517, %v4332, 0
      %v4400 = vsel %vm517, %v4333, 0
      %v4403 = vsel %vm517, %v4334, 0
      %v4406 = vsel %vm517, %v4335, 0
      %v4409 = vsel %vm517, %v4336, 0
      %v4412 = vsel %vm517, %v4337, 0
      %v4415 = vsel %vm517, %v4338, 0
      %v4418 = vsel %vm517, %v4339, 0
      %v4421 = vsel %vm517, %v4340, 0
      %v4424 = vsel %vm517, %v4341, 0
      %v4427 = vsel %vm517, %v4342, 0
      %v4430 = vsel %vm517, %v4343, 0
      %v4433 = vsel %vm517, %v4344, 0
      %v4436 = vsel %vm517, %v4345, 0
      %v4439 = vsel %vm517, %v4346, 0
      %v4442 = vsel %vm517, %v4347, 0
      %v4445 = vsel %vm517, %v4348, 0
      %4447 = vmatprep.subr.mxu0 0.0
      %4448 = vmatpush1.msra.mxu0 %v4350
      %4449 = vmatprep.subr.mxu0 0.0
      %4450 = vmatpush1.msra.mxu0 0.0
      %4451 = vmatprep.subr.mxu0 0.0
      %4452 = vmatpush1.msra.mxu0 0.0
      %4453 = vmatprep.subr.mxu0 0.0
      %4454 = vmatpush1.msra.mxu0 0.0
      %4455 = vmatprep.subr.mxu0 0.0
      %4456 = vmatpush1.msra.mxu0 0.0
      %4457 = vmatprep.subr.mxu0 0.0
      %4458 = vmatpush1.msra.mxu0 0.0
      %4459 = vmatprep.subr.mxu0 0.0
      %4460 = vmatpush1.msra.mxu0 0.0
      %4461 = vmatprep.subr.mxu0 0.0
      %4462 = vmatpush1.msra.mxu0 0.0
      %4463 = vmatprep.subr.mxu0 0.0
      %4464 = vmatpush1.msra.mxu0 0.0
      %4465 = vmatprep.subr.mxu0 0.0
      %4466 = vmatpush1.msra.mxu0 0.0
      %4467 = vmatprep.subr.mxu0 0.0
      %4468 = vmatpush1.msra.mxu0 0.0
      %4469 = vmatprep.subr.mxu0 0.0
      %4470 = vmatpush1.msra.mxu0 0.0
      %4471 = vmatprep.subr.mxu0 0.0
      %4472 = vmatpush1.msra.mxu0 0.0
      %4473 = vmatprep.subr.mxu0 0.0
      %4474 = vmatpush1.msra.mxu0 0.0
      %4475 = vmatprep.subr.mxu0 0.0
      %4476 = vmatpush1.msra.mxu0 0.0
      %4477 = vmatprep.subr.mxu0 0.0
      %4478 = vmatpush1.msra.mxu0 0.0
      %4479 = vmatprep.subr.mxu0 0.0
      %4480 = vmatpush1.msra.mxu0 0.0
      %4481 = vmatprep.subr.mxu0 0.0
      %4482 = vmatpush1.msra.mxu0 0.0
      %4483 = vmatprep.subr.mxu0 0.0
      %4484 = vmatpush1.msra.mxu0 0.0
      %4485 = vmatprep.subr.mxu0 0.0
      %4486 = vmatpush1.msra.mxu0 0.0
      %4487 = vmatprep.subr.mxu0 0.0
      %4488 = vmatpush1.msra.mxu0 0.0
      %4489 = vmatprep.subr.mxu0 0.0
      %4490 = vmatpush1.msra.mxu0 0.0
      %4491 = vmatprep.subr.mxu0 0.0
      %4492 = vmatpush1.msra.mxu0 0.0
      %4493 = vmatprep.subr.mxu0 0.0
      %4494 = vmatpush1.msra.mxu0 0.0
      %4495 = vmatprep.subr.mxu0 0.0
      %4496 = vmatpush1.msra.mxu0 0.0
      %4497 = vmatprep.subr.mxu0 0.0
      %4498 = vmatpush1.msra.mxu0 0.0
      %4499 = vmatprep.subr.mxu0 0.0
      %4500 = vmatpush1.msra.mxu0 0.0
      %4501 = vmatprep.subr.mxu0 0.0
      %4502 = vmatpush1.msra.mxu0 0.0
      %4503 = vmatprep.subr.mxu0 0.0
      %4504 = vmatpush1.msra.mxu0 0.0
      %4505 = vmatprep.subr.mxu0 0.0
      %4506 = vmatpush1.msra.mxu0 0.0
      %4507 = vmatprep.subr.mxu0 0.0
      %4508 = vmatpush1.msra.mxu0 0.0
      %4509 = vmatprep.subr.mxu0 0.0
      %4510 = vmatpush1.msra.mxu0 0.0
      %4511 = vmatprep.mubr.f32.mxu0 0.0
      %4512 = vmatmul.mubr.f32.gmra.mrb[0].mxu0 %v4352
      %v4513 = vpop.f32.mrb[0].mxu0
      %v4514 = vadd.f32 0.0, %v4513
      %v4515 = vpop.f32.mrb[0].mxu0
      %4516 = vmatprep.mubr.f32.mxu0 0.0
      %4517 = vmatmul.mubr.f32.gmra.mrb[0].mxu0 %v4355
      %v4518 = vpop.f32.mrb[0].mxu0
      %v4519 = vadd.f32 0.0, %v4518
      %v4520 = vpop.f32.mrb[0].mxu0
      %4521 = vmatprep.mubr.f32.mxu0 0.0
      %4522 = vmatmul.mubr.f32.gmra.mrb[0].mxu0 %v4358
      %v4523 = vpop.f32.mrb[0].mxu0
      %v4524 = vadd.f32 0.0, %v4523
      %v4525 = vpop.f32.mrb[0].mxu0
      %4526 = vmatprep.mubr.f32.mxu0 0.0
      %4527 = vmatmul.mubr.f32.gmra.mrb[0].mxu0 %v4361
      %v4528 = vpop.f32.mrb[0].mxu0
      %v4529 = vadd.f32 0.0, %v4528
      %v4530 = vpop.f32.mrb[0].mxu0
      %4531 = vmatprep.mubr.f32.mxu0 0.0
      %4532 = vmatmul.mubr.f32.gmra.mrb[0].mxu0 %v4364
      %v4533 = vpop.f32.mrb[0].mxu0
      %v4534 = vadd.f32 0.0, %v4533
      %v4535 = vpop.f32.mrb[0].mxu0
      %4536 = vmatprep.mubr.f32.mxu0 0.0
      %4537 = vmatmul.mubr.f32.gmra.mrb[0].mxu0 %v4367
      %v4538 = vpop.f32.mrb[0].mxu0
      %v4539 = vadd.f32 0.0, %v4538
      %v4540 = vpop.f32.mrb[0].mxu0
      %4541 = vmatprep.mubr.f32.mxu0 0.0
      %4542 = vmatmul.mubr.f32.gmra.mrb[0].mxu0 %v4370
      %v4543 = vpop.f32.mrb[0].mxu0
      %v4544 = vadd.f32 0.0, %v4543
      %v4545 = vpop.f32.mrb[0].mxu0
      %4546 = vmatprep.mubr.f32.mxu0 0.0
      %4547 = vmatmul.mubr.f32.gmra.mrb[0].mxu0 %v4373
      %v4548 = vpop.f32.mrb[0].mxu0
      %v4549 = vadd.f32 0.0, %v4548
      %v4550 = vpop.f32.mrb[0].mxu0
      %4551 = vmatprep.mubr.f32.mxu0 0.0
      %4552 = vmatmul.mubr.f32.gmra.mrb[0].mxu0 %v4376
      %v4553 = vpop.f32.mrb[0].mxu0
      %v4554 = vadd.f32 0.0, %v4553
      %v4555 = vpop.f32.mrb[0].mxu0
      %4556 = vmatprep.mubr.f32.mxu0 0.0
      %4557 = vmatmul.mubr.f32.gmra.mrb[0].mxu0 %v4379
      %v4558 = vpop.f32.mrb[0].mxu0
      %v4559 = vadd.f32 0.0, %v4558
      %v4560 = vpop.f32.mrb[0].mxu0
      %4561 = vmatprep.mubr.f32.mxu0 0.0
      %4562 = vmatmul.mubr.f32.gmra.mrb[0].mxu0 %v4382
      %v4563 = vpop.f32.mrb[0].mxu0
      %v4564 = vadd.f32 0.0, %v4563
      %v4565 = vpop.f32.mrb[0].mxu0
      %4566 = vmatprep.mubr.f32.mxu0 0.0
      %4567 = vmatmul.mubr.f32.gmra.mrb[0].mxu0 %v4385
      %v4568 = vpop.f32.mrb[0].mxu0
      %v4569 = vadd.f32 0.0, %v4568
      %v4570 = vpop.f32.mrb[0].mxu0
      %4571 = vmatprep.mubr.f32.mxu0 0.0
      %4572 = vmatmul.mubr.f32.gmra.mrb[0].mxu0 %v4388
      %v4573 = vpop.f32.mrb[0].mxu0
      %v4574 = vadd.f32 0.0, %v4573
      %v4575 = vpop.f32.mrb[0].mxu0
      %4576 = vmatprep.mubr.f32.mxu0 0.0
      %4577 = vmatmul.mubr.f32.gmra.mrb[0].mxu0 %v4391
      %v4578 = vpop.f32.mrb[0].mxu0
      %v4579 = vadd.f32 0.0, %v4578
      %v4580 = vpop.f32.mrb[0].mxu0
      %4581 = vmatprep.mubr.f32.mxu0 0.0
      %4582 = vmatmul.mubr.f32.gmra.mrb[0].mxu0 %v4394
      %v4583 = vpop.f32.mrb[0].mxu0
      %v4584 = vadd.f32 0.0, %v4583
      %v4585 = vpop.f32.mrb[0].mxu0
      %4586 = vmatprep.mubr.f32.mxu0 0.0
      %4587 = vmatmul.mubr.f32.gmra.mrb[0].mxu0 %v4397
      %v4588 = vpop.f32.mrb[0].mxu0
      %v4589 = vadd.f32 0.0, %v4588
      %v4590 = vpop.f32.mrb[0].mxu0
      %4591 = vmatprep.mubr.f32.mxu0 0.0
      %4592 = vmatmul.mubr.f32.gmra.mrb[0].mxu0 %v4400
      %v4593 = vpop.f32.mrb[0].mxu0
      %v4594 = vadd.f32 0.0, %v4593
      %v4595 = vpop.f32.mrb[0].mxu0
      %4596 = vmatprep.mubr.f32.mxu0 0.0
      %4597 = vmatmul.mubr.f32.gmra.mrb[0].mxu0 %v4403
      %v4598 = vpop.f32.mrb[0].mxu0
      %v4599 = vadd.f32 0.0, %v4598
      %v4600 = vpop.f32.mrb[0].mxu0
      %4601 = vmatprep.mubr.f32.mxu0 0.0
      %4602 = vmatmul.mubr.f32.gmra.mrb[0].mxu0 %v4406
      %v4603 = vpop.f32.mrb[0].mxu0
      %v4604 = vadd.f32 0.0, %v4603
      %v4605 = vpop.f32.mrb[0].mxu0
      %4606 = vmatprep.mubr.f32.mxu0 0.0
      %4607 = vmatmul.mubr.f32.gmra.mrb[0].mxu0 %v4409
      %v4608 = vpop.f32.mrb[0].mxu0
      %v4609 = vadd.f32 0.0, %v4608
      %v4610 = vpop.f32.mrb[0].mxu0
      %4611 = vmatprep.mubr.f32.mxu0 0.0
      %4612 = vmatmul.mubr.f32.gmra.mrb[0].mxu0 %v4412
      %v4613 = vpop.f32.mrb[0].mxu0
      %v4614 = vadd.f32 0.0, %v4613
      %v4615 = vpop.f32.mrb[0].mxu0
      %4616 = vmatprep.mubr.f32.mxu0 0.0
      %4617 = vmatmul.mubr.f32.gmra.mrb[0].mxu0 %v4415
      %v4618 = vpop.f32.mrb[0].mxu0
      %v4619 = vadd.f32 0.0, %v4618
      %v4620 = vpop.f32.mrb[0].mxu0
      %4621 = vmatprep.mubr.f32.mxu0 0.0
      %4622 = vmatmul.mubr.f32.gmra.mrb[0].mxu0 %v4418
      %v4623 = vpop.f32.mrb[0].mxu0
      %v4624 = vadd.f32 0.0, %v4623
      %v4625 = vpop.f32.mrb[0].mxu0
      %4626 = vmatprep.mubr.f32.mxu0 0.0
      %4627 = vmatmul.mubr.f32.gmra.mrb[0].mxu0 %v4421
      %v4628 = vpop.f32.mrb[0].mxu0
      %v4629 = vadd.f32 0.0, %v4628
      %v4630 = vpop.f32.mrb[0].mxu0
      %4631 = vmatprep.mubr.f32.mxu0 0.0
      %4632 = vmatmul.mubr.f32.gmra.mrb[0].mxu0 %v4424
      %v4633 = vpop.f32.mrb[0].mxu0
      %v4634 = vadd.f32 0.0, %v4633
      %v4635 = vpop.f32.mrb[0].mxu0
      %4636 = vmatprep.mubr.f32.mxu0 0.0
      %4637 = vmatmul.mubr.f32.gmra.mrb[0].mxu0 %v4427
      %v4638 = vpop.f32.mrb[0].mxu0
      %v4639 = vadd.f32 0.0, %v4638
      %v4640 = vpop.f32.mrb[0].mxu0
      %4641 = vmatprep.mubr.f32.mxu0 0.0
      %4642 = vmatmul.mubr.f32.gmra.mrb[0].mxu0 %v4430
      %v4643 = vpop.f32.mrb[0].mxu0
      %v4644 = vadd.f32 0.0, %v4643
      %v4645 = vpop.f32.mrb[0].mxu0
      %4646 = vmatprep.mubr.f32.mxu0 0.0
      %4647 = vmatmul.mubr.f32.gmra.mrb[0].mxu0 %v4433
      %v4648 = vpop.f32.mrb[0].mxu0
      %v4649 = vadd.f32 0.0, %v4648
      %v4650 = vpop.f32.mrb[0].mxu0
      %4651 = vmatprep.mubr.f32.mxu0 0.0
      %4652 = vmatmul.mubr.f32.gmra.mrb[0].mxu0 %v4436
      %v4653 = vpop.f32.mrb[0].mxu0
      %v4654 = vadd.f32 0.0, %v4653
      %v4655 = vpop.f32.mrb[0].mxu0
      %4656 = vmatprep.mubr.f32.mxu0 0.0
      %4657 = vmatmul.mubr.f32.gmra.mrb[0].mxu0 %v4439
      %v4658 = vpop.f32.mrb[0].mxu0
      %v4659 = vadd.f32 0.0, %v4658
      %v4660 = vpop.f32.mrb[0].mxu0
      %4661 = vmatprep.mubr.f32.mxu0 0.0
      %4662 = vmatmul.mubr.f32.gmra.mrb[0].mxu0 %v4442
      %v4663 = vpop.f32.mrb[0].mxu0
      %v4664 = vadd.f32 0.0, %v4663
      %v4665 = vpop.f32.mrb[0].mxu0
      %4666 = vmatprep.mubr.f32.mxu0 0.0
      %4667 = vmatmul.mubr.f32.gmra.mrb[0].mxu0 %v4445
      %v4668 = vpop.f32.mrb[0].mxu0
      %v4669 = vadd.f32 0.0, %v4668
      %v4670 = vpop.f32.mrb[0].mxu0
      %4671 = vdwg.mxu0
      %v4672 = vadd.f32 %v4285, %v4514
      %v4673 = vadd.f32 %v4286, %v4519
      %v4674 = vadd.f32 %v4287, %v4524
      %v4675 = vadd.f32 %v4288, %v4529
      %v4676 = vadd.f32 %v4289, %v4534
      %v4677 = vadd.f32 %v4290, %v4539
      %v4678 = vadd.f32 %v4291, %v4544
      %v4679 = vadd.f32 %v4292, %v4549
      %v4680 = vadd.f32 %v4293, %v4554
      %v4681 = vadd.f32 %v4294, %v4559
      %v4682 = vadd.f32 %v4295, %v4564
      %v4683 = vadd.f32 %v4296, %v4569
      %v4684 = vadd.f32 %v4297, %v4574
      %v4685 = vadd.f32 %v4298, %v4579
      %v4686 = vadd.f32 %v4299, %v4584
      %v4687 = vadd.f32 %v4300, %v4589
      %v4688 = vadd.f32 %v4301, %v4594
      %v4689 = vadd.f32 %v4302, %v4599
      %v4690 = vadd.f32 %v4303, %v4604
      %v4691 = vadd.f32 %v4304, %v4609
      %v4692 = vadd.f32 %v4305, %v4614
      %v4693 = vadd.f32 %v4306, %v4619
      %v4694 = vadd.f32 %v4307, %v4624
      %v4695 = vadd.f32 %v4308, %v4629
      %v4696 = vadd.f32 %v4309, %v4634
      %v4697 = vadd.f32 %v4310, %v4639
      %v4698 = vadd.f32 %v4311, %v4644
      %v4699 = vadd.f32 %v4312, %v4649
      %v4700 = vadd.f32 %v4313, %v4654
      %v4701 = vadd.f32 %v4314, %v4659
      %v4702 = vadd.f32 %v4315, %v4664
      %v4703 = vadd.f32 %v4316, %v4669
      %v4704 = vld [vmem:[%s7] sm:$0x1]
      %v4706 = vlaneseq
      %v4707 = vshrl.u32 %v4706, 7
      %v4708 = vsub.s32 0, %v4707
      %v4709 = vrot.slane %v4704, %v4708
      %v4711 = vadd.f32 %v4672, %v4709
      %v4712 = vadd.f32 %v4673, %v4709
      %v4713 = vadd.f32 %v4674, %v4709
      %v4714 = vadd.f32 %v4675, %v4709
      %v4715 = vadd.f32 %v4676, %v4709
      %v4716 = vadd.f32 %v4677, %v4709
      %v4717 = vadd.f32 %v4678, %v4709
      %v4718 = vadd.f32 %v4679, %v4709
      %v4719 = vadd.f32 %v4680, %v4709
      %v4720 = vadd.f32 %v4681, %v4709
      %v4721 = vadd.f32 %v4682, %v4709
      %v4722 = vadd.f32 %v4683, %v4709
      %v4723 = vadd.f32 %v4684, %v4709
      %v4724 = vadd.f32 %v4685, %v4709
      %v4725 = vadd.f32 %v4686, %v4709
      %v4726 = vadd.f32 %v4687, %v4709
      %v4727 = vadd.f32 %v4688, %v4709
      %v4728 = vadd.f32 %v4689, %v4709
      %v4729 = vadd.f32 %v4690, %v4709
      %v4730 = vadd.f32 %v4691, %v4709
      %v4731 = vadd.f32 %v4692, %v4709
      %v4732 = vadd.f32 %v4693, %v4709
      %v4733 = vadd.f32 %v4694, %v4709
      %v4734 = vadd.f32 %v4695, %v4709
      %v4735 = vadd.f32 %v4696, %v4709
      %v4736 = vadd.f32 %v4697, %v4709
      %v4737 = vadd.f32 %v4698, %v4709
      %v4738 = vadd.f32 %v4699, %v4709
      %v4739 = vadd.f32 %v4700, %v4709
      %v4740 = vadd.f32 %v4701, %v4709
      %v4741 = vadd.f32 %v4702, %v4709
      %v4742 = vadd.f32 %v4703, %v4709
      %v4743 = vld [vmem:[%s476] sm:$0x1]
      %v4745 = vlaneseq
      %v4746 = vshrl.u32 %v4745, 7
      %v4747 = vsub.s32 0, %v4746
      %v4748 = vrot.slane %v4743, %v4747
      %v4750 = vadd.f32 %v4711, %v4748
      %v4751 = vadd.f32 %v4712, %v4748
      %v4752 = vadd.f32 %v4713, %v4748
      %v4753 = vadd.f32 %v4714, %v4748
      %v4754 = vadd.f32 %v4715, %v4748
      %v4755 = vadd.f32 %v4716, %v4748
      %v4756 = vadd.f32 %v4717, %v4748
      %v4757 = vadd.f32 %v4718, %v4748
      %v4758 = vadd.f32 %v4719, %v4748
      %v4759 = vadd.f32 %v4720, %v4748
      %v4760 = vadd.f32 %v4721, %v4748
      %v4761 = vadd.f32 %v4722, %v4748
      %v4762 = vadd.f32 %v4723, %v4748
      %v4763 = vadd.f32 %v4724, %v4748
      %v4764 = vadd.f32 %v4725, %v4748
      %v4765 = vadd.f32 %v4726, %v4748
      %v4766 = vadd.f32 %v4727, %v4748
      %v4767 = vadd.f32 %v4728, %v4748
      %v4768 = vadd.f32 %v4729, %v4748
      %v4769 = vadd.f32 %v4730, %v4748
      %v4770 = vadd.f32 %v4731, %v4748
      %v4771 = vadd.f32 %v4732, %v4748
      %v4772 = vadd.f32 %v4733, %v4748
      %v4773 = vadd.f32 %v4734, %v4748
      %v4774 = vadd.f32 %v4735, %v4748
      %v4775 = vadd.f32 %v4736, %v4748
      %v4776 = vadd.f32 %v4737, %v4748
      %v4777 = vadd.f32 %v4738, %v4748
      %v4778 = vadd.f32 %v4739, %v4748
      %v4779 = vadd.f32 %v4740, %v4748
      %v4780 = vadd.f32 %v4741, %v4748
      %v4781 = vadd.f32 %v4742, %v4748
      %v4782 = vld [vmem:[%s3] sm:$0xff]
      %v4783 = vld [vmem:[%s3 + $0x8] sm:$0xff]
      %v4784 = vld [vmem:[%s8] sm:$0x1]
      %v4785 = vld [vmem:[%s9] sm:$0x1]
      %vm4786 = vcmask 130048
      %v4787 = vsel %vm4786, %v4750, 0.0
      %v4788 = vsel %vm4786, %v4751, 0.0
      %v4789 = vadd.f32 %v4787, %v4788
      %v4790 = vsel %vm4786, %v4752, 0.0
      %v4791 = vadd.f32 %v4789, %v4790
      %v4792 = vsel %vm4786, %v4753, 0.0
      %v4793 = vadd.f32 %v4791, %v4792
      %v4794 = vsel %vm4786, %v4754, 0.0
      %v4795 = vadd.f32 %v4793, %v4794
      %v4796 = vsel %vm4786, %v4755, 0.0
      %v4797 = vadd.f32 %v4795, %v4796
      %v4798 = vsel %vm4786, %v4756, 0.0
      %v4799 = vadd.f32 %v4797, %v4798
      %v4800 = vsel %vm4786, %v4757, 0.0
      %v4801 = vadd.f32 %v4799, %v4800
      %v4802 = vsel %vm4786, %v4758, 0.0
      %v4803 = vadd.f32 %v4801, %v4802
      %v4804 = vsel %vm4786, %v4759, 0.0
      %v4805 = vadd.f32 %v4803, %v4804
      %v4806 = vsel %vm4786, %v4760, 0.0
      %v4807 = vadd.f32 %v4805, %v4806
      %v4808 = vsel %vm4786, %v4761, 0.0
      %v4809 = vadd.f32 %v4807, %v4808
      %v4810 = vsel %vm4786, %v4762, 0.0
      %v4811 = vadd.f32 %v4809, %v4810
      %v4812 = vsel %vm4786, %v4763, 0.0
      %v4813 = vadd.f32 %v4811, %v4812
      %v4814 = vsel %vm4786, %v4764, 0.0
      %v4815 = vadd.f32 %v4813, %v4814
      %v4816 = vsel %vm4786, %v4765, 0.0
      %v4817 = vadd.f32 %v4815, %v4816
      %v4818 = vsel %vm4786, %v4766, 0.0
      %v4819 = vadd.f32 %v4817, %v4818
      %v4820 = vsel %vm4786, %v4767, 0.0
      %v4821 = vadd.f32 %v4819, %v4820
      %v4822 = vsel %vm4786, %v4768, 0.0
      %v4823 = vadd.f32 %v4821, %v4822
      %v4824 = vsel %vm4786, %v4769, 0.0
      %v4825 = vadd.f32 %v4823, %v4824
      %v4826 = vsel %vm4786, %v4770, 0.0
      %v4827 = vadd.f32 %v4825, %v4826
      %v4828 = vsel %vm4786, %v4771, 0.0
      %v4829 = vadd.f32 %v4827, %v4828
      %v4830 = vsel %vm4786, %v4772, 0.0
      %v4831 = vadd.f32 %v4829, %v4830
      %v4832 = vsel %vm4786, %v4773, 0.0
      %v4833 = vadd.f32 %v4831, %v4832
      %v4834 = vsel %vm4786, %v4774, 0.0
      %v4835 = vadd.f32 %v4833, %v4834
      %v4836 = vsel %vm4786, %v4775, 0.0
      %v4837 = vadd.f32 %v4835, %v4836
      %v4838 = vsel %vm4786, %v4776, 0.0
      %v4839 = vadd.f32 %v4837, %v4838
      %v4840 = vsel %vm4786, %v4777, 0.0
      %v4841 = vadd.f32 %v4839, %v4840
      %v4842 = vsel %vm4786, %v4778, 0.0
      %v4843 = vadd.f32 %v4841, %v4842
      %v4844 = vsel %vm4786, %v4779, 0.0
      %v4845 = vadd.f32 %v4843, %v4844
      %v4846 = vsel %vm4786, %v4780, 0.0
      %v4847 = vadd.f32 %v4845, %v4846
      %v4848 = vsel %vm4786, %v4781, 0.0
      %v4849 = vadd.f32 %v4847, %v4848
      %v4850 = vrot.slane %v4849, 4
      %v4851 = vadd.f32 %v4849, %v4850
      %v4852 = vrot.slane %v4851, 2
      %v4853 = vadd.f32 %v4851, %v4852
      %v4854 = vrot.slane %v4853, 1
      %v4855 = vadd.f32 %v4853, %v4854
      %v4856 = vmul.f32 %v4750, %v4750
      %v4857 = vmul.f32 %v4751, %v4751
      %v4858 = vmul.f32 %v4752, %v4752
      %v4859 = vmul.f32 %v4753, %v4753
      %v4860 = vmul.f32 %v4754, %v4754
      %v4861 = vmul.f32 %v4755, %v4755
      %v4862 = vmul.f32 %v4756, %v4756
      %v4863 = vmul.f32 %v4757, %v4757
      %v4864 = vmul.f32 %v4758, %v4758
      %v4865 = vmul.f32 %v4759, %v4759
      %v4866 = vmul.f32 %v4760, %v4760
      %v4867 = vmul.f32 %v4761, %v4761
      %v4868 = vmul.f32 %v4762, %v4762
      %v4869 = vmul.f32 %v4763, %v4763
      %v4870 = vmul.f32 %v4764, %v4764
      %v4871 = vmul.f32 %v4765, %v4765
      %v4872 = vmul.f32 %v4766, %v4766
      %v4873 = vmul.f32 %v4767, %v4767
      %v4874 = vmul.f32 %v4768, %v4768
      %v4875 = vmul.f32 %v4769, %v4769
      %v4876 = vmul.f32 %v4770, %v4770
      %v4877 = vmul.f32 %v4771, %v4771
      %v4878 = vmul.f32 %v4772, %v4772
      %v4879 = vmul.f32 %v4773, %v4773
      %v4880 = vmul.f32 %v4774, %v4774
      %v4881 = vmul.f32 %v4775, %v4775
      %v4882 = vmul.f32 %v4776, %v4776
      %v4883 = vmul.f32 %v4777, %v4777
      %v4884 = vmul.f32 %v4778, %v4778
      %v4885 = vmul.f32 %v4779, %v4779
      %v4886 = vmul.f32 %v4780, %v4780
      %v4887 = vmul.f32 %v4781, %v4781
      %v4888 = vsel %vm4786, %v4856, 0.0
      %v4889 = vsel %vm4786, %v4857, 0.0
      %v4890 = vadd.f32 %v4888, %v4889
      %v4891 = vsel %vm4786, %v4858, 0.0
      %v4892 = vadd.f32 %v4890, %v4891
      %v4893 = vsel %vm4786, %v4859, 0.0
      %v4894 = vadd.f32 %v4892, %v4893
      %v4895 = vsel %vm4786, %v4860, 0.0
      %v4896 = vadd.f32 %v4894, %v4895
      %v4897 = vsel %vm4786, %v4861, 0.0
      %v4898 = vadd.f32 %v4896, %v4897
      %v4899 = vsel %vm4786, %v4862, 0.0
      %v4900 = vadd.f32 %v4898, %v4899
      %v4901 = vsel %vm4786, %v4863, 0.0
      %v4902 = vadd.f32 %v4900, %v4901
      %v4903 = vsel %vm4786, %v4864, 0.0
      %v4904 = vadd.f32 %v4902, %v4903
      %v4905 = vsel %vm4786, %v4865, 0.0
      %v4906 = vadd.f32 %v4904, %v4905
      %v4907 = vsel %vm4786, %v4866, 0.0
      %v4908 = vadd.f32 %v4906, %v4907
      %v4909 = vsel %vm4786, %v4867, 0.0
      %v4910 = vadd.f32 %v4908, %v4909
      %v4911 = vsel %vm4786, %v4868, 0.0
      %v4912 = vadd.f32 %v4910, %v4911
      %v4913 = vsel %vm4786, %v4869, 0.0
      %v4914 = vadd.f32 %v4912, %v4913
      %v4915 = vsel %vm4786, %v4870, 0.0
      %v4916 = vadd.f32 %v4914, %v4915
      %v4917 = vsel %vm4786, %v4871, 0.0
      %v4918 = vadd.f32 %v4916, %v4917
      %v4919 = vsel %vm4786, %v4872, 0.0
      %v4920 = vadd.f32 %v4918, %v4919
      %v4921 = vsel %vm4786, %v4873, 0.0
      %v4922 = vadd.f32 %v4920, %v4921
      %v4923 = vsel %vm4786, %v4874, 0.0
      %v4924 = vadd.f32 %v4922, %v4923
      %v4925 = vsel %vm4786, %v4875, 0.0
      %v4926 = vadd.f32 %v4924, %v4925
      %v4927 = vsel %vm4786, %v4876, 0.0
      %v4928 = vadd.f32 %v4926, %v4927
      %v4929 = vsel %vm4786, %v4877, 0.0
      %v4930 = vadd.f32 %v4928, %v4929
      %v4931 = vsel %vm4786, %v4878, 0.0
      %v4932 = vadd.f32 %v4930, %v4931
      %v4933 = vsel %vm4786, %v4879, 0.0
      %v4934 = vadd.f32 %v4932, %v4933
      %v4935 = vsel %vm4786, %v4880, 0.0
      %v4936 = vadd.f32 %v4934, %v4935
      %v4937 = vsel %vm4786, %v4881, 0.0
      %v4938 = vadd.f32 %v4936, %v4937
      %v4939 = vsel %vm4786, %v4882, 0.0
      %v4940 = vadd.f32 %v4938, %v4939
      %v4941 = vsel %vm4786, %v4883, 0.0
      %v4942 = vadd.f32 %v4940, %v4941
      %v4943 = vsel %vm4786, %v4884, 0.0
      %v4944 = vadd.f32 %v4942, %v4943
      %v4945 = vsel %vm4786, %v4885, 0.0
      %v4946 = vadd.f32 %v4944, %v4945
      %v4947 = vsel %vm4786, %v4886, 0.0
      %v4948 = vadd.f32 %v4946, %v4947
      %v4949 = vsel %vm4786, %v4887, 0.0
      %v4950 = vadd.f32 %v4948, %v4949
      %v4951 = vrot.slane %v4950, 4
      %v4952 = vadd.f32 %v4950, %v4951
      %v4953 = vrot.slane %v4952, 2
      %v4954 = vadd.f32 %v4952, %v4953
      %v4955 = vrot.slane %v4954, 1
      %v4956 = vadd.f32 %v4954, %v4955
      %v4958 = vsel %vm4786, %v4855, 0
      %4960 = vmatprep.subr.mxu0 0.0
      %4961 = vmatpush1.msra.mxu0 %v4782
      %4962 = vmatprep.subr.mxu0 0.0
      %4963 = vmatpush1.msra.mxu0 %v4783
      %4964 = vmatprep.subr.mxu0 0.0
      %4965 = vmatpush1.msra.mxu0 0.0
      %4966 = vmatprep.subr.mxu0 0.0
      %4967 = vmatpush1.msra.mxu0 0.0
      %4968 = vmatprep.subr.mxu0 0.0
      %4969 = vmatpush1.msra.mxu0 0.0
      %4970 = vmatprep.subr.mxu0 0.0
      %4971 = vmatpush1.msra.mxu0 0.0
      %4972 = vmatprep.subr.mxu0 0.0
      %4973 = vmatpush1.msra.mxu0 0.0
      %4974 = vmatprep.subr.mxu0 0.0
      %4975 = vmatpush1.msra.mxu0 0.0
      %4976 = vmatprep.subr.mxu0 0.0
      %4977 = vmatpush1.msra.mxu0 0.0
      %4978 = vmatprep.subr.mxu0 0.0
      %4979 = vmatpush1.msra.mxu0 0.0
      %4980 = vmatprep.subr.mxu0 0.0
      %4981 = vmatpush1.msra.mxu0 0.0
      %4982 = vmatprep.subr.mxu0 0.0
      %4983 = vmatpush1.msra.mxu0 0.0
      %4984 = vmatprep.subr.mxu0 0.0
      %4985 = vmatpush1.msra.mxu0 0.0
      %4986 = vmatprep.subr.mxu0 0.0
      %4987 = vmatpush1.msra.mxu0 0.0
      %4988 = vmatprep.subr.mxu0 0.0
      %4989 = vmatpush1.msra.mxu0 0.0
      %4990 = vmatprep.subr.mxu0 0.0
      %4991 = vmatpush1.msra.mxu0 0.0
      %4992 = vmatprep.subr.mxu0 0.0
      %4993 = vmatpush1.msra.mxu0 0.0
      %4994 = vmatprep.subr.mxu0 0.0
      %4995 = vmatpush1.msra.mxu0 0.0
      %4996 = vmatprep.subr.mxu0 0.0
      %4997 = vmatpush1.msra.mxu0 0.0
      %4998 = vmatprep.subr.mxu0 0.0
      %4999 = vmatpush1.msra.mxu0 0.0
      %5000 = vmatprep.subr.mxu0 0.0
      %5001 = vmatpush1.msra.mxu0 0.0
      %5002 = vmatprep.subr.mxu0 0.0
      %5003 = vmatpush1.msra.mxu0 0.0
      %5004 = vmatprep.subr.mxu0 0.0
      %5005 = vmatpush1.msra.mxu0 0.0
      %5006 = vmatprep.subr.mxu0 0.0
      %5007 = vmatpush1.msra.mxu0 0.0
      %5008 = vmatprep.subr.mxu0 0.0
      %5009 = vmatpush1.msra.mxu0 0.0
      %5010 = vmatprep.subr.mxu0 0.0
      %5011 = vmatpush1.msra.mxu0 0.0
      %5012 = vmatprep.subr.mxu0 0.0
      %5013 = vmatpush1.msra.mxu0 0.0
      %5014 = vmatprep.subr.mxu0 0.0
      %5015 = vmatpush1.msra.mxu0 0.0
      %5016 = vmatprep.subr.mxu0 0.0
      %5017 = vmatpush1.msra.mxu0 0.0
      %5018 = vmatprep.subr.mxu0 0.0
      %5019 = vmatpush1.msra.mxu0 0.0
      %5020 = vmatprep.subr.mxu0 0.0
      %5021 = vmatpush1.msra.mxu0 0.0
      %5022 = vmatprep.subr.mxu0 0.0
      %5023 = vmatpush1.msra.mxu0 0.0
      %5024 = vmatprep.mubr.f32.mxu0 0.0
      %5025 = vmatmul.mubr.f32.gmra.mrb[0].mxu0 %v4958
      %v5026 = vpop.f32.mrb[0].mxu0
      %v5027 = vadd.f32 0.0, %v5026
      %v5028 = vpop.f32.mrb[0].mxu0
      %5029 = vdwg.mxu0
      %v5031 = vsel %vm4786, %v4956, 0
      %5033 = vmatprep.subr.mxu0 0.0
      %5034 = vmatpush1.msra.mxu0 %v4782
      %5035 = vmatprep.subr.mxu0 0.0
      %5036 = vmatpush1.msra.mxu0 %v4783
      %5037 = vmatprep.subr.mxu0 0.0
      %5038 = vmatpush1.msra.mxu0 0.0
      %5039 = vmatprep.subr.mxu0 0.0
      %5040 = vmatpush1.msra.mxu0 0.0
      %5041 = vmatprep.subr.mxu0 0.0
      %5042 = vmatpush1.msra.mxu0 0.0
      %5043 = vmatprep.subr.mxu0 0.0
      %5044 = vmatpush1.msra.mxu0 0.0
      %5045 = vmatprep.subr.mxu0 0.0
      %5046 = vmatpush1.msra.mxu0 0.0
      %5047 = vmatprep.subr.mxu0 0.0
      %5048 = vmatpush1.msra.mxu0 0.0
      %5049 = vmatprep.subr.mxu0 0.0
      %5050 = vmatpush1.msra.mxu0 0.0
      %5051 = vmatprep.subr.mxu0 0.0
      %5052 = vmatpush1.msra.mxu0 0.0
      %5053 = vmatprep.subr.mxu0 0.0
      %5054 = vmatpush1.msra.mxu0 0.0
      %5055 = vmatprep.subr.mxu0 0.0
      %5056 = vmatpush1.msra.mxu0 0.0
      %5057 = vmatprep.subr.mxu0 0.0
      %5058 = vmatpush1.msra.mxu0 0.0
      %5059 = vmatprep.subr.mxu0 0.0
      %5060 = vmatpush1.msra.mxu0 0.0
      %5061 = vmatprep.subr.mxu0 0.0
      %5062 = vmatpush1.msra.mxu0 0.0
      %5063 = vmatprep.subr.mxu0 0.0
      %5064 = vmatpush1.msra.mxu0 0.0
      %5065 = vmatprep.subr.mxu0 0.0
      %5066 = vmatpush1.msra.mxu0 0.0
      %5067 = vmatprep.subr.mxu0 0.0
      %5068 = vmatpush1.msra.mxu0 0.0
      %5069 = vmatprep.subr.mxu0 0.0
      %5070 = vmatpush1.msra.mxu0 0.0
      %5071 = vmatprep.subr.mxu0 0.0
      %5072 = vmatpush1.msra.mxu0 0.0
      %5073 = vmatprep.subr.mxu0 0.0
      %5074 = vmatpush1.msra.mxu0 0.0
      %5075 = vmatprep.subr.mxu0 0.0
      %5076 = vmatpush1.msra.mxu0 0.0
      %5077 = vmatprep.subr.mxu0 0.0
      %5078 = vmatpush1.msra.mxu0 0.0
      %5079 = vmatprep.subr.mxu0 0.0
      %5080 = vmatpush1.msra.mxu0 0.0
      %5081 = vmatprep.subr.mxu0 0.0
      %5082 = vmatpush1.msra.mxu0 0.0
      %5083 = vmatprep.subr.mxu0 0.0
      %5084 = vmatpush1.msra.mxu0 0.0
      %5085 = vmatprep.subr.mxu0 0.0
      %5086 = vmatpush1.msra.mxu0 0.0
      %5087 = vmatprep.subr.mxu0 0.0
      %5088 = vmatpush1.msra.mxu0 0.0
      %5089 = vmatprep.subr.mxu0 0.0
      %5090 = vmatpush1.msra.mxu0 0.0
      %5091 = vmatprep.subr.mxu0 0.0
      %5092 = vmatpush1.msra.mxu0 0.0
      %5093 = vmatprep.subr.mxu0 0.0
      %5094 = vmatpush1.msra.mxu0 0.0
      %5095 = vmatprep.subr.mxu0 0.0
      %5096 = vmatpush1.msra.mxu0 0.0
      %5097 = vmatprep.mubr.f32.mxu0 0.0
      %5098 = vmatmul.mubr.f32.gmra.mrb[0].mxu0 %v5031
      %v5099 = vpop.f32.mrb[0].mxu0
      %v5100 = vadd.f32 0.0, %v5099
      %v5101 = vpop.f32.mrb[0].mxu0
      %5102 = vdwg.mxu0
      %v5103 = vmul.f32 %v5027, %v5027
      %v5104 = vsub.f32 %v5100, %v5103
      %v5105 = vmax.f32 %v5104, 0.0
      %v5106 = vadd.f32 %v5105, 1e-05
      %v5107 = vrsqrt.pop %v5106
      %v5108 = vlaneseq
      %v5109 = vshrl.u32 %v5108, 7
      %v5110 = vsub.s32 0, %v5109
      %v5111 = vrot.slane %v5027, %v5110
      %v5112 = vsub.f32 %v4750, %v5111
      %v5113 = vsub.f32 %v4751, %v5111
      %v5114 = vsub.f32 %v4752, %v5111
      %v5115 = vsub.f32 %v4753, %v5111
      %v5116 = vsub.f32 %v4754, %v5111
      %v5117 = vsub.f32 %v4755, %v5111
      %v5118 = vsub.f32 %v4756, %v5111
      %v5119 = vsub.f32 %v4757, %v5111
      %v5120 = vsub.f32 %v4758, %v5111
      %v5121 = vsub.f32 %v4759, %v5111
      %v5122 = vsub.f32 %v4760, %v5111
      %v5123 = vsub.f32 %v4761, %v5111
      %v5124 = vsub.f32 %v4762, %v5111
      %v5125 = vsub.f32 %v4763, %v5111
      %v5126 = vsub.f32 %v4764, %v5111
      %v5127 = vsub.f32 %v4765, %v5111
      %v5128 = vsub.f32 %v4766, %v5111
      %v5129 = vsub.f32 %v4767, %v5111
      %v5130 = vsub.f32 %v4768, %v5111
      %v5131 = vsub.f32 %v4769, %v5111
      %v5132 = vsub.f32 %v4770, %v5111
      %v5133 = vsub.f32 %v4771, %v5111
      %v5134 = vsub.f32 %v4772, %v5111
      %v5135 = vsub.f32 %v4773, %v5111
      %v5136 = vsub.f32 %v4774, %v5111
      %v5137 = vsub.f32 %v4775, %v5111
      %v5138 = vsub.f32 %v4776, %v5111
      %v5139 = vsub.f32 %v4777, %v5111
      %v5140 = vsub.f32 %v4778, %v5111
      %v5141 = vsub.f32 %v4779, %v5111
      %v5142 = vsub.f32 %v4780, %v5111
      %v5143 = vsub.f32 %v4781, %v5111
      %v5144 = vlaneseq
      %v5145 = vshrl.u32 %v5144, 7
      %v5146 = vsub.s32 0, %v5145
      %v5147 = vrot.slane %v5107, %v5146
      %v5148 = vmul.f32 %v5112, %v5147
      %v5149 = vmul.f32 %v5113, %v5147
      %v5150 = vmul.f32 %v5114, %v5147
      %v5151 = vmul.f32 %v5115, %v5147
      %v5152 = vmul.f32 %v5116, %v5147
      %v5153 = vmul.f32 %v5117, %v5147
      %v5154 = vmul.f32 %v5118, %v5147
      %v5155 = vmul.f32 %v5119, %v5147
      %v5156 = vmul.f32 %v5120, %v5147
      %v5157 = vmul.f32 %v5121, %v5147
      %v5158 = vmul.f32 %v5122, %v5147
      %v5159 = vmul.f32 %v5123, %v5147
      %v5160 = vmul.f32 %v5124, %v5147
      %v5161 = vmul.f32 %v5125, %v5147
      %v5162 = vmul.f32 %v5126, %v5147
      %v5163 = vmul.f32 %v5127, %v5147
      %v5164 = vmul.f32 %v5128, %v5147
      %v5165 = vmul.f32 %v5129, %v5147
      %v5166 = vmul.f32 %v5130, %v5147
      %v5167 = vmul.f32 %v5131, %v5147
      %v5168 = vmul.f32 %v5132, %v5147
      %v5169 = vmul.f32 %v5133, %v5147
      %v5170 = vmul.f32 %v5134, %v5147
      %v5171 = vmul.f32 %v5135, %v5147
      %v5172 = vmul.f32 %v5136, %v5147
      %v5173 = vmul.f32 %v5137, %v5147
      %v5174 = vmul.f32 %v5138, %v5147
      %v5175 = vmul.f32 %v5139, %v5147
      %v5176 = vmul.f32 %v5140, %v5147
      %v5177 = vmul.f32 %v5141, %v5147
      %v5178 = vmul.f32 %v5142, %v5147
      %v5179 = vmul.f32 %v5143, %v5147
      %v5181 = vlaneseq
      %v5182 = vshrl.u32 %v5181, 7
      %v5183 = vsub.s32 0, %v5182
      %v5184 = vrot.slane %v4784, %v5183
      %v5186 = vmul.f32 %v5148, %v5184
      %v5187 = vmul.f32 %v5149, %v5184
      %v5188 = vmul.f32 %v5150, %v5184
      %v5189 = vmul.f32 %v5151, %v5184
      %v5190 = vmul.f32 %v5152, %v5184
      %v5191 = vmul.f32 %v5153, %v5184
      %v5192 = vmul.f32 %v5154, %v5184
      %v5193 = vmul.f32 %v5155, %v5184
      %v5194 = vmul.f32 %v5156, %v5184
      %v5195 = vmul.f32 %v5157, %v5184
      %v5196 = vmul.f32 %v5158, %v5184
      %v5197 = vmul.f32 %v5159, %v5184
      %v5198 = vmul.f32 %v5160, %v5184
      %v5199 = vmul.f32 %v5161, %v5184
      %v5200 = vmul.f32 %v5162, %v5184
      %v5201 = vmul.f32 %v5163, %v5184
      %v5202 = vmul.f32 %v5164, %v5184
      %v5203 = vmul.f32 %v5165, %v5184
      %v5204 = vmul.f32 %v5166, %v5184
      %v5205 = vmul.f32 %v5167, %v5184
      %v5206 = vmul.f32 %v5168, %v5184
      %v5207 = vmul.f32 %v5169, %v5184
      %v5208 = vmul.f32 %v5170, %v5184
      %v5209 = vmul.f32 %v5171, %v5184
      %v5210 = vmul.f32 %v5172, %v5184
      %v5211 = vmul.f32 %v5173, %v5184
      %v5212 = vmul.f32 %v5174, %v5184
      %v5213 = vmul.f32 %v5175, %v5184
      %v5214 = vmul.f32 %v5176, %v5184
      %v5215 = vmul.f32 %v5177, %v5184
      %v5216 = vmul.f32 %v5178, %v5184
      %v5217 = vmul.f32 %v5179, %v5184
      %v5219 = vlaneseq
      %v5220 = vshrl.u32 %v5219, 7
      %v5221 = vsub.s32 0, %v5220
      %v5222 = vrot.slane %v4785, %v5221
      %v5224 = vadd.f32 %v5186, %v5222
      %v5225 = vadd.f32 %v5187, %v5222
      %v5226 = vadd.f32 %v5188, %v5222
      %v5227 = vadd.f32 %v5189, %v5222
      %v5228 = vadd.f32 %v5190, %v5222
      %v5229 = vadd.f32 %v5191, %v5222
      %v5230 = vadd.f32 %v5192, %v5222
      %v5231 = vadd.f32 %v5193, %v5222
      %v5232 = vadd.f32 %v5194, %v5222
      %v5233 = vadd.f32 %v5195, %v5222
      %v5234 = vadd.f32 %v5196, %v5222
      %v5235 = vadd.f32 %v5197, %v5222
      %v5236 = vadd.f32 %v5198, %v5222
      %v5237 = vadd.f32 %v5199, %v5222
      %v5238 = vadd.f32 %v5200, %v5222
      %v5239 = vadd.f32 %v5201, %v5222
      %v5240 = vadd.f32 %v5202, %v5222
      %v5241 = vadd.f32 %v5203, %v5222
      %v5242 = vadd.f32 %v5204, %v5222
      %v5243 = vadd.f32 %v5205, %v5222
      %v5244 = vadd.f32 %v5206, %v5222
      %v5245 = vadd.f32 %v5207, %v5222
      %v5246 = vadd.f32 %v5208, %v5222
      %v5247 = vadd.f32 %v5209, %v5222
      %v5248 = vadd.f32 %v5210, %v5222
      %v5249 = vadd.f32 %v5211, %v5222
      %v5250 = vadd.f32 %v5212, %v5222
      %v5251 = vadd.f32 %v5213, %v5222
      %v5252 = vadd.f32 %v5214, %v5222
      %v5253 = vadd.f32 %v5215, %v5222
      %v5254 = vadd.f32 %v5216, %v5222
      %v5255 = vadd.f32 %v5217, %v5222
      %v5256 = vxor.u32 %v5224, 2147483648
      %v5257 = vxor.u32 %v5225, 2147483648
      %v5258 = vxor.u32 %v5226, 2147483648
      %v5259 = vxor.u32 %v5227, 2147483648
      %v5260 = vxor.u32 %v5228, 2147483648
      %v5261 = vxor.u32 %v5229, 2147483648
      %v5262 = vxor.u32 %v5230, 2147483648
      %v5263 = vxor.u32 %v5231, 2147483648
      %v5264 = vxor.u32 %v5232, 2147483648
      %v5265 = vxor.u32 %v5233, 2147483648
      %v5266 = vxor.u32 %v5234, 2147483648
      %v5267 = vxor.u32 %v5235, 2147483648
      %v5268 = vxor.u32 %v5236, 2147483648
      %v5269 = vxor.u32 %v5237, 2147483648
      %v5270 = vxor.u32 %v5238, 2147483648
      %v5271 = vxor.u32 %v5239, 2147483648
      %v5272 = vxor.u32 %v5240, 2147483648
      %v5273 = vxor.u32 %v5241, 2147483648
      %v5274 = vxor.u32 %v5242, 2147483648
      %v5275 = vxor.u32 %v5243, 2147483648
      %v5276 = vxor.u32 %v5244, 2147483648
      %v5277 = vxor.u32 %v5245, 2147483648
      %v5278 = vxor.u32 %v5246, 2147483648
      %v5279 = vxor.u32 %v5247, 2147483648
      %v5280 = vxor.u32 %v5248, 2147483648
      %v5281 = vxor.u32 %v5249, 2147483648
      %v5282 = vxor.u32 %v5250, 2147483648
      %v5283 = vxor.u32 %v5251, 2147483648
      %v5284 = vxor.u32 %v5252, 2147483648
      %v5285 = vxor.u32 %v5253, 2147483648
      %v5286 = vxor.u32 %v5254, 2147483648
      %v5287 = vxor.u32 %v5255, 2147483648
      %v5288 = vmul.f32 %v5256, 1.442695
      %v5289 = vpow.pop %v5288
      %v5290 = vmul.f32 %v5257, 1.442695
      %v5291 = vpow.pop %v5290
      %v5292 = vmul.f32 %v5258, 1.442695
      %v5293 = vpow.pop %v5292
      %v5294 = vmul.f32 %v5259, 1.442695
      %v5295 = vpow.pop %v5294
      %v5296 = vmul.f32 %v5260, 1.442695
      %v5297 = vpow.pop %v5296
      %v5298 = vmul.f32 %v5261, 1.442695
      %v5299 = vpow.pop %v5298
      %v5300 = vmul.f32 %v5262, 1.442695
      %v5301 = vpow.pop %v5300
      %v5302 = vmul.f32 %v5263, 1.442695
      %v5303 = vpow.pop %v5302
      %v5304 = vmul.f32 %v5264, 1.442695
      %v5305 = vpow.pop %v5304
      %v5306 = vmul.f32 %v5265, 1.442695
      %v5307 = vpow.pop %v5306
      %v5308 = vmul.f32 %v5266, 1.442695
      %v5309 = vpow.pop %v5308
      %v5310 = vmul.f32 %v5267, 1.442695
      %v5311 = vpow.pop %v5310
      %v5312 = vmul.f32 %v5268, 1.442695
      %v5313 = vpow.pop %v5312
      %v5314 = vmul.f32 %v5269, 1.442695
      %v5315 = vpow.pop %v5314
      %v5316 = vmul.f32 %v5270, 1.442695
      %v5317 = vpow.pop %v5316
      %v5318 = vmul.f32 %v5271, 1.442695
      %v5319 = vpow.pop %v5318
      %v5320 = vmul.f32 %v5272, 1.442695
      %v5321 = vpow.pop %v5320
      %v5322 = vmul.f32 %v5273, 1.442695
      %v5323 = vpow.pop %v5322
      %v5324 = vmul.f32 %v5274, 1.442695
      %v5325 = vpow.pop %v5324
      %v5326 = vmul.f32 %v5275, 1.442695
      %v5327 = vpow.pop %v5326
      %v5328 = vmul.f32 %v5276, 1.442695
      %v5329 = vpow.pop %v5328
      %v5330 = vmul.f32 %v5277, 1.442695
      %v5331 = vpow.pop %v5330
      %v5332 = vmul.f32 %v5278, 1.442695
      %v5333 = vpow.pop %v5332
      %v5334 = vmul.f32 %v5279, 1.442695
      %v5335 = vpow.pop %v5334
      %v5336 = vmul.f32 %v5280, 1.442695
      %v5337 = vpow.pop %v5336
      %v5338 = vmul.f32 %v5281, 1.442695
      %v5339 = vpow.pop %v5338
      %v5340 = vmul.f32 %v5282, 1.442695
      %v5341 = vpow.pop %v5340
      %v5342 = vmul.f32 %v5283, 1.442695
      %v5343 = vpow.pop %v5342
      %v5344 = vmul.f32 %v5284, 1.442695
      %v5345 = vpow.pop %v5344
      %v5346 = vmul.f32 %v5285, 1.442695
      %v5347 = vpow.pop %v5346
      %v5348 = vmul.f32 %v5286, 1.442695
      %v5349 = vpow.pop %v5348
      %v5350 = vmul.f32 %v5287, 1.442695
      %v5351 = vpow.pop %v5350
      %v5352 = vadd.f32 %v5289, 1.0
      %v5353 = vadd.f32 %v5291, 1.0
      %v5354 = vadd.f32 %v5293, 1.0
      %v5355 = vadd.f32 %v5295, 1.0
      %v5356 = vadd.f32 %v5297, 1.0
      %v5357 = vadd.f32 %v5299, 1.0
      %v5358 = vadd.f32 %v5301, 1.0
      %v5359 = vadd.f32 %v5303, 1.0
      %v5360 = vadd.f32 %v5305, 1.0
      %v5361 = vadd.f32 %v5307, 1.0
      %v5362 = vadd.f32 %v5309, 1.0
      %v5363 = vadd.f32 %v5311, 1.0
      %v5364 = vadd.f32 %v5313, 1.0
      %v5365 = vadd.f32 %v5315, 1.0
      %v5366 = vadd.f32 %v5317, 1.0
      %v5367 = vadd.f32 %v5319, 1.0
      %v5368 = vadd.f32 %v5321, 1.0
      %v5369 = vadd.f32 %v5323, 1.0
      %v5370 = vadd.f32 %v5325, 1.0
      %v5371 = vadd.f32 %v5327, 1.0
      %v5372 = vadd.f32 %v5329, 1.0
      %v5373 = vadd.f32 %v5331, 1.0
      %v5374 = vadd.f32 %v5333, 1.0
      %v5375 = vadd.f32 %v5335, 1.0
      %v5376 = vadd.f32 %v5337, 1.0
      %v5377 = vadd.f32 %v5339, 1.0
      %v5378 = vadd.f32 %v5341, 1.0
      %v5379 = vadd.f32 %v5343, 1.0
      %v5380 = vadd.f32 %v5345, 1.0
      %v5381 = vadd.f32 %v5347, 1.0
      %v5382 = vadd.f32 %v5349, 1.0
      %v5383 = vadd.f32 %v5351, 1.0
      %v5384 = vrcp.pop %v5352
      %v5385 = vmul.f32 1.0, %v5384
      %v5386 = vrcp.pop %v5353
      %v5387 = vmul.f32 1.0, %v5386
      %v5388 = vrcp.pop %v5354
      %v5389 = vmul.f32 1.0, %v5388
      %v5390 = vrcp.pop %v5355
      %v5391 = vmul.f32 1.0, %v5390
      %v5392 = vrcp.pop %v5356
      %v5393 = vmul.f32 1.0, %v5392
      %v5394 = vrcp.pop %v5357
      %v5395 = vmul.f32 1.0, %v5394
      %v5396 = vrcp.pop %v5358
      %v5397 = vmul.f32 1.0, %v5396
      %v5398 = vrcp.pop %v5359
      %v5399 = vmul.f32 1.0, %v5398
      %v5400 = vrcp.pop %v5360
      %v5401 = vmul.f32 1.0, %v5400
      %v5402 = vrcp.pop %v5361
      %v5403 = vmul.f32 1.0, %v5402
      %v5404 = vrcp.pop %v5362
      %v5405 = vmul.f32 1.0, %v5404
      %v5406 = vrcp.pop %v5363
      %v5407 = vmul.f32 1.0, %v5406
      %v5408 = vrcp.pop %v5364
      %v5409 = vmul.f32 1.0, %v5408
      %v5410 = vrcp.pop %v5365
      %v5411 = vmul.f32 1.0, %v5410
      %v5412 = vrcp.pop %v5366
      %v5413 = vmul.f32 1.0, %v5412
      %v5414 = vrcp.pop %v5367
      %v5415 = vmul.f32 1.0, %v5414
      %v5416 = vrcp.pop %v5368
      %v5417 = vmul.f32 1.0, %v5416
      %v5418 = vrcp.pop %v5369
      %v5419 = vmul.f32 1.0, %v5418
      %v5420 = vrcp.pop %v5370
      %v5421 = vmul.f32 1.0, %v5420
      %v5422 = vrcp.pop %v5371
      %v5423 = vmul.f32 1.0, %v5422
      %v5424 = vrcp.pop %v5372
      %v5425 = vmul.f32 1.0, %v5424
      %v5426 = vrcp.pop %v5373
      %v5427 = vmul.f32 1.0, %v5426
      %v5428 = vrcp.pop %v5374
      %v5429 = vmul.f32 1.0, %v5428
      %v5430 = vrcp.pop %v5375
      %v5431 = vmul.f32 1.0, %v5430
      %v5432 = vrcp.pop %v5376
      %v5433 = vmul.f32 1.0, %v5432
      %v5434 = vrcp.pop %v5377
      %v5435 = vmul.f32 1.0, %v5434
      %v5436 = vrcp.pop %v5378
      %v5437 = vmul.f32 1.0, %v5436
      %v5438 = vrcp.pop %v5379
      %v5439 = vmul.f32 1.0, %v5438
      %v5440 = vrcp.pop %v5380
      %v5441 = vmul.f32 1.0, %v5440
      %v5442 = vrcp.pop %v5381
      %v5443 = vmul.f32 1.0, %v5442
      %v5444 = vrcp.pop %v5382
      %v5445 = vmul.f32 1.0, %v5444
      %v5446 = vrcp.pop %v5383
      %v5447 = vmul.f32 1.0, %v5446
      %v5448 = vmul.f32 %v5224, %v5385
      %v5449 = vmul.f32 %v5225, %v5387
      %v5450 = vmul.f32 %v5226, %v5389
      %v5451 = vmul.f32 %v5227, %v5391
      %v5452 = vmul.f32 %v5228, %v5393
      %v5453 = vmul.f32 %v5229, %v5395
      %v5454 = vmul.f32 %v5230, %v5397
      %v5455 = vmul.f32 %v5231, %v5399
      %v5456 = vmul.f32 %v5232, %v5401
      %v5457 = vmul.f32 %v5233, %v5403
      %v5458 = vmul.f32 %v5234, %v5405
      %v5459 = vmul.f32 %v5235, %v5407
      %v5460 = vmul.f32 %v5236, %v5409
      %v5461 = vmul.f32 %v5237, %v5411
      %v5462 = vmul.f32 %v5238, %v5413
      %v5463 = vmul.f32 %v5239, %v5415
      %v5464 = vmul.f32 %v5240, %v5417
      %v5465 = vmul.f32 %v5241, %v5419
      %v5466 = vmul.f32 %v5242, %v5421
      %v5467 = vmul.f32 %v5243, %v5423
      %v5468 = vmul.f32 %v5244, %v5425
      %v5469 = vmul.f32 %v5245, %v5427
      %v5470 = vmul.f32 %v5246, %v5429
      %v5471 = vmul.f32 %v5247, %v5431
      %v5472 = vmul.f32 %v5248, %v5433
      %v5473 = vmul.f32 %v5249, %v5435
      %v5474 = vmul.f32 %v5250, %v5437
      %v5475 = vmul.f32 %v5251, %v5439
      %v5476 = vmul.f32 %v5252, %v5441
      %v5477 = vmul.f32 %v5253, %v5443
      %v5478 = vmul.f32 %v5254, %v5445
      %v5479 = vmul.f32 %v5255, %v5447
      %5480 = vst.msk [vmem:[#allocation3] sm:$0xff] %vm4786, 0.0
      %5481 = vst.msk [vmem:[#allocation3 + $0x8] sm:$0xff] %vm4786, 0.0
      %5482 = vst.msk [vmem:[#allocation3 + $0x10] sm:$0xff] %vm4786, 0.0
      %5483 = vst.msk [vmem:[#allocation3 + $0x18] sm:$0xff] %vm4786, 0.0
      %s5484 = scalar_lea.vmem [#allocation3], 544
      %5485 = vst.msk [vmem:[%s5484] sm:$0xff] %vm4786, 0.0
      %5486 = vst.msk [vmem:[%s5484 + $0x8] sm:$0xff] %vm4786, 0.0
      %5487 = vst.msk [vmem:[%s5484 + $0x10] sm:$0xff] %vm4786, 0.0
      %5488 = vst.msk [vmem:[%s5484 + $0x18] sm:$0xff] %vm4786, 0.0
      %s5489 = scalar_lea.vmem [#allocation3], 32
      %5490 = vst.msk [vmem:[%s5489] sm:$0xff] %vm4786, 0.0
      %5491 = vst.msk [vmem:[%s5489 + $0x20] sm:$0xff] %vm4786, 0.0
      %5492 = vst.msk [vmem:[%s5489 + $0x40] sm:$0xff] %vm4786, 0.0
      %5493 = vst.msk [vmem:[%s5489 + $0x60] sm:$0xff] %vm4786, 0.0
      %5494 = vst.msk [vmem:[%s5489 + $0x80] sm:$0xff] %vm4786, 0.0
      %5495 = vst.msk [vmem:[%s5489 + $0xa0] sm:$0xff] %vm4786, 0.0
      %5496 = vst.msk [vmem:[%s5489 + $0xc0] sm:$0xff] %vm4786, 0.0
      %5497 = vst.msk [vmem:[%s5489 + $0xe0] sm:$0xff] %vm4786, 0.0
      %5498 = vst.msk [vmem:[%s5489 + $0x100] sm:$0xff] %vm4786, 0.0
      %5499 = vst.msk [vmem:[%s5489 + $0x120] sm:$0xff] %vm4786, 0.0
      %5500 = vst.msk [vmem:[%s5489 + $0x140] sm:$0xff] %vm4786, 0.0
      %5501 = vst.msk [vmem:[%s5489 + $0x160] sm:$0xff] %vm4786, 0.0
      %5502 = vst.msk [vmem:[%s5489 + $0x180] sm:$0xff] %vm4786, 0.0
      %5503 = vst.msk [vmem:[%s5489 + $0x1a0] sm:$0xff] %vm4786, 0.0
      %5504 = vst.msk [vmem:[%s5489 + $0x1c0] sm:$0xff] %vm4786, 0.0
      %5505 = vst.msk [vmem:[%s5489 + $0x1e0] sm:$0xff] %vm4786, 0.0
      %5506 = vst.msk [vmem:[%s5489 + $0x18] sm:$0xff] %vm4786, 0.0
      %5507 = vst.msk [vmem:[%s5489 + $0x38] sm:$0xff] %vm4786, 0.0
      %5508 = vst.msk [vmem:[%s5489 + $0x58] sm:$0xff] %vm4786, 0.0
      %5509 = vst.msk [vmem:[%s5489 + $0x78] sm:$0xff] %vm4786, 0.0
      %5510 = vst.msk [vmem:[%s5489 + $0x98] sm:$0xff] %vm4786, 0.0
      %5511 = vst.msk [vmem:[%s5489 + $0xb8] sm:$0xff] %vm4786, 0.0
      %5512 = vst.msk [vmem:[%s5489 + $0xd8] sm:$0xff] %vm4786, 0.0
      %5513 = vst.msk [vmem:[%s5489 + $0xf8] sm:$0xff] %vm4786, 0.0
      %5514 = vst.msk [vmem:[%s5489 + $0x118] sm:$0xff] %vm4786, 0.0
      %5515 = vst.msk [vmem:[%s5489 + $0x138] sm:$0xff] %vm4786, 0.0
      %5516 = vst.msk [vmem:[%s5489 + $0x158] sm:$0xff] %vm4786, 0.0
      %5517 = vst.msk [vmem:[%s5489 + $0x178] sm:$0xff] %vm4786, 0.0
      %5518 = vst.msk [vmem:[%s5489 + $0x198] sm:$0xff] %vm4786, 0.0
      %5519 = vst.msk [vmem:[%s5489 + $0x1b8] sm:$0xff] %vm4786, 0.0
      %5520 = vst.msk [vmem:[%s5489 + $0x1d8] sm:$0xff] %vm4786, 0.0
      %5521 = vst.msk [vmem:[%s5489 + $0x1f8] sm:$0xff] %vm4786, 0.0
      %5522 = vst.msk [vmem:[%s5489 + $0x8] sm:$0xff] %vm4786, %v5448
      %5523 = vst.msk [vmem:[%s5489 + $0x10] sm:$0xff] %vm4786, %v5449
      %5524 = vst.msk [vmem:[%s5489 + $0x28] sm:$0xff] %vm4786, %v5450
      %5525 = vst.msk [vmem:[%s5489 + $0x30] sm:$0xff] %vm4786, %v5451
      %5526 = vst.msk [vmem:[%s5489 + $0x48] sm:$0xff] %vm4786, %v5452
      %5527 = vst.msk [vmem:[%s5489 + $0x50] sm:$0xff] %vm4786, %v5453
      %5528 = vst.msk [vmem:[%s5489 + $0x68] sm:$0xff] %vm4786, %v5454
      %5529 = vst.msk [vmem:[%s5489 + $0x70] sm:$0xff] %vm4786, %v5455
      %5530 = vst.msk [vmem:[%s5489 + $0x88] sm:$0xff] %vm4786, %v5456
      %5531 = vst.msk [vmem:[%s5489 + $0x90] sm:$0xff] %vm4786, %v5457
      %5532 = vst.msk [vmem:[%s5489 + $0xa8] sm:$0xff] %vm4786, %v5458
      %5533 = vst.msk [vmem:[%s5489 + $0xb0] sm:$0xff] %vm4786, %v5459
      %5534 = vst.msk [vmem:[%s5489 + $0xc8] sm:$0xff] %vm4786, %v5460
      %5535 = vst.msk [vmem:[%s5489 + $0xd0] sm:$0xff] %vm4786, %v5461
      %5536 = vst.msk [vmem:[%s5489 + $0xe8] sm:$0xff] %vm4786, %v5462
      %5537 = vst.msk [vmem:[%s5489 + $0xf0] sm:$0xff] %vm4786, %v5463
      %5538 = vst.msk [vmem:[%s5489 + $0x108] sm:$0xff] %vm4786, %v5464
      %5539 = vst.msk [vmem:[%s5489 + $0x110] sm:$0xff] %vm4786, %v5465
      %5540 = vst.msk [vmem:[%s5489 + $0x128] sm:$0xff] %vm4786, %v5466
      %5541 = vst.msk [vmem:[%s5489 + $0x130] sm:$0xff] %vm4786, %v5467
      %5542 = vst.msk [vmem:[%s5489 + $0x148] sm:$0xff] %vm4786, %v5468
      %5543 = vst.msk [vmem:[%s5489 + $0x150] sm:$0xff] %vm4786, %v5469
      %5544 = vst.msk [vmem:[%s5489 + $0x168] sm:$0xff] %vm4786, %v5470
      %5545 = vst.msk [vmem:[%s5489 + $0x170] sm:$0xff] %vm4786, %v5471
      %5546 = vst.msk [vmem:[%s5489 + $0x188] sm:$0xff] %vm4786, %v5472
      %5547 = vst.msk [vmem:[%s5489 + $0x190] sm:$0xff] %vm4786, %v5473
      %5548 = vst.msk [vmem:[%s5489 + $0x1a8] sm:$0xff] %vm4786, %v5474
      %5549 = vst.msk [vmem:[%s5489 + $0x1b0] sm:$0xff] %vm4786, %v5475
      %5550 = vst.msk [vmem:[%s5489 + $0x1c8] sm:$0xff] %vm4786, %v5476
      %5551 = vst.msk [vmem:[%s5489 + $0x1d0] sm:$0xff] %vm4786, %v5477
      %5552 = vst.msk [vmem:[%s5489 + $0x1e8] sm:$0xff] %vm4786, %v5478
      %5553 = vst.msk [vmem:[%s5489 + $0x1f0] sm:$0xff] %vm4786, %v5479
      %v5554 = vld [vmem:[#allocation3 + $0x7] sm:$0xff]
      %v5555 = vld [vmem:[#allocation3 + $0xf] sm:$0xff]
      %v5556 = vld [vmem:[#allocation3 + $0x27] sm:$0xff]
      %v5557 = vld [vmem:[#allocation3 + $0x2f] sm:$0xff]
      %v5558 = vld [vmem:[#allocation3 + $0x47] sm:$0xff]
      %v5559 = vld [vmem:[#allocation3 + $0x4f] sm:$0xff]
      %v5560 = vld [vmem:[#allocation3 + $0x67] sm:$0xff]
      %v5561 = vld [vmem:[#allocation3 + $0x6f] sm:$0xff]
      %v5562 = vld [vmem:[#allocation3 + $0x87] sm:$0xff]
      %v5563 = vld [vmem:[#allocation3 + $0x8f] sm:$0xff]
      %v5564 = vld [vmem:[#allocation3 + $0xa7] sm:$0xff]
      %v5565 = vld [vmem:[#allocation3 + $0xaf] sm:$0xff]
      %v5566 = vld [vmem:[#allocation3 + $0xc7] sm:$0xff]
      %v5567 = vld [vmem:[#allocation3 + $0xcf] sm:$0xff]
      %v5568 = vld [vmem:[#allocation3 + $0xe7] sm:$0xff]
      %v5569 = vld [vmem:[#allocation3 + $0xef] sm:$0xff]
      %v5570 = vld [vmem:[#allocation3 + $0x107] sm:$0xff]
      %v5571 = vld [vmem:[#allocation3 + $0x10f] sm:$0xff]
      %v5572 = vld [vmem:[#allocation3 + $0x127] sm:$0xff]
      %v5573 = vld [vmem:[#allocation3 + $0x12f] sm:$0xff]
      %v5574 = vld [vmem:[#allocation3 + $0x147] sm:$0xff]
      %v5575 = vld [vmem:[#allocation3 + $0x14f] sm:$0xff]
      %v5576 = vld [vmem:[#allocation3 + $0x167] sm:$0xff]
      %v5577 = vld [vmem:[#allocation3 + $0x16f] sm:$0xff]
      %v5578 = vld [vmem:[#allocation3 + $0x187] sm:$0xff]
      %v5579 = vld [vmem:[#allocation3 + $0x18f] sm:$0xff]
      %v5580 = vld [vmem:[#allocation3 + $0x1a7] sm:$0xff]
      %v5581 = vld [vmem:[#allocation3 + $0x1af] sm:$0xff]
      %v5582 = vld [vmem:[#allocation3 + $0x1c7] sm:$0xff]
      %v5583 = vld [vmem:[#allocation3 + $0x1cf] sm:$0xff]
      %v5584 = vld [vmem:[#allocation3 + $0x1e7] sm:$0xff]
      %v5585 = vld [vmem:[#allocation3 + $0x1ef] sm:$0xff]
      %v5586 = vld [vmem:[%s10] sm:$0xff]
      %v5587 = vld [vmem:[%s10 + $0x8] sm:$0xff]
      %v5588 = vld [vmem:[#allocation3 + $0x8] sm:$0xff]
      %v5589 = vld [vmem:[#allocation3 + $0x10] sm:$0xff]
      %v5590 = vld [vmem:[#allocation3 + $0x28] sm:$0xff]
      %v5591 = vld [vmem:[#allocation3 + $0x30] sm:$0xff]
      %v5592 = vld [vmem:[#allocation3 + $0x48] sm:$0xff]
      %v5593 = vld [vmem:[#allocation3 + $0x50] sm:$0xff]
      %v5594 = vld [vmem:[#allocation3 + $0x68] sm:$0xff]
      %v5595 = vld [vmem:[#allocation3 + $0x70] sm:$0xff]
      %v5596 = vld [vmem:[#allocation3 + $0x88] sm:$0xff]
      %v5597 = vld [vmem:[#allocation3 + $0x90] sm:$0xff]
      %v5598 = vld [vmem:[#allocation3 + $0xa8] sm:$0xff]
      %v5599 = vld [vmem:[#allocation3 + $0xb0] sm:$0xff]
      %v5600 = vld [vmem:[#allocation3 + $0xc8] sm:$0xff]
      %v5601 = vld [vmem:[#allocation3 + $0xd0] sm:$0xff]
      %v5602 = vld [vmem:[#allocation3 + $0xe8] sm:$0xff]
      %v5603 = vld [vmem:[#allocation3 + $0xf0] sm:$0xff]
      %v5604 = vld [vmem:[#allocation3 + $0x108] sm:$0xff]
      %v5605 = vld [vmem:[#allocation3 + $0x110] sm:$0xff]
      %v5606 = vld [vmem:[#allocation3 + $0x128] sm:$0xff]
      %v5607 = vld [vmem:[#allocation3 + $0x130] sm:$0xff]
      %v5608 = vld [vmem:[#allocation3 + $0x148] sm:$0xff]
      %v5609 = vld [vmem:[#allocation3 + $0x150] sm:$0xff]
      %v5610 = vld [vmem:[#allocation3 + $0x168] sm:$0xff]
      %v5611 = vld [vmem:[#allocation3 + $0x170] sm:$0xff]
      %v5612 = vld [vmem:[#allocation3 + $0x188] sm:$0xff]
      %v5613 = vld [vmem:[#allocation3 + $0x190] sm:$0xff]
      %v5614 = vld [vmem:[#allocation3 + $0x1a8] sm:$0xff]
      %v5615 = vld [vmem:[#allocation3 + $0x1b0] sm:$0xff]
      %v5616 = vld [vmem:[#allocation3 + $0x1c8] sm:$0xff]
      %v5617 = vld [vmem:[#allocation3 + $0x1d0] sm:$0xff]
      %v5618 = vld [vmem:[#allocation3 + $0x1e8] sm:$0xff]
      %v5619 = vld [vmem:[#allocation3 + $0x1f0] sm:$0xff]
      %s5620 = scalar_lea.vmem %s10, 16
      %v5621 = vld [vmem:[%s5620] sm:$0xff]
      %v5622 = vld [vmem:[%s5620 + $0x8] sm:$0xff]
      %v5624 = vsel %vm4786, %v5588, 0
      %v5627 = vsel %vm4786, %v5589, 0
      %v5630 = vsel %vm4786, %v5590, 0
      %v5633 = vsel %vm4786, %v5591, 0
      %v5636 = vsel %vm4786, %v5592, 0
      %v5639 = vsel %vm4786, %v5593, 0
      %v5642 = vsel %vm4786, %v5594, 0
      %v5645 = vsel %vm4786, %v5595, 0
      %v5648 = vsel %vm4786, %v5596, 0
      %v5651 = vsel %vm4786, %v5597, 0
      %v5654 = vsel %vm4786, %v5598, 0
      %v5657 = vsel %vm4786, %v5599, 0
      %v5660 = vsel %vm4786, %v5600, 0
      %v5663 = vsel %vm4786, %v5601, 0
      %v5666 = vsel %vm4786, %v5602, 0
      %v5669 = vsel %vm4786, %v5603, 0
      %v5672 = vsel %vm4786, %v5604, 0
      %v5675 = vsel %vm4786, %v5605, 0
      %v5678 = vsel %vm4786, %v5606, 0
      %v5681 = vsel %vm4786, %v5607, 0
      %v5684 = vsel %vm4786, %v5608, 0
      %v5687 = vsel %vm4786, %v5609, 0
      %v5690 = vsel %vm4786, %v5610, 0
      %v5693 = vsel %vm4786, %v5611, 0
      %v5696 = vsel %vm4786, %v5612, 0
      %v5699 = vsel %vm4786, %v5613, 0
      %v5702 = vsel %vm4786, %v5614, 0
      %v5705 = vsel %vm4786, %v5615, 0
      %v5708 = vsel %vm4786, %v5616, 0
      %v5711 = vsel %vm4786, %v5617, 0
      %v5714 = vsel %vm4786, %v5618, 0
      %v5717 = vsel %vm4786, %v5619, 0
      %5719 = vmatprep.subr.mxu0 0.0
      %5720 = vmatpush1.msra.mxu0 %v5621
      %5721 = vmatprep.subr.mxu0 0.0
      %5722 = vmatpush1.msra.mxu0 %v5622
      %5723 = vmatprep.subr.mxu0 0.0
      %5724 = vmatpush1.msra.mxu0 0.0
      %5725 = vmatprep.subr.mxu0 0.0
      %5726 = vmatpush1.msra.mxu0 0.0
      %5727 = vmatprep.subr.mxu0 0.0
      %5728 = vmatpush1.msra.mxu0 0.0
      %5729 = vmatprep.subr.mxu0 0.0
      %5730 = vmatpush1.msra.mxu0 0.0
      %5731 = vmatprep.subr.mxu0 0.0
      %5732 = vmatpush1.msra.mxu0 0.0
      %5733 = vmatprep.subr.mxu0 0.0
      %5734 = vmatpush1.msra.mxu0 0.0
      %5735 = vmatprep.subr.mxu0 0.0
      %5736 = vmatpush1.msra.mxu0 0.0
      %5737 = vmatprep.subr.mxu0 0.0
      %5738 = vmatpush1.msra.mxu0 0.0
      %5739 = vmatprep.subr.mxu0 0.0
      %5740 = vmatpush1.msra.mxu0 0.0
      %5741 = vmatprep.subr.mxu0 0.0
      %5742 = vmatpush1.msra.mxu0 0.0
      %5743 = vmatprep.subr.mxu0 0.0
      %5744 = vmatpush1.msra.mxu0 0.0
      %5745 = vmatprep.subr.mxu0 0.0
      %5746 = vmatpush1.msra.mxu0 0.0
      %5747 = vmatprep.subr.mxu0 0.0
      %5748 = vmatpush1.msra.mxu0 0.0
      %5749 = vmatprep.subr.mxu0 0.0
      %5750 = vmatpush1.msra.mxu0 0.0
      %5751 = vmatprep.subr.mxu0 0.0
      %5752 = vmatpush1.msra.mxu0 0.0
      %5753 = vmatprep.subr.mxu0 0.0
      %5754 = vmatpush1.msra.mxu0 0.0
      %5755 = vmatprep.subr.mxu0 0.0
      %5756 = vmatpush1.msra.mxu0 0.0
      %5757 = vmatprep.subr.mxu0 0.0
      %5758 = vmatpush1.msra.mxu0 0.0
      %5759 = vmatprep.subr.mxu0 0.0
      %5760 = vmatpush1.msra.mxu0 0.0
      %5761 = vmatprep.subr.mxu0 0.0
      %5762 = vmatpush1.msra.mxu0 0.0
      %5763 = vmatprep.subr.mxu0 0.0
      %5764 = vmatpush1.msra.mxu0 0.0
      %5765 = vmatprep.subr.mxu0 0.0
      %5766 = vmatpush1.msra.mxu0 0.0
      %5767 = vmatprep.subr.mxu0 0.0
      %5768 = vmatpush1.msra.mxu0 0.0
      %5769 = vmatprep.subr.mxu0 0.0
      %5770 = vmatpush1.msra.mxu0 0.0
      %5771 = vmatprep.subr.mxu0 0.0
      %5772 = vmatpush1.msra.mxu0 0.0
      %5773 = vmatprep.subr.mxu0 0.0
      %5774 = vmatpush1.msra.mxu0 0.0
      %5775 = vmatprep.subr.mxu0 0.0
      %5776 = vmatpush1.msra.mxu0 0.0
      %5777 = vmatprep.subr.mxu0 0.0
      %5778 = vmatpush1.msra.mxu0 0.0
      %5779 = vmatprep.subr.mxu0 0.0
      %5780 = vmatpush1.msra.mxu0 0.0
      %5781 = vmatprep.subr.mxu0 0.0
      %5782 = vmatpush1.msra.mxu0 0.0
      %5783 = vmatprep.mubr.f32.mxu0 0.0
      %5784 = vmatmul.mubr.f32.gmra.mrb[0].mxu0 %v5624
      %v5785 = vpop.f32.mrb[0].mxu0
      %v5786 = vadd.f32 0.0, %v5785
      %v5787 = vpop.f32.mrb[0].mxu0
      %5788 = vmatprep.mubr.f32.mxu0 0.0
      %5789 = vmatmul.mubr.f32.gmra.mrb[0].mxu0 %v5627
      %v5790 = vpop.f32.mrb[0].mxu0
      %v5791 = vadd.f32 0.0, %v5790
      %v5792 = vpop.f32.mrb[0].mxu0
      %5793 = vmatprep.mubr.f32.mxu0 0.0
      %5794 = vmatmul.mubr.f32.gmra.mrb[0].mxu0 %v5630
      %v5795 = vpop.f32.mrb[0].mxu0
      %v5796 = vadd.f32 0.0, %v5795
      %v5797 = vpop.f32.mrb[0].mxu0
      %5798 = vmatprep.mubr.f32.mxu0 0.0
      %5799 = vmatmul.mubr.f32.gmra.mrb[0].mxu0 %v5633
      %v5800 = vpop.f32.mrb[0].mxu0
      %v5801 = vadd.f32 0.0, %v5800
      %v5802 = vpop.f32.mrb[0].mxu0
      %5803 = vmatprep.mubr.f32.mxu0 0.0
      %5804 = vmatmul.mubr.f32.gmra.mrb[0].mxu0 %v5636
      %v5805 = vpop.f32.mrb[0].mxu0
      %v5806 = vadd.f32 0.0, %v5805
      %v5807 = vpop.f32.mrb[0].mxu0
      %5808 = vmatprep.mubr.f32.mxu0 0.0
      %5809 = vmatmul.mubr.f32.gmra.mrb[0].mxu0 %v5639
      %v5810 = vpop.f32.mrb[0].mxu0
      %v5811 = vadd.f32 0.0, %v5810
      %v5812 = vpop.f32.mrb[0].mxu0
      %5813 = vmatprep.mubr.f32.mxu0 0.0
      %5814 = vmatmul.mubr.f32.gmra.mrb[0].mxu0 %v5642
      %v5815 = vpop.f32.mrb[0].mxu0
      %v5816 = vadd.f32 0.0, %v5815
      %v5817 = vpop.f32.mrb[0].mxu0
      %5818 = vmatprep.mubr.f32.mxu0 0.0
      %5819 = vmatmul.mubr.f32.gmra.mrb[0].mxu0 %v5645
      %v5820 = vpop.f32.mrb[0].mxu0
      %v5821 = vadd.f32 0.0, %v5820
      %v5822 = vpop.f32.mrb[0].mxu0
      %5823 = vmatprep.mubr.f32.mxu0 0.0
      %5824 = vmatmul.mubr.f32.gmra.mrb[0].mxu0 %v5648
      %v5825 = vpop.f32.mrb[0].mxu0
      %v5826 = vadd.f32 0.0, %v5825
      %v5827 = vpop.f32.mrb[0].mxu0
      %5828 = vmatprep.mubr.f32.mxu0 0.0
      %5829 = vmatmul.mubr.f32.gmra.mrb[0].mxu0 %v5651
      %v5830 = vpop.f32.mrb[0].mxu0
      %v5831 = vadd.f32 0.0, %v5830
      %v5832 = vpop.f32.mrb[0].mxu0
      %5833 = vmatprep.mubr.f32.mxu0 0.0
      %5834 = vmatmul.mubr.f32.gmra.mrb[0].mxu0 %v5654
      %v5835 = vpop.f32.mrb[0].mxu0
      %v5836 = vadd.f32 0.0, %v5835
      %v5837 = vpop.f32.mrb[0].mxu0
      %5838 = vmatprep.mubr.f32.mxu0 0.0
      %5839 = vmatmul.mubr.f32.gmra.mrb[0].mxu0 %v5657
      %v5840 = vpop.f32.mrb[0].mxu0
      %v5841 = vadd.f32 0.0, %v5840
      %v5842 = vpop.f32.mrb[0].mxu0
      %5843 = vmatprep.mubr.f32.mxu0 0.0
      %5844 = vmatmul.mubr.f32.gmra.mrb[0].mxu0 %v5660
      %v5845 = vpop.f32.mrb[0].mxu0
      %v5846 = vadd.f32 0.0, %v5845
      %v5847 = vpop.f32.mrb[0].mxu0
      %5848 = vmatprep.mubr.f32.mxu0 0.0
      %5849 = vmatmul.mubr.f32.gmra.mrb[0].mxu0 %v5663
      %v5850 = vpop.f32.mrb[0].mxu0
      %v5851 = vadd.f32 0.0, %v5850
      %v5852 = vpop.f32.mrb[0].mxu0
      %5853 = vmatprep.mubr.f32.mxu0 0.0
      %5854 = vmatmul.mubr.f32.gmra.mrb[0].mxu0 %v5666
      %v5855 = vpop.f32.mrb[0].mxu0
      %v5856 = vadd.f32 0.0, %v5855
      %v5857 = vpop.f32.mrb[0].mxu0
      %5858 = vmatprep.mubr.f32.mxu0 0.0
      %5859 = vmatmul.mubr.f32.gmra.mrb[0].mxu0 %v5669
      %v5860 = vpop.f32.mrb[0].mxu0
      %v5861 = vadd.f32 0.0, %v5860
      %v5862 = vpop.f32.mrb[0].mxu0
      %5863 = vmatprep.mubr.f32.mxu0 0.0
      %5864 = vmatmul.mubr.f32.gmra.mrb[0].mxu0 %v5672
      %v5865 = vpop.f32.mrb[0].mxu0
      %v5866 = vadd.f32 0.0, %v5865
      %v5867 = vpop.f32.mrb[0].mxu0
      %5868 = vmatprep.mubr.f32.mxu0 0.0
      %5869 = vmatmul.mubr.f32.gmra.mrb[0].mxu0 %v5675
      %v5870 = vpop.f32.mrb[0].mxu0
      %v5871 = vadd.f32 0.0, %v5870
      %v5872 = vpop.f32.mrb[0].mxu0
      %5873 = vmatprep.mubr.f32.mxu0 0.0
      %5874 = vmatmul.mubr.f32.gmra.mrb[0].mxu0 %v5678
      %v5875 = vpop.f32.mrb[0].mxu0
      %v5876 = vadd.f32 0.0, %v5875
      %v5877 = vpop.f32.mrb[0].mxu0
      %5878 = vmatprep.mubr.f32.mxu0 0.0
      %5879 = vmatmul.mubr.f32.gmra.mrb[0].mxu0 %v5681
      %v5880 = vpop.f32.mrb[0].mxu0
      %v5881 = vadd.f32 0.0, %v5880
      %v5882 = vpop.f32.mrb[0].mxu0
      %5883 = vmatprep.mubr.f32.mxu0 0.0
      %5884 = vmatmul.mubr.f32.gmra.mrb[0].mxu0 %v5684
      %v5885 = vpop.f32.mrb[0].mxu0
      %v5886 = vadd.f32 0.0, %v5885
      %v5887 = vpop.f32.mrb[0].mxu0
      %5888 = vmatprep.mubr.f32.mxu0 0.0
      %5889 = vmatmul.mubr.f32.gmra.mrb[0].mxu0 %v5687
      %v5890 = vpop.f32.mrb[0].mxu0
      %v5891 = vadd.f32 0.0, %v5890
      %v5892 = vpop.f32.mrb[0].mxu0
      %5893 = vmatprep.mubr.f32.mxu0 0.0
      %5894 = vmatmul.mubr.f32.gmra.mrb[0].mxu0 %v5690
      %v5895 = vpop.f32.mrb[0].mxu0
      %v5896 = vadd.f32 0.0, %v5895
      %v5897 = vpop.f32.mrb[0].mxu0
      %5898 = vmatprep.mubr.f32.mxu0 0.0
      %5899 = vmatmul.mubr.f32.gmra.mrb[0].mxu0 %v5693
      %v5900 = vpop.f32.mrb[0].mxu0
      %v5901 = vadd.f32 0.0, %v5900
      %v5902 = vpop.f32.mrb[0].mxu0
      %5903 = vmatprep.mubr.f32.mxu0 0.0
      %5904 = vmatmul.mubr.f32.gmra.mrb[0].mxu0 %v5696
      %v5905 = vpop.f32.mrb[0].mxu0
      %v5906 = vadd.f32 0.0, %v5905
      %v5907 = vpop.f32.mrb[0].mxu0
      %5908 = vmatprep.mubr.f32.mxu0 0.0
      %5909 = vmatmul.mubr.f32.gmra.mrb[0].mxu0 %v5699
      %v5910 = vpop.f32.mrb[0].mxu0
      %v5911 = vadd.f32 0.0, %v5910
      %v5912 = vpop.f32.mrb[0].mxu0
      %5913 = vmatprep.mubr.f32.mxu0 0.0
      %5914 = vmatmul.mubr.f32.gmra.mrb[0].mxu0 %v5702
      %v5915 = vpop.f32.mrb[0].mxu0
      %v5916 = vadd.f32 0.0, %v5915
      %v5917 = vpop.f32.mrb[0].mxu0
      %5918 = vmatprep.mubr.f32.mxu0 0.0
      %5919 = vmatmul.mubr.f32.gmra.mrb[0].mxu0 %v5705
      %v5920 = vpop.f32.mrb[0].mxu0
      %v5921 = vadd.f32 0.0, %v5920
      %v5922 = vpop.f32.mrb[0].mxu0
      %5923 = vmatprep.mubr.f32.mxu0 0.0
      %5924 = vmatmul.mubr.f32.gmra.mrb[0].mxu0 %v5708
      %v5925 = vpop.f32.mrb[0].mxu0
      %v5926 = vadd.f32 0.0, %v5925
      %v5927 = vpop.f32.mrb[0].mxu0
      %5928 = vmatprep.mubr.f32.mxu0 0.0
      %5929 = vmatmul.mubr.f32.gmra.mrb[0].mxu0 %v5711
      %v5930 = vpop.f32.mrb[0].mxu0
      %v5931 = vadd.f32 0.0, %v5930
      %v5932 = vpop.f32.mrb[0].mxu0
      %5933 = vmatprep.mubr.f32.mxu0 0.0
      %5934 = vmatmul.mubr.f32.gmra.mrb[0].mxu0 %v5714
      %v5935 = vpop.f32.mrb[0].mxu0
      %v5936 = vadd.f32 0.0, %v5935
      %v5937 = vpop.f32.mrb[0].mxu0
      %5938 = vmatprep.mubr.f32.mxu0 0.0
      %5939 = vmatmul.mubr.f32.gmra.mrb[0].mxu0 %v5717
      %v5940 = vpop.f32.mrb[0].mxu0
      %v5941 = vadd.f32 0.0, %v5940
      %v5942 = vpop.f32.mrb[0].mxu0
      %5943 = vdwg.mxu0
      %v5945 = vsel %vm4786, %v5554, 0
      %v5948 = vsel %vm4786, %v5555, 0
      %v5951 = vsel %vm4786, %v5556, 0
      %v5954 = vsel %vm4786, %v5557, 0
      %v5957 = vsel %vm4786, %v5558, 0
      %v5960 = vsel %vm4786, %v5559, 0
      %v5963 = vsel %vm4786, %v5560, 0
      %v5966 = vsel %vm4786, %v5561, 0
      %v5969 = vsel %vm4786, %v5562, 0
      %v5972 = vsel %vm4786, %v5563, 0
      %v5975 = vsel %vm4786, %v5564, 0
      %v5978 = vsel %vm4786, %v5565, 0
      %v5981 = vsel %vm4786, %v5566, 0
      %v5984 = vsel %vm4786, %v5567, 0
      %v5987 = vsel %vm4786, %v5568, 0
      %v5990 = vsel %vm4786, %v5569, 0
      %v5993 = vsel %vm4786, %v5570, 0
      %v5996 = vsel %vm4786, %v5571, 0
      %v5999 = vsel %vm4786, %v5572, 0
      %v6002 = vsel %vm4786, %v5573, 0
      %v6005 = vsel %vm4786, %v5574, 0
      %v6008 = vsel %vm4786, %v5575, 0
      %v6011 = vsel %vm4786, %v5576, 0
      %v6014 = vsel %vm4786, %v5577, 0
      %v6017 = vsel %vm4786, %v5578, 0
      %v6020 = vsel %vm4786, %v5579, 0
      %v6023 = vsel %vm4786, %v5580, 0
      %v6026 = vsel %vm4786, %v5581, 0
      %v6029 = vsel %vm4786, %v5582, 0
      %v6032 = vsel %vm4786, %v5583, 0
      %v6035 = vsel %vm4786, %v5584, 0
      %v6038 = vsel %vm4786, %v5585, 0
      %6040 = vmatprep.subr.mxu0 0.0
      %6041 = vmatpush1.msra.mxu0 %v5586
      %6042 = vmatprep.subr.mxu0 0.0
      %6043 = vmatpush1.msra.mxu0 %v5587
      %6044 = vmatprep.subr.mxu0 0.0
      %6045 = vmatpush1.msra.mxu0 0.0
      %6046 = vmatprep.subr.mxu0 0.0
      %6047 = vmatpush1.msra.mxu0 0.0
      %6048 = vmatprep.subr.mxu0 0.0
      %6049 = vmatpush1.msra.mxu0 0.0
      %6050 = vmatprep.subr.mxu0 0.0
      %6051 = vmatpush1.msra.mxu0 0.0
      %6052 = vmatprep.subr.mxu0 0.0
      %6053 = vmatpush1.msra.mxu0 0.0
      %6054 = vmatprep.subr.mxu0 0.0
      %6055 = vmatpush1.msra.mxu0 0.0
      %6056 = vmatprep.subr.mxu0 0.0
      %6057 = vmatpush1.msra.mxu0 0.0
      %6058 = vmatprep.subr.mxu0 0.0
      %6059 = vmatpush1.msra.mxu0 0.0
      %6060 = vmatprep.subr.mxu0 0.0
      %6061 = vmatpush1.msra.mxu0 0.0
      %6062 = vmatprep.subr.mxu0 0.0
      %6063 = vmatpush1.msra.mxu0 0.0
      %6064 = vmatprep.subr.mxu0 0.0
      %6065 = vmatpush1.msra.mxu0 0.0
      %6066 = vmatprep.subr.mxu0 0.0
      %6067 = vmatpush1.msra.mxu0 0.0
      %6068 = vmatprep.subr.mxu0 0.0
      %6069 = vmatpush1.msra.mxu0 0.0
      %6070 = vmatprep.subr.mxu0 0.0
      %6071 = vmatpush1.msra.mxu0 0.0
      %6072 = vmatprep.subr.mxu0 0.0
      %6073 = vmatpush1.msra.mxu0 0.0
      %6074 = vmatprep.subr.mxu0 0.0
      %6075 = vmatpush1.msra.mxu0 0.0
      %6076 = vmatprep.subr.mxu0 0.0
      %6077 = vmatpush1.msra.mxu0 0.0
      %6078 = vmatprep.subr.mxu0 0.0
      %6079 = vmatpush1.msra.mxu0 0.0
      %6080 = vmatprep.subr.mxu0 0.0
      %6081 = vmatpush1.msra.mxu0 0.0
      %6082 = vmatprep.subr.mxu0 0.0
      %6083 = vmatpush1.msra.mxu0 0.0
      %6084 = vmatprep.subr.mxu0 0.0
      %6085 = vmatpush1.msra.mxu0 0.0
      %6086 = vmatprep.subr.mxu0 0.0
      %6087 = vmatpush1.msra.mxu0 0.0
      %6088 = vmatprep.subr.mxu0 0.0
      %6089 = vmatpush1.msra.mxu0 0.0
      %6090 = vmatprep.subr.mxu0 0.0
      %6091 = vmatpush1.msra.mxu0 0.0
      %6092 = vmatprep.subr.mxu0 0.0
      %6093 = vmatpush1.msra.mxu0 0.0
      %6094 = vmatprep.subr.mxu0 0.0
      %6095 = vmatpush1.msra.mxu0 0.0
      %6096 = vmatprep.subr.mxu0 0.0
      %6097 = vmatpush1.msra.mxu0 0.0
      %6098 = vmatprep.subr.mxu0 0.0
      %6099 = vmatpush1.msra.mxu0 0.0
      %6100 = vmatprep.subr.mxu0 0.0
      %6101 = vmatpush1.msra.mxu0 0.0
      %6102 = vmatprep.subr.mxu0 0.0
      %6103 = vmatpush1.msra.mxu0 0.0
      %6104 = vmatprep.mubr.f32.mxu0 0.0
      %6105 = vmatmul.mubr.f32.gmra.mrb[0].mxu0 %v5945
      %v6106 = vpop.f32.mrb[0].mxu0
      %v6107 = vadd.f32 %v5786, %v6106
      %v6108 = vpop.f32.mrb[0].mxu0
      %6109 = vmatprep.mubr.f32.mxu0 0.0
      %6110 = vmatmul.mubr.f32.gmra.mrb[0].mxu0 %v5948
      %v6111 = vpop.f32.mrb[0].mxu0
      %v6112 = vadd.f32 %v5791, %v6111
      %v6113 = vpop.f32.mrb[0].mxu0
      %6114 = vmatprep.mubr.f32.mxu0 0.0
      %6115 = vmatmul.mubr.f32.gmra.mrb[0].mxu0 %v5951
      %v6116 = vpop.f32.mrb[0].mxu0
      %v6117 = vadd.f32 %v5796, %v6116
      %v6118 = vpop.f32.mrb[0].mxu0
      %6119 = vmatprep.mubr.f32.mxu0 0.0
      %6120 = vmatmul.mubr.f32.gmra.mrb[0].mxu0 %v5954
      %v6121 = vpop.f32.mrb[0].mxu0
      %v6122 = vadd.f32 %v5801, %v6121
      %v6123 = vpop.f32.mrb[0].mxu0
      %6124 = vmatprep.mubr.f32.mxu0 0.0
      %6125 = vmatmul.mubr.f32.gmra.mrb[0].mxu0 %v5957
      %v6126 = vpop.f32.mrb[0].mxu0
      %v6127 = vadd.f32 %v5806, %v6126
      %v6128 = vpop.f32.mrb[0].mxu0
      %6129 = vmatprep.mubr.f32.mxu0 0.0
      %6130 = vmatmul.mubr.f32.gmra.mrb[0].mxu0 %v5960
      %v6131 = vpop.f32.mrb[0].mxu0
      %v6132 = vadd.f32 %v5811, %v6131
      %v6133 = vpop.f32.mrb[0].mxu0
      %6134 = vmatprep.mubr.f32.mxu0 0.0
      %6135 = vmatmul.mubr.f32.gmra.mrb[0].mxu0 %v5963
      %v6136 = vpop.f32.mrb[0].mxu0
      %v6137 = vadd.f32 %v5816, %v6136
      %v6138 = vpop.f32.mrb[0].mxu0
      %6139 = vmatprep.mubr.f32.mxu0 0.0
      %6140 = vmatmul.mubr.f32.gmra.mrb[0].mxu0 %v5966
      %v6141 = vpop.f32.mrb[0].mxu0
      %v6142 = vadd.f32 %v5821, %v6141
      %v6143 = vpop.f32.mrb[0].mxu0
      %6144 = vmatprep.mubr.f32.mxu0 0.0
      %6145 = vmatmul.mubr.f32.gmra.mrb[0].mxu0 %v5969
      %v6146 = vpop.f32.mrb[0].mxu0
      %v6147 = vadd.f32 %v5826, %v6146
      %v6148 = vpop.f32.mrb[0].mxu0
      %6149 = vmatprep.mubr.f32.mxu0 0.0
      %6150 = vmatmul.mubr.f32.gmra.mrb[0].mxu0 %v5972
      %v6151 = vpop.f32.mrb[0].mxu0
      %v6152 = vadd.f32 %v5831, %v6151
      %v6153 = vpop.f32.mrb[0].mxu0
      %6154 = vmatprep.mubr.f32.mxu0 0.0
      %6155 = vmatmul.mubr.f32.gmra.mrb[0].mxu0 %v5975
      %v6156 = vpop.f32.mrb[0].mxu0
      %v6157 = vadd.f32 %v5836, %v6156
      %v6158 = vpop.f32.mrb[0].mxu0
      %6159 = vmatprep.mubr.f32.mxu0 0.0
      %6160 = vmatmul.mubr.f32.gmra.mrb[0].mxu0 %v5978
      %v6161 = vpop.f32.mrb[0].mxu0
      %v6162 = vadd.f32 %v5841, %v6161
      %v6163 = vpop.f32.mrb[0].mxu0
      %6164 = vmatprep.mubr.f32.mxu0 0.0
      %6165 = vmatmul.mubr.f32.gmra.mrb[0].mxu0 %v5981
      %v6166 = vpop.f32.mrb[0].mxu0
      %v6167 = vadd.f32 %v5846, %v6166
      %v6168 = vpop.f32.mrb[0].mxu0
      %6169 = vmatprep.mubr.f32.mxu0 0.0
      %6170 = vmatmul.mubr.f32.gmra.mrb[0].mxu0 %v5984
      %v6171 = vpop.f32.mrb[0].mxu0
      %v6172 = vadd.f32 %v5851, %v6171
      %v6173 = vpop.f32.mrb[0].mxu0
      %6174 = vmatprep.mubr.f32.mxu0 0.0
      %6175 = vmatmul.mubr.f32.gmra.mrb[0].mxu0 %v5987
      %v6176 = vpop.f32.mrb[0].mxu0
      %v6177 = vadd.f32 %v5856, %v6176
      %v6178 = vpop.f32.mrb[0].mxu0
      %6179 = vmatprep.mubr.f32.mxu0 0.0
      %6180 = vmatmul.mubr.f32.gmra.mrb[0].mxu0 %v5990
      %v6181 = vpop.f32.mrb[0].mxu0
      %v6182 = vadd.f32 %v5861, %v6181
      %v6183 = vpop.f32.mrb[0].mxu0
      %6184 = vmatprep.mubr.f32.mxu0 0.0
      %6185 = vmatmul.mubr.f32.gmra.mrb[0].mxu0 %v5993
      %v6186 = vpop.f32.mrb[0].mxu0
      %v6187 = vadd.f32 %v5866, %v6186
      %v6188 = vpop.f32.mrb[0].mxu0
      %6189 = vmatprep.mubr.f32.mxu0 0.0
      %6190 = vmatmul.mubr.f32.gmra.mrb[0].mxu0 %v5996
      %v6191 = vpop.f32.mrb[0].mxu0
      %v6192 = vadd.f32 %v5871, %v6191
      %v6193 = vpop.f32.mrb[0].mxu0
      %6194 = vmatprep.mubr.f32.mxu0 0.0
      %6195 = vmatmul.mubr.f32.gmra.mrb[0].mxu0 %v5999
      %v6196 = vpop.f32.mrb[0].mxu0
      %v6197 = vadd.f32 %v5876, %v6196
      %v6198 = vpop.f32.mrb[0].mxu0
      %6199 = vmatprep.mubr.f32.mxu0 0.0
      %6200 = vmatmul.mubr.f32.gmra.mrb[0].mxu0 %v6002
      %v6201 = vpop.f32.mrb[0].mxu0
      %v6202 = vadd.f32 %v5881, %v6201
      %v6203 = vpop.f32.mrb[0].mxu0
      %6204 = vmatprep.mubr.f32.mxu0 0.0
      %6205 = vmatmul.mubr.f32.gmra.mrb[0].mxu0 %v6005
      %v6206 = vpop.f32.mrb[0].mxu0
      %v6207 = vadd.f32 %v5886, %v6206
      %v6208 = vpop.f32.mrb[0].mxu0
      %6209 = vmatprep.mubr.f32.mxu0 0.0
      %6210 = vmatmul.mubr.f32.gmra.mrb[0].mxu0 %v6008
      %v6211 = vpop.f32.mrb[0].mxu0
      %v6212 = vadd.f32 %v5891, %v6211
      %v6213 = vpop.f32.mrb[0].mxu0
      %6214 = vmatprep.mubr.f32.mxu0 0.0
      %6215 = vmatmul.mubr.f32.gmra.mrb[0].mxu0 %v6011
      %v6216 = vpop.f32.mrb[0].mxu0
      %v6217 = vadd.f32 %v5896, %v6216
      %v6218 = vpop.f32.mrb[0].mxu0
      %6219 = vmatprep.mubr.f32.mxu0 0.0
      %6220 = vmatmul.mubr.f32.gmra.mrb[0].mxu0 %v6014
      %v6221 = vpop.f32.mrb[0].mxu0
      %v6222 = vadd.f32 %v5901, %v6221
      %v6223 = vpop.f32.mrb[0].mxu0
      %6224 = vmatprep.mubr.f32.mxu0 0.0
      %6225 = vmatmul.mubr.f32.gmra.mrb[0].mxu0 %v6017
      %v6226 = vpop.f32.mrb[0].mxu0
      %v6227 = vadd.f32 %v5906, %v6226
      %v6228 = vpop.f32.mrb[0].mxu0
      %6229 = vmatprep.mubr.f32.mxu0 0.0
      %6230 = vmatmul.mubr.f32.gmra.mrb[0].mxu0 %v6020
      %v6231 = vpop.f32.mrb[0].mxu0
      %v6232 = vadd.f32 %v5911, %v6231
      %v6233 = vpop.f32.mrb[0].mxu0
      %6234 = vmatprep.mubr.f32.mxu0 0.0
      %6235 = vmatmul.mubr.f32.gmra.mrb[0].mxu0 %v6023
      %v6236 = vpop.f32.mrb[0].mxu0
      %v6237 = vadd.f32 %v5916, %v6236
      %v6238 = vpop.f32.mrb[0].mxu0
      %6239 = vmatprep.mubr.f32.mxu0 0.0
      %6240 = vmatmul.mubr.f32.gmra.mrb[0].mxu0 %v6026
      %v6241 = vpop.f32.mrb[0].mxu0
      %v6242 = vadd.f32 %v5921, %v6241
      %v6243 = vpop.f32.mrb[0].mxu0
      %6244 = vmatprep.mubr.f32.mxu0 0.0
      %6245 = vmatmul.mubr.f32.gmra.mrb[0].mxu0 %v6029
      %v6246 = vpop.f32.mrb[0].mxu0
      %v6247 = vadd.f32 %v5926, %v6246
      %v6248 = vpop.f32.mrb[0].mxu0
      %6249 = vmatprep.mubr.f32.mxu0 0.0
      %6250 = vmatmul.mubr.f32.gmra.mrb[0].mxu0 %v6032
      %v6251 = vpop.f32.mrb[0].mxu0
      %v6252 = vadd.f32 %v5931, %v6251
      %v6253 = vpop.f32.mrb[0].mxu0
      %6254 = vmatprep.mubr.f32.mxu0 0.0
      %6255 = vmatmul.mubr.f32.gmra.mrb[0].mxu0 %v6035
      %v6256 = vpop.f32.mrb[0].mxu0
      %v6257 = vadd.f32 %v5936, %v6256
      %v6258 = vpop.f32.mrb[0].mxu0
      %6259 = vmatprep.mubr.f32.mxu0 0.0
      %6260 = vmatmul.mubr.f32.gmra.mrb[0].mxu0 %v6038
      %v6261 = vpop.f32.mrb[0].mxu0
      %v6262 = vadd.f32 %v5941, %v6261
      %v6263 = vpop.f32.mrb[0].mxu0
      %6264 = vdwg.mxu0
      %v6265 = vld [vmem:[#allocation3 + $0x9] sm:$0xff]
      %v6266 = vld [vmem:[#allocation3 + $0x11] sm:$0xff]
      %v6267 = vld [vmem:[#allocation3 + $0x29] sm:$0xff]
      %v6268 = vld [vmem:[#allocation3 + $0x31] sm:$0xff]
      %v6269 = vld [vmem:[#allocation3 + $0x49] sm:$0xff]
      %v6270 = vld [vmem:[#allocation3 + $0x51] sm:$0xff]
      %v6271 = vld [vmem:[#allocation3 + $0x69] sm:$0xff]
      %v6272 = vld [vmem:[#allocation3 + $0x71] sm:$0xff]
      %v6273 = vld [vmem:[#allocation3 + $0x89] sm:$0xff]
      %v6274 = vld [vmem:[#allocation3 + $0x91] sm:$0xff]
      %v6275 = vld [vmem:[#allocation3 + $0xa9] sm:$0xff]
      %v6276 = vld [vmem:[#allocation3 + $0xb1] sm:$0xff]
      %v6277 = vld [vmem:[#allocation3 + $0xc9] sm:$0xff]
      %v6278 = vld [vmem:[#allocation3 + $0xd1] sm:$0xff]
      %v6279 = vld [vmem:[#allocation3 + $0xe9] sm:$0xff]
      %v6280 = vld [vmem:[#allocation3 + $0xf1] sm:$0xff]
      %v6281 = vld [vmem:[#allocation3 + $0x109] sm:$0xff]
      %v6282 = vld [vmem:[#allocation3 + $0x111] sm:$0xff]
      %v6283 = vld [vmem:[#allocation3 + $0x129] sm:$0xff]
      %v6284 = vld [vmem:[#allocation3 + $0x131] sm:$0xff]
      %v6285 = vld [vmem:[#allocation3 + $0x149] sm:$0xff]
      %v6286 = vld [vmem:[#allocation3 + $0x151] sm:$0xff]
      %v6287 = vld [vmem:[#allocation3 + $0x169] sm:$0xff]
      %v6288 = vld [vmem:[#allocation3 + $0x171] sm:$0xff]
      %v6289 = vld [vmem:[#allocation3 + $0x189] sm:$0xff]
      %v6290 = vld [vmem:[#allocation3 + $0x191] sm:$0xff]
      %v6291 = vld [vmem:[#allocation3 + $0x1a9] sm:$0xff]
      %v6292 = vld [vmem:[#allocation3 + $0x1b1] sm:$0xff]
      %v6293 = vld [vmem:[#allocation3 + $0x1c9] sm:$0xff]
      %v6294 = vld [vmem:[#allocation3 + $0x1d1] sm:$0xff]
      %v6295 = vld [vmem:[#allocation3 + $0x1e9] sm:$0xff]
      %v6296 = vld [vmem:[#allocation3 + $0x1f1] sm:$0xff]
      %s6297 = scalar_lea.vmem %s10, 32
      %v6298 = vld [vmem:[%s6297] sm:$0xff]
      %v6299 = vld [vmem:[%s6297 + $0x8] sm:$0xff]
      %v6301 = vsel %vm4786, %v6265, 0
      %v6304 = vsel %vm4786, %v6266, 0
      %v6307 = vsel %vm4786, %v6267, 0
      %v6310 = vsel %vm4786, %v6268, 0
      %v6313 = vsel %vm4786, %v6269, 0
      %v6316 = vsel %vm4786, %v6270, 0
      %v6319 = vsel %vm4786, %v6271, 0
      %v6322 = vsel %vm4786, %v6272, 0
      %v6325 = vsel %vm4786, %v6273, 0
      %v6328 = vsel %vm4786, %v6274, 0
      %v6331 = vsel %vm4786, %v6275, 0
      %v6334 = vsel %vm4786, %v6276, 0
      %v6337 = vsel %vm4786, %v6277, 0
      %v6340 = vsel %vm4786, %v6278, 0
      %v6343 = vsel %vm4786, %v6279, 0
      %v6346 = vsel %vm4786, %v6280, 0
      %v6349 = vsel %vm4786, %v6281, 0
      %v6352 = vsel %vm4786, %v6282, 0
      %v6355 = vsel %vm4786, %v6283, 0
      %v6358 = vsel %vm4786, %v6284, 0
      %v6361 = vsel %vm4786, %v6285, 0
      %v6364 = vsel %vm4786, %v6286, 0
      %v6367 = vsel %vm4786, %v6287, 0
      %v6370 = vsel %vm4786, %v6288, 0
      %v6373 = vsel %vm4786, %v6289, 0
      %v6376 = vsel %vm4786, %v6290, 0
      %v6379 = vsel %vm4786, %v6291, 0
      %v6382 = vsel %vm4786, %v6292, 0
      %v6385 = vsel %vm4786, %v6293, 0
      %v6388 = vsel %vm4786, %v6294, 0
      %v6391 = vsel %vm4786, %v6295, 0
      %v6394 = vsel %vm4786, %v6296, 0
      %6396 = vmatprep.subr.mxu0 0.0
      %6397 = vmatpush1.msra.mxu0 %v6298
      %6398 = vmatprep.subr.mxu0 0.0
      %6399 = vmatpush1.msra.mxu0 %v6299
      %6400 = vmatprep.subr.mxu0 0.0
      %6401 = vmatpush1.msra.mxu0 0.0
      %6402 = vmatprep.subr.mxu0 0.0
      %6403 = vmatpush1.msra.mxu0 0.0
      %6404 = vmatprep.subr.mxu0 0.0
      %6405 = vmatpush1.msra.mxu0 0.0
      %6406 = vmatprep.subr.mxu0 0.0
      %6407 = vmatpush1.msra.mxu0 0.0
      %6408 = vmatprep.subr.mxu0 0.0
      %6409 = vmatpush1.msra.mxu0 0.0
      %6410 = vmatprep.subr.mxu0 0.0
      %6411 = vmatpush1.msra.mxu0 0.0
      %6412 = vmatprep.subr.mxu0 0.0
      %6413 = vmatpush1.msra.mxu0 0.0
      %6414 = vmatprep.subr.mxu0 0.0
      %6415 = vmatpush1.msra.mxu0 0.0
      %6416 = vmatprep.subr.mxu0 0.0
      %6417 = vmatpush1.msra.mxu0 0.0
      %6418 = vmatprep.subr.mxu0 0.0
      %6419 = vmatpush1.msra.mxu0 0.0
      %6420 = vmatprep.subr.mxu0 0.0
      %6421 = vmatpush1.msra.mxu0 0.0
      %6422 = vmatprep.subr.mxu0 0.0
      %6423 = vmatpush1.msra.mxu0 0.0
      %6424 = vmatprep.subr.mxu0 0.0
      %6425 = vmatpush1.msra.mxu0 0.0
      %6426 = vmatprep.subr.mxu0 0.0
      %6427 = vmatpush1.msra.mxu0 0.0
      %6428 = vmatprep.subr.mxu0 0.0
      %6429 = vmatpush1.msra.mxu0 0.0
      %6430 = vmatprep.subr.mxu0 0.0
      %6431 = vmatpush1.msra.mxu0 0.0
      %6432 = vmatprep.subr.mxu0 0.0
      %6433 = vmatpush1.msra.mxu0 0.0
      %6434 = vmatprep.subr.mxu0 0.0
      %6435 = vmatpush1.msra.mxu0 0.0
      %6436 = vmatprep.subr.mxu0 0.0
      %6437 = vmatpush1.msra.mxu0 0.0
      %6438 = vmatprep.subr.mxu0 0.0
      %6439 = vmatpush1.msra.mxu0 0.0
      %6440 = vmatprep.subr.mxu0 0.0
      %6441 = vmatpush1.msra.mxu0 0.0
      %6442 = vmatprep.subr.mxu0 0.0
      %6443 = vmatpush1.msra.mxu0 0.0
      %6444 = vmatprep.subr.mxu0 0.0
      %6445 = vmatpush1.msra.mxu0 0.0
      %6446 = vmatprep.subr.mxu0 0.0
      %6447 = vmatpush1.msra.mxu0 0.0
      %6448 = vmatprep.subr.mxu0 0.0
      %6449 = vmatpush1.msra.mxu0 0.0
      %6450 = vmatprep.subr.mxu0 0.0
      %6451 = vmatpush1.msra.mxu0 0.0
      %6452 = vmatprep.subr.mxu0 0.0
      %6453 = vmatpush1.msra.mxu0 0.0
      %6454 = vmatprep.subr.mxu0 0.0
      %6455 = vmatpush1.msra.mxu0 0.0
      %6456 = vmatprep.subr.mxu0 0.0
      %6457 = vmatpush1.msra.mxu0 0.0
      %6458 = vmatprep.subr.mxu0 0.0
      %6459 = vmatpush1.msra.mxu0 0.0
      %6460 = vmatprep.mubr.f32.mxu0 0.0
      %6461 = vmatmul.mubr.f32.gmra.mrb[0].mxu0 %v6301
      %v6462 = vpop.f32.mrb[0].mxu0
      %v6463 = vadd.f32 0.0, %v6462
      %v6464 = vpop.f32.mrb[0].mxu0
      %6465 = vmatprep.mubr.f32.mxu0 0.0
      %6466 = vmatmul.mubr.f32.gmra.mrb[0].mxu0 %v6304
      %v6467 = vpop.f32.mrb[0].mxu0
      %v6468 = vadd.f32 0.0, %v6467
      %v6469 = vpop.f32.mrb[0].mxu0
      %6470 = vmatprep.mubr.f32.mxu0 0.0
      %6471 = vmatmul.mubr.f32.gmra.mrb[0].mxu0 %v6307
      %v6472 = vpop.f32.mrb[0].mxu0
      %v6473 = vadd.f32 0.0, %v6472
      %v6474 = vpop.f32.mrb[0].mxu0
      %6475 = vmatprep.mubr.f32.mxu0 0.0
      %6476 = vmatmul.mubr.f32.gmra.mrb[0].mxu0 %v6310
      %v6477 = vpop.f32.mrb[0].mxu0
      %v6478 = vadd.f32 0.0, %v6477
      %v6479 = vpop.f32.mrb[0].mxu0
      %6480 = vmatprep.mubr.f32.mxu0 0.0
      %6481 = vmatmul.mubr.f32.gmra.mrb[0].mxu0 %v6313
      %v6482 = vpop.f32.mrb[0].mxu0
      %v6483 = vadd.f32 0.0, %v6482
      %v6484 = vpop.f32.mrb[0].mxu0
      %6485 = vmatprep.mubr.f32.mxu0 0.0
      %6486 = vmatmul.mubr.f32.gmra.mrb[0].mxu0 %v6316
      %v6487 = vpop.f32.mrb[0].mxu0
      %v6488 = vadd.f32 0.0, %v6487
      %v6489 = vpop.f32.mrb[0].mxu0
      %6490 = vmatprep.mubr.f32.mxu0 0.0
      %6491 = vmatmul.mubr.f32.gmra.mrb[0].mxu0 %v6319
      %v6492 = vpop.f32.mrb[0].mxu0
      %v6493 = vadd.f32 0.0, %v6492
      %v6494 = vpop.f32.mrb[0].mxu0
      %6495 = vmatprep.mubr.f32.mxu0 0.0
      %6496 = vmatmul.mubr.f32.gmra.mrb[0].mxu0 %v6322
      %v6497 = vpop.f32.mrb[0].mxu0
      %v6498 = vadd.f32 0.0, %v6497
      %v6499 = vpop.f32.mrb[0].mxu0
      %6500 = vmatprep.mubr.f32.mxu0 0.0
      %6501 = vmatmul.mubr.f32.gmra.mrb[0].mxu0 %v6325
      %v6502 = vpop.f32.mrb[0].mxu0
      %v6503 = vadd.f32 0.0, %v6502
      %v6504 = vpop.f32.mrb[0].mxu0
      %6505 = vmatprep.mubr.f32.mxu0 0.0
      %6506 = vmatmul.mubr.f32.gmra.mrb[0].mxu0 %v6328
      %v6507 = vpop.f32.mrb[0].mxu0
      %v6508 = vadd.f32 0.0, %v6507
      %v6509 = vpop.f32.mrb[0].mxu0
      %6510 = vmatprep.mubr.f32.mxu0 0.0
      %6511 = vmatmul.mubr.f32.gmra.mrb[0].mxu0 %v6331
      %v6512 = vpop.f32.mrb[0].mxu0
      %v6513 = vadd.f32 0.0, %v6512
      %v6514 = vpop.f32.mrb[0].mxu0
      %6515 = vmatprep.mubr.f32.mxu0 0.0
      %6516 = vmatmul.mubr.f32.gmra.mrb[0].mxu0 %v6334
      %v6517 = vpop.f32.mrb[0].mxu0
      %v6518 = vadd.f32 0.0, %v6517
      %v6519 = vpop.f32.mrb[0].mxu0
      %6520 = vmatprep.mubr.f32.mxu0 0.0
      %6521 = vmatmul.mubr.f32.gmra.mrb[0].mxu0 %v6337
      %v6522 = vpop.f32.mrb[0].mxu0
      %v6523 = vadd.f32 0.0, %v6522
      %v6524 = vpop.f32.mrb[0].mxu0
      %6525 = vmatprep.mubr.f32.mxu0 0.0
      %6526 = vmatmul.mubr.f32.gmra.mrb[0].mxu0 %v6340
      %v6527 = vpop.f32.mrb[0].mxu0
      %v6528 = vadd.f32 0.0, %v6527
      %v6529 = vpop.f32.mrb[0].mxu0
      %6530 = vmatprep.mubr.f32.mxu0 0.0
      %6531 = vmatmul.mubr.f32.gmra.mrb[0].mxu0 %v6343
      %v6532 = vpop.f32.mrb[0].mxu0
      %v6533 = vadd.f32 0.0, %v6532
      %v6534 = vpop.f32.mrb[0].mxu0
      %6535 = vmatprep.mubr.f32.mxu0 0.0
      %6536 = vmatmul.mubr.f32.gmra.mrb[0].mxu0 %v6346
      %v6537 = vpop.f32.mrb[0].mxu0
      %v6538 = vadd.f32 0.0, %v6537
      %v6539 = vpop.f32.mrb[0].mxu0
      %6540 = vmatprep.mubr.f32.mxu0 0.0
      %6541 = vmatmul.mubr.f32.gmra.mrb[0].mxu0 %v6349
      %v6542 = vpop.f32.mrb[0].mxu0
      %v6543 = vadd.f32 0.0, %v6542
      %v6544 = vpop.f32.mrb[0].mxu0
      %6545 = vmatprep.mubr.f32.mxu0 0.0
      %6546 = vmatmul.mubr.f32.gmra.mrb[0].mxu0 %v6352
      %v6547 = vpop.f32.mrb[0].mxu0
      %v6548 = vadd.f32 0.0, %v6547
      %v6549 = vpop.f32.mrb[0].mxu0
      %6550 = vmatprep.mubr.f32.mxu0 0.0
      %6551 = vmatmul.mubr.f32.gmra.mrb[0].mxu0 %v6355
      %v6552 = vpop.f32.mrb[0].mxu0
      %v6553 = vadd.f32 0.0, %v6552
      %v6554 = vpop.f32.mrb[0].mxu0
      %6555 = vmatprep.mubr.f32.mxu0 0.0
      %6556 = vmatmul.mubr.f32.gmra.mrb[0].mxu0 %v6358
      %v6557 = vpop.f32.mrb[0].mxu0
      %v6558 = vadd.f32 0.0, %v6557
      %v6559 = vpop.f32.mrb[0].mxu0
      %6560 = vmatprep.mubr.f32.mxu0 0.0
      %6561 = vmatmul.mubr.f32.gmra.mrb[0].mxu0 %v6361
      %v6562 = vpop.f32.mrb[0].mxu0
      %v6563 = vadd.f32 0.0, %v6562
      %v6564 = vpop.f32.mrb[0].mxu0
      %6565 = vmatprep.mubr.f32.mxu0 0.0
      %6566 = vmatmul.mubr.f32.gmra.mrb[0].mxu0 %v6364
      %v6567 = vpop.f32.mrb[0].mxu0
      %v6568 = vadd.f32 0.0, %v6567
      %v6569 = vpop.f32.mrb[0].mxu0
      %6570 = vmatprep.mubr.f32.mxu0 0.0
      %6571 = vmatmul.mubr.f32.gmra.mrb[0].mxu0 %v6367
      %v6572 = vpop.f32.mrb[0].mxu0
      %v6573 = vadd.f32 0.0, %v6572
      %v6574 = vpop.f32.mrb[0].mxu0
      %6575 = vmatprep.mubr.f32.mxu0 0.0
      %6576 = vmatmul.mubr.f32.gmra.mrb[0].mxu0 %v6370
      %v6577 = vpop.f32.mrb[0].mxu0
      %v6578 = vadd.f32 0.0, %v6577
      %v6579 = vpop.f32.mrb[0].mxu0
      %6580 = vmatprep.mubr.f32.mxu0 0.0
      %6581 = vmatmul.mubr.f32.gmra.mrb[0].mxu0 %v6373
      %v6582 = vpop.f32.mrb[0].mxu0
      %v6583 = vadd.f32 0.0, %v6582
      %v6584 = vpop.f32.mrb[0].mxu0
      %6585 = vmatprep.mubr.f32.mxu0 0.0
      %6586 = vmatmul.mubr.f32.gmra.mrb[0].mxu0 %v6376
      %v6587 = vpop.f32.mrb[0].mxu0
      %v6588 = vadd.f32 0.0, %v6587
      %v6589 = vpop.f32.mrb[0].mxu0
      %6590 = vmatprep.mubr.f32.mxu0 0.0
      %6591 = vmatmul.mubr.f32.gmra.mrb[0].mxu0 %v6379
      %v6592 = vpop.f32.mrb[0].mxu0
      %v6593 = vadd.f32 0.0, %v6592
      %v6594 = vpop.f32.mrb[0].mxu0
      %6595 = vmatprep.mubr.f32.mxu0 0.0
      %6596 = vmatmul.mubr.f32.gmra.mrb[0].mxu0 %v6382
      %v6597 = vpop.f32.mrb[0].mxu0
      %v6598 = vadd.f32 0.0, %v6597
      %v6599 = vpop.f32.mrb[0].mxu0
      %6600 = vmatprep.mubr.f32.mxu0 0.0
      %6601 = vmatmul.mubr.f32.gmra.mrb[0].mxu0 %v6385
      %v6602 = vpop.f32.mrb[0].mxu0
      %v6603 = vadd.f32 0.0, %v6602
      %v6604 = vpop.f32.mrb[0].mxu0
      %6605 = vmatprep.mubr.f32.mxu0 0.0
      %6606 = vmatmul.mubr.f32.gmra.mrb[0].mxu0 %v6388
      %v6607 = vpop.f32.mrb[0].mxu0
      %v6608 = vadd.f32 0.0, %v6607
      %v6609 = vpop.f32.mrb[0].mxu0
      %6610 = vmatprep.mubr.f32.mxu0 0.0
      %6611 = vmatmul.mubr.f32.gmra.mrb[0].mxu0 %v6391
      %v6612 = vpop.f32.mrb[0].mxu0
      %v6613 = vadd.f32 0.0, %v6612
      %v6614 = vpop.f32.mrb[0].mxu0
      %6615 = vmatprep.mubr.f32.mxu0 0.0
      %6616 = vmatmul.mubr.f32.gmra.mrb[0].mxu0 %v6394
      %v6617 = vpop.f32.mrb[0].mxu0
      %v6618 = vadd.f32 0.0, %v6617
      %v6619 = vpop.f32.mrb[0].mxu0
      %6620 = vdwg.mxu0
      %v6621 = vadd.f32 %v6107, %v6463
      %v6622 = vadd.f32 %v6112, %v6468
      %v6623 = vadd.f32 %v6117, %v6473
      %v6624 = vadd.f32 %v6122, %v6478
      %v6625 = vadd.f32 %v6127, %v6483
      %v6626 = vadd.f32 %v6132, %v6488
      %v6627 = vadd.f32 %v6137, %v6493
      %v6628 = vadd.f32 %v6142, %v6498
      %v6629 = vadd.f32 %v6147, %v6503
      %v6630 = vadd.f32 %v6152, %v6508
      %v6631 = vadd.f32 %v6157, %v6513
      %v6632 = vadd.f32 %v6162, %v6518
      %v6633 = vadd.f32 %v6167, %v6523
      %v6634 = vadd.f32 %v6172, %v6528
      %v6635 = vadd.f32 %v6177, %v6533
      %v6636 = vadd.f32 %v6182, %v6538
      %v6637 = vadd.f32 %v6187, %v6543
      %v6638 = vadd.f32 %v6192, %v6548
      %v6639 = vadd.f32 %v6197, %v6553
      %v6640 = vadd.f32 %v6202, %v6558
      %v6641 = vadd.f32 %v6207, %v6563
      %v6642 = vadd.f32 %v6212, %v6568
      %v6643 = vadd.f32 %v6217, %v6573
      %v6644 = vadd.f32 %v6222, %v6578
      %v6645 = vadd.f32 %v6227, %v6583
      %v6646 = vadd.f32 %v6232, %v6588
      %v6647 = vadd.f32 %v6237, %v6593
      %v6648 = vadd.f32 %v6242, %v6598
      %v6649 = vadd.f32 %v6247, %v6603
      %v6650 = vadd.f32 %v6252, %v6608
      %v6651 = vadd.f32 %v6257, %v6613
      %v6652 = vadd.f32 %v6262, %v6618
      %v6653 = vld [vmem:[%s5489 + $0x7] sm:$0xff]
      %v6654 = vld [vmem:[%s5489 + $0xf] sm:$0xff]
      %v6655 = vld [vmem:[%s5489 + $0x27] sm:$0xff]
      %v6656 = vld [vmem:[%s5489 + $0x2f] sm:$0xff]
      %v6657 = vld [vmem:[%s5489 + $0x47] sm:$0xff]
      %v6658 = vld [vmem:[%s5489 + $0x4f] sm:$0xff]
      %v6659 = vld [vmem:[%s5489 + $0x67] sm:$0xff]
      %v6660 = vld [vmem:[%s5489 + $0x6f] sm:$0xff]
      %v6661 = vld [vmem:[%s5489 + $0x87] sm:$0xff]
      %v6662 = vld [vmem:[%s5489 + $0x8f] sm:$0xff]
      %v6663 = vld [vmem:[%s5489 + $0xa7] sm:$0xff]
      %v6664 = vld [vmem:[%s5489 + $0xaf] sm:$0xff]
      %v6665 = vld [vmem:[%s5489 + $0xc7] sm:$0xff]
      %v6666 = vld [vmem:[%s5489 + $0xcf] sm:$0xff]
      %v6667 = vld [vmem:[%s5489 + $0xe7] sm:$0xff]
      %v6668 = vld [vmem:[%s5489 + $0xef] sm:$0xff]
      %v6669 = vld [vmem:[%s5489 + $0x107] sm:$0xff]
      %v6670 = vld [vmem:[%s5489 + $0x10f] sm:$0xff]
      %v6671 = vld [vmem:[%s5489 + $0x127] sm:$0xff]
      %v6672 = vld [vmem:[%s5489 + $0x12f] sm:$0xff]
      %v6673 = vld [vmem:[%s5489 + $0x147] sm:$0xff]
      %v6674 = vld [vmem:[%s5489 + $0x14f] sm:$0xff]
      %v6675 = vld [vmem:[%s5489 + $0x167] sm:$0xff]
      %v6676 = vld [vmem:[%s5489 + $0x16f] sm:$0xff]
      %v6677 = vld [vmem:[%s5489 + $0x187] sm:$0xff]
      %v6678 = vld [vmem:[%s5489 + $0x18f] sm:$0xff]
      %v6679 = vld [vmem:[%s5489 + $0x1a7] sm:$0xff]
      %v6680 = vld [vmem:[%s5489 + $0x1af] sm:$0xff]
      %v6681 = vld [vmem:[%s5489 + $0x1c7] sm:$0xff]
      %v6682 = vld [vmem:[%s5489 + $0x1cf] sm:$0xff]
      %v6683 = vld [vmem:[%s5489 + $0x1e7] sm:$0xff]
      %v6684 = vld [vmem:[%s5489 + $0x1ef] sm:$0xff]
      %s6685 = scalar_lea.vmem %s10, 48
      %v6686 = vld [vmem:[%s6685] sm:$0xff]
      %v6687 = vld [vmem:[%s6685 + $0x8] sm:$0xff]
      %v6689 = vsel %vm4786, %v6653, 0
      %v6692 = vsel %vm4786, %v6654, 0
      %v6695 = vsel %vm4786, %v6655, 0
      %v6698 = vsel %vm4786, %v6656, 0
      %v6701 = vsel %vm4786, %v6657, 0
      %v6704 = vsel %vm4786, %v6658, 0
      %v6707 = vsel %vm4786, %v6659, 0
      %v6710 = vsel %vm4786, %v6660, 0
      %v6713 = vsel %vm4786, %v6661, 0
      %v6716 = vsel %vm4786, %v6662, 0
      %v6719 = vsel %vm4786, %v6663, 0
      %v6722 = vsel %vm4786, %v6664, 0
      %v6725 = vsel %vm4786, %v6665, 0
      %v6728 = vsel %vm4786, %v6666, 0
      %v6731 = vsel %vm4786, %v6667, 0
      %v6734 = vsel %vm4786, %v6668, 0
      %v6737 = vsel %vm4786, %v6669, 0
      %v6740 = vsel %vm4786, %v6670, 0
      %v6743 = vsel %vm4786, %v6671, 0
      %v6746 = vsel %vm4786, %v6672, 0
      %v6749 = vsel %vm4786, %v6673, 0
      %v6752 = vsel %vm4786, %v6674, 0
      %v6755 = vsel %vm4786, %v6675, 0
      %v6758 = vsel %vm4786, %v6676, 0
      %v6761 = vsel %vm4786, %v6677, 0
      %v6764 = vsel %vm4786, %v6678, 0
      %v6767 = vsel %vm4786, %v6679, 0
      %v6770 = vsel %vm4786, %v6680, 0
      %v6773 = vsel %vm4786, %v6681, 0
      %v6776 = vsel %vm4786, %v6682, 0
      %v6779 = vsel %vm4786, %v6683, 0
      %v6782 = vsel %vm4786, %v6684, 0
      %6784 = vmatprep.subr.mxu0 0.0
      %6785 = vmatpush1.msra.mxu0 %v6686
      %6786 = vmatprep.subr.mxu0 0.0
      %6787 = vmatpush1.msra.mxu0 %v6687
      %6788 = vmatprep.subr.mxu0 0.0
      %6789 = vmatpush1.msra.mxu0 0.0
      %6790 = vmatprep.subr.mxu0 0.0
      %6791 = vmatpush1.msra.mxu0 0.0
      %6792 = vmatprep.subr.mxu0 0.0
      %6793 = vmatpush1.msra.mxu0 0.0
      %6794 = vmatprep.subr.mxu0 0.0
      %6795 = vmatpush1.msra.mxu0 0.0
      %6796 = vmatprep.subr.mxu0 0.0
      %6797 = vmatpush1.msra.mxu0 0.0
      %6798 = vmatprep.subr.mxu0 0.0
      %6799 = vmatpush1.msra.mxu0 0.0
      %6800 = vmatprep.subr.mxu0 0.0
      %6801 = vmatpush1.msra.mxu0 0.0
      %6802 = vmatprep.subr.mxu0 0.0
      %6803 = vmatpush1.msra.mxu0 0.0
      %6804 = vmatprep.subr.mxu0 0.0
      %6805 = vmatpush1.msra.mxu0 0.0
      %6806 = vmatprep.subr.mxu0 0.0
      %6807 = vmatpush1.msra.mxu0 0.0
      %6808 = vmatprep.subr.mxu0 0.0
      %6809 = vmatpush1.msra.mxu0 0.0
      %6810 = vmatprep.subr.mxu0 0.0
      %6811 = vmatpush1.msra.mxu0 0.0
      %6812 = vmatprep.subr.mxu0 0.0
      %6813 = vmatpush1.msra.mxu0 0.0
      %6814 = vmatprep.subr.mxu0 0.0
      %6815 = vmatpush1.msra.mxu0 0.0
      %6816 = vmatprep.subr.mxu0 0.0
      %6817 = vmatpush1.msra.mxu0 0.0
      %6818 = vmatprep.subr.mxu0 0.0
      %6819 = vmatpush1.msra.mxu0 0.0
      %6820 = vmatprep.subr.mxu0 0.0
      %6821 = vmatpush1.msra.mxu0 0.0
      %6822 = vmatprep.subr.mxu0 0.0
      %6823 = vmatpush1.msra.mxu0 0.0
      %6824 = vmatprep.subr.mxu0 0.0
      %6825 = vmatpush1.msra.mxu0 0.0
      %6826 = vmatprep.subr.mxu0 0.0
      %6827 = vmatpush1.msra.mxu0 0.0
      %6828 = vmatprep.subr.mxu0 0.0
      %6829 = vmatpush1.msra.mxu0 0.0
      %6830 = vmatprep.subr.mxu0 0.0
      %6831 = vmatpush1.msra.mxu0 0.0
      %6832 = vmatprep.subr.mxu0 0.0
      %6833 = vmatpush1.msra.mxu0 0.0
      %6834 = vmatprep.subr.mxu0 0.0
      %6835 = vmatpush1.msra.mxu0 0.0
      %6836 = vmatprep.subr.mxu0 0.0
      %6837 = vmatpush1.msra.mxu0 0.0
      %6838 = vmatprep.subr.mxu0 0.0
      %6839 = vmatpush1.msra.mxu0 0.0
      %6840 = vmatprep.subr.mxu0 0.0
      %6841 = vmatpush1.msra.mxu0 0.0
      %6842 = vmatprep.subr.mxu0 0.0
      %6843 = vmatpush1.msra.mxu0 0.0
      %6844 = vmatprep.subr.mxu0 0.0
      %6845 = vmatpush1.msra.mxu0 0.0
      %6846 = vmatprep.subr.mxu0 0.0
      %6847 = vmatpush1.msra.mxu0 0.0
      %6848 = vmatprep.mubr.f32.mxu0 0.0
      %6849 = vmatmul.mubr.f32.gmra.mrb[0].mxu0 %v6689
      %v6850 = vpop.f32.mrb[0].mxu0
      %v6851 = vadd.f32 0.0, %v6850
      %v6852 = vpop.f32.mrb[0].mxu0
      %6853 = vmatprep.mubr.f32.mxu0 0.0
      %6854 = vmatmul.mubr.f32.gmra.mrb[0].mxu0 %v6692
      %v6855 = vpop.f32.mrb[0].mxu0
      %v6856 = vadd.f32 0.0, %v6855
      %v6857 = vpop.f32.mrb[0].mxu0
      %6858 = vmatprep.mubr.f32.mxu0 0.0
      %6859 = vmatmul.mubr.f32.gmra.mrb[0].mxu0 %v6695
      %v6860 = vpop.f32.mrb[0].mxu0
      %v6861 = vadd.f32 0.0, %v6860
      %v6862 = vpop.f32.mrb[0].mxu0
      %6863 = vmatprep.mubr.f32.mxu0 0.0
      %6864 = vmatmul.mubr.f32.gmra.mrb[0].mxu0 %v6698
      %v6865 = vpop.f32.mrb[0].mxu0
      %v6866 = vadd.f32 0.0, %v6865
      %v6867 = vpop.f32.mrb[0].mxu0
      %6868 = vmatprep.mubr.f32.mxu0 0.0
      %6869 = vmatmul.mubr.f32.gmra.mrb[0].mxu0 %v6701
      %v6870 = vpop.f32.mrb[0].mxu0
      %v6871 = vadd.f32 0.0, %v6870
      %v6872 = vpop.f32.mrb[0].mxu0
      %6873 = vmatprep.mubr.f32.mxu0 0.0
      %6874 = vmatmul.mubr.f32.gmra.mrb[0].mxu0 %v6704
      %v6875 = vpop.f32.mrb[0].mxu0
      %v6876 = vadd.f32 0.0, %v6875
      %v6877 = vpop.f32.mrb[0].mxu0
      %6878 = vmatprep.mubr.f32.mxu0 0.0
      %6879 = vmatmul.mubr.f32.gmra.mrb[0].mxu0 %v6707
      %v6880 = vpop.f32.mrb[0].mxu0
      %v6881 = vadd.f32 0.0, %v6880
      %v6882 = vpop.f32.mrb[0].mxu0
      %6883 = vmatprep.mubr.f32.mxu0 0.0
      %6884 = vmatmul.mubr.f32.gmra.mrb[0].mxu0 %v6710
      %v6885 = vpop.f32.mrb[0].mxu0
      %v6886 = vadd.f32 0.0, %v6885
      %v6887 = vpop.f32.mrb[0].mxu0
      %6888 = vmatprep.mubr.f32.mxu0 0.0
      %6889 = vmatmul.mubr.f32.gmra.mrb[0].mxu0 %v6713
      %v6890 = vpop.f32.mrb[0].mxu0
      %v6891 = vadd.f32 0.0, %v6890
      %v6892 = vpop.f32.mrb[0].mxu0
      %6893 = vmatprep.mubr.f32.mxu0 0.0
      %6894 = vmatmul.mubr.f32.gmra.mrb[0].mxu0 %v6716
      %v6895 = vpop.f32.mrb[0].mxu0
      %v6896 = vadd.f32 0.0, %v6895
      %v6897 = vpop.f32.mrb[0].mxu0
      %6898 = vmatprep.mubr.f32.mxu0 0.0
      %6899 = vmatmul.mubr.f32.gmra.mrb[0].mxu0 %v6719
      %v6900 = vpop.f32.mrb[0].mxu0
      %v6901 = vadd.f32 0.0, %v6900
      %v6902 = vpop.f32.mrb[0].mxu0
      %6903 = vmatprep.mubr.f32.mxu0 0.0
      %6904 = vmatmul.mubr.f32.gmra.mrb[0].mxu0 %v6722
      %v6905 = vpop.f32.mrb[0].mxu0
      %v6906 = vadd.f32 0.0, %v6905
      %v6907 = vpop.f32.mrb[0].mxu0
      %6908 = vmatprep.mubr.f32.mxu0 0.0
      %6909 = vmatmul.mubr.f32.gmra.mrb[0].mxu0 %v6725
      %v6910 = vpop.f32.mrb[0].mxu0
      %v6911 = vadd.f32 0.0, %v6910
      %v6912 = vpop.f32.mrb[0].mxu0
      %6913 = vmatprep.mubr.f32.mxu0 0.0
      %6914 = vmatmul.mubr.f32.gmra.mrb[0].mxu0 %v6728
      %v6915 = vpop.f32.mrb[0].mxu0
      %v6916 = vadd.f32 0.0, %v6915
      %v6917 = vpop.f32.mrb[0].mxu0
      %6918 = vmatprep.mubr.f32.mxu0 0.0
      %6919 = vmatmul.mubr.f32.gmra.mrb[0].mxu0 %v6731
      %v6920 = vpop.f32.mrb[0].mxu0
      %v6921 = vadd.f32 0.0, %v6920
      %v6922 = vpop.f32.mrb[0].mxu0
      %6923 = vmatprep.mubr.f32.mxu0 0.0
      %6924 = vmatmul.mubr.f32.gmra.mrb[0].mxu0 %v6734
      %v6925 = vpop.f32.mrb[0].mxu0
      %v6926 = vadd.f32 0.0, %v6925
      %v6927 = vpop.f32.mrb[0].mxu0
      %6928 = vmatprep.mubr.f32.mxu0 0.0
      %6929 = vmatmul.mubr.f32.gmra.mrb[0].mxu0 %v6737
      %v6930 = vpop.f32.mrb[0].mxu0
      %v6931 = vadd.f32 0.0, %v6930
      %v6932 = vpop.f32.mrb[0].mxu0
      %6933 = vmatprep.mubr.f32.mxu0 0.0
      %6934 = vmatmul.mubr.f32.gmra.mrb[0].mxu0 %v6740
      %v6935 = vpop.f32.mrb[0].mxu0
      %v6936 = vadd.f32 0.0, %v6935
      %v6937 = vpop.f32.mrb[0].mxu0
      %6938 = vmatprep.mubr.f32.mxu0 0.0
      %6939 = vmatmul.mubr.f32.gmra.mrb[0].mxu0 %v6743
      %v6940 = vpop.f32.mrb[0].mxu0
      %v6941 = vadd.f32 0.0, %v6940
      %v6942 = vpop.f32.mrb[0].mxu0
      %6943 = vmatprep.mubr.f32.mxu0 0.0
      %6944 = vmatmul.mubr.f32.gmra.mrb[0].mxu0 %v6746
      %v6945 = vpop.f32.mrb[0].mxu0
      %v6946 = vadd.f32 0.0, %v6945
      %v6947 = vpop.f32.mrb[0].mxu0
      %6948 = vmatprep.mubr.f32.mxu0 0.0
      %6949 = vmatmul.mubr.f32.gmra.mrb[0].mxu0 %v6749
      %v6950 = vpop.f32.mrb[0].mxu0
      %v6951 = vadd.f32 0.0, %v6950
      %v6952 = vpop.f32.mrb[0].mxu0
      %6953 = vmatprep.mubr.f32.mxu0 0.0
      %6954 = vmatmul.mubr.f32.gmra.mrb[0].mxu0 %v6752
      %v6955 = vpop.f32.mrb[0].mxu0
      %v6956 = vadd.f32 0.0, %v6955
      %v6957 = vpop.f32.mrb[0].mxu0
      %6958 = vmatprep.mubr.f32.mxu0 0.0
      %6959 = vmatmul.mubr.f32.gmra.mrb[0].mxu0 %v6755
      %v6960 = vpop.f32.mrb[0].mxu0
      %v6961 = vadd.f32 0.0, %v6960
      %v6962 = vpop.f32.mrb[0].mxu0
      %6963 = vmatprep.mubr.f32.mxu0 0.0
      %6964 = vmatmul.mubr.f32.gmra.mrb[0].mxu0 %v6758
      %v6965 = vpop.f32.mrb[0].mxu0
      %v6966 = vadd.f32 0.0, %v6965
      %v6967 = vpop.f32.mrb[0].mxu0
      %6968 = vmatprep.mubr.f32.mxu0 0.0
      %6969 = vmatmul.mubr.f32.gmra.mrb[0].mxu0 %v6761
      %v6970 = vpop.f32.mrb[0].mxu0
      %v6971 = vadd.f32 0.0, %v6970
      %v6972 = vpop.f32.mrb[0].mxu0
      %6973 = vmatprep.mubr.f32.mxu0 0.0
      %6974 = vmatmul.mubr.f32.gmra.mrb[0].mxu0 %v6764
      %v6975 = vpop.f32.mrb[0].mxu0
      %v6976 = vadd.f32 0.0, %v6975
      %v6977 = vpop.f32.mrb[0].mxu0
      %6978 = vmatprep.mubr.f32.mxu0 0.0
      %6979 = vmatmul.mubr.f32.gmra.mrb[0].mxu0 %v6767
      %v6980 = vpop.f32.mrb[0].mxu0
      %v6981 = vadd.f32 0.0, %v6980
      %v6982 = vpop.f32.mrb[0].mxu0
      %6983 = vmatprep.mubr.f32.mxu0 0.0
      %6984 = vmatmul.mubr.f32.gmra.mrb[0].mxu0 %v6770
      %v6985 = vpop.f32.mrb[0].mxu0
      %v6986 = vadd.f32 0.0, %v6985
      %v6987 = vpop.f32.mrb[0].mxu0
      %6988 = vmatprep.mubr.f32.mxu0 0.0
      %6989 = vmatmul.mubr.f32.gmra.mrb[0].mxu0 %v6773
      %v6990 = vpop.f32.mrb[0].mxu0
      %v6991 = vadd.f32 0.0, %v6990
      %v6992 = vpop.f32.mrb[0].mxu0
      %6993 = vmatprep.mubr.f32.mxu0 0.0
      %6994 = vmatmul.mubr.f32.gmra.mrb[0].mxu0 %v6776
      %v6995 = vpop.f32.mrb[0].mxu0
      %v6996 = vadd.f32 0.0, %v6995
      %v6997 = vpop.f32.mrb[0].mxu0
      %6998 = vmatprep.mubr.f32.mxu0 0.0
      %6999 = vmatmul.mubr.f32.gmra.mrb[0].mxu0 %v6779
      %v7000 = vpop.f32.mrb[0].mxu0
      %v7001 = vadd.f32 0.0, %v7000
      %v7002 = vpop.f32.mrb[0].mxu0
      %7003 = vmatprep.mubr.f32.mxu0 0.0
      %7004 = vmatmul.mubr.f32.gmra.mrb[0].mxu0 %v6782
      %v7005 = vpop.f32.mrb[0].mxu0
      %v7006 = vadd.f32 0.0, %v7005
      %v7007 = vpop.f32.mrb[0].mxu0
      %7008 = vdwg.mxu0
      %v7009 = vadd.f32 %v6621, %v6851
      %v7010 = vadd.f32 %v6622, %v6856
      %v7011 = vadd.f32 %v6623, %v6861
      %v7012 = vadd.f32 %v6624, %v6866
      %v7013 = vadd.f32 %v6625, %v6871
      %v7014 = vadd.f32 %v6626, %v6876
      %v7015 = vadd.f32 %v6627, %v6881
      %v7016 = vadd.f32 %v6628, %v6886
      %v7017 = vadd.f32 %v6629, %v6891
      %v7018 = vadd.f32 %v6630, %v6896
      %v7019 = vadd.f32 %v6631, %v6901
      %v7020 = vadd.f32 %v6632, %v6906
      %v7021 = vadd.f32 %v6633, %v6911
      %v7022 = vadd.f32 %v6634, %v6916
      %v7023 = vadd.f32 %v6635, %v6921
      %v7024 = vadd.f32 %v6636, %v6926
      %v7025 = vadd.f32 %v6637, %v6931
      %v7026 = vadd.f32 %v6638, %v6936
      %v7027 = vadd.f32 %v6639, %v6941
      %v7028 = vadd.f32 %v6640, %v6946
      %v7029 = vadd.f32 %v6641, %v6951
      %v7030 = vadd.f32 %v6642, %v6956
      %v7031 = vadd.f32 %v6643, %v6961
      %v7032 = vadd.f32 %v6644, %v6966
      %v7033 = vadd.f32 %v6645, %v6971
      %v7034 = vadd.f32 %v6646, %v6976
      %v7035 = vadd.f32 %v6647, %v6981
      %v7036 = vadd.f32 %v6648, %v6986
      %v7037 = vadd.f32 %v6649, %v6991
      %v7038 = vadd.f32 %v6650, %v6996
      %v7039 = vadd.f32 %v6651, %v7001
      %v7040 = vadd.f32 %v6652, %v7006
      %v7041 = vld [vmem:[%s5489 + $0x8] sm:$0xff]
      %v7042 = vld [vmem:[%s5489 + $0x10] sm:$0xff]
      %v7043 = vld [vmem:[%s5489 + $0x28] sm:$0xff]
      %v7044 = vld [vmem:[%s5489 + $0x30] sm:$0xff]
      %v7045 = vld [vmem:[%s5489 + $0x48] sm:$0xff]
      %v7046 = vld [vmem:[%s5489 + $0x50] sm:$0xff]
      %v7047 = vld [vmem:[%s5489 + $0x68] sm:$0xff]
      %v7048 = vld [vmem:[%s5489 + $0x70] sm:$0xff]
      %v7049 = vld [vmem:[%s5489 + $0x88] sm:$0xff]
      %v7050 = vld [vmem:[%s5489 + $0x90] sm:$0xff]
      %v7051 = vld [vmem:[%s5489 + $0xa8] sm:$0xff]
      %v7052 = vld [vmem:[%s5489 + $0xb0] sm:$0xff]
      %v7053 = vld [vmem:[%s5489 + $0xc8] sm:$0xff]
      %v7054 = vld [vmem:[%s5489 + $0xd0] sm:$0xff]
      %v7055 = vld [vmem:[%s5489 + $0xe8] sm:$0xff]
      %v7056 = vld [vmem:[%s5489 + $0xf0] sm:$0xff]
      %v7057 = vld [vmem:[%s5489 + $0x108] sm:$0xff]
      %v7058 = vld [vmem:[%s5489 + $0x110] sm:$0xff]
      %v7059 = vld [vmem:[%s5489 + $0x128] sm:$0xff]
      %v7060 = vld [vmem:[%s5489 + $0x130] sm:$0xff]
      %v7061 = vld [vmem:[%s5489 + $0x148] sm:$0xff]
      %v7062 = vld [vmem:[%s5489 + $0x150] sm:$0xff]
      %v7063 = vld [vmem:[%s5489 + $0x168] sm:$0xff]
      %v7064 = vld [vmem:[%s5489 + $0x170] sm:$0xff]
      %v7065 = vld [vmem:[%s5489 + $0x188] sm:$0xff]
      %v7066 = vld [vmem:[%s5489 + $0x190] sm:$0xff]
      %v7067 = vld [vmem:[%s5489 + $0x1a8] sm:$0xff]
      %v7068 = vld [vmem:[%s5489 + $0x1b0] sm:$0xff]
      %v7069 = vld [vmem:[%s5489 + $0x1c8] sm:$0xff]
      %v7070 = vld [vmem:[%s5489 + $0x1d0] sm:$0xff]
      %v7071 = vld [vmem:[%s5489 + $0x1e8] sm:$0xff]
      %v7072 = vld [vmem:[%s5489 + $0x1f0] sm:$0xff]
      %s7073 = scalar_lea.vmem %s10, 64
      %v7074 = vld [vmem:[%s7073] sm:$0xff]
      %v7075 = vld [vmem:[%s7073 + $0x8] sm:$0xff]
      %v7077 = vsel %vm4786, %v7041, 0
      %v7080 = vsel %vm4786, %v7042, 0
      %v7083 = vsel %vm4786, %v7043, 0
      %v7086 = vsel %vm4786, %v7044, 0
      %v7089 = vsel %vm4786, %v7045, 0
      %v7092 = vsel %vm4786, %v7046, 0
      %v7095 = vsel %vm4786, %v7047, 0
      %v7098 = vsel %vm4786, %v7048, 0
      %v7101 = vsel %vm4786, %v7049, 0
      %v7104 = vsel %vm4786, %v7050, 0
      %v7107 = vsel %vm4786, %v7051, 0
      %v7110 = vsel %vm4786, %v7052, 0
      %v7113 = vsel %vm4786, %v7053, 0
      %v7116 = vsel %vm4786, %v7054, 0
      %v7119 = vsel %vm4786, %v7055, 0
      %v7122 = vsel %vm4786, %v7056, 0
      %v7125 = vsel %vm4786, %v7057, 0
      %v7128 = vsel %vm4786, %v7058, 0
      %v7131 = vsel %vm4786, %v7059, 0
      %v7134 = vsel %vm4786, %v7060, 0
      %v7137 = vsel %vm4786, %v7061, 0
      %v7140 = vsel %vm4786, %v7062, 0
      %v7143 = vsel %vm4786, %v7063, 0
      %v7146 = vsel %vm4786, %v7064, 0
      %v7149 = vsel %vm4786, %v7065, 0
      %v7152 = vsel %vm4786, %v7066, 0
      %v7155 = vsel %vm4786, %v7067, 0
      %v7158 = vsel %vm4786, %v7068, 0
      %v7161 = vsel %vm4786, %v7069, 0
      %v7164 = vsel %vm4786, %v7070, 0
      %v7167 = vsel %vm4786, %v7071, 0
      %v7170 = vsel %vm4786, %v7072, 0
      %7172 = vmatprep.subr.mxu0 0.0
      %7173 = vmatpush1.msra.mxu0 %v7074
      %7174 = vmatprep.subr.mxu0 0.0
      %7175 = vmatpush1.msra.mxu0 %v7075
      %7176 = vmatprep.subr.mxu0 0.0
      %7177 = vmatpush1.msra.mxu0 0.0
      %7178 = vmatprep.subr.mxu0 0.0
      %7179 = vmatpush1.msra.mxu0 0.0
      %7180 = vmatprep.subr.mxu0 0.0
      %7181 = vmatpush1.msra.mxu0 0.0
      %7182 = vmatprep.subr.mxu0 0.0
      %7183 = vmatpush1.msra.mxu0 0.0
      %7184 = vmatprep.subr.mxu0 0.0
      %7185 = vmatpush1.msra.mxu0 0.0
      %7186 = vmatprep.subr.mxu0 0.0
      %7187 = vmatpush1.msra.mxu0 0.0
      %7188 = vmatprep.subr.mxu0 0.0
      %7189 = vmatpush1.msra.mxu0 0.0
      %7190 = vmatprep.subr.mxu0 0.0
      %7191 = vmatpush1.msra.mxu0 0.0
      %7192 = vmatprep.subr.mxu0 0.0
      %7193 = vmatpush1.msra.mxu0 0.0
      %7194 = vmatprep.subr.mxu0 0.0
      %7195 = vmatpush1.msra.mxu0 0.0
      %7196 = vmatprep.subr.mxu0 0.0
      %7197 = vmatpush1.msra.mxu0 0.0
      %7198 = vmatprep.subr.mxu0 0.0
      %7199 = vmatpush1.msra.mxu0 0.0
      %7200 = vmatprep.subr.mxu0 0.0
      %7201 = vmatpush1.msra.mxu0 0.0
      %7202 = vmatprep.subr.mxu0 0.0
      %7203 = vmatpush1.msra.mxu0 0.0
      %7204 = vmatprep.subr.mxu0 0.0
      %7205 = vmatpush1.msra.mxu0 0.0
      %7206 = vmatprep.subr.mxu0 0.0
      %7207 = vmatpush1.msra.mxu0 0.0
      %7208 = vmatprep.subr.mxu0 0.0
      %7209 = vmatpush1.msra.mxu0 0.0
      %7210 = vmatprep.subr.mxu0 0.0
      %7211 = vmatpush1.msra.mxu0 0.0
      %7212 = vmatprep.subr.mxu0 0.0
      %7213 = vmatpush1.msra.mxu0 0.0
      %7214 = vmatprep.subr.mxu0 0.0
      %7215 = vmatpush1.msra.mxu0 0.0
      %7216 = vmatprep.subr.mxu0 0.0
      %7217 = vmatpush1.msra.mxu0 0.0
      %7218 = vmatprep.subr.mxu0 0.0
      %7219 = vmatpush1.msra.mxu0 0.0
      %7220 = vmatprep.subr.mxu0 0.0
      %7221 = vmatpush1.msra.mxu0 0.0
      %7222 = vmatprep.subr.mxu0 0.0
      %7223 = vmatpush1.msra.mxu0 0.0
      %7224 = vmatprep.subr.mxu0 0.0
      %7225 = vmatpush1.msra.mxu0 0.0
      %7226 = vmatprep.subr.mxu0 0.0
      %7227 = vmatpush1.msra.mxu0 0.0
      %7228 = vmatprep.subr.mxu0 0.0
      %7229 = vmatpush1.msra.mxu0 0.0
      %7230 = vmatprep.subr.mxu0 0.0
      %7231 = vmatpush1.msra.mxu0 0.0
      %7232 = vmatprep.subr.mxu0 0.0
      %7233 = vmatpush1.msra.mxu0 0.0
      %7234 = vmatprep.subr.mxu0 0.0
      %7235 = vmatpush1.msra.mxu0 0.0
      %7236 = vmatprep.mubr.f32.mxu0 0.0
      %7237 = vmatmul.mubr.f32.gmra.mrb[0].mxu0 %v7077
      %v7238 = vpop.f32.mrb[0].mxu0
      %v7239 = vadd.f32 0.0, %v7238
      %v7240 = vpop.f32.mrb[0].mxu0
      %7241 = vmatprep.mubr.f32.mxu0 0.0
      %7242 = vmatmul.mubr.f32.gmra.mrb[0].mxu0 %v7080
      %v7243 = vpop.f32.mrb[0].mxu0
      %v7244 = vadd.f32 0.0, %v7243
      %v7245 = vpop.f32.mrb[0].mxu0
      %7246 = vmatprep.mubr.f32.mxu0 0.0
      %7247 = vmatmul.mubr.f32.gmra.mrb[0].mxu0 %v7083
      %v7248 = vpop.f32.mrb[0].mxu0
      %v7249 = vadd.f32 0.0, %v7248
      %v7250 = vpop.f32.mrb[0].mxu0
      %7251 = vmatprep.mubr.f32.mxu0 0.0
      %7252 = vmatmul.mubr.f32.gmra.mrb[0].mxu0 %v7086
      %v7253 = vpop.f32.mrb[0].mxu0
      %v7254 = vadd.f32 0.0, %v7253
      %v7255 = vpop.f32.mrb[0].mxu0
      %7256 = vmatprep.mubr.f32.mxu0 0.0
      %7257 = vmatmul.mubr.f32.gmra.mrb[0].mxu0 %v7089
      %v7258 = vpop.f32.mrb[0].mxu0
      %v7259 = vadd.f32 0.0, %v7258
      %v7260 = vpop.f32.mrb[0].mxu0
      %7261 = vmatprep.mubr.f32.mxu0 0.0
      %7262 = vmatmul.mubr.f32.gmra.mrb[0].mxu0 %v7092
      %v7263 = vpop.f32.mrb[0].mxu0
      %v7264 = vadd.f32 0.0, %v7263
      %v7265 = vpop.f32.mrb[0].mxu0
      %7266 = vmatprep.mubr.f32.mxu0 0.0
      %7267 = vmatmul.mubr.f32.gmra.mrb[0].mxu0 %v7095
      %v7268 = vpop.f32.mrb[0].mxu0
      %v7269 = vadd.f32 0.0, %v7268
      %v7270 = vpop.f32.mrb[0].mxu0
      %7271 = vmatprep.mubr.f32.mxu0 0.0
      %7272 = vmatmul.mubr.f32.gmra.mrb[0].mxu0 %v7098
      %v7273 = vpop.f32.mrb[0].mxu0
      %v7274 = vadd.f32 0.0, %v7273
      %v7275 = vpop.f32.mrb[0].mxu0
      %7276 = vmatprep.mubr.f32.mxu0 0.0
      %7277 = vmatmul.mubr.f32.gmra.mrb[0].mxu0 %v7101
      %v7278 = vpop.f32.mrb[0].mxu0
      %v7279 = vadd.f32 0.0, %v7278
      %v7280 = vpop.f32.mrb[0].mxu0
      %7281 = vmatprep.mubr.f32.mxu0 0.0
      %7282 = vmatmul.mubr.f32.gmra.mrb[0].mxu0 %v7104
      %v7283 = vpop.f32.mrb[0].mxu0
      %v7284 = vadd.f32 0.0, %v7283
      %v7285 = vpop.f32.mrb[0].mxu0
      %7286 = vmatprep.mubr.f32.mxu0 0.0
      %7287 = vmatmul.mubr.f32.gmra.mrb[0].mxu0 %v7107
      %v7288 = vpop.f32.mrb[0].mxu0
      %v7289 = vadd.f32 0.0, %v7288
      %v7290 = vpop.f32.mrb[0].mxu0
      %7291 = vmatprep.mubr.f32.mxu0 0.0
      %7292 = vmatmul.mubr.f32.gmra.mrb[0].mxu0 %v7110
      %v7293 = vpop.f32.mrb[0].mxu0
      %v7294 = vadd.f32 0.0, %v7293
      %v7295 = vpop.f32.mrb[0].mxu0
      %7296 = vmatprep.mubr.f32.mxu0 0.0
      %7297 = vmatmul.mubr.f32.gmra.mrb[0].mxu0 %v7113
      %v7298 = vpop.f32.mrb[0].mxu0
      %v7299 = vadd.f32 0.0, %v7298
      %v7300 = vpop.f32.mrb[0].mxu0
      %7301 = vmatprep.mubr.f32.mxu0 0.0
      %7302 = vmatmul.mubr.f32.gmra.mrb[0].mxu0 %v7116
      %v7303 = vpop.f32.mrb[0].mxu0
      %v7304 = vadd.f32 0.0, %v7303
      %v7305 = vpop.f32.mrb[0].mxu0
      %7306 = vmatprep.mubr.f32.mxu0 0.0
      %7307 = vmatmul.mubr.f32.gmra.mrb[0].mxu0 %v7119
      %v7308 = vpop.f32.mrb[0].mxu0
      %v7309 = vadd.f32 0.0, %v7308
      %v7310 = vpop.f32.mrb[0].mxu0
      %7311 = vmatprep.mubr.f32.mxu0 0.0
      %7312 = vmatmul.mubr.f32.gmra.mrb[0].mxu0 %v7122
      %v7313 = vpop.f32.mrb[0].mxu0
      %v7314 = vadd.f32 0.0, %v7313
      %v7315 = vpop.f32.mrb[0].mxu0
      %7316 = vmatprep.mubr.f32.mxu0 0.0
      %7317 = vmatmul.mubr.f32.gmra.mrb[0].mxu0 %v7125
      %v7318 = vpop.f32.mrb[0].mxu0
      %v7319 = vadd.f32 0.0, %v7318
      %v7320 = vpop.f32.mrb[0].mxu0
      %7321 = vmatprep.mubr.f32.mxu0 0.0
      %7322 = vmatmul.mubr.f32.gmra.mrb[0].mxu0 %v7128
      %v7323 = vpop.f32.mrb[0].mxu0
      %v7324 = vadd.f32 0.0, %v7323
      %v7325 = vpop.f32.mrb[0].mxu0
      %7326 = vmatprep.mubr.f32.mxu0 0.0
      %7327 = vmatmul.mubr.f32.gmra.mrb[0].mxu0 %v7131
      %v7328 = vpop.f32.mrb[0].mxu0
      %v7329 = vadd.f32 0.0, %v7328
      %v7330 = vpop.f32.mrb[0].mxu0
      %7331 = vmatprep.mubr.f32.mxu0 0.0
      %7332 = vmatmul.mubr.f32.gmra.mrb[0].mxu0 %v7134
      %v7333 = vpop.f32.mrb[0].mxu0
      %v7334 = vadd.f32 0.0, %v7333
      %v7335 = vpop.f32.mrb[0].mxu0
      %7336 = vmatprep.mubr.f32.mxu0 0.0
      %7337 = vmatmul.mubr.f32.gmra.mrb[0].mxu0 %v7137
      %v7338 = vpop.f32.mrb[0].mxu0
      %v7339 = vadd.f32 0.0, %v7338
      %v7340 = vpop.f32.mrb[0].mxu0
      %7341 = vmatprep.mubr.f32.mxu0 0.0
      %7342 = vmatmul.mubr.f32.gmra.mrb[0].mxu0 %v7140
      %v7343 = vpop.f32.mrb[0].mxu0
      %v7344 = vadd.f32 0.0, %v7343
      %v7345 = vpop.f32.mrb[0].mxu0
      %7346 = vmatprep.mubr.f32.mxu0 0.0
      %7347 = vmatmul.mubr.f32.gmra.mrb[0].mxu0 %v7143
      %v7348 = vpop.f32.mrb[0].mxu0
      %v7349 = vadd.f32 0.0, %v7348
      %v7350 = vpop.f32.mrb[0].mxu0
      %7351 = vmatprep.mubr.f32.mxu0 0.0
      %7352 = vmatmul.mubr.f32.gmra.mrb[0].mxu0 %v7146
      %v7353 = vpop.f32.mrb[0].mxu0
      %v7354 = vadd.f32 0.0, %v7353
      %v7355 = vpop.f32.mrb[0].mxu0
      %7356 = vmatprep.mubr.f32.mxu0 0.0
      %7357 = vmatmul.mubr.f32.gmra.mrb[0].mxu0 %v7149
      %v7358 = vpop.f32.mrb[0].mxu0
      %v7359 = vadd.f32 0.0, %v7358
      %v7360 = vpop.f32.mrb[0].mxu0
      %7361 = vmatprep.mubr.f32.mxu0 0.0
      %7362 = vmatmul.mubr.f32.gmra.mrb[0].mxu0 %v7152
      %v7363 = vpop.f32.mrb[0].mxu0
      %v7364 = vadd.f32 0.0, %v7363
      %v7365 = vpop.f32.mrb[0].mxu0
      %7366 = vmatprep.mubr.f32.mxu0 0.0
      %7367 = vmatmul.mubr.f32.gmra.mrb[0].mxu0 %v7155
      %v7368 = vpop.f32.mrb[0].mxu0
      %v7369 = vadd.f32 0.0, %v7368
      %v7370 = vpop.f32.mrb[0].mxu0
      %7371 = vmatprep.mubr.f32.mxu0 0.0
      %7372 = vmatmul.mubr.f32.gmra.mrb[0].mxu0 %v7158
      %v7373 = vpop.f32.mrb[0].mxu0
      %v7374 = vadd.f32 0.0, %v7373
      %v7375 = vpop.f32.mrb[0].mxu0
      %7376 = vmatprep.mubr.f32.mxu0 0.0
      %7377 = vmatmul.mubr.f32.gmra.mrb[0].mxu0 %v7161
      %v7378 = vpop.f32.mrb[0].mxu0
      %v7379 = vadd.f32 0.0, %v7378
      %v7380 = vpop.f32.mrb[0].mxu0
      %7381 = vmatprep.mubr.f32.mxu0 0.0
      %7382 = vmatmul.mubr.f32.gmra.mrb[0].mxu0 %v7164
      %v7383 = vpop.f32.mrb[0].mxu0
      %v7384 = vadd.f32 0.0, %v7383
      %v7385 = vpop.f32.mrb[0].mxu0
      %7386 = vmatprep.mubr.f32.mxu0 0.0
      %7387 = vmatmul.mubr.f32.gmra.mrb[0].mxu0 %v7167
      %v7388 = vpop.f32.mrb[0].mxu0
      %v7389 = vadd.f32 0.0, %v7388
      %v7390 = vpop.f32.mrb[0].mxu0
      %7391 = vmatprep.mubr.f32.mxu0 0.0
      %7392 = vmatmul.mubr.f32.gmra.mrb[0].mxu0 %v7170
      %v7393 = vpop.f32.mrb[0].mxu0
      %v7394 = vadd.f32 0.0, %v7393
      %v7395 = vpop.f32.mrb[0].mxu0
      %7396 = vdwg.mxu0
      %v7397 = vadd.f32 %v7009, %v7239
      %v7398 = vadd.f32 %v7010, %v7244
      %v7399 = vadd.f32 %v7011, %v7249
      %v7400 = vadd.f32 %v7012, %v7254
      %v7401 = vadd.f32 %v7013, %v7259
      %v7402 = vadd.f32 %v7014, %v7264
      %v7403 = vadd.f32 %v7015, %v7269
      %v7404 = vadd.f32 %v7016, %v7274
      %v7405 = vadd.f32 %v7017, %v7279
      %v7406 = vadd.f32 %v7018, %v7284
      %v7407 = vadd.f32 %v7019, %v7289
      %v7408 = vadd.f32 %v7020, %v7294
      %v7409 = vadd.f32 %v7021, %v7299
      %v7410 = vadd.f32 %v7022, %v7304
      %v7411 = vadd.f32 %v7023, %v7309
      %v7412 = vadd.f32 %v7024, %v7314
      %v7413 = vadd.f32 %v7025, %v7319
      %v7414 = vadd.f32 %v7026, %v7324
      %v7415 = vadd.f32 %v7027, %v7329
      %v7416 = vadd.f32 %v7028, %v7334
      %v7417 = vadd.f32 %v7029, %v7339
      %v7418 = vadd.f32 %v7030, %v7344
      %v7419 = vadd.f32 %v7031, %v7349
      %v7420 = vadd.f32 %v7032, %v7354
      %v7421 = vadd.f32 %v7033, %v7359
      %v7422 = vadd.f32 %v7034, %v7364
      %v7423 = vadd.f32 %v7035, %v7369
      %v7424 = vadd.f32 %v7036, %v7374
      %v7425 = vadd.f32 %v7037, %v7379
      %v7426 = vadd.f32 %v7038, %v7384
      %v7427 = vadd.f32 %v7039, %v7389
      %v7428 = vadd.f32 %v7040, %v7394
      %v7429 = vld [vmem:[%s5489 + $0x9] sm:$0xff]
      %v7430 = vld [vmem:[%s5489 + $0x11] sm:$0xff]
      %v7431 = vld [vmem:[%s5489 + $0x29] sm:$0xff]
      %v7432 = vld [vmem:[%s5489 + $0x31] sm:$0xff]
      %v7433 = vld [vmem:[%s5489 + $0x49] sm:$0xff]
      %v7434 = vld [vmem:[%s5489 + $0x51] sm:$0xff]
      %v7435 = vld [vmem:[%s5489 + $0x69] sm:$0xff]
      %v7436 = vld [vmem:[%s5489 + $0x71] sm:$0xff]
      %v7437 = vld [vmem:[%s5489 + $0x89] sm:$0xff]
      %v7438 = vld [vmem:[%s5489 + $0x91] sm:$0xff]
      %v7439 = vld [vmem:[%s5489 + $0xa9] sm:$0xff]
      %v7440 = vld [vmem:[%s5489 + $0xb1] sm:$0xff]
      %v7441 = vld [vmem:[%s5489 + $0xc9] sm:$0xff]
      %v7442 = vld [vmem:[%s5489 + $0xd1] sm:$0xff]
      %v7443 = vld [vmem:[%s5489 + $0xe9] sm:$0xff]
      %v7444 = vld [vmem:[%s5489 + $0xf1] sm:$0xff]
      %v7445 = vld [vmem:[%s5489 + $0x109] sm:$0xff]
      %v7446 = vld [vmem:[%s5489 + $0x111] sm:$0xff]
      %v7447 = vld [vmem:[%s5489 + $0x129] sm:$0xff]
      %v7448 = vld [vmem:[%s5489 + $0x131] sm:$0xff]
      %v7449 = vld [vmem:[%s5489 + $0x149] sm:$0xff]
      %v7450 = vld [vmem:[%s5489 + $0x151] sm:$0xff]
      %v7451 = vld [vmem:[%s5489 + $0x169] sm:$0xff]
      %v7452 = vld [vmem:[%s5489 + $0x171] sm:$0xff]
      %v7453 = vld [vmem:[%s5489 + $0x189] sm:$0xff]
      %v7454 = vld [vmem:[%s5489 + $0x191] sm:$0xff]
      %v7455 = vld [vmem:[%s5489 + $0x1a9] sm:$0xff]
      %v7456 = vld [vmem:[%s5489 + $0x1b1] sm:$0xff]
      %v7457 = vld [vmem:[%s5489 + $0x1c9] sm:$0xff]
      %v7458 = vld [vmem:[%s5489 + $0x1d1] sm:$0xff]
      %v7459 = vld [vmem:[%s5489 + $0x1e9] sm:$0xff]
      %v7460 = vld [vmem:[%s5489 + $0x1f1] sm:$0xff]
      %s7461 = scalar_lea.vmem %s10, 80
      %v7462 = vld [vmem:[%s7461] sm:$0xff]
      %v7463 = vld [vmem:[%s7461 + $0x8] sm:$0xff]
      %v7465 = vsel %vm4786, %v7429, 0
      %v7468 = vsel %vm4786, %v7430, 0
      %v7471 = vsel %vm4786, %v7431, 0
      %v7474 = vsel %vm4786, %v7432, 0
      %v7477 = vsel %vm4786, %v7433, 0
      %v7480 = vsel %vm4786, %v7434, 0
      %v7483 = vsel %vm4786, %v7435, 0
      %v7486 = vsel %vm4786, %v7436, 0
      %v7489 = vsel %vm4786, %v7437, 0
      %v7492 = vsel %vm4786, %v7438, 0
      %v7495 = vsel %vm4786, %v7439, 0
      %v7498 = vsel %vm4786, %v7440, 0
      %v7501 = vsel %vm4786, %v7441, 0
      %v7504 = vsel %vm4786, %v7442, 0
      %v7507 = vsel %vm4786, %v7443, 0
      %v7510 = vsel %vm4786, %v7444, 0
      %v7513 = vsel %vm4786, %v7445, 0
      %v7516 = vsel %vm4786, %v7446, 0
      %v7519 = vsel %vm4786, %v7447, 0
      %v7522 = vsel %vm4786, %v7448, 0
      %v7525 = vsel %vm4786, %v7449, 0
      %v7528 = vsel %vm4786, %v7450, 0
      %v7531 = vsel %vm4786, %v7451, 0
      %v7534 = vsel %vm4786, %v7452, 0
      %v7537 = vsel %vm4786, %v7453, 0
      %v7540 = vsel %vm4786, %v7454, 0
      %v7543 = vsel %vm4786, %v7455, 0
      %v7546 = vsel %vm4786, %v7456, 0
      %v7549 = vsel %vm4786, %v7457, 0
      %v7552 = vsel %vm4786, %v7458, 0
      %v7555 = vsel %vm4786, %v7459, 0
      %v7558 = vsel %vm4786, %v7460, 0
      %7560 = vmatprep.subr.mxu0 0.0
      %7561 = vmatpush1.msra.mxu0 %v7462
      %7562 = vmatprep.subr.mxu0 0.0
      %7563 = vmatpush1.msra.mxu0 %v7463
      %7564 = vmatprep.subr.mxu0 0.0
      %7565 = vmatpush1.msra.mxu0 0.0
      %7566 = vmatprep.subr.mxu0 0.0
      %7567 = vmatpush1.msra.mxu0 0.0
      %7568 = vmatprep.subr.mxu0 0.0
      %7569 = vmatpush1.msra.mxu0 0.0
      %7570 = vmatprep.subr.mxu0 0.0
      %7571 = vmatpush1.msra.mxu0 0.0
      %7572 = vmatprep.subr.mxu0 0.0
      %7573 = vmatpush1.msra.mxu0 0.0
      %7574 = vmatprep.subr.mxu0 0.0
      %7575 = vmatpush1.msra.mxu0 0.0
      %7576 = vmatprep.subr.mxu0 0.0
      %7577 = vmatpush1.msra.mxu0 0.0
      %7578 = vmatprep.subr.mxu0 0.0
      %7579 = vmatpush1.msra.mxu0 0.0
      %7580 = vmatprep.subr.mxu0 0.0
      %7581 = vmatpush1.msra.mxu0 0.0
      %7582 = vmatprep.subr.mxu0 0.0
      %7583 = vmatpush1.msra.mxu0 0.0
      %7584 = vmatprep.subr.mxu0 0.0
      %7585 = vmatpush1.msra.mxu0 0.0
      %7586 = vmatprep.subr.mxu0 0.0
      %7587 = vmatpush1.msra.mxu0 0.0
      %7588 = vmatprep.subr.mxu0 0.0
      %7589 = vmatpush1.msra.mxu0 0.0
      %7590 = vmatprep.subr.mxu0 0.0
      %7591 = vmatpush1.msra.mxu0 0.0
      %7592 = vmatprep.subr.mxu0 0.0
      %7593 = vmatpush1.msra.mxu0 0.0
      %7594 = vmatprep.subr.mxu0 0.0
      %7595 = vmatpush1.msra.mxu0 0.0
      %7596 = vmatprep.subr.mxu0 0.0
      %7597 = vmatpush1.msra.mxu0 0.0
      %7598 = vmatprep.subr.mxu0 0.0
      %7599 = vmatpush1.msra.mxu0 0.0
      %7600 = vmatprep.subr.mxu0 0.0
      %7601 = vmatpush1.msra.mxu0 0.0
      %7602 = vmatprep.subr.mxu0 0.0
      %7603 = vmatpush1.msra.mxu0 0.0
      %7604 = vmatprep.subr.mxu0 0.0
      %7605 = vmatpush1.msra.mxu0 0.0
      %7606 = vmatprep.subr.mxu0 0.0
      %7607 = vmatpush1.msra.mxu0 0.0
      %7608 = vmatprep.subr.mxu0 0.0
      %7609 = vmatpush1.msra.mxu0 0.0
      %7610 = vmatprep.subr.mxu0 0.0
      %7611 = vmatpush1.msra.mxu0 0.0
      %7612 = vmatprep.subr.mxu0 0.0
      %7613 = vmatpush1.msra.mxu0 0.0
      %7614 = vmatprep.subr.mxu0 0.0
      %7615 = vmatpush1.msra.mxu0 0.0
      %7616 = vmatprep.subr.mxu0 0.0
      %7617 = vmatpush1.msra.mxu0 0.0
      %7618 = vmatprep.subr.mxu0 0.0
      %7619 = vmatpush1.msra.mxu0 0.0
      %7620 = vmatprep.subr.mxu0 0.0
      %7621 = vmatpush1.msra.mxu0 0.0
      %7622 = vmatprep.subr.mxu0 0.0
      %7623 = vmatpush1.msra.mxu0 0.0
      %7624 = vmatprep.mubr.f32.mxu0 0.0
      %7625 = vmatmul.mubr.f32.gmra.mrb[0].mxu0 %v7465
      %v7626 = vpop.f32.mrb[0].mxu0
      %v7627 = vadd.f32 0.0, %v7626
      %v7628 = vpop.f32.mrb[0].mxu0
      %7629 = vmatprep.mubr.f32.mxu0 0.0
      %7630 = vmatmul.mubr.f32.gmra.mrb[0].mxu0 %v7468
      %v7631 = vpop.f32.mrb[0].mxu0
      %v7632 = vadd.f32 0.0, %v7631
      %v7633 = vpop.f32.mrb[0].mxu0
      %7634 = vmatprep.mubr.f32.mxu0 0.0
      %7635 = vmatmul.mubr.f32.gmra.mrb[0].mxu0 %v7471
      %v7636 = vpop.f32.mrb[0].mxu0
      %v7637 = vadd.f32 0.0, %v7636
      %v7638 = vpop.f32.mrb[0].mxu0
      %7639 = vmatprep.mubr.f32.mxu0 0.0
      %7640 = vmatmul.mubr.f32.gmra.mrb[0].mxu0 %v7474
      %v7641 = vpop.f32.mrb[0].mxu0
      %v7642 = vadd.f32 0.0, %v7641
      %v7643 = vpop.f32.mrb[0].mxu0
      %7644 = vmatprep.mubr.f32.mxu0 0.0
      %7645 = vmatmul.mubr.f32.gmra.mrb[0].mxu0 %v7477
      %v7646 = vpop.f32.mrb[0].mxu0
      %v7647 = vadd.f32 0.0, %v7646
      %v7648 = vpop.f32.mrb[0].mxu0
      %7649 = vmatprep.mubr.f32.mxu0 0.0
      %7650 = vmatmul.mubr.f32.gmra.mrb[0].mxu0 %v7480
      %v7651 = vpop.f32.mrb[0].mxu0
      %v7652 = vadd.f32 0.0, %v7651
      %v7653 = vpop.f32.mrb[0].mxu0
      %7654 = vmatprep.mubr.f32.mxu0 0.0
      %7655 = vmatmul.mubr.f32.gmra.mrb[0].mxu0 %v7483
      %v7656 = vpop.f32.mrb[0].mxu0
      %v7657 = vadd.f32 0.0, %v7656
      %v7658 = vpop.f32.mrb[0].mxu0
      %7659 = vmatprep.mubr.f32.mxu0 0.0
      %7660 = vmatmul.mubr.f32.gmra.mrb[0].mxu0 %v7486
      %v7661 = vpop.f32.mrb[0].mxu0
      %v7662 = vadd.f32 0.0, %v7661
      %v7663 = vpop.f32.mrb[0].mxu0
      %7664 = vmatprep.mubr.f32.mxu0 0.0
      %7665 = vmatmul.mubr.f32.gmra.mrb[0].mxu0 %v7489
      %v7666 = vpop.f32.mrb[0].mxu0
      %v7667 = vadd.f32 0.0, %v7666
      %v7668 = vpop.f32.mrb[0].mxu0
      %7669 = vmatprep.mubr.f32.mxu0 0.0
      %7670 = vmatmul.mubr.f32.gmra.mrb[0].mxu0 %v7492
      %v7671 = vpop.f32.mrb[0].mxu0
      %v7672 = vadd.f32 0.0, %v7671
      %v7673 = vpop.f32.mrb[0].mxu0
      %7674 = vmatprep.mubr.f32.mxu0 0.0
      %7675 = vmatmul.mubr.f32.gmra.mrb[0].mxu0 %v7495
      %v7676 = vpop.f32.mrb[0].mxu0
      %v7677 = vadd.f32 0.0, %v7676
      %v7678 = vpop.f32.mrb[0].mxu0
      %7679 = vmatprep.mubr.f32.mxu0 0.0
      %7680 = vmatmul.mubr.f32.gmra.mrb[0].mxu0 %v7498
      %v7681 = vpop.f32.mrb[0].mxu0
      %v7682 = vadd.f32 0.0, %v7681
      %v7683 = vpop.f32.mrb[0].mxu0
      %7684 = vmatprep.mubr.f32.mxu0 0.0
      %7685 = vmatmul.mubr.f32.gmra.mrb[0].mxu0 %v7501
      %v7686 = vpop.f32.mrb[0].mxu0
      %v7687 = vadd.f32 0.0, %v7686
      %v7688 = vpop.f32.mrb[0].mxu0
      %7689 = vmatprep.mubr.f32.mxu0 0.0
      %7690 = vmatmul.mubr.f32.gmra.mrb[0].mxu0 %v7504
      %v7691 = vpop.f32.mrb[0].mxu0
      %v7692 = vadd.f32 0.0, %v7691
      %v7693 = vpop.f32.mrb[0].mxu0
      %7694 = vmatprep.mubr.f32.mxu0 0.0
      %7695 = vmatmul.mubr.f32.gmra.mrb[0].mxu0 %v7507
      %v7696 = vpop.f32.mrb[0].mxu0
      %v7697 = vadd.f32 0.0, %v7696
      %v7698 = vpop.f32.mrb[0].mxu0
      %7699 = vmatprep.mubr.f32.mxu0 0.0
      %7700 = vmatmul.mubr.f32.gmra.mrb[0].mxu0 %v7510
      %v7701 = vpop.f32.mrb[0].mxu0
      %v7702 = vadd.f32 0.0, %v7701
      %v7703 = vpop.f32.mrb[0].mxu0
      %7704 = vmatprep.mubr.f32.mxu0 0.0
      %7705 = vmatmul.mubr.f32.gmra.mrb[0].mxu0 %v7513
      %v7706 = vpop.f32.mrb[0].mxu0
      %v7707 = vadd.f32 0.0, %v7706
      %v7708 = vpop.f32.mrb[0].mxu0
      %7709 = vmatprep.mubr.f32.mxu0 0.0
      %7710 = vmatmul.mubr.f32.gmra.mrb[0].mxu0 %v7516
      %v7711 = vpop.f32.mrb[0].mxu0
      %v7712 = vadd.f32 0.0, %v7711
      %v7713 = vpop.f32.mrb[0].mxu0
      %7714 = vmatprep.mubr.f32.mxu0 0.0
      %7715 = vmatmul.mubr.f32.gmra.mrb[0].mxu0 %v7519
      %v7716 = vpop.f32.mrb[0].mxu0
      %v7717 = vadd.f32 0.0, %v7716
      %v7718 = vpop.f32.mrb[0].mxu0
      %7719 = vmatprep.mubr.f32.mxu0 0.0
      %7720 = vmatmul.mubr.f32.gmra.mrb[0].mxu0 %v7522
      %v7721 = vpop.f32.mrb[0].mxu0
      %v7722 = vadd.f32 0.0, %v7721
      %v7723 = vpop.f32.mrb[0].mxu0
      %7724 = vmatprep.mubr.f32.mxu0 0.0
      %7725 = vmatmul.mubr.f32.gmra.mrb[0].mxu0 %v7525
      %v7726 = vpop.f32.mrb[0].mxu0
      %v7727 = vadd.f32 0.0, %v7726
      %v7728 = vpop.f32.mrb[0].mxu0
      %7729 = vmatprep.mubr.f32.mxu0 0.0
      %7730 = vmatmul.mubr.f32.gmra.mrb[0].mxu0 %v7528
      %v7731 = vpop.f32.mrb[0].mxu0
      %v7732 = vadd.f32 0.0, %v7731
      %v7733 = vpop.f32.mrb[0].mxu0
      %7734 = vmatprep.mubr.f32.mxu0 0.0
      %7735 = vmatmul.mubr.f32.gmra.mrb[0].mxu0 %v7531
      %v7736 = vpop.f32.mrb[0].mxu0
      %v7737 = vadd.f32 0.0, %v7736
      %v7738 = vpop.f32.mrb[0].mxu0
      %7739 = vmatprep.mubr.f32.mxu0 0.0
      %7740 = vmatmul.mubr.f32.gmra.mrb[0].mxu0 %v7534
      %v7741 = vpop.f32.mrb[0].mxu0
      %v7742 = vadd.f32 0.0, %v7741
      %v7743 = vpop.f32.mrb[0].mxu0
      %7744 = vmatprep.mubr.f32.mxu0 0.0
      %7745 = vmatmul.mubr.f32.gmra.mrb[0].mxu0 %v7537
      %v7746 = vpop.f32.mrb[0].mxu0
      %v7747 = vadd.f32 0.0, %v7746
      %v7748 = vpop.f32.mrb[0].mxu0
      %7749 = vmatprep.mubr.f32.mxu0 0.0
      %7750 = vmatmul.mubr.f32.gmra.mrb[0].mxu0 %v7540
      %v7751 = vpop.f32.mrb[0].mxu0
      %v7752 = vadd.f32 0.0, %v7751
      %v7753 = vpop.f32.mrb[0].mxu0
      %7754 = vmatprep.mubr.f32.mxu0 0.0
      %7755 = vmatmul.mubr.f32.gmra.mrb[0].mxu0 %v7543
      %v7756 = vpop.f32.mrb[0].mxu0
      %v7757 = vadd.f32 0.0, %v7756
      %v7758 = vpop.f32.mrb[0].mxu0
      %7759 = vmatprep.mubr.f32.mxu0 0.0
      %7760 = vmatmul.mubr.f32.gmra.mrb[0].mxu0 %v7546
      %v7761 = vpop.f32.mrb[0].mxu0
      %v7762 = vadd.f32 0.0, %v7761
      %v7763 = vpop.f32.mrb[0].mxu0
      %7764 = vmatprep.mubr.f32.mxu0 0.0
      %7765 = vmatmul.mubr.f32.gmra.mrb[0].mxu0 %v7549
      %v7766 = vpop.f32.mrb[0].mxu0
      %v7767 = vadd.f32 0.0, %v7766
      %v7768 = vpop.f32.mrb[0].mxu0
      %7769 = vmatprep.mubr.f32.mxu0 0.0
      %7770 = vmatmul.mubr.f32.gmra.mrb[0].mxu0 %v7552
      %v7771 = vpop.f32.mrb[0].mxu0
      %v7772 = vadd.f32 0.0, %v7771
      %v7773 = vpop.f32.mrb[0].mxu0
      %7774 = vmatprep.mubr.f32.mxu0 0.0
      %7775 = vmatmul.mubr.f32.gmra.mrb[0].mxu0 %v7555
      %v7776 = vpop.f32.mrb[0].mxu0
      %v7777 = vadd.f32 0.0, %v7776
      %v7778 = vpop.f32.mrb[0].mxu0
      %7779 = vmatprep.mubr.f32.mxu0 0.0
      %7780 = vmatmul.mubr.f32.gmra.mrb[0].mxu0 %v7558
      %v7781 = vpop.f32.mrb[0].mxu0
      %v7782 = vadd.f32 0.0, %v7781
      %v7783 = vpop.f32.mrb[0].mxu0
      %7784 = vdwg.mxu0
      %v7785 = vadd.f32 %v7397, %v7627
      %v7786 = vadd.f32 %v7398, %v7632
      %v7787 = vadd.f32 %v7399, %v7637
      %v7788 = vadd.f32 %v7400, %v7642
      %v7789 = vadd.f32 %v7401, %v7647
      %v7790 = vadd.f32 %v7402, %v7652
      %v7791 = vadd.f32 %v7403, %v7657
      %v7792 = vadd.f32 %v7404, %v7662
      %v7793 = vadd.f32 %v7405, %v7667
      %v7794 = vadd.f32 %v7406, %v7672
      %v7795 = vadd.f32 %v7407, %v7677
      %v7796 = vadd.f32 %v7408, %v7682
      %v7797 = vadd.f32 %v7409, %v7687
      %v7798 = vadd.f32 %v7410, %v7692
      %v7799 = vadd.f32 %v7411, %v7697
      %v7800 = vadd.f32 %v7412, %v7702
      %v7801 = vadd.f32 %v7413, %v7707
      %v7802 = vadd.f32 %v7414, %v7712
      %v7803 = vadd.f32 %v7415, %v7717
      %v7804 = vadd.f32 %v7416, %v7722
      %v7805 = vadd.f32 %v7417, %v7727
      %v7806 = vadd.f32 %v7418, %v7732
      %v7807 = vadd.f32 %v7419, %v7737
      %v7808 = vadd.f32 %v7420, %v7742
      %v7809 = vadd.f32 %v7421, %v7747
      %v7810 = vadd.f32 %v7422, %v7752
      %v7811 = vadd.f32 %v7423, %v7757
      %v7812 = vadd.f32 %v7424, %v7762
      %v7813 = vadd.f32 %v7425, %v7767
      %v7814 = vadd.f32 %v7426, %v7772
      %v7815 = vadd.f32 %v7427, %v7777
      %v7816 = vadd.f32 %v7428, %v7782
      %s7817 = scalar_lea.vmem [#allocation3], 64
      %v7818 = vld [vmem:[%s7817 + $0x7] sm:$0xff]
      %v7819 = vld [vmem:[%s7817 + $0xf] sm:$0xff]
      %v7820 = vld [vmem:[%s7817 + $0x27] sm:$0xff]
      %v7821 = vld [vmem:[%s7817 + $0x2f] sm:$0xff]
      %v7822 = vld [vmem:[%s7817 + $0x47] sm:$0xff]
      %v7823 = vld [vmem:[%s7817 + $0x4f] sm:$0xff]
      %v7824 = vld [vmem:[%s7817 + $0x67] sm:$0xff]
      %v7825 = vld [vmem:[%s7817 + $0x6f] sm:$0xff]
      %v7826 = vld [vmem:[%s7817 + $0x87] sm:$0xff]
      %v7827 = vld [vmem:[%s7817 + $0x8f] sm:$0xff]
      %v7828 = vld [vmem:[%s7817 + $0xa7] sm:$0xff]
      %v7829 = vld [vmem:[%s7817 + $0xaf] sm:$0xff]
      %v7830 = vld [vmem:[%s7817 + $0xc7] sm:$0xff]
      %v7831 = vld [vmem:[%s7817 + $0xcf] sm:$0xff]
      %v7832 = vld [vmem:[%s7817 + $0xe7] sm:$0xff]
      %v7833 = vld [vmem:[%s7817 + $0xef] sm:$0xff]
      %v7834 = vld [vmem:[%s7817 + $0x107] sm:$0xff]
      %v7835 = vld [vmem:[%s7817 + $0x10f] sm:$0xff]
      %v7836 = vld [vmem:[%s7817 + $0x127] sm:$0xff]
      %v7837 = vld [vmem:[%s7817 + $0x12f] sm:$0xff]
      %v7838 = vld [vmem:[%s7817 + $0x147] sm:$0xff]
      %v7839 = vld [vmem:[%s7817 + $0x14f] sm:$0xff]
      %v7840 = vld [vmem:[%s7817 + $0x167] sm:$0xff]
      %v7841 = vld [vmem:[%s7817 + $0x16f] sm:$0xff]
      %v7842 = vld [vmem:[%s7817 + $0x187] sm:$0xff]
      %v7843 = vld [vmem:[%s7817 + $0x18f] sm:$0xff]
      %v7844 = vld [vmem:[%s7817 + $0x1a7] sm:$0xff]
      %v7845 = vld [vmem:[%s7817 + $0x1af] sm:$0xff]
      %v7846 = vld [vmem:[%s7817 + $0x1c7] sm:$0xff]
      %v7847 = vld [vmem:[%s7817 + $0x1cf] sm:$0xff]
      %v7848 = vld [vmem:[%s7817 + $0x1e7] sm:$0xff]
      %v7849 = vld [vmem:[%s7817 + $0x1ef] sm:$0xff]
      %s7850 = scalar_lea.vmem %s10, 96
      %v7851 = vld [vmem:[%s7850] sm:$0xff]
      %v7852 = vld [vmem:[%s7850 + $0x8] sm:$0xff]
      %v7854 = vsel %vm4786, %v7818, 0
      %v7857 = vsel %vm4786, %v7819, 0
      %v7860 = vsel %vm4786, %v7820, 0
      %v7863 = vsel %vm4786, %v7821, 0
      %v7866 = vsel %vm4786, %v7822, 0
      %v7869 = vsel %vm4786, %v7823, 0
      %v7872 = vsel %vm4786, %v7824, 0
      %v7875 = vsel %vm4786, %v7825, 0
      %v7878 = vsel %vm4786, %v7826, 0
      %v7881 = vsel %vm4786, %v7827, 0
      %v7884 = vsel %vm4786, %v7828, 0
      %v7887 = vsel %vm4786, %v7829, 0
      %v7890 = vsel %vm4786, %v7830, 0
      %v7893 = vsel %vm4786, %v7831, 0
      %v7896 = vsel %vm4786, %v7832, 0
      %v7899 = vsel %vm4786, %v7833, 0
      %v7902 = vsel %vm4786, %v7834, 0
      %v7905 = vsel %vm4786, %v7835, 0
      %v7908 = vsel %vm4786, %v7836, 0
      %v7911 = vsel %vm4786, %v7837, 0
      %v7914 = vsel %vm4786, %v7838, 0
      %v7917 = vsel %vm4786, %v7839, 0
      %v7920 = vsel %vm4786, %v7840, 0
      %v7923 = vsel %vm4786, %v7841, 0
      %v7926 = vsel %vm4786, %v7842, 0
      %v7929 = vsel %vm4786, %v7843, 0
      %v7932 = vsel %vm4786, %v7844, 0
      %v7935 = vsel %vm4786, %v7845, 0
      %v7938 = vsel %vm4786, %v7846, 0
      %v7941 = vsel %vm4786, %v7847, 0
      %v7944 = vsel %vm4786, %v7848, 0
      %v7947 = vsel %vm4786, %v7849, 0
      %7949 = vmatprep.subr.mxu0 0.0
      %7950 = vmatpush1.msra.mxu0 %v7851
      %7951 = vmatprep.subr.mxu0 0.0
      %7952 = vmatpush1.msra.mxu0 %v7852
      %7953 = vmatprep.subr.mxu0 0.0
      %7954 = vmatpush1.msra.mxu0 0.0
      %7955 = vmatprep.subr.mxu0 0.0
      %7956 = vmatpush1.msra.mxu0 0.0
      %7957 = vmatprep.subr.mxu0 0.0
      %7958 = vmatpush1.msra.mxu0 0.0
      %7959 = vmatprep.subr.mxu0 0.0
      %7960 = vmatpush1.msra.mxu0 0.0
      %7961 = vmatprep.subr.mxu0 0.0
      %7962 = vmatpush1.msra.mxu0 0.0
      %7963 = vmatprep.subr.mxu0 0.0
      %7964 = vmatpush1.msra.mxu0 0.0
      %7965 = vmatprep.subr.mxu0 0.0
      %7966 = vmatpush1.msra.mxu0 0.0
      %7967 = vmatprep.subr.mxu0 0.0
      %7968 = vmatpush1.msra.mxu0 0.0
      %7969 = vmatprep.subr.mxu0 0.0
      %7970 = vmatpush1.msra.mxu0 0.0
      %7971 = vmatprep.subr.mxu0 0.0
      %7972 = vmatpush1.msra.mxu0 0.0
      %7973 = vmatprep.subr.mxu0 0.0
      %7974 = vmatpush1.msra.mxu0 0.0
      %7975 = vmatprep.subr.mxu0 0.0
      %7976 = vmatpush1.msra.mxu0 0.0
      %7977 = vmatprep.subr.mxu0 0.0
      %7978 = vmatpush1.msra.mxu0 0.0
      %7979 = vmatprep.subr.mxu0 0.0
      %7980 = vmatpush1.msra.mxu0 0.0
      %7981 = vmatprep.subr.mxu0 0.0
      %7982 = vmatpush1.msra.mxu0 0.0
      %7983 = vmatprep.subr.mxu0 0.0
      %7984 = vmatpush1.msra.mxu0 0.0
      %7985 = vmatprep.subr.mxu0 0.0
      %7986 = vmatpush1.msra.mxu0 0.0
      %7987 = vmatprep.subr.mxu0 0.0
      %7988 = vmatpush1.msra.mxu0 0.0
      %7989 = vmatprep.subr.mxu0 0.0
      %7990 = vmatpush1.msra.mxu0 0.0
      %7991 = vmatprep.subr.mxu0 0.0
      %7992 = vmatpush1.msra.mxu0 0.0
      %7993 = vmatprep.subr.mxu0 0.0
      %7994 = vmatpush1.msra.mxu0 0.0
      %7995 = vmatprep.subr.mxu0 0.0
      %7996 = vmatpush1.msra.mxu0 0.0
      %7997 = vmatprep.subr.mxu0 0.0
      %7998 = vmatpush1.msra.mxu0 0.0
      %7999 = vmatprep.subr.mxu0 0.0
      %8000 = vmatpush1.msra.mxu0 0.0
      %8001 = vmatprep.subr.mxu0 0.0
      %8002 = vmatpush1.msra.mxu0 0.0
      %8003 = vmatprep.subr.mxu0 0.0
      %8004 = vmatpush1.msra.mxu0 0.0
      %8005 = vmatprep.subr.mxu0 0.0
      %8006 = vmatpush1.msra.mxu0 0.0
      %8007 = vmatprep.subr.mxu0 0.0
      %8008 = vmatpush1.msra.mxu0 0.0
      %8009 = vmatprep.subr.mxu0 0.0
      %8010 = vmatpush1.msra.mxu0 0.0
      %8011 = vmatprep.subr.mxu0 0.0
      %8012 = vmatpush1.msra.mxu0 0.0
      %8013 = vmatprep.mubr.f32.mxu0 0.0
      %8014 = vmatmul.mubr.f32.gmra.mrb[0].mxu0 %v7854
      %v8015 = vpop.f32.mrb[0].mxu0
      %v8016 = vadd.f32 0.0, %v8015
      %v8017 = vpop.f32.mrb[0].mxu0
      %8018 = vmatprep.mubr.f32.mxu0 0.0
      %8019 = vmatmul.mubr.f32.gmra.mrb[0].mxu0 %v7857
      %v8020 = vpop.f32.mrb[0].mxu0
      %v8021 = vadd.f32 0.0, %v8020
      %v8022 = vpop.f32.mrb[0].mxu0
      %8023 = vmatprep.mubr.f32.mxu0 0.0
      %8024 = vmatmul.mubr.f32.gmra.mrb[0].mxu0 %v7860
      %v8025 = vpop.f32.mrb[0].mxu0
      %v8026 = vadd.f32 0.0, %v8025
      %v8027 = vpop.f32.mrb[0].mxu0
      %8028 = vmatprep.mubr.f32.mxu0 0.0
      %8029 = vmatmul.mubr.f32.gmra.mrb[0].mxu0 %v7863
      %v8030 = vpop.f32.mrb[0].mxu0
      %v8031 = vadd.f32 0.0, %v8030
      %v8032 = vpop.f32.mrb[0].mxu0
      %8033 = vmatprep.mubr.f32.mxu0 0.0
      %8034 = vmatmul.mubr.f32.gmra.mrb[0].mxu0 %v7866
      %v8035 = vpop.f32.mrb[0].mxu0
      %v8036 = vadd.f32 0.0, %v8035
      %v8037 = vpop.f32.mrb[0].mxu0
      %8038 = vmatprep.mubr.f32.mxu0 0.0
      %8039 = vmatmul.mubr.f32.gmra.mrb[0].mxu0 %v7869
      %v8040 = vpop.f32.mrb[0].mxu0
      %v8041 = vadd.f32 0.0, %v8040
      %v8042 = vpop.f32.mrb[0].mxu0
      %8043 = vmatprep.mubr.f32.mxu0 0.0
      %8044 = vmatmul.mubr.f32.gmra.mrb[0].mxu0 %v7872
      %v8045 = vpop.f32.mrb[0].mxu0
      %v8046 = vadd.f32 0.0, %v8045
      %v8047 = vpop.f32.mrb[0].mxu0
      %8048 = vmatprep.mubr.f32.mxu0 0.0
      %8049 = vmatmul.mubr.f32.gmra.mrb[0].mxu0 %v7875
      %v8050 = vpop.f32.mrb[0].mxu0
      %v8051 = vadd.f32 0.0, %v8050
      %v8052 = vpop.f32.mrb[0].mxu0
      %8053 = vmatprep.mubr.f32.mxu0 0.0
      %8054 = vmatmul.mubr.f32.gmra.mrb[0].mxu0 %v7878
      %v8055 = vpop.f32.mrb[0].mxu0
      %v8056 = vadd.f32 0.0, %v8055
      %v8057 = vpop.f32.mrb[0].mxu0
      %8058 = vmatprep.mubr.f32.mxu0 0.0
      %8059 = vmatmul.mubr.f32.gmra.mrb[0].mxu0 %v7881
      %v8060 = vpop.f32.mrb[0].mxu0
      %v8061 = vadd.f32 0.0, %v8060
      %v8062 = vpop.f32.mrb[0].mxu0
      %8063 = vmatprep.mubr.f32.mxu0 0.0
      %8064 = vmatmul.mubr.f32.gmra.mrb[0].mxu0 %v7884
      %v8065 = vpop.f32.mrb[0].mxu0
      %v8066 = vadd.f32 0.0, %v8065
      %v8067 = vpop.f32.mrb[0].mxu0
      %8068 = vmatprep.mubr.f32.mxu0 0.0
      %8069 = vmatmul.mubr.f32.gmra.mrb[0].mxu0 %v7887
      %v8070 = vpop.f32.mrb[0].mxu0
      %v8071 = vadd.f32 0.0, %v8070
      %v8072 = vpop.f32.mrb[0].mxu0
      %8073 = vmatprep.mubr.f32.mxu0 0.0
      %8074 = vmatmul.mubr.f32.gmra.mrb[0].mxu0 %v7890
      %v8075 = vpop.f32.mrb[0].mxu0
      %v8076 = vadd.f32 0.0, %v8075
      %v8077 = vpop.f32.mrb[0].mxu0
      %8078 = vmatprep.mubr.f32.mxu0 0.0
      %8079 = vmatmul.mubr.f32.gmra.mrb[0].mxu0 %v7893
      %v8080 = vpop.f32.mrb[0].mxu0
      %v8081 = vadd.f32 0.0, %v8080
      %v8082 = vpop.f32.mrb[0].mxu0
      %8083 = vmatprep.mubr.f32.mxu0 0.0
      %8084 = vmatmul.mubr.f32.gmra.mrb[0].mxu0 %v7896
      %v8085 = vpop.f32.mrb[0].mxu0
      %v8086 = vadd.f32 0.0, %v8085
      %v8087 = vpop.f32.mrb[0].mxu0
      %8088 = vmatprep.mubr.f32.mxu0 0.0
      %8089 = vmatmul.mubr.f32.gmra.mrb[0].mxu0 %v7899
      %v8090 = vpop.f32.mrb[0].mxu0
      %v8091 = vadd.f32 0.0, %v8090
      %v8092 = vpop.f32.mrb[0].mxu0
      %8093 = vmatprep.mubr.f32.mxu0 0.0
      %8094 = vmatmul.mubr.f32.gmra.mrb[0].mxu0 %v7902
      %v8095 = vpop.f32.mrb[0].mxu0
      %v8096 = vadd.f32 0.0, %v8095
      %v8097 = vpop.f32.mrb[0].mxu0
      %8098 = vmatprep.mubr.f32.mxu0 0.0
      %8099 = vmatmul.mubr.f32.gmra.mrb[0].mxu0 %v7905
      %v8100 = vpop.f32.mrb[0].mxu0
      %v8101 = vadd.f32 0.0, %v8100
      %v8102 = vpop.f32.mrb[0].mxu0
      %8103 = vmatprep.mubr.f32.mxu0 0.0
      %8104 = vmatmul.mubr.f32.gmra.mrb[0].mxu0 %v7908
      %v8105 = vpop.f32.mrb[0].mxu0
      %v8106 = vadd.f32 0.0, %v8105
      %v8107 = vpop.f32.mrb[0].mxu0
      %8108 = vmatprep.mubr.f32.mxu0 0.0
      %8109 = vmatmul.mubr.f32.gmra.mrb[0].mxu0 %v7911
      %v8110 = vpop.f32.mrb[0].mxu0
      %v8111 = vadd.f32 0.0, %v8110
      %v8112 = vpop.f32.mrb[0].mxu0
      %8113 = vmatprep.mubr.f32.mxu0 0.0
      %8114 = vmatmul.mubr.f32.gmra.mrb[0].mxu0 %v7914
      %v8115 = vpop.f32.mrb[0].mxu0
      %v8116 = vadd.f32 0.0, %v8115
      %v8117 = vpop.f32.mrb[0].mxu0
      %8118 = vmatprep.mubr.f32.mxu0 0.0
      %8119 = vmatmul.mubr.f32.gmra.mrb[0].mxu0 %v7917
      %v8120 = vpop.f32.mrb[0].mxu0
      %v8121 = vadd.f32 0.0, %v8120
      %v8122 = vpop.f32.mrb[0].mxu0
      %8123 = vmatprep.mubr.f32.mxu0 0.0
      %8124 = vmatmul.mubr.f32.gmra.mrb[0].mxu0 %v7920
      %v8125 = vpop.f32.mrb[0].mxu0
      %v8126 = vadd.f32 0.0, %v8125
      %v8127 = vpop.f32.mrb[0].mxu0
      %8128 = vmatprep.mubr.f32.mxu0 0.0
      %8129 = vmatmul.mubr.f32.gmra.mrb[0].mxu0 %v7923
      %v8130 = vpop.f32.mrb[0].mxu0
      %v8131 = vadd.f32 0.0, %v8130
      %v8132 = vpop.f32.mrb[0].mxu0
      %8133 = vmatprep.mubr.f32.mxu0 0.0
      %8134 = vmatmul.mubr.f32.gmra.mrb[0].mxu0 %v7926
      %v8135 = vpop.f32.mrb[0].mxu0
      %v8136 = vadd.f32 0.0, %v8135
      %v8137 = vpop.f32.mrb[0].mxu0
      %8138 = vmatprep.mubr.f32.mxu0 0.0
      %8139 = vmatmul.mubr.f32.gmra.mrb[0].mxu0 %v7929
      %v8140 = vpop.f32.mrb[0].mxu0
      %v8141 = vadd.f32 0.0, %v8140
      %v8142 = vpop.f32.mrb[0].mxu0
      %8143 = vmatprep.mubr.f32.mxu0 0.0
      %8144 = vmatmul.mubr.f32.gmra.mrb[0].mxu0 %v7932
      %v8145 = vpop.f32.mrb[0].mxu0
      %v8146 = vadd.f32 0.0, %v8145
      %v8147 = vpop.f32.mrb[0].mxu0
      %8148 = vmatprep.mubr.f32.mxu0 0.0
      %8149 = vmatmul.mubr.f32.gmra.mrb[0].mxu0 %v7935
      %v8150 = vpop.f32.mrb[0].mxu0
      %v8151 = vadd.f32 0.0, %v8150
      %v8152 = vpop.f32.mrb[0].mxu0
      %8153 = vmatprep.mubr.f32.mxu0 0.0
      %8154 = vmatmul.mubr.f32.gmra.mrb[0].mxu0 %v7938
      %v8155 = vpop.f32.mrb[0].mxu0
      %v8156 = vadd.f32 0.0, %v8155
      %v8157 = vpop.f32.mrb[0].mxu0
      %8158 = vmatprep.mubr.f32.mxu0 0.0
      %8159 = vmatmul.mubr.f32.gmra.mrb[0].mxu0 %v7941
      %v8160 = vpop.f32.mrb[0].mxu0
      %v8161 = vadd.f32 0.0, %v8160
      %v8162 = vpop.f32.mrb[0].mxu0
      %8163 = vmatprep.mubr.f32.mxu0 0.0
      %8164 = vmatmul.mubr.f32.gmra.mrb[0].mxu0 %v7944
      %v8165 = vpop.f32.mrb[0].mxu0
      %v8166 = vadd.f32 0.0, %v8165
      %v8167 = vpop.f32.mrb[0].mxu0
      %8168 = vmatprep.mubr.f32.mxu0 0.0
      %8169 = vmatmul.mubr.f32.gmra.mrb[0].mxu0 %v7947
      %v8170 = vpop.f32.mrb[0].mxu0
      %v8171 = vadd.f32 0.0, %v8170
      %v8172 = vpop.f32.mrb[0].mxu0
      %8173 = vdwg.mxu0
      %v8174 = vadd.f32 %v7785, %v8016
      %v8175 = vadd.f32 %v7786, %v8021
      %v8176 = vadd.f32 %v7787, %v8026
      %v8177 = vadd.f32 %v7788, %v8031
      %v8178 = vadd.f32 %v7789, %v8036
      %v8179 = vadd.f32 %v7790, %v8041
      %v8180 = vadd.f32 %v7791, %v8046
      %v8181 = vadd.f32 %v7792, %v8051
      %v8182 = vadd.f32 %v7793, %v8056
      %v8183 = vadd.f32 %v7794, %v8061
      %v8184 = vadd.f32 %v7795, %v8066
      %v8185 = vadd.f32 %v7796, %v8071
      %v8186 = vadd.f32 %v7797, %v8076
      %v8187 = vadd.f32 %v7798, %v8081
      %v8188 = vadd.f32 %v7799, %v8086
      %v8189 = vadd.f32 %v7800, %v8091
      %v8190 = vadd.f32 %v7801, %v8096
      %v8191 = vadd.f32 %v7802, %v8101
      %v8192 = vadd.f32 %v7803, %v8106
      %v8193 = vadd.f32 %v7804, %v8111
      %v8194 = vadd.f32 %v7805, %v8116
      %v8195 = vadd.f32 %v7806, %v8121
      %v8196 = vadd.f32 %v7807, %v8126
      %v8197 = vadd.f32 %v7808, %v8131
      %v8198 = vadd.f32 %v7809, %v8136
      %v8199 = vadd.f32 %v7810, %v8141
      %v8200 = vadd.f32 %v7811, %v8146
      %v8201 = vadd.f32 %v7812, %v8151
      %v8202 = vadd.f32 %v7813, %v8156
      %v8203 = vadd.f32 %v7814, %v8161
      %v8204 = vadd.f32 %v7815, %v8166
      %v8205 = vadd.f32 %v7816, %v8171
      %v8206 = vld [vmem:[%s7817 + $0x8] sm:$0xff]
      %v8207 = vld [vmem:[%s7817 + $0x10] sm:$0xff]
      %v8208 = vld [vmem:[%s7817 + $0x28] sm:$0xff]
      %v8209 = vld [vmem:[%s7817 + $0x30] sm:$0xff]
      %v8210 = vld [vmem:[%s7817 + $0x48] sm:$0xff]
      %v8211 = vld [vmem:[%s7817 + $0x50] sm:$0xff]
      %v8212 = vld [vmem:[%s7817 + $0x68] sm:$0xff]
      %v8213 = vld [vmem:[%s7817 + $0x70] sm:$0xff]
      %v8214 = vld [vmem:[%s7817 + $0x88] sm:$0xff]
      %v8215 = vld [vmem:[%s7817 + $0x90] sm:$0xff]
      %v8216 = vld [vmem:[%s7817 + $0xa8] sm:$0xff]
      %v8217 = vld [vmem:[%s7817 + $0xb0] sm:$0xff]
      %v8218 = vld [vmem:[%s7817 + $0xc8] sm:$0xff]
      %v8219 = vld [vmem:[%s7817 + $0xd0] sm:$0xff]
      %v8220 = vld [vmem:[%s7817 + $0xe8] sm:$0xff]
      %v8221 = vld [vmem:[%s7817 + $0xf0] sm:$0xff]
      %v8222 = vld [vmem:[%s7817 + $0x108] sm:$0xff]
      %v8223 = vld [vmem:[%s7817 + $0x110] sm:$0xff]
      %v8224 = vld [vmem:[%s7817 + $0x128] sm:$0xff]
      %v8225 = vld [vmem:[%s7817 + $0x130] sm:$0xff]
      %v8226 = vld [vmem:[%s7817 + $0x148] sm:$0xff]
      %v8227 = vld [vmem:[%s7817 + $0x150] sm:$0xff]
      %v8228 = vld [vmem:[%s7817 + $0x168] sm:$0xff]
      %v8229 = vld [vmem:[%s7817 + $0x170] sm:$0xff]
      %v8230 = vld [vmem:[%s7817 + $0x188] sm:$0xff]
      %v8231 = vld [vmem:[%s7817 + $0x190] sm:$0xff]
      %v8232 = vld [vmem:[%s7817 + $0x1a8] sm:$0xff]
      %v8233 = vld [vmem:[%s7817 + $0x1b0] sm:$0xff]
      %v8234 = vld [vmem:[%s7817 + $0x1c8] sm:$0xff]
      %v8235 = vld [vmem:[%s7817 + $0x1d0] sm:$0xff]
      %v8236 = vld [vmem:[%s7817 + $0x1e8] sm:$0xff]
      %v8237 = vld [vmem:[%s7817 + $0x1f0] sm:$0xff]
      %s8238 = scalar_lea.vmem %s10, 112
      %v8239 = vld [vmem:[%s8238] sm:$0xff]
      %v8240 = vld [vmem:[%s8238 + $0x8] sm:$0xff]
      %v8242 = vsel %vm4786, %v8206, 0
      %v8245 = vsel %vm4786, %v8207, 0
      %v8248 = vsel %vm4786, %v8208, 0
      %v8251 = vsel %vm4786, %v8209, 0
      %v8254 = vsel %vm4786, %v8210, 0
      %v8257 = vsel %vm4786, %v8211, 0
      %v8260 = vsel %vm4786, %v8212, 0
      %v8263 = vsel %vm4786, %v8213, 0
      %v8266 = vsel %vm4786, %v8214, 0
      %v8269 = vsel %vm4786, %v8215, 0
      %v8272 = vsel %vm4786, %v8216, 0
      %v8275 = vsel %vm4786, %v8217, 0
      %v8278 = vsel %vm4786, %v8218, 0
      %v8281 = vsel %vm4786, %v8219, 0
      %v8284 = vsel %vm4786, %v8220, 0
      %v8287 = vsel %vm4786, %v8221, 0
      %v8290 = vsel %vm4786, %v8222, 0
      %v8293 = vsel %vm4786, %v8223, 0
      %v8296 = vsel %vm4786, %v8224, 0
      %v8299 = vsel %vm4786, %v8225, 0
      %v8302 = vsel %vm4786, %v8226, 0
      %v8305 = vsel %vm4786, %v8227, 0
      %v8308 = vsel %vm4786, %v8228, 0
      %v8311 = vsel %vm4786, %v8229, 0
      %v8314 = vsel %vm4786, %v8230, 0
      %v8317 = vsel %vm4786, %v8231, 0
      %v8320 = vsel %vm4786, %v8232, 0
      %v8323 = vsel %vm4786, %v8233, 0
      %v8326 = vsel %vm4786, %v8234, 0
      %v8329 = vsel %vm4786, %v8235, 0
      %v8332 = vsel %vm4786, %v8236, 0
      %v8335 = vsel %vm4786, %v8237, 0
      %8337 = vmatprep.subr.mxu0 0.0
      %8338 = vmatpush1.msra.mxu0 %v8239
      %8339 = vmatprep.subr.mxu0 0.0
      %8340 = vmatpush1.msra.mxu0 %v8240
      %8341 = vmatprep.subr.mxu0 0.0
      %8342 = vmatpush1.msra.mxu0 0.0
      %8343 = vmatprep.subr.mxu0 0.0
      %8344 = vmatpush1.msra.mxu0 0.0
      %8345 = vmatprep.subr.mxu0 0.0
      %8346 = vmatpush1.msra.mxu0 0.0
      %8347 = vmatprep.subr.mxu0 0.0
      %8348 = vmatpush1.msra.mxu0 0.0
      %8349 = vmatprep.subr.mxu0 0.0
      %8350 = vmatpush1.msra.mxu0 0.0
      %8351 = vmatprep.subr.mxu0 0.0
      %8352 = vmatpush1.msra.mxu0 0.0
      %8353 = vmatprep.subr.mxu0 0.0
      %8354 = vmatpush1.msra.mxu0 0.0
      %8355 = vmatprep.subr.mxu0 0.0
      %8356 = vmatpush1.msra.mxu0 0.0
      %8357 = vmatprep.subr.mxu0 0.0
      %8358 = vmatpush1.msra.mxu0 0.0
      %8359 = vmatprep.subr.mxu0 0.0
      %8360 = vmatpush1.msra.mxu0 0.0
      %8361 = vmatprep.subr.mxu0 0.0
      %8362 = vmatpush1.msra.mxu0 0.0
      %8363 = vmatprep.subr.mxu0 0.0
      %8364 = vmatpush1.msra.mxu0 0.0
      %8365 = vmatprep.subr.mxu0 0.0
      %8366 = vmatpush1.msra.mxu0 0.0
      %8367 = vmatprep.subr.mxu0 0.0
      %8368 = vmatpush1.msra.mxu0 0.0
      %8369 = vmatprep.subr.mxu0 0.0
      %8370 = vmatpush1.msra.mxu0 0.0
      %8371 = vmatprep.subr.mxu0 0.0
      %8372 = vmatpush1.msra.mxu0 0.0
      %8373 = vmatprep.subr.mxu0 0.0
      %8374 = vmatpush1.msra.mxu0 0.0
      %8375 = vmatprep.subr.mxu0 0.0
      %8376 = vmatpush1.msra.mxu0 0.0
      %8377 = vmatprep.subr.mxu0 0.0
      %8378 = vmatpush1.msra.mxu0 0.0
      %8379 = vmatprep.subr.mxu0 0.0
      %8380 = vmatpush1.msra.mxu0 0.0
      %8381 = vmatprep.subr.mxu0 0.0
      %8382 = vmatpush1.msra.mxu0 0.0
      %8383 = vmatprep.subr.mxu0 0.0
      %8384 = vmatpush1.msra.mxu0 0.0
      %8385 = vmatprep.subr.mxu0 0.0
      %8386 = vmatpush1.msra.mxu0 0.0
      %8387 = vmatprep.subr.mxu0 0.0
      %8388 = vmatpush1.msra.mxu0 0.0
      %8389 = vmatprep.subr.mxu0 0.0
      %8390 = vmatpush1.msra.mxu0 0.0
      %8391 = vmatprep.subr.mxu0 0.0
      %8392 = vmatpush1.msra.mxu0 0.0
      %8393 = vmatprep.subr.mxu0 0.0
      %8394 = vmatpush1.msra.mxu0 0.0
      %8395 = vmatprep.subr.mxu0 0.0
      %8396 = vmatpush1.msra.mxu0 0.0
      %8397 = vmatprep.subr.mxu0 0.0
      %8398 = vmatpush1.msra.mxu0 0.0
      %8399 = vmatprep.subr.mxu0 0.0
      %8400 = vmatpush1.msra.mxu0 0.0
      %8401 = vmatprep.mubr.f32.mxu0 0.0
      %8402 = vmatmul.mubr.f32.gmra.mrb[0].mxu0 %v8242
      %v8403 = vpop.f32.mrb[0].mxu0
      %v8404 = vadd.f32 0.0, %v8403
      %v8405 = vpop.f32.mrb[0].mxu0
      %8406 = vmatprep.mubr.f32.mxu0 0.0
      %8407 = vmatmul.mubr.f32.gmra.mrb[0].mxu0 %v8245
      %v8408 = vpop.f32.mrb[0].mxu0
      %v8409 = vadd.f32 0.0, %v8408
      %v8410 = vpop.f32.mrb[0].mxu0
      %8411 = vmatprep.mubr.f32.mxu0 0.0
      %8412 = vmatmul.mubr.f32.gmra.mrb[0].mxu0 %v8248
      %v8413 = vpop.f32.mrb[0].mxu0
      %v8414 = vadd.f32 0.0, %v8413
      %v8415 = vpop.f32.mrb[0].mxu0
      %8416 = vmatprep.mubr.f32.mxu0 0.0
      %8417 = vmatmul.mubr.f32.gmra.mrb[0].mxu0 %v8251
      %v8418 = vpop.f32.mrb[0].mxu0
      %v8419 = vadd.f32 0.0, %v8418
      %v8420 = vpop.f32.mrb[0].mxu0
      %8421 = vmatprep.mubr.f32.mxu0 0.0
      %8422 = vmatmul.mubr.f32.gmra.mrb[0].mxu0 %v8254
      %v8423 = vpop.f32.mrb[0].mxu0
      %v8424 = vadd.f32 0.0, %v8423
      %v8425 = vpop.f32.mrb[0].mxu0
      %8426 = vmatprep.mubr.f32.mxu0 0.0
      %8427 = vmatmul.mubr.f32.gmra.mrb[0].mxu0 %v8257
      %v8428 = vpop.f32.mrb[0].mxu0
      %v8429 = vadd.f32 0.0, %v8428
      %v8430 = vpop.f32.mrb[0].mxu0
      %8431 = vmatprep.mubr.f32.mxu0 0.0
      %8432 = vmatmul.mubr.f32.gmra.mrb[0].mxu0 %v8260
      %v8433 = vpop.f32.mrb[0].mxu0
      %v8434 = vadd.f32 0.0, %v8433
      %v8435 = vpop.f32.mrb[0].mxu0
      %8436 = vmatprep.mubr.f32.mxu0 0.0
      %8437 = vmatmul.mubr.f32.gmra.mrb[0].mxu0 %v8263
      %v8438 = vpop.f32.mrb[0].mxu0
      %v8439 = vadd.f32 0.0, %v8438
      %v8440 = vpop.f32.mrb[0].mxu0
      %8441 = vmatprep.mubr.f32.mxu0 0.0
      %8442 = vmatmul.mubr.f32.gmra.mrb[0].mxu0 %v8266
      %v8443 = vpop.f32.mrb[0].mxu0
      %v8444 = vadd.f32 0.0, %v8443
      %v8445 = vpop.f32.mrb[0].mxu0
      %8446 = vmatprep.mubr.f32.mxu0 0.0
      %8447 = vmatmul.mubr.f32.gmra.mrb[0].mxu0 %v8269
      %v8448 = vpop.f32.mrb[0].mxu0
      %v8449 = vadd.f32 0.0, %v8448
      %v8450 = vpop.f32.mrb[0].mxu0
      %8451 = vmatprep.mubr.f32.mxu0 0.0
      %8452 = vmatmul.mubr.f32.gmra.mrb[0].mxu0 %v8272
      %v8453 = vpop.f32.mrb[0].mxu0
      %v8454 = vadd.f32 0.0, %v8453
      %v8455 = vpop.f32.mrb[0].mxu0
      %8456 = vmatprep.mubr.f32.mxu0 0.0
      %8457 = vmatmul.mubr.f32.gmra.mrb[0].mxu0 %v8275
      %v8458 = vpop.f32.mrb[0].mxu0
      %v8459 = vadd.f32 0.0, %v8458
      %v8460 = vpop.f32.mrb[0].mxu0
      %8461 = vmatprep.mubr.f32.mxu0 0.0
      %8462 = vmatmul.mubr.f32.gmra.mrb[0].mxu0 %v8278
      %v8463 = vpop.f32.mrb[0].mxu0
      %v8464 = vadd.f32 0.0, %v8463
      %v8465 = vpop.f32.mrb[0].mxu0
      %8466 = vmatprep.mubr.f32.mxu0 0.0
      %8467 = vmatmul.mubr.f32.gmra.mrb[0].mxu0 %v8281
      %v8468 = vpop.f32.mrb[0].mxu0
      %v8469 = vadd.f32 0.0, %v8468
      %v8470 = vpop.f32.mrb[0].mxu0
      %8471 = vmatprep.mubr.f32.mxu0 0.0
      %8472 = vmatmul.mubr.f32.gmra.mrb[0].mxu0 %v8284
      %v8473 = vpop.f32.mrb[0].mxu0
      %v8474 = vadd.f32 0.0, %v8473
      %v8475 = vpop.f32.mrb[0].mxu0
      %8476 = vmatprep.mubr.f32.mxu0 0.0
      %8477 = vmatmul.mubr.f32.gmra.mrb[0].mxu0 %v8287
      %v8478 = vpop.f32.mrb[0].mxu0
      %v8479 = vadd.f32 0.0, %v8478
      %v8480 = vpop.f32.mrb[0].mxu0
      %8481 = vmatprep.mubr.f32.mxu0 0.0
      %8482 = vmatmul.mubr.f32.gmra.mrb[0].mxu0 %v8290
      %v8483 = vpop.f32.mrb[0].mxu0
      %v8484 = vadd.f32 0.0, %v8483
      %v8485 = vpop.f32.mrb[0].mxu0
      %8486 = vmatprep.mubr.f32.mxu0 0.0
      %8487 = vmatmul.mubr.f32.gmra.mrb[0].mxu0 %v8293
      %v8488 = vpop.f32.mrb[0].mxu0
      %v8489 = vadd.f32 0.0, %v8488
      %v8490 = vpop.f32.mrb[0].mxu0
      %8491 = vmatprep.mubr.f32.mxu0 0.0
      %8492 = vmatmul.mubr.f32.gmra.mrb[0].mxu0 %v8296
      %v8493 = vpop.f32.mrb[0].mxu0
      %v8494 = vadd.f32 0.0, %v8493
      %v8495 = vpop.f32.mrb[0].mxu0
      %8496 = vmatprep.mubr.f32.mxu0 0.0
      %8497 = vmatmul.mubr.f32.gmra.mrb[0].mxu0 %v8299
      %v8498 = vpop.f32.mrb[0].mxu0
      %v8499 = vadd.f32 0.0, %v8498
      %v8500 = vpop.f32.mrb[0].mxu0
      %8501 = vmatprep.mubr.f32.mxu0 0.0
      %8502 = vmatmul.mubr.f32.gmra.mrb[0].mxu0 %v8302
      %v8503 = vpop.f32.mrb[0].mxu0
      %v8504 = vadd.f32 0.0, %v8503
      %v8505 = vpop.f32.mrb[0].mxu0
      %8506 = vmatprep.mubr.f32.mxu0 0.0
      %8507 = vmatmul.mubr.f32.gmra.mrb[0].mxu0 %v8305
      %v8508 = vpop.f32.mrb[0].mxu0
      %v8509 = vadd.f32 0.0, %v8508
      %v8510 = vpop.f32.mrb[0].mxu0
      %8511 = vmatprep.mubr.f32.mxu0 0.0
      %8512 = vmatmul.mubr.f32.gmra.mrb[0].mxu0 %v8308
      %v8513 = vpop.f32.mrb[0].mxu0
      %v8514 = vadd.f32 0.0, %v8513
      %v8515 = vpop.f32.mrb[0].mxu0
      %8516 = vmatprep.mubr.f32.mxu0 0.0
      %8517 = vmatmul.mubr.f32.gmra.mrb[0].mxu0 %v8311
      %v8518 = vpop.f32.mrb[0].mxu0
      %v8519 = vadd.f32 0.0, %v8518
      %v8520 = vpop.f32.mrb[0].mxu0
      %8521 = vmatprep.mubr.f32.mxu0 0.0
      %8522 = vmatmul.mubr.f32.gmra.mrb[0].mxu0 %v8314
      %v8523 = vpop.f32.mrb[0].mxu0
      %v8524 = vadd.f32 0.0, %v8523
      %v8525 = vpop.f32.mrb[0].mxu0
      %8526 = vmatprep.mubr.f32.mxu0 0.0
      %8527 = vmatmul.mubr.f32.gmra.mrb[0].mxu0 %v8317
      %v8528 = vpop.f32.mrb[0].mxu0
      %v8529 = vadd.f32 0.0, %v8528
      %v8530 = vpop.f32.mrb[0].mxu0
      %8531 = vmatprep.mubr.f32.mxu0 0.0
      %8532 = vmatmul.mubr.f32.gmra.mrb[0].mxu0 %v8320
      %v8533 = vpop.f32.mrb[0].mxu0
      %v8534 = vadd.f32 0.0, %v8533
      %v8535 = vpop.f32.mrb[0].mxu0
      %8536 = vmatprep.mubr.f32.mxu0 0.0
      %8537 = vmatmul.mubr.f32.gmra.mrb[0].mxu0 %v8323
      %v8538 = vpop.f32.mrb[0].mxu0
      %v8539 = vadd.f32 0.0, %v8538
      %v8540 = vpop.f32.mrb[0].mxu0
      %8541 = vmatprep.mubr.f32.mxu0 0.0
      %8542 = vmatmul.mubr.f32.gmra.mrb[0].mxu0 %v8326
      %v8543 = vpop.f32.mrb[0].mxu0
      %v8544 = vadd.f32 0.0, %v8543
      %v8545 = vpop.f32.mrb[0].mxu0
      %8546 = vmatprep.mubr.f32.mxu0 0.0
      %8547 = vmatmul.mubr.f32.gmra.mrb[0].mxu0 %v8329
      %v8548 = vpop.f32.mrb[0].mxu0
      %v8549 = vadd.f32 0.0, %v8548
      %v8550 = vpop.f32.mrb[0].mxu0
      %8551 = vmatprep.mubr.f32.mxu0 0.0
      %8552 = vmatmul.mubr.f32.gmra.mrb[0].mxu0 %v8332
      %v8553 = vpop.f32.mrb[0].mxu0
      %v8554 = vadd.f32 0.0, %v8553
      %v8555 = vpop.f32.mrb[0].mxu0
      %8556 = vmatprep.mubr.f32.mxu0 0.0
      %8557 = vmatmul.mubr.f32.gmra.mrb[0].mxu0 %v8335
      %v8558 = vpop.f32.mrb[0].mxu0
      %v8559 = vadd.f32 0.0, %v8558
      %v8560 = vpop.f32.mrb[0].mxu0
      %8561 = vdwg.mxu0
      %v8562 = vadd.f32 %v8174, %v8404
      %v8563 = vadd.f32 %v8175, %v8409
      %v8564 = vadd.f32 %v8176, %v8414
      %v8565 = vadd.f32 %v8177, %v8419
      %v8566 = vadd.f32 %v8178, %v8424
      %v8567 = vadd.f32 %v8179, %v8429
      %v8568 = vadd.f32 %v8180, %v8434
      %v8569 = vadd.f32 %v8181, %v8439
      %v8570 = vadd.f32 %v8182, %v8444
      %v8571 = vadd.f32 %v8183, %v8449
      %v8572 = vadd.f32 %v8184, %v8454
      %v8573 = vadd.f32 %v8185, %v8459
      %v8574 = vadd.f32 %v8186, %v8464
      %v8575 = vadd.f32 %v8187, %v8469
      %v8576 = vadd.f32 %v8188, %v8474
      %v8577 = vadd.f32 %v8189, %v8479
      %v8578 = vadd.f32 %v8190, %v8484
      %v8579 = vadd.f32 %v8191, %v8489
      %v8580 = vadd.f32 %v8192, %v8494
      %v8581 = vadd.f32 %v8193, %v8499
      %v8582 = vadd.f32 %v8194, %v8504
      %v8583 = vadd.f32 %v8195, %v8509
      %v8584 = vadd.f32 %v8196, %v8514
      %v8585 = vadd.f32 %v8197, %v8519
      %v8586 = vadd.f32 %v8198, %v8524
      %v8587 = vadd.f32 %v8199, %v8529
      %v8588 = vadd.f32 %v8200, %v8534
      %v8589 = vadd.f32 %v8201, %v8539
      %v8590 = vadd.f32 %v8202, %v8544
      %v8591 = vadd.f32 %v8203, %v8549
      %v8592 = vadd.f32 %v8204, %v8554
      %v8593 = vadd.f32 %v8205, %v8559
      %v8594 = vld [vmem:[%s7817 + $0x9] sm:$0xff]
      %v8595 = vld [vmem:[%s7817 + $0x11] sm:$0xff]
      %v8596 = vld [vmem:[%s7817 + $0x29] sm:$0xff]
      %v8597 = vld [vmem:[%s7817 + $0x31] sm:$0xff]
      %v8598 = vld [vmem:[%s7817 + $0x49] sm:$0xff]
      %v8599 = vld [vmem:[%s7817 + $0x51] sm:$0xff]
      %v8600 = vld [vmem:[%s7817 + $0x69] sm:$0xff]
      %v8601 = vld [vmem:[%s7817 + $0x71] sm:$0xff]
      %v8602 = vld [vmem:[%s7817 + $0x89] sm:$0xff]
      %v8603 = vld [vmem:[%s7817 + $0x91] sm:$0xff]
      %v8604 = vld [vmem:[%s7817 + $0xa9] sm:$0xff]
      %v8605 = vld [vmem:[%s7817 + $0xb1] sm:$0xff]
      %v8606 = vld [vmem:[%s7817 + $0xc9] sm:$0xff]
      %v8607 = vld [vmem:[%s7817 + $0xd1] sm:$0xff]
      %v8608 = vld [vmem:[%s7817 + $0xe9] sm:$0xff]
      %v8609 = vld [vmem:[%s7817 + $0xf1] sm:$0xff]
      %v8610 = vld [vmem:[%s7817 + $0x109] sm:$0xff]
      %v8611 = vld [vmem:[%s7817 + $0x111] sm:$0xff]
      %v8612 = vld [vmem:[%s7817 + $0x129] sm:$0xff]
      %v8613 = vld [vmem:[%s7817 + $0x131] sm:$0xff]
      %v8614 = vld [vmem:[%s7817 + $0x149] sm:$0xff]
      %v8615 = vld [vmem:[%s7817 + $0x151] sm:$0xff]
      %v8616 = vld [vmem:[%s7817 + $0x169] sm:$0xff]
      %v8617 = vld [vmem:[%s7817 + $0x171] sm:$0xff]
      %v8618 = vld [vmem:[%s7817 + $0x189] sm:$0xff]
      %v8619 = vld [vmem:[%s7817 + $0x191] sm:$0xff]
      %v8620 = vld [vmem:[%s7817 + $0x1a9] sm:$0xff]
      %v8621 = vld [vmem:[%s7817 + $0x1b1] sm:$0xff]
      %v8622 = vld [vmem:[%s7817 + $0x1c9] sm:$0xff]
      %v8623 = vld [vmem:[%s7817 + $0x1d1] sm:$0xff]
      %v8624 = vld [vmem:[%s7817 + $0x1e9] sm:$0xff]
      %v8625 = vld [vmem:[%s7817 + $0x1f1] sm:$0xff]
      %s8626 = scalar_lea.vmem %s10, 128
      %v8627 = vld [vmem:[%s8626] sm:$0xff]
      %v8628 = vld [vmem:[%s8626 + $0x8] sm:$0xff]
      %v8630 = vsel %vm4786, %v8594, 0
      %v8633 = vsel %vm4786, %v8595, 0
      %v8636 = vsel %vm4786, %v8596, 0
      %v8639 = vsel %vm4786, %v8597, 0
      %v8642 = vsel %vm4786, %v8598, 0
      %v8645 = vsel %vm4786, %v8599, 0
      %v8648 = vsel %vm4786, %v8600, 0
      %v8651 = vsel %vm4786, %v8601, 0
      %v8654 = vsel %vm4786, %v8602, 0
      %v8657 = vsel %vm4786, %v8603, 0
      %v8660 = vsel %vm4786, %v8604, 0
      %v8663 = vsel %vm4786, %v8605, 0
      %v8666 = vsel %vm4786, %v8606, 0
      %v8669 = vsel %vm4786, %v8607, 0
      %v8672 = vsel %vm4786, %v8608, 0
      %v8675 = vsel %vm4786, %v8609, 0
      %v8678 = vsel %vm4786, %v8610, 0
      %v8681 = vsel %vm4786, %v8611, 0
      %v8684 = vsel %vm4786, %v8612, 0
      %v8687 = vsel %vm4786, %v8613, 0
      %v8690 = vsel %vm4786, %v8614, 0
      %v8693 = vsel %vm4786, %v8615, 0
      %v8696 = vsel %vm4786, %v8616, 0
      %v8699 = vsel %vm4786, %v8617, 0
      %v8702 = vsel %vm4786, %v8618, 0
      %v8705 = vsel %vm4786, %v8619, 0
      %v8708 = vsel %vm4786, %v8620, 0
      %v8711 = vsel %vm4786, %v8621, 0
      %v8714 = vsel %vm4786, %v8622, 0
      %v8717 = vsel %vm4786, %v8623, 0
      %v8720 = vsel %vm4786, %v8624, 0
      %v8723 = vsel %vm4786, %v8625, 0
      %8725 = vmatprep.subr.mxu0 0.0
      %8726 = vmatpush1.msra.mxu0 %v8627
      %8727 = vmatprep.subr.mxu0 0.0
      %8728 = vmatpush1.msra.mxu0 %v8628
      %8729 = vmatprep.subr.mxu0 0.0
      %8730 = vmatpush1.msra.mxu0 0.0
      %8731 = vmatprep.subr.mxu0 0.0
      %8732 = vmatpush1.msra.mxu0 0.0
      %8733 = vmatprep.subr.mxu0 0.0
      %8734 = vmatpush1.msra.mxu0 0.0
      %8735 = vmatprep.subr.mxu0 0.0
      %8736 = vmatpush1.msra.mxu0 0.0
      %8737 = vmatprep.subr.mxu0 0.0
      %8738 = vmatpush1.msra.mxu0 0.0
      %8739 = vmatprep.subr.mxu0 0.0
      %8740 = vmatpush1.msra.mxu0 0.0
      %8741 = vmatprep.subr.mxu0 0.0
      %8742 = vmatpush1.msra.mxu0 0.0
      %8743 = vmatprep.subr.mxu0 0.0
      %8744 = vmatpush1.msra.mxu0 0.0
      %8745 = vmatprep.subr.mxu0 0.0
      %8746 = vmatpush1.msra.mxu0 0.0
      %8747 = vmatprep.subr.mxu0 0.0
      %8748 = vmatpush1.msra.mxu0 0.0
      %8749 = vmatprep.subr.mxu0 0.0
      %8750 = vmatpush1.msra.mxu0 0.0
      %8751 = vmatprep.subr.mxu0 0.0
      %8752 = vmatpush1.msra.mxu0 0.0
      %8753 = vmatprep.subr.mxu0 0.0
      %8754 = vmatpush1.msra.mxu0 0.0
      %8755 = vmatprep.subr.mxu0 0.0
      %8756 = vmatpush1.msra.mxu0 0.0
      %8757 = vmatprep.subr.mxu0 0.0
      %8758 = vmatpush1.msra.mxu0 0.0
      %8759 = vmatprep.subr.mxu0 0.0
      %8760 = vmatpush1.msra.mxu0 0.0
      %8761 = vmatprep.subr.mxu0 0.0
      %8762 = vmatpush1.msra.mxu0 0.0
      %8763 = vmatprep.subr.mxu0 0.0
      %8764 = vmatpush1.msra.mxu0 0.0
      %8765 = vmatprep.subr.mxu0 0.0
      %8766 = vmatpush1.msra.mxu0 0.0
      %8767 = vmatprep.subr.mxu0 0.0
      %8768 = vmatpush1.msra.mxu0 0.0
      %8769 = vmatprep.subr.mxu0 0.0
      %8770 = vmatpush1.msra.mxu0 0.0
      %8771 = vmatprep.subr.mxu0 0.0
      %8772 = vmatpush1.msra.mxu0 0.0
      %8773 = vmatprep.subr.mxu0 0.0
      %8774 = vmatpush1.msra.mxu0 0.0
      %8775 = vmatprep.subr.mxu0 0.0
      %8776 = vmatpush1.msra.mxu0 0.0
      %8777 = vmatprep.subr.mxu0 0.0
      %8778 = vmatpush1.msra.mxu0 0.0
      %8779 = vmatprep.subr.mxu0 0.0
      %8780 = vmatpush1.msra.mxu0 0.0
      %8781 = vmatprep.subr.mxu0 0.0
      %8782 = vmatpush1.msra.mxu0 0.0
      %8783 = vmatprep.subr.mxu0 0.0
      %8784 = vmatpush1.msra.mxu0 0.0
      %8785 = vmatprep.subr.mxu0 0.0
      %8786 = vmatpush1.msra.mxu0 0.0
      %8787 = vmatprep.subr.mxu0 0.0
      %8788 = vmatpush1.msra.mxu0 0.0
      %8789 = vmatprep.mubr.f32.mxu0 0.0
      %8790 = vmatmul.mubr.f32.gmra.mrb[0].mxu0 %v8630
      %v8791 = vpop.f32.mrb[0].mxu0
      %v8792 = vadd.f32 0.0, %v8791
      %v8793 = vpop.f32.mrb[0].mxu0
      %8794 = vmatprep.mubr.f32.mxu0 0.0
      %8795 = vmatmul.mubr.f32.gmra.mrb[0].mxu0 %v8633
      %v8796 = vpop.f32.mrb[0].mxu0
      %v8797 = vadd.f32 0.0, %v8796
      %v8798 = vpop.f32.mrb[0].mxu0
      %8799 = vmatprep.mubr.f32.mxu0 0.0
      %8800 = vmatmul.mubr.f32.gmra.mrb[0].mxu0 %v8636
      %v8801 = vpop.f32.mrb[0].mxu0
      %v8802 = vadd.f32 0.0, %v8801
      %v8803 = vpop.f32.mrb[0].mxu0
      %8804 = vmatprep.mubr.f32.mxu0 0.0
      %8805 = vmatmul.mubr.f32.gmra.mrb[0].mxu0 %v8639
      %v8806 = vpop.f32.mrb[0].mxu0
      %v8807 = vadd.f32 0.0, %v8806
      %v8808 = vpop.f32.mrb[0].mxu0
      %8809 = vmatprep.mubr.f32.mxu0 0.0
      %8810 = vmatmul.mubr.f32.gmra.mrb[0].mxu0 %v8642
      %v8811 = vpop.f32.mrb[0].mxu0
      %v8812 = vadd.f32 0.0, %v8811
      %v8813 = vpop.f32.mrb[0].mxu0
      %8814 = vmatprep.mubr.f32.mxu0 0.0
      %8815 = vmatmul.mubr.f32.gmra.mrb[0].mxu0 %v8645
      %v8816 = vpop.f32.mrb[0].mxu0
      %v8817 = vadd.f32 0.0, %v8816
      %v8818 = vpop.f32.mrb[0].mxu0
      %8819 = vmatprep.mubr.f32.mxu0 0.0
      %8820 = vmatmul.mubr.f32.gmra.mrb[0].mxu0 %v8648
      %v8821 = vpop.f32.mrb[0].mxu0
      %v8822 = vadd.f32 0.0, %v8821
      %v8823 = vpop.f32.mrb[0].mxu0
      %8824 = vmatprep.mubr.f32.mxu0 0.0
      %8825 = vmatmul.mubr.f32.gmra.mrb[0].mxu0 %v8651
      %v8826 = vpop.f32.mrb[0].mxu0
      %v8827 = vadd.f32 0.0, %v8826
      %v8828 = vpop.f32.mrb[0].mxu0
      %8829 = vmatprep.mubr.f32.mxu0 0.0
      %8830 = vmatmul.mubr.f32.gmra.mrb[0].mxu0 %v8654
      %v8831 = vpop.f32.mrb[0].mxu0
      %v8832 = vadd.f32 0.0, %v8831
      %v8833 = vpop.f32.mrb[0].mxu0
      %8834 = vmatprep.mubr.f32.mxu0 0.0
      %8835 = vmatmul.mubr.f32.gmra.mrb[0].mxu0 %v8657
      %v8836 = vpop.f32.mrb[0].mxu0
      %v8837 = vadd.f32 0.0, %v8836
      %v8838 = vpop.f32.mrb[0].mxu0
      %8839 = vmatprep.mubr.f32.mxu0 0.0
      %8840 = vmatmul.mubr.f32.gmra.mrb[0].mxu0 %v8660
      %v8841 = vpop.f32.mrb[0].mxu0
      %v8842 = vadd.f32 0.0, %v8841
      %v8843 = vpop.f32.mrb[0].mxu0
      %8844 = vmatprep.mubr.f32.mxu0 0.0
      %8845 = vmatmul.mubr.f32.gmra.mrb[0].mxu0 %v8663
      %v8846 = vpop.f32.mrb[0].mxu0
      %v8847 = vadd.f32 0.0, %v8846
      %v8848 = vpop.f32.mrb[0].mxu0
      %8849 = vmatprep.mubr.f32.mxu0 0.0
      %8850 = vmatmul.mubr.f32.gmra.mrb[0].mxu0 %v8666
      %v8851 = vpop.f32.mrb[0].mxu0
      %v8852 = vadd.f32 0.0, %v8851
      %v8853 = vpop.f32.mrb[0].mxu0
      %8854 = vmatprep.mubr.f32.mxu0 0.0
      %8855 = vmatmul.mubr.f32.gmra.mrb[0].mxu0 %v8669
      %v8856 = vpop.f32.mrb[0].mxu0
      %v8857 = vadd.f32 0.0, %v8856
      %v8858 = vpop.f32.mrb[0].mxu0
      %8859 = vmatprep.mubr.f32.mxu0 0.0
      %8860 = vmatmul.mubr.f32.gmra.mrb[0].mxu0 %v8672
      %v8861 = vpop.f32.mrb[0].mxu0
      %v8862 = vadd.f32 0.0, %v8861
      %v8863 = vpop.f32.mrb[0].mxu0
      %8864 = vmatprep.mubr.f32.mxu0 0.0
      %8865 = vmatmul.mubr.f32.gmra.mrb[0].mxu0 %v8675
      %v8866 = vpop.f32.mrb[0].mxu0
      %v8867 = vadd.f32 0.0, %v8866
      %v8868 = vpop.f32.mrb[0].mxu0
      %8869 = vmatprep.mubr.f32.mxu0 0.0
      %8870 = vmatmul.mubr.f32.gmra.mrb[0].mxu0 %v8678
      %v8871 = vpop.f32.mrb[0].mxu0
      %v8872 = vadd.f32 0.0, %v8871
      %v8873 = vpop.f32.mrb[0].mxu0
      %8874 = vmatprep.mubr.f32.mxu0 0.0
      %8875 = vmatmul.mubr.f32.gmra.mrb[0].mxu0 %v8681
      %v8876 = vpop.f32.mrb[0].mxu0
      %v8877 = vadd.f32 0.0, %v8876
      %v8878 = vpop.f32.mrb[0].mxu0
      %8879 = vmatprep.mubr.f32.mxu0 0.0
      %8880 = vmatmul.mubr.f32.gmra.mrb[0].mxu0 %v8684
      %v8881 = vpop.f32.mrb[0].mxu0
      %v8882 = vadd.f32 0.0, %v8881
      %v8883 = vpop.f32.mrb[0].mxu0
      %8884 = vmatprep.mubr.f32.mxu0 0.0
      %8885 = vmatmul.mubr.f32.gmra.mrb[0].mxu0 %v8687
      %v8886 = vpop.f32.mrb[0].mxu0
      %v8887 = vadd.f32 0.0, %v8886
      %v8888 = vpop.f32.mrb[0].mxu0
      %8889 = vmatprep.mubr.f32.mxu0 0.0
      %8890 = vmatmul.mubr.f32.gmra.mrb[0].mxu0 %v8690
      %v8891 = vpop.f32.mrb[0].mxu0
      %v8892 = vadd.f32 0.0, %v8891
      %v8893 = vpop.f32.mrb[0].mxu0
      %8894 = vmatprep.mubr.f32.mxu0 0.0
      %8895 = vmatmul.mubr.f32.gmra.mrb[0].mxu0 %v8693
      %v8896 = vpop.f32.mrb[0].mxu0
      %v8897 = vadd.f32 0.0, %v8896
      %v8898 = vpop.f32.mrb[0].mxu0
      %8899 = vmatprep.mubr.f32.mxu0 0.0
      %8900 = vmatmul.mubr.f32.gmra.mrb[0].mxu0 %v8696
      %v8901 = vpop.f32.mrb[0].mxu0
      %v8902 = vadd.f32 0.0, %v8901
      %v8903 = vpop.f32.mrb[0].mxu0
      %8904 = vmatprep.mubr.f32.mxu0 0.0
      %8905 = vmatmul.mubr.f32.gmra.mrb[0].mxu0 %v8699
      %v8906 = vpop.f32.mrb[0].mxu0
      %v8907 = vadd.f32 0.0, %v8906
      %v8908 = vpop.f32.mrb[0].mxu0
      %8909 = vmatprep.mubr.f32.mxu0 0.0
      %8910 = vmatmul.mubr.f32.gmra.mrb[0].mxu0 %v8702
      %v8911 = vpop.f32.mrb[0].mxu0
      %v8912 = vadd.f32 0.0, %v8911
      %v8913 = vpop.f32.mrb[0].mxu0
      %8914 = vmatprep.mubr.f32.mxu0 0.0
      %8915 = vmatmul.mubr.f32.gmra.mrb[0].mxu0 %v8705
      %v8916 = vpop.f32.mrb[0].mxu0
      %v8917 = vadd.f32 0.0, %v8916
      %v8918 = vpop.f32.mrb[0].mxu0
      %8919 = vmatprep.mubr.f32.mxu0 0.0
      %8920 = vmatmul.mubr.f32.gmra.mrb[0].mxu0 %v8708
      %v8921 = vpop.f32.mrb[0].mxu0
      %v8922 = vadd.f32 0.0, %v8921
      %v8923 = vpop.f32.mrb[0].mxu0
      %8924 = vmatprep.mubr.f32.mxu0 0.0
      %8925 = vmatmul.mubr.f32.gmra.mrb[0].mxu0 %v8711
      %v8926 = vpop.f32.mrb[0].mxu0
      %v8927 = vadd.f32 0.0, %v8926
      %v8928 = vpop.f32.mrb[0].mxu0
      %8929 = vmatprep.mubr.f32.mxu0 0.0
      %8930 = vmatmul.mubr.f32.gmra.mrb[0].mxu0 %v8714
      %v8931 = vpop.f32.mrb[0].mxu0
      %v8932 = vadd.f32 0.0, %v8931
      %v8933 = vpop.f32.mrb[0].mxu0
      %8934 = vmatprep.mubr.f32.mxu0 0.0
      %8935 = vmatmul.mubr.f32.gmra.mrb[0].mxu0 %v8717
      %v8936 = vpop.f32.mrb[0].mxu0
      %v8937 = vadd.f32 0.0, %v8936
      %v8938 = vpop.f32.mrb[0].mxu0
      %8939 = vmatprep.mubr.f32.mxu0 0.0
      %8940 = vmatmul.mubr.f32.gmra.mrb[0].mxu0 %v8720
      %v8941 = vpop.f32.mrb[0].mxu0
      %v8942 = vadd.f32 0.0, %v8941
      %v8943 = vpop.f32.mrb[0].mxu0
      %8944 = vmatprep.mubr.f32.mxu0 0.0
      %8945 = vmatmul.mubr.f32.gmra.mrb[0].mxu0 %v8723
      %v8946 = vpop.f32.mrb[0].mxu0
      %v8947 = vadd.f32 0.0, %v8946
      %v8948 = vpop.f32.mrb[0].mxu0
      %8949 = vdwg.mxu0
      %v8950 = vadd.f32 %v8562, %v8792
      %v8951 = vadd.f32 %v8563, %v8797
      %v8952 = vadd.f32 %v8564, %v8802
      %v8953 = vadd.f32 %v8565, %v8807
      %v8954 = vadd.f32 %v8566, %v8812
      %v8955 = vadd.f32 %v8567, %v8817
      %v8956 = vadd.f32 %v8568, %v8822
      %v8957 = vadd.f32 %v8569, %v8827
      %v8958 = vadd.f32 %v8570, %v8832
      %v8959 = vadd.f32 %v8571, %v8837
      %v8960 = vadd.f32 %v8572, %v8842
      %v8961 = vadd.f32 %v8573, %v8847
      %v8962 = vadd.f32 %v8574, %v8852
      %v8963 = vadd.f32 %v8575, %v8857
      %v8964 = vadd.f32 %v8576, %v8862
      %v8965 = vadd.f32 %v8577, %v8867
      %v8966 = vadd.f32 %v8578, %v8872
      %v8967 = vadd.f32 %v8579, %v8877
      %v8968 = vadd.f32 %v8580, %v8882
      %v8969 = vadd.f32 %v8581, %v8887
      %v8970 = vadd.f32 %v8582, %v8892
      %v8971 = vadd.f32 %v8583, %v8897
      %v8972 = vadd.f32 %v8584, %v8902
      %v8973 = vadd.f32 %v8585, %v8907
      %v8974 = vadd.f32 %v8586, %v8912
      %v8975 = vadd.f32 %v8587, %v8917
      %v8976 = vadd.f32 %v8588, %v8922
      %v8977 = vadd.f32 %v8589, %v8927
      %v8978 = vadd.f32 %v8590, %v8932
      %v8979 = vadd.f32 %v8591, %v8937
      %v8980 = vadd.f32 %v8592, %v8942
      %v8981 = vadd.f32 %v8593, %v8947
      %v8982 = vld [vmem:[%s11] sm:$0x1]
      %v8984 = vlaneseq
      %v8985 = vshrl.u32 %v8984, 7
      %v8986 = vsub.s32 0, %v8985
      %v8987 = vrot.slane %v8982, %v8986
      %v8989 = vadd.f32 %v8950, %v8987
      %v8990 = vadd.f32 %v8951, %v8987
      %v8991 = vadd.f32 %v8952, %v8987
      %v8992 = vadd.f32 %v8953, %v8987
      %v8993 = vadd.f32 %v8954, %v8987
      %v8994 = vadd.f32 %v8955, %v8987
      %v8995 = vadd.f32 %v8956, %v8987
      %v8996 = vadd.f32 %v8957, %v8987
      %v8997 = vadd.f32 %v8958, %v8987
      %v8998 = vadd.f32 %v8959, %v8987
      %v8999 = vadd.f32 %v8960, %v8987
      %v9000 = vadd.f32 %v8961, %v8987
      %v9001 = vadd.f32 %v8962, %v8987
      %v9002 = vadd.f32 %v8963, %v8987
      %v9003 = vadd.f32 %v8964, %v8987
      %v9004 = vadd.f32 %v8965, %v8987
      %v9005 = vadd.f32 %v8966, %v8987
      %v9006 = vadd.f32 %v8967, %v8987
      %v9007 = vadd.f32 %v8968, %v8987
      %v9008 = vadd.f32 %v8969, %v8987
      %v9009 = vadd.f32 %v8970, %v8987
      %v9010 = vadd.f32 %v8971, %v8987
      %v9011 = vadd.f32 %v8972, %v8987
      %v9012 = vadd.f32 %v8973, %v8987
      %v9013 = vadd.f32 %v8974, %v8987
      %v9014 = vadd.f32 %v8975, %v8987
      %v9015 = vadd.f32 %v8976, %v8987
      %v9016 = vadd.f32 %v8977, %v8987
      %v9017 = vadd.f32 %v8978, %v8987
      %v9018 = vadd.f32 %v8979, %v8987
      %v9019 = vadd.f32 %v8980, %v8987
      %v9020 = vadd.f32 %v8981, %v8987
      %v9021 = vld [vmem:[%s12] sm:$0xff]
      %v9022 = vld [vmem:[%s13] sm:$0x1]
      %v9024 = vlaneseq
      %v9025 = vshrl.u32 %v9024, 7
      %v9026 = vsub.s32 0, %v9025
      %v9027 = vrot.slane %v9022, %v9026
      %v9030 = vsel %vm517, %v482, 0
      %v9033 = vsel %vm517, %v483, 0
      %v9036 = vsel %vm517, %v484, 0
      %v9039 = vsel %vm517, %v485, 0
      %v9042 = vsel %vm517, %v486, 0
      %v9045 = vsel %vm517, %v487, 0
      %v9048 = vsel %vm517, %v488, 0
      %v9051 = vsel %vm517, %v489, 0
      %v9054 = vsel %vm517, %v490, 0
      %v9057 = vsel %vm517, %v491, 0
      %v9060 = vsel %vm517, %v492, 0
      %v9063 = vsel %vm517, %v493, 0
      %v9066 = vsel %vm517, %v494, 0
      %v9069 = vsel %vm517, %v495, 0
      %v9072 = vsel %vm517, %v496, 0
      %v9075 = vsel %vm517, %v497, 0
      %v9078 = vsel %vm517, %v498, 0
      %v9081 = vsel %vm517, %v499, 0
      %v9084 = vsel %vm517, %v500, 0
      %v9087 = vsel %vm517, %v501, 0
      %v9090 = vsel %vm517, %v502, 0
      %v9093 = vsel %vm517, %v503, 0
      %v9096 = vsel %vm517, %v504, 0
      %v9099 = vsel %vm517, %v505, 0
      %v9102 = vsel %vm517, %v506, 0
      %v9105 = vsel %vm517, %v507, 0
      %v9108 = vsel %vm517, %v508, 0
      %v9111 = vsel %vm517, %v509, 0
      %v9114 = vsel %vm517, %v510, 0
      %v9117 = vsel %vm517, %v511, 0
      %v9120 = vsel %vm517, %v512, 0
      %v9123 = vsel %vm517, %v513, 0
      %9125 = vmatprep.subr.mxu0 0.0
      %9126 = vmatpush1.msra.mxu0 %v9021
      %9127 = vmatprep.subr.mxu0 0.0
      %9128 = vmatpush1.msra.mxu0 0.0
      %9129 = vmatprep.subr.mxu0 0.0
      %9130 = vmatpush1.msra.mxu0 0.0
      %9131 = vmatprep.subr.mxu0 0.0
      %9132 = vmatpush1.msra.mxu0 0.0
      %9133 = vmatprep.subr.mxu0 0.0
      %9134 = vmatpush1.msra.mxu0 0.0
      %9135 = vmatprep.subr.mxu0 0.0
      %9136 = vmatpush1.msra.mxu0 0.0
      %9137 = vmatprep.subr.mxu0 0.0
      %9138 = vmatpush1.msra.mxu0 0.0
      %9139 = vmatprep.subr.mxu0 0.0
      %9140 = vmatpush1.msra.mxu0 0.0
      %9141 = vmatprep.subr.mxu0 0.0
      %9142 = vmatpush1.msra.mxu0 0.0
      %9143 = vmatprep.subr.mxu0 0.0
      %9144 = vmatpush1.msra.mxu0 0.0
      %9145 = vmatprep.subr.mxu0 0.0
      %9146 = vmatpush1.msra.mxu0 0.0
      %9147 = vmatprep.subr.mxu0 0.0
      %9148 = vmatpush1.msra.mxu0 0.0
      %9149 = vmatprep.subr.mxu0 0.0
      %9150 = vmatpush1.msra.mxu0 0.0
      %9151 = vmatprep.subr.mxu0 0.0
      %9152 = vmatpush1.msra.mxu0 0.0
      %9153 = vmatprep.subr.mxu0 0.0
      %9154 = vmatpush1.msra.mxu0 0.0
      %9155 = vmatprep.subr.mxu0 0.0
      %9156 = vmatpush1.msra.mxu0 0.0
      %9157 = vmatprep.subr.mxu0 0.0
      %9158 = vmatpush1.msra.mxu0 0.0
      %9159 = vmatprep.subr.mxu0 0.0
      %9160 = vmatpush1.msra.mxu0 0.0
      %9161 = vmatprep.subr.mxu0 0.0
      %9162 = vmatpush1.msra.mxu0 0.0
      %9163 = vmatprep.subr.mxu0 0.0
      %9164 = vmatpush1.msra.mxu0 0.0
      %9165 = vmatprep.subr.mxu0 0.0
      %9166 = vmatpush1.msra.mxu0 0.0
      %9167 = vmatprep.subr.mxu0 0.0
      %9168 = vmatpush1.msra.mxu0 0.0
      %9169 = vmatprep.subr.mxu0 0.0
      %9170 = vmatpush1.msra.mxu0 0.0
      %9171 = vmatprep.subr.mxu0 0.0
      %9172 = vmatpush1.msra.mxu0 0.0
      %9173 = vmatprep.subr.mxu0 0.0
      %9174 = vmatpush1.msra.mxu0 0.0
      %9175 = vmatprep.subr.mxu0 0.0
      %9176 = vmatpush1.msra.mxu0 0.0
      %9177 = vmatprep.subr.mxu0 0.0
      %9178 = vmatpush1.msra.mxu0 0.0
      %9179 = vmatprep.subr.mxu0 0.0
      %9180 = vmatpush1.msra.mxu0 0.0
      %9181 = vmatprep.subr.mxu0 0.0
      %9182 = vmatpush1.msra.mxu0 0.0
      %9183 = vmatprep.subr.mxu0 0.0
      %9184 = vmatpush1.msra.mxu0 0.0
      %9185 = vmatprep.subr.mxu0 0.0
      %9186 = vmatpush1.msra.mxu0 0.0
      %9187 = vmatprep.subr.mxu0 0.0
      %9188 = vmatpush1.msra.mxu0 0.0
      %9189 = vmatprep.mubr.f32.mxu0 0.0
      %9190 = vmatmul.mubr.f32.gmra.mrb[0].mxu0 %v9030
      %v9191 = vpop.f32.mrb[0].mxu0
      %v9192 = vadd.f32 %v9027, %v9191
      %v9193 = vpop.f32.mrb[0].mxu0
      %9194 = vmatprep.mubr.f32.mxu0 0.0
      %9195 = vmatmul.mubr.f32.gmra.mrb[0].mxu0 %v9033
      %v9196 = vpop.f32.mrb[0].mxu0
      %v9197 = vadd.f32 %v9027, %v9196
      %v9198 = vpop.f32.mrb[0].mxu0
      %9199 = vmatprep.mubr.f32.mxu0 0.0
      %9200 = vmatmul.mubr.f32.gmra.mrb[0].mxu0 %v9036
      %v9201 = vpop.f32.mrb[0].mxu0
      %v9202 = vadd.f32 %v9027, %v9201
      %v9203 = vpop.f32.mrb[0].mxu0
      %9204 = vmatprep.mubr.f32.mxu0 0.0
      %9205 = vmatmul.mubr.f32.gmra.mrb[0].mxu0 %v9039
      %v9206 = vpop.f32.mrb[0].mxu0
      %v9207 = vadd.f32 %v9027, %v9206
      %v9208 = vpop.f32.mrb[0].mxu0
      %9209 = vmatprep.mubr.f32.mxu0 0.0
      %9210 = vmatmul.mubr.f32.gmra.mrb[0].mxu0 %v9042
      %v9211 = vpop.f32.mrb[0].mxu0
      %v9212 = vadd.f32 %v9027, %v9211
      %v9213 = vpop.f32.mrb[0].mxu0
      %9214 = vmatprep.mubr.f32.mxu0 0.0
      %9215 = vmatmul.mubr.f32.gmra.mrb[0].mxu0 %v9045
      %v9216 = vpop.f32.mrb[0].mxu0
      %v9217 = vadd.f32 %v9027, %v9216
      %v9218 = vpop.f32.mrb[0].mxu0
      %9219 = vmatprep.mubr.f32.mxu0 0.0
      %9220 = vmatmul.mubr.f32.gmra.mrb[0].mxu0 %v9048
      %v9221 = vpop.f32.mrb[0].mxu0
      %v9222 = vadd.f32 %v9027, %v9221
      %v9223 = vpop.f32.mrb[0].mxu0
      %9224 = vmatprep.mubr.f32.mxu0 0.0
      %9225 = vmatmul.mubr.f32.gmra.mrb[0].mxu0 %v9051
      %v9226 = vpop.f32.mrb[0].mxu0
      %v9227 = vadd.f32 %v9027, %v9226
      %v9228 = vpop.f32.mrb[0].mxu0
      %9229 = vmatprep.mubr.f32.mxu0 0.0
      %9230 = vmatmul.mubr.f32.gmra.mrb[0].mxu0 %v9054
      %v9231 = vpop.f32.mrb[0].mxu0
      %v9232 = vadd.f32 %v9027, %v9231
      %v9233 = vpop.f32.mrb[0].mxu0
      %9234 = vmatprep.mubr.f32.mxu0 0.0
      %9235 = vmatmul.mubr.f32.gmra.mrb[0].mxu0 %v9057
      %v9236 = vpop.f32.mrb[0].mxu0
      %v9237 = vadd.f32 %v9027, %v9236
      %v9238 = vpop.f32.mrb[0].mxu0
      %9239 = vmatprep.mubr.f32.mxu0 0.0
      %9240 = vmatmul.mubr.f32.gmra.mrb[0].mxu0 %v9060
      %v9241 = vpop.f32.mrb[0].mxu0
      %v9242 = vadd.f32 %v9027, %v9241
      %v9243 = vpop.f32.mrb[0].mxu0
      %9244 = vmatprep.mubr.f32.mxu0 0.0
      %9245 = vmatmul.mubr.f32.gmra.mrb[0].mxu0 %v9063
      %v9246 = vpop.f32.mrb[0].mxu0
      %v9247 = vadd.f32 %v9027, %v9246
      %v9248 = vpop.f32.mrb[0].mxu0
      %9249 = vmatprep.mubr.f32.mxu0 0.0
      %9250 = vmatmul.mubr.f32.gmra.mrb[0].mxu0 %v9066
      %v9251 = vpop.f32.mrb[0].mxu0
      %v9252 = vadd.f32 %v9027, %v9251
      %v9253 = vpop.f32.mrb[0].mxu0
      %9254 = vmatprep.mubr.f32.mxu0 0.0
      %9255 = vmatmul.mubr.f32.gmra.mrb[0].mxu0 %v9069
      %v9256 = vpop.f32.mrb[0].mxu0
      %v9257 = vadd.f32 %v9027, %v9256
      %v9258 = vpop.f32.mrb[0].mxu0
      %9259 = vmatprep.mubr.f32.mxu0 0.0
      %9260 = vmatmul.mubr.f32.gmra.mrb[0].mxu0 %v9072
      %v9261 = vpop.f32.mrb[0].mxu0
      %v9262 = vadd.f32 %v9027, %v9261
      %v9263 = vpop.f32.mrb[0].mxu0
      %9264 = vmatprep.mubr.f32.mxu0 0.0
      %9265 = vmatmul.mubr.f32.gmra.mrb[0].mxu0 %v9075
      %v9266 = vpop.f32.mrb[0].mxu0
      %v9267 = vadd.f32 %v9027, %v9266
      %v9268 = vpop.f32.mrb[0].mxu0
      %9269 = vmatprep.mubr.f32.mxu0 0.0
      %9270 = vmatmul.mubr.f32.gmra.mrb[0].mxu0 %v9078
      %v9271 = vpop.f32.mrb[0].mxu0
      %v9272 = vadd.f32 %v9027, %v9271
      %v9273 = vpop.f32.mrb[0].mxu0
      %9274 = vmatprep.mubr.f32.mxu0 0.0
      %9275 = vmatmul.mubr.f32.gmra.mrb[0].mxu0 %v9081
      %v9276 = vpop.f32.mrb[0].mxu0
      %v9277 = vadd.f32 %v9027, %v9276
      %v9278 = vpop.f32.mrb[0].mxu0
      %9279 = vmatprep.mubr.f32.mxu0 0.0
      %9280 = vmatmul.mubr.f32.gmra.mrb[0].mxu0 %v9084
      %v9281 = vpop.f32.mrb[0].mxu0
      %v9282 = vadd.f32 %v9027, %v9281
      %v9283 = vpop.f32.mrb[0].mxu0
      %9284 = vmatprep.mubr.f32.mxu0 0.0
      %9285 = vmatmul.mubr.f32.gmra.mrb[0].mxu0 %v9087
      %v9286 = vpop.f32.mrb[0].mxu0
      %v9287 = vadd.f32 %v9027, %v9286
      %v9288 = vpop.f32.mrb[0].mxu0
      %9289 = vmatprep.mubr.f32.mxu0 0.0
      %9290 = vmatmul.mubr.f32.gmra.mrb[0].mxu0 %v9090
      %v9291 = vpop.f32.mrb[0].mxu0
      %v9292 = vadd.f32 %v9027, %v9291
      %v9293 = vpop.f32.mrb[0].mxu0
      %9294 = vmatprep.mubr.f32.mxu0 0.0
      %9295 = vmatmul.mubr.f32.gmra.mrb[0].mxu0 %v9093
      %v9296 = vpop.f32.mrb[0].mxu0
      %v9297 = vadd.f32 %v9027, %v9296
      %v9298 = vpop.f32.mrb[0].mxu0
      %9299 = vmatprep.mubr.f32.mxu0 0.0
      %9300 = vmatmul.mubr.f32.gmra.mrb[0].mxu0 %v9096
      %v9301 = vpop.f32.mrb[0].mxu0
      %v9302 = vadd.f32 %v9027, %v9301
      %v9303 = vpop.f32.mrb[0].mxu0
      %9304 = vmatprep.mubr.f32.mxu0 0.0
      %9305 = vmatmul.mubr.f32.gmra.mrb[0].mxu0 %v9099
      %v9306 = vpop.f32.mrb[0].mxu0
      %v9307 = vadd.f32 %v9027, %v9306
      %v9308 = vpop.f32.mrb[0].mxu0
      %9309 = vmatprep.mubr.f32.mxu0 0.0
      %9310 = vmatmul.mubr.f32.gmra.mrb[0].mxu0 %v9102
      %v9311 = vpop.f32.mrb[0].mxu0
      %v9312 = vadd.f32 %v9027, %v9311
      %v9313 = vpop.f32.mrb[0].mxu0
      %9314 = vmatprep.mubr.f32.mxu0 0.0
      %9315 = vmatmul.mubr.f32.gmra.mrb[0].mxu0 %v9105
      %v9316 = vpop.f32.mrb[0].mxu0
      %v9317 = vadd.f32 %v9027, %v9316
      %v9318 = vpop.f32.mrb[0].mxu0
      %9319 = vmatprep.mubr.f32.mxu0 0.0
      %9320 = vmatmul.mubr.f32.gmra.mrb[0].mxu0 %v9108
      %v9321 = vpop.f32.mrb[0].mxu0
      %v9322 = vadd.f32 %v9027, %v9321
      %v9323 = vpop.f32.mrb[0].mxu0
      %9324 = vmatprep.mubr.f32.mxu0 0.0
      %9325 = vmatmul.mubr.f32.gmra.mrb[0].mxu0 %v9111
      %v9326 = vpop.f32.mrb[0].mxu0
      %v9327 = vadd.f32 %v9027, %v9326
      %v9328 = vpop.f32.mrb[0].mxu0
      %9329 = vmatprep.mubr.f32.mxu0 0.0
      %9330 = vmatmul.mubr.f32.gmra.mrb[0].mxu0 %v9114
      %v9331 = vpop.f32.mrb[0].mxu0
      %v9332 = vadd.f32 %v9027, %v9331
      %v9333 = vpop.f32.mrb[0].mxu0
      %9334 = vmatprep.mubr.f32.mxu0 0.0
      %9335 = vmatmul.mubr.f32.gmra.mrb[0].mxu0 %v9117
      %v9336 = vpop.f32.mrb[0].mxu0
      %v9337 = vadd.f32 %v9027, %v9336
      %v9338 = vpop.f32.mrb[0].mxu0
      %9339 = vmatprep.mubr.f32.mxu0 0.0
      %9340 = vmatmul.mubr.f32.gmra.mrb[0].mxu0 %v9120
      %v9341 = vpop.f32.mrb[0].mxu0
      %v9342 = vadd.f32 %v9027, %v9341
      %v9343 = vpop.f32.mrb[0].mxu0
      %9344 = vmatprep.mubr.f32.mxu0 0.0
      %9345 = vmatmul.mubr.f32.gmra.mrb[0].mxu0 %v9123
      %v9346 = vpop.f32.mrb[0].mxu0
      %v9347 = vadd.f32 %v9027, %v9346
      %v9348 = vpop.f32.mrb[0].mxu0
      %9349 = vdwg.mxu0
      %v9350 = vadd.f32 %v8989, %v9192
      %v9351 = vadd.f32 %v8990, %v9197
      %v9352 = vadd.f32 %v8991, %v9202
      %v9353 = vadd.f32 %v8992, %v9207
      %v9354 = vadd.f32 %v8993, %v9212
      %v9355 = vadd.f32 %v8994, %v9217
      %v9356 = vadd.f32 %v8995, %v9222
      %v9357 = vadd.f32 %v8996, %v9227
      %v9358 = vadd.f32 %v8997, %v9232
      %v9359 = vadd.f32 %v8998, %v9237
      %v9360 = vadd.f32 %v8999, %v9242
      %v9361 = vadd.f32 %v9000, %v9247
      %v9362 = vadd.f32 %v9001, %v9252
      %v9363 = vadd.f32 %v9002, %v9257
      %v9364 = vadd.f32 %v9003, %v9262
      %v9365 = vadd.f32 %v9004, %v9267
      %v9366 = vadd.f32 %v9005, %v9272
      %v9367 = vadd.f32 %v9006, %v9277
      %v9368 = vadd.f32 %v9007, %v9282
      %v9369 = vadd.f32 %v9008, %v9287
      %v9370 = vadd.f32 %v9009, %v9292
      %v9371 = vadd.f32 %v9010, %v9297
      %v9372 = vadd.f32 %v9011, %v9302
      %v9373 = vadd.f32 %v9012, %v9307
      %v9374 = vadd.f32 %v9013, %v9312
      %v9375 = vadd.f32 %v9014, %v9317
      %v9376 = vadd.f32 %v9015, %v9322
      %v9377 = vadd.f32 %v9016, %v9327
      %v9378 = vadd.f32 %v9017, %v9332
      %v9379 = vadd.f32 %v9018, %v9337
      %v9380 = vadd.f32 %v9019, %v9342
      %v9381 = vadd.f32 %v9020, %v9347
      %9382 = vst.msk [vmem:[%s481] sm:$0xff] %vm4786, %v9350
      %9383 = vst.msk [vmem:[%s481 + $0x8] sm:$0xff] %vm4786, %v9351
      %9384 = vst.msk [vmem:[%s481 + $0x10] sm:$0xff] %vm4786, %v9352
      %9385 = vst.msk [vmem:[%s481 + $0x18] sm:$0xff] %vm4786, %v9353
      %9386 = vst.msk [vmem:[%s481 + $0x20] sm:$0xff] %vm4786, %v9354
      %9387 = vst.msk [vmem:[%s481 + $0x28] sm:$0xff] %vm4786, %v9355
      %9388 = vst.msk [vmem:[%s481 + $0x30] sm:$0xff] %vm4786, %v9356
      %9389 = vst.msk [vmem:[%s481 + $0x38] sm:$0xff] %vm4786, %v9357
      %9390 = vst.msk [vmem:[%s481 + $0x40] sm:$0xff] %vm4786, %v9358
      %9391 = vst.msk [vmem:[%s481 + $0x48] sm:$0xff] %vm4786, %v9359
      %9392 = vst.msk [vmem:[%s481 + $0x50] sm:$0xff] %vm4786, %v9360
      %9393 = vst.msk [vmem:[%s481 + $0x58] sm:$0xff] %vm4786, %v9361
      %9394 = vst.msk [vmem:[%s481 + $0x60] sm:$0xff] %vm4786, %v9362
      %9395 = vst.msk [vmem:[%s481 + $0x68] sm:$0xff] %vm4786, %v9363
      %9396 = vst.msk [vmem:[%s481 + $0x70] sm:$0xff] %vm4786, %v9364
      %9397 = vst.msk [vmem:[%s481 + $0x78] sm:$0xff] %vm4786, %v9365
      %9398 = vst.msk [vmem:[%s481 + $0x80] sm:$0xff] %vm4786, %v9366
      %9399 = vst.msk [vmem:[%s481 + $0x88] sm:$0xff] %vm4786, %v9367
      %9400 = vst.msk [vmem:[%s481 + $0x90] sm:$0xff] %vm4786, %v9368
      %9401 = vst.msk [vmem:[%s481 + $0x98] sm:$0xff] %vm4786, %v9369
      %9402 = vst.msk [vmem:[%s481 + $0xa0] sm:$0xff] %vm4786, %v9370
      %9403 = vst.msk [vmem:[%s481 + $0xa8] sm:$0xff] %vm4786, %v9371
      %9404 = vst.msk [vmem:[%s481 + $0xb0] sm:$0xff] %vm4786, %v9372
      %9405 = vst.msk [vmem:[%s481 + $0xb8] sm:$0xff] %vm4786, %v9373
      %9406 = vst.msk [vmem:[%s481 + $0xc0] sm:$0xff] %vm4786, %v9374
      %9407 = vst.msk [vmem:[%s481 + $0xc8] sm:$0xff] %vm4786, %v9375
      %9408 = vst.msk [vmem:[%s481 + $0xd0] sm:$0xff] %vm4786, %v9376
      %9409 = vst.msk [vmem:[%s481 + $0xd8] sm:$0xff] %vm4786, %v9377
      %9410 = vst.msk [vmem:[%s481 + $0xe0] sm:$0xff] %vm4786, %v9378
      %9411 = vst.msk [vmem:[%s481 + $0xe8] sm:$0xff] %vm4786, %v9379
      %9412 = vst.msk [vmem:[%s481 + $0xf0] sm:$0xff] %vm4786, %v9380
      %9413 = vst.msk [vmem:[%s481 + $0xf8] sm:$0xff] %vm4786, %v9381
      %p9414 = scmp.lt.s32.totalorder %s25, 1
      %s9415 = scalar_select %p9414, %s25, 1
      %s9416 = smul.addr %s9415, 32
      %s9417 = smul.addr %s9416, 8
      %s9418 = scalar_lea.vmem %s14, %s9417
      // Predicated region
      $region77: #{tpu_custom_call.1} parent=75 // pred_check
        %p9419 = pneg %p347
      $region78: #{tpu_custom_call.1} parent=75 // pred_check_branch
        %9421 = sbr.rel (%p9419) target = $region80
      $region79: #{tpu_custom_call.1} parent=75 // pred_region
        _
      $region80: #{tpu_custom_call.1} parent=75 // pred_fallthru
        _
    $region76: #{tpu_custom_call.1} parent=5 // pred_fallthru
      _
    %p9422 = scmp.le.s32.totalorder 2, %s20
    // Predicated region
    $region81: #{tpu_custom_call.1} parent=5 // pred_check
      %p9423 = pneg %p9422
    $region82: #{tpu_custom_call.1} parent=5 // pred_check_branch
      %9425 = sbr.rel (%p9423) target = $region84
    $region83: #{tpu_custom_call.1} parent=5 // pred_region
      %s9426 = ssub.s32 %s20, 2
      // Predicated region
      $region85: #{tpu_custom_call.1} parent=83 // pred_check
        %p9427 = pneg %p353
      $region86: #{tpu_custom_call.1} parent=83 // pred_check_branch
        %9429 = sbr.rel (%p9427) target = $region88
      $region87: #{tpu_custom_call.1} parent=83 // pred_region
        %p9430 = scmp.lt.s32.totalorder %s26, 1
        %s9431 = scalar_select %p9430, %s26, 1
        %s9432 = smul.addr %s9431, 32
        %s9433 = smul.addr %s9432, 8
        %s9434 = scalar_lea.vmem %s14, %s9433
      $region88: #{tpu_custom_call.1} parent=83 // pred_fallthru
        _
    $region84: #{tpu_custom_call.1} parent=5 // pred_fallthru
      _
  $region6: #{tpu_custom_call.1} parent=0 // loop_footer
    %s24 = sadd.s32 1, %s20
  $region7: #{tpu_custom_call.1} parent=0 // loop_footer_branch
    %19 = sbr.rel target = $region3
  $region8: #{tpu_custom_call.1} parent=0 // loop_exit
    _

</llo_original>
